<compile_context>
chip_gen: v7x
topology: tpu7x:2x2x1
jax: 0.10.0
libtpu: 0.0.40
codegen_flags: <defaults>
</compile_context>

<pallas_src>
import functools

import jax
import jax.numpy as jnp
from jax.experimental import pallas as pl
from jax.experimental.pallas import tpu as pltpu

# ---- module constants (scaled down from height=width=256, stride=8) ----
HEIGHT = 32
WIDTH = 32
STRIDE = 8
PATCH_DIM = STRIDE * STRIDE          # 64
FEAT_C = 32                          # backbone feature channels
TEMP = 25.0                          # self.TEMP
OHEM_RANGE = (0.4, 1.0)
BETA = 0.5                           # smooth_l1 beta
LOSS_LANES = 128                     # lane-dense padding for tiny loss outputs


def _pick_tile_rows(m, target):
    """Largest row tile <= target that divides m and is a multiple of 8."""
    for t in (target, 1024, 512, 256, 128, 64, 32, 16, 8):
        if t <= m and m % t == 0 and t % 8 == 0:
            return t
    return m


# ============================ Pallas kernels ============================

def _patch_embed_kernel(x_ref, w_ref, b_ref, o_ref):
    # x: [tm, 3*s*s] bf16, w: [3*s*s, C] bf16, b: [1, C] f32 -> L2-normalized tokens [tm, C] f32
    y = jnp.dot(x_ref[...], w_ref[...], preferred_element_type=jnp.float32) + b_ref[...]
    inv = jax.lax.rsqrt(jnp.sum(y * y, axis=-1, keepdims=True) + 1e-12)
    o_ref[...] = y * inv


def patch_embed(imgs, w_bf16, b):
    """imgs: [N, 3, HEIGHT, WIDTH] -> features [N, H, W, C] (stand-in backbone)."""
    n = imgs.shape[0]
    h, wgrid = HEIGHT // STRIDE, WIDTH // STRIDE
    m = n * h * wgrid
    kdim = 3 * STRIDE * STRIDE
    patches = imgs.reshape(n, 3, h, STRIDE, wgrid, STRIDE)
    patches = patches.transpose(0, 2, 4, 1, 3, 5).reshape(m, kdim)
    patches = patches.astype(jnp.bfloat16)        # halve the dominant input DMA
    tile_m = _pick_tile_rows(m, 1024)
    # Note: FEAT_C=32 -> 32-lane output stores; kernel is input-DMA bound, the masked
    # vst epilogue is secondary and downstream semantics need C=32 row-major tokens.
    out = pl.pallas_call(
        _patch_embed_kernel,
        grid=(m // tile_m,),
        in_specs=[
            pl.BlockSpec((tile_m, kdim), lambda i: (i, 0)),
            pl.BlockSpec((kdim, FEAT_C), lambda i: (0, 0)),
            pl.BlockSpec((1, FEAT_C), lambda i: (0, 0)),
        ],
        out_specs=pl.BlockSpec((tile_m, FEAT_C), lambda i: (i, 0)),
        out_shape=jax.ShapeDtypeStruct((m, FEAT_C), jnp.float32),
        compiler_params=pltpu.CompilerParams(dimension_semantics=("parallel",)),
    )(patches, w_bf16, b.reshape(1, FEAT_C))
    return out.reshape(n, h, wgrid, FEAT_C)


def _color_attn_kernel(ks_ref, ko_ref, ls_ref, lo_ref, ms_ref,
                       color_ref, loss_ref, *, temp, t_dim, tq):
    # ks/ko : [1, T, HW, C]   f32   this-batch / flipped-batch features (K side, resident)
    # ls/lo : [1, T, HW, D]   bf16  this-batch / flipped-batch label tokens (resident)
    # ms    : [1, T, tq, D]   bf16  this-batch mask, current query tile
    # color : [1, T-1, tq, D] f32   predictions for pairs (0, j), current query tile
    # loss  : [1, 1, 128]     f32   per-pair smooth-L1 *sums*, accumulated over q tiles
    qi = pl.program_id(1)
    q0 = pl.multiple_of(qi * tq, tq)

    beta = BETA
    inv_2beta = 0.5 / beta
    half_beta = 0.5 * beta
    lane = jax.lax.broadcasted_iota(jnp.int32, (1, LOSS_LANES), 1)
    ones_q = jnp.ones((1, tq), jnp.float32)
    loss_row = jnp.zeros((1, LOSS_LANES), jnp.float32)

    @pl.when(qi == 0)
    def _():
        loss_ref[...] = jnp.zeros_like(loss_ref)

    p = 0
    for i in range(t_dim):
        # K-side operands depend only on i: prepare (and cast) them once per i.
        k_s = ks_ref[0, i].astype(jnp.bfloat16)          # [HW, C]
        k_o = ko_ref[0, i].astype(jnp.bfloat16)          # [HW, C]
        lab_s = ls_ref[0, i]                             # [HW, D] bf16
        lab_o = lo_ref[0, i]                             # [HW, D] bf16
        for j in range(t_dim):
            if i == j:
                continue
            # query tile; temp folded into q ([tq,C] mul instead of the [tq,2HW] att)
            q = (ks_ref[0, j, pl.ds(q0, tq), :] * temp).astype(jnp.bfloat16)   # [tq, C]

            # "concat with flipped batch" expressed as two matmuls (no VMEM concat copies)
            att_s = jax.lax.dot_general(q, k_s, (((1,), (1,)), ((), ())),
                                        preferred_element_type=jnp.float32)    # [tq, HW]
            att_o = jax.lax.dot_general(q, k_o, (((1,), (1,)), ((), ())),
                                        preferred_element_type=jnp.float32)    # [tq, HW]
            m = jnp.maximum(jnp.max(att_s, axis=-1, keepdims=True),
                            jnp.max(att_o, axis=-1, keepdims=True))
            e_s = jnp.exp(att_s - m)
            e_o = jnp.exp(att_o - m)
            denom = (jnp.sum(e_s, axis=-1, keepdims=True) +
                     jnp.sum(e_o, axis=-1, keepdims=True))
            # deferred softmax normalization: normalize the [tq,D] result, not [tq,2HW]
            cu = (jnp.dot(e_s.astype(jnp.bfloat16), lab_s,
                          preferred_element_type=jnp.float32) +
                  jnp.dot(e_o.astype(jnp.bfloat16), lab_o,
                          preferred_element_type=jnp.float32))                 # [tq, D]
            color = cu * pl.reciprocal(denom, approx=False)   # exact; feeds loss + output

            gt = ls_ref[0, j, pl.ds(q0, tq), :].astype(jnp.float32)            # [tq, D]
            msk = ms_ref[0, j].astype(jnp.float32)                             # [tq, D]
            d = (color - gt) * msk
            ad = jnp.abs(d)
            sl1 = jnp.where(ad < beta, inv_2beta * d * d, ad - half_beta)
            # loss reduction on the MXU (ones @ sl1) + tiny 192-lane sum, not a big XLU reduce
            part = jnp.sum(jax.lax.dot_general(ones_q, sl1, (((1,), (0,)), ((), ())),
                                               preferred_element_type=jnp.float32))
            loss_row = loss_row + jnp.where(lane == p, part, 0.0)

            if i == 0:
                color_ref[0, j - 1] = color
            p += 1

    loss_ref[0] = loss_ref[0] + loss_row


def color_attention(key1, lab_bf16, mask_bf16, temp):
    """key1: [B,T,HW,C] f32, lab_bf16/mask_bf16: [B,T,HW,D] bf16 ->
       color [B,T-1,HW,D] f32 (pairs (0,j)), per-pair smooth-L1 means [B, T*(T-1)]."""
    b_dim, t_dim, hw, c = key1.shape
    d = lab_bf16.shape[3]
    n_pairs = t_dim * (t_dim - 1)
    assert n_pairs <= LOSS_LANES
    tq = _pick_tile_rows(hw, 256)
    n_qt = hw // tq

    same4 = lambda b, q: (b, 0, 0, 0)
    flip4 = lambda b, q: (b_dim - 1 - b, 0, 0, 0)   # torch.flip over batch
    qtile4 = lambda b, q: (b, 0, q, 0)

    kern = functools.partial(_color_attn_kernel, temp=temp, t_dim=t_dim, tq=tq)
    color, loss_sums = pl.pallas_call(
        kern,
        grid=(b_dim, n_qt),
        in_specs=[
            pl.BlockSpec((1, t_dim, hw, c), same4),    # K same-batch   (resident over q)
            pl.BlockSpec((1, t_dim, hw, c), flip4),    # K flipped      (resident over q)
            pl.BlockSpec((1, t_dim, hw, d), same4),    # lab same-batch (resident over q)
            pl.BlockSpec((1, t_dim, hw, d), flip4),    # lab flipped    (resident over q)
            pl.BlockSpec((1, t_dim, tq, d), qtile4),   # mask, pipelined per q tile
        ],
        out_specs=(
            pl.BlockSpec((1, t_dim - 1, tq, d), qtile4),
            pl.BlockSpec((1, 1, LOSS_LANES), lambda b, q: (b, 0, 0)),
        ),
        out_shape=(
            jax.ShapeDtypeStruct((b_dim, t_dim - 1, hw, d), jnp.float32),
            jax.ShapeDtypeStruct((b_dim, 1, LOSS_LANES), jnp.float32),
        ),
        compiler_params=pltpu.CompilerParams(
            dimension_semantics=("parallel", "arbitrary")),
    )(key1, key1, lab_bf16, lab_bf16, mask_bf16)
    losses = loss_sums[:, 0, :n_pairs] * (1.0 / float(hw * d))
    return color, losses


def _neg_kernel(fi_ref, fj_ref, o_ref):
    i = pl.program_id(0)
    j = pl.program_id(1)

    @pl.when(j == 0)
    def _():
        o_ref[...] = jnp.zeros_like(o_ref)

    @pl.when(i != j)   # skip diagonal blocks by block index (no per-element mask)
    def _():
        fi = fi_ref[0].astype(jnp.bfloat16)
        fj = fj_ref[0].astype(jnp.bfloat16)
        g = jax.lax.dot_general(fi, fj, (((1,), (1,)), ((), ())),
                                preferred_element_type=jnp.float32)     # [HW, HW]
        o_ref[...] = o_ref[...] + jnp.sum(jnp.abs(g)).reshape(1, 1, 1)


def neg_loss_fn(feat):
    """feat: [B, HW, C] f32 -> sum_{i!=j} mean(|f_i f_j^T|) / B / (B-1)."""
    b, hw, c = feat.shape
    if b < 2:
        return jnp.zeros((), jnp.float32)
    # Tiled Gram: one [HW,HW] block per (i,j) grid step, per-row-i accumulator over j.
    # Never materializes the [B*HW, B*HW] Gram; scales to production shapes.
    out = pl.pallas_call(
        _neg_kernel,
        grid=(b, b),
        in_specs=[
            pl.BlockSpec((1, hw, c), lambda i, j: (i, 0, 0)),
            pl.BlockSpec((1, hw, c), lambda i, j: (j, 0, 0)),
        ],
        out_specs=pl.BlockSpec((1, 1, 1), lambda i, j: (i, 0, 0)),
        out_shape=jax.ShapeDtypeStruct((b, 1, 1), jnp.float32),
        compiler_params=pltpu.CompilerParams(
            dimension_semantics=("parallel", "arbitrary")),
    )(feat, feat)
    return jnp.sum(out) / float(hw * hw) / float(b * (b - 1))


def _smooth_l1_rows_kernel(a_ref, b_ref, o_ref, *, beta, inv_f):
    # a, b: [N, F] (F lane-dense) -> per-row means as a [1, N] row (ones-matmul on the MXU)
    d = a_ref[...] - b_ref[...]
    ad = jnp.abs(d)
    sl1 = jnp.where(ad < beta, (0.5 / beta) * d * d, ad - 0.5 * beta)
    ones = jnp.ones((1, sl1.shape[1]), jnp.float32)
    sums = jax.lax.dot_general(ones, sl1, (((1,), (1,)), ((), ())),
                               preferred_element_type=jnp.float32)           # [1, N]
    o_ref[...] = sums * inv_f


def per_sample_smooth_l1(a_flat, b_flat, beta=BETA):
    """a_flat, b_flat: [N, F] -> per-sample smooth-L1 means [N]."""
    n, f = a_flat.shape
    # Output is a single tiny (1, N<=128) row -> one store; negligible vs. the F-wide input DMA.
    out = pl.pallas_call(
        functools.partial(_smooth_l1_rows_kernel, beta=beta, inv_f=1.0 / f),
        out_shape=jax.ShapeDtypeStruct((1, n), jnp.float32),
    )(a_flat, b_flat)
    return out[0]


# ============================ JAX glue ============================

def grid_sample_nearest_reflect_nhwc(x, grid):
    """F.grid_sample(x_nchw, grid, mode='nearest', padding_mode='reflection',
    align_corners=False), evaluated in NHWC (no NCHW relayout of the feature maps).
    x: [N,H,W,C]; grid: [N,Hg,Wg,2] with (x,y) in [-1,1].
    Data-dependent gather, done in plain JAX (glue)."""
    _, h, w, _ = x.shape

    def unnorm(coord, size):
        return ((coord + 1.0) * size - 1.0) * 0.5

    def reflect_clip(coord, size):
        low = -0.5
        span = float(size)
        t = jnp.abs(coord - low)
        extra = jnp.mod(t, span)
        flips = jnp.floor(t / span)
        out = jnp.where(jnp.mod(flips, 2.0) == 0.0, low + extra, low + span - extra)
        return jnp.clip(out, 0.0, size - 1.0)

    ix = reflect_clip(unnorm(grid[..., 0], w), w)
    iy = reflect_clip(unnorm(grid[..., 1], h), h)
    ix = jnp.clip(jnp.round(ix), 0, w - 1).astype(jnp.int32)
    iy = jnp.clip(jnp.round(iy), 0, h - 1).astype(jnp.int32)

    def gather_one(xn, iyn, ixn):
        return xn[iyn, ixn, :]    # [Hg, Wg, C]

    return jax.vmap(gather_one)(x, iy, ix)


def vit_forward(params, frames1, frames2, affines, affine_src, labLst, w_mask_lst,
                temp=TEMP, ohem_range=OHEM_RANGE):
    del affine_src  # unused in the non-DUL forward path (matches PyTorch code)
    b_dim, t_dim = frames1.shape[:2]
    h, w = HEIGHT // STRIDE, WIDTH // STRIDE
    hw = h * w
    c = FEAT_C
    d = PATCH_DIM * 3
    bt = b_dim * t_dim

    img1 = frames1.reshape(bt, 3, HEIGHT, WIDTH)
    img2 = frames2.reshape(bt, 3, HEIGHT, WIDTH)
    aff = affines.reshape(bt, h, w, 2)

    w_bf16 = params['w'].astype(jnp.bfloat16)     # bf16 weights for the MXU
    # one fused patch-embed pipeline over both image streams (shared resident weights)
    feats = patch_embed(jnp.concatenate([img1, img2], axis=0), w_bf16, params['b'])
    key1_hw = feats[:bt]                                    # [BT, h, w, C]
    key2_hw = jax.lax.stop_gradient(feats[bt:])             # torch.no_grad()

    key1 = key1_hw.reshape(b_dim, t_dim, hw, c)
    key2 = key2_hw.reshape(b_dim, t_dim, hw, c)

    lab_tok = labLst.reshape(bt, 3, h, STRIDE, w, STRIDE) \
        .transpose(0, 2, 4, 3, 5, 1).reshape(b_dim, t_dim, hw, d)
    mask_tok = w_mask_lst.reshape(bt, 3, h, STRIDE, w, STRIDE) \
        .transpose(0, 2, 4, 3, 5, 1).reshape(b_dim, t_dim, hw, d)
    # bf16 label/mask tokens in HBM: mask is exact in bf16; labels are cast to bf16 for
    # the e@lab MXU matmul anyway.  Halves the dominant D=192 DMA on every generation.
    lab_bf16 = lab_tok.astype(jnp.bfloat16)
    mask_bf16 = mask_tok.astype(jnp.bfloat16)

    # ---------------- loss_ce (_ce_loss2), NHWC end-to-end ----------------
    k1_aligned = grid_sample_nearest_reflect_nhwc(key1_hw, aff)             # [BT, h, w, C]
    per_sample = per_sample_smooth_l1(
        k1_aligned.reshape(bt, h * w * c),
        key2_hw.reshape(bt, h * w * c), beta=BETA)
    per_sample = jnp.sort(per_sample)
    i1 = int(bt * ohem_range[0])
    i2 = int(bt * ohem_range[1])
    loss_ce = jnp.mean(per_sample[i1:i2])

    # ---------------- color attention losses (is_neg=True branch) ----------------
    color, loss_pb = color_attention(key1, lab_bf16, mask_bf16, temp)

    color_losses = jnp.sort(loss_pb.reshape(-1))   # list.sort() of the scalar losses
    n = color_losses.shape[0]
    c1 = int(n * ohem_range[0])
    c2 = int(n * ohem_range[1])
    loss_color = jnp.sum(color_losses[c1:c2]) / (c2 - c1)

    color_pred_lst = []
    for j in range(1, t_dim):                      # pairs (0, j) in order of j
        cp = color[:, j - 1].reshape(b_dim, h, w, STRIDE, STRIDE, 3)
        cp = cp.transpose(0, 5, 1, 3, 2, 4).reshape(b_dim, 3, HEIGHT, WIDTH)
        color_pred_lst.append(cp)

    neg_loss = neg_loss_fn(key1[:, 0])

    return {
        'feat1': key1,
        'feat2': key2,
        'loss_ce': loss_ce,
        'neg_loss': neg_loss,
        'color_lst': color_pred_lst,
        'loss_color': loss_color,
        'loss_dul': jnp.zeros((1,), jnp.float32),
    }


# ============================ main ============================

if __name__ == "__main__":
    key = jax.random.PRNGKey(0)
    ks = jax.random.split(key, 8)
    B, T = 2, 2
    H, W = HEIGHT // STRIDE, WIDTH // STRIDE

    frames1 = jax.random.normal(ks[0], (B, T, 3, HEIGHT, WIDTH), jnp.float32)
    frames2 = jax.random.normal(ks[1], (B, T, 3, HEIGHT, WIDTH), jnp.float32)
    affines = jax.random.uniform(ks[2], (B, T, H, W, 2), jnp.float32, -1.0, 1.0)
    affine_src = jax.random.normal(ks[3], (B, T, 2, 3), jnp.float32)  # unused (non-DUL)
    labLst = jax.random.normal(ks[4], (B, T, 3, HEIGHT, WIDTH), jnp.float32)
    w_mask_lst = (jax.random.uniform(ks[5], (B, T, 3, HEIGHT, WIDTH)) > 0.5).astype(jnp.float32)

    params = {
        'w': 0.02 * jax.random.normal(ks[6], (3 * STRIDE * STRIDE, FEAT_C), jnp.float32),
        'b': jnp.zeros((FEAT_C,), jnp.float32),
    }

    fwd = jax.jit(vit_forward)
    out = fwd(params, frames1, frames2, affines, affine_src, labLst, w_mask_lst)
    jax.block_until_ready(out)
    print("KERNEL_OK")
</pallas_src>

<mosaic_0001>
module attributes {stable_mosaic.version = 11 : i64} {
  func.func @_patch_embed_kernel(%arg0: i32, %arg1: memref<128x192xbf16, #tpu.memory_space<vmem>>, %arg2: memref<192x32xbf16, #tpu.memory_space<vmem>>, %arg3: memref<1x32xf32, #tpu.memory_space<vmem>>, %arg4: memref<128x32xf32, #tpu.memory_space<vmem>>) attributes {dimension_semantics = [#tpu.dimension_semantics<parallel>], iteration_bounds = array<i64: 1>, scalar_prefetch = 0 : i64, scratch_operands = 0 : i64, tpu.core_type = #tpu.core_type<tc>, window_params = [{transform_indices = @transform_0, window_bounds = array<i64: 128, 192>}, {pipeline_mode = #tpu.pipeline_mode<synchronous>, transform_indices = @transform_1, window_bounds = array<i64: 192, 32>}, {pipeline_mode = #tpu.pipeline_mode<synchronous>, transform_indices = @transform_2, window_bounds = array<i64: 1, 32>}, {transform_indices = @transform_3, window_bounds = array<i64: 128, 32>}]} {
    %c0 = arith.constant 0 : index
    %c0_0 = arith.constant 0 : index
    %0 = vector.load %arg1[%c0, %c0_0] : memref<128x192xbf16, #tpu.memory_space<vmem>>, vector<128x192xbf16>
    %c0_1 = arith.constant 0 : index
    %c0_2 = arith.constant 0 : index
    %1 = vector.load %arg2[%c0_1, %c0_2] : memref<192x32xbf16, #tpu.memory_space<vmem>>, vector<192x32xbf16>
    %cst = arith.constant dense<0.000000e+00> : vector<128x32xf32>
    %2 = tpu.matmul %0, %1, %cst {dimension_numbers = #tpu.dot_dimension_numbers<[1], [0], [0], [1], [0, 0, 1, 1], [], []>} : vector<128x192xbf16>, vector<192x32xbf16>, vector<128x32xf32> -> vector<128x32xf32>
    %c0_3 = arith.constant 0 : index
    %c0_4 = arith.constant 0 : index
    %3 = vector.load %arg3[%c0_3, %c0_4] : memref<1x32xf32, #tpu.memory_space<vmem>>, vector<1x32xf32>
    %4 = vector.broadcast %3 : vector<1x32xf32> to vector<128x32xf32>
    %5 = arith.addf %2, %4 : vector<128x32xf32>
    %6 = arith.mulf %5, %5 : vector<128x32xf32>
    %cst_5 = arith.constant dense<0.000000e+00> : vector<128xf32>
    %7 = vector.multi_reduction <add>, %6, %cst_5 [1] : vector<128x32xf32> to vector<128xf32>
    %8 = vector.shape_cast %7 : vector<128xf32> to vector<128x1xf32>
    %cst_6 = arith.constant 9.99999996E-13 : f32
    %9 = vector.broadcast %cst_6 : f32 to vector<128x1xf32>
    %10 = arith.addf %8, %9 : vector<128x1xf32>
    %11 = math.rsqrt %10 : vector<128x1xf32>
    %12 = vector.broadcast %11 : vector<128x1xf32> to vector<128x32xf32>
    %13 = arith.mulf %5, %12 : vector<128x32xf32>
    %c0_7 = arith.constant 0 : index
    %c0_8 = arith.constant 0 : index
    %14 = vector.load %arg4[%c0_7, %c0_8] : memref<128x32xf32, #tpu.memory_space<vmem>>, vector<128x32xf32>
    tpu.vector_store %arg4[%c0_7, %c0_8], %13 {strides = array<i32>} : memref<128x32xf32, #tpu.memory_space<vmem>>, vector<128x32xf32>,
    return
  }
  func.func @transform_0(%arg0: i32) -> (i32, i32) {
    %c0_i32 = arith.constant 0 : i32
    %c0_i32_0 = arith.constant 0 : i32
    return %arg0, %c0_i32 : i32, i32
  }
  func.func @transform_1(%arg0: i32) -> (i32, i32) {
    %c0_i32 = arith.constant 0 : i32
    %c0_i32_0 = arith.constant 0 : i32
    %c0_i32_1 = arith.constant 0 : i32
    return %c0_i32, %c0_i32_0 : i32, i32
  }
  func.func @transform_2(%arg0: i32) -> (i32, i32) {
    %c0_i32 = arith.constant 0 : i32
    %c0_i32_0 = arith.constant 0 : i32
    %c0_i32_1 = arith.constant 0 : i32
    return %c0_i32, %c0_i32_0 : i32, i32
  }
  func.func @transform_3(%arg0: i32) -> (i32, i32) {
    %c0_i32 = arith.constant 0 : i32
    %c0_i32_0 = arith.constant 0 : i32
    return %arg0, %c0_i32 : i32, i32
  }
}

module attributes {stable_mosaic.version = 11 : i64} {
  func.func @_color_attn_kernel(%arg0: i32, %arg1: i32, %arg2: memref<1x2x16x32xf32, #tpu.memory_space<vmem>>, %arg3: memref<1x2x16x32xf32, #tpu.memory_space<vmem>>, %arg4: memref<1x2x16x192xbf16, #tpu.memory_space<vmem>>, %arg5: memref<1x2x16x192xbf16, #tpu.memory_space<vmem>>, %arg6: memref<1x2x16x192xbf16, #tpu.memory_space<vmem>>, %arg7: memref<1x1x16x192xf32, #tpu.memory_space<vmem>>, %arg8: memref<1x1x128xf32, #tpu.memory_space<vmem>>) attributes {dimension_semantics = [#tpu.dimension_semantics<parallel>, #tpu.dimension_semantics<arbitrary>], iteration_bounds = array<i64: 2, 1>, scalar_prefetch = 0 : i64, scratch_operands = 0 : i64, tpu.core_type = #tpu.core_type<tc>, window_params = [{transform_indices = @transform_0, window_bounds = array<i64: 1, 2, 16, 32>}, {transform_indices = @transform_1, window_bounds = array<i64: 1, 2, 16, 32>}, {transform_indices = @transform_2, window_bounds = array<i64: 1, 2, 16, 192>}, {transform_indices = @transform_3, window_bounds = array<i64: 1, 2, 16, 192>}, {transform_indices = @transform_4, window_bounds = array<i64: 1, 2, 16, 192>}, {transform_indices = @transform_5, window_bounds = array<i64: 1, 1, 16, 192>}, {transform_indices = @transform_6, window_bounds = array<i64: 1, 1, 128>}]} {
    %c16_i32 = arith.constant 16 : i32
    %0 = arith.muli %arg1, %c16_i32 : i32
    %1 = tpu.assume_multiple %0, 16 : i32
    %2 = tpu.iota {dimensions = array<i32: 1>} : vector<1x128xi32>
    %cst = arith.constant 1.000000e+00 : f32
    %3 = vector.broadcast %cst : f32 to vector<1x16xf32>
    %cst_0 = arith.constant 0.000000e+00 : f32
    %4 = vector.broadcast %cst_0 : f32 to vector<1x128xf32>
    %c0_i32 = arith.constant 0 : i32
    %5 = arith.cmpi eq, %arg1, %c0_i32 : i32
    %6 = arith.extui %5 : i1 to i32
    %c0_i32_1 = arith.constant 0 : i32
    %7 = arith.cmpi ne, %6, %c0_i32_1 : i32
    scf.if %7 {
      %cst_93 = arith.constant 0.000000e+00 : f32
      %159 = vector.broadcast %cst_93 : f32 to vector<1x1x128xf32>
      %c0_94 = arith.constant 0 : index
      %c0_95 = arith.constant 0 : index
      %c0_96 = arith.constant 0 : index
      %160 = vector.load %arg8[%c0_94, %c0_95, %c0_96] : memref<1x1x128xf32, #tpu.memory_space<vmem>>, vector<1x1x128xf32>
      tpu.vector_store %arg8[%c0_94, %c0_95, %c0_96], %159 {strides = array<i32>} : memref<1x1x128xf32, #tpu.memory_space<vmem>>, vector<1x1x128xf32>,
    } else {
    }
    %c0 = arith.constant 0 : index
    %c0_2 = arith.constant 0 : index
    %c0_3 = arith.constant 0 : index
    %c0_4 = arith.constant 0 : index
    %8 = vector.load %arg2[%c0, %c0_2, %c0_3, %c0_4] : memref<1x2x16x32xf32, #tpu.memory_space<vmem>>, vector<1x1x16x32xf32>
    %9 = vector.shape_cast %8 : vector<1x1x16x32xf32> to vector<16x32xf32>
    %10 = arith.truncf %9 : vector<16x32xf32> to vector<16x32xbf16>
    %c0_5 = arith.constant 0 : index
    %c0_6 = arith.constant 0 : index
    %c0_7 = arith.constant 0 : index
    %c0_8 = arith.constant 0 : index
    %11 = vector.load %arg3[%c0_5, %c0_6, %c0_7, %c0_8] : memref<1x2x16x32xf32, #tpu.memory_space<vmem>>, vector<1x1x16x32xf32>
    %12 = vector.shape_cast %11 : vector<1x1x16x32xf32> to vector<16x32xf32>
    %13 = arith.truncf %12 : vector<16x32xf32> to vector<16x32xbf16>
    %c0_9 = arith.constant 0 : index
    %c0_10 = arith.constant 0 : index
    %c0_11 = arith.constant 0 : index
    %c0_12 = arith.constant 0 : index
    %14 = vector.load %arg4[%c0_9, %c0_10, %c0_11, %c0_12] : memref<1x2x16x192xbf16, #tpu.memory_space<vmem>>, vector<1x1x16x192xbf16>
    %15 = vector.shape_cast %14 : vector<1x1x16x192xbf16> to vector<16x192xbf16>
    %c0_13 = arith.constant 0 : index
    %c0_14 = arith.constant 0 : index
    %c0_15 = arith.constant 0 : index
    %c0_16 = arith.constant 0 : index
    %16 = vector.load %arg5[%c0_13, %c0_14, %c0_15, %c0_16] : memref<1x2x16x192xbf16, #tpu.memory_space<vmem>>, vector<1x1x16x192xbf16>
    %17 = vector.shape_cast %16 : vector<1x1x16x192xbf16> to vector<16x192xbf16>
    %c0_17 = arith.constant 0 : index
    %c1 = arith.constant 1 : index
    %18 = arith.index_cast %1 : i32 to index
    %c0_18 = arith.constant 0 : index
    %19 = vector.load %arg2[%c0_17, %c1, %18, %c0_18] : memref<1x2x16x32xf32, #tpu.memory_space<vmem>>, vector<1x1x16x32xf32>
    %20 = vector.shape_cast %19 : vector<1x1x16x32xf32> to vector<16x32xf32>
    %cst_19 = arith.constant 2.500000e+01 : f32
    %21 = vector.broadcast %cst_19 : f32 to vector<16x32xf32>
    %22 = arith.mulf %20, %21 : vector<16x32xf32>
    %23 = arith.truncf %22 : vector<16x32xf32> to vector<16x32xbf16>
    %cst_20 = arith.constant dense<0.000000e+00> : vector<16x16xf32>
    %24 = tpu.matmul %23, %10, %cst_20 {dimension_numbers = #tpu.dot_dimension_numbers<[1], [1], [0], [0], [0, 0, 1, 0], [], []>} : vector<16x32xbf16>, vector<16x32xbf16>, vector<16x16xf32> -> vector<16x16xf32>
    %cst_21 = arith.constant dense<0.000000e+00> : vector<16x16xf32>
    %25 = tpu.matmul %23, %13, %cst_21 {dimension_numbers = #tpu.dot_dimension_numbers<[1], [1], [0], [0], [0, 0, 1, 0], [], []>} : vector<16x32xbf16>, vector<16x32xbf16>, vector<16x16xf32> -> vector<16x16xf32>
    %cst_22 = arith.constant dense<0xFF800000> : vector<16xf32>
    %26 = vector.multi_reduction <maximumf>, %24, %cst_22 [1] : vector<16x16xf32> to vector<16xf32>
    %27 = vector.shape_cast %26 : vector<16xf32> to vector<16x1xf32>
    %cst_23 = arith.constant dense<0xFF800000> : vector<16xf32>
    %28 = vector.multi_reduction <maximumf>, %25, %cst_23 [1] : vector<16x16xf32> to vector<16xf32>
    %29 = vector.shape_cast %28 : vector<16xf32> to vector<16x1xf32>
    %30 = arith.maximumf %27, %29 : vector<16x1xf32>
    %31 = vector.broadcast %30 : vector<16x1xf32> to vector<16x16xf32>
    %32 = arith.subf %24, %31 : vector<16x16xf32>
    %33 = math.exp %32 : vector<16x16xf32>
    %34 = vector.broadcast %30 : vector<16x1xf32> to vector<16x16xf32>
    %35 = arith.subf %25, %34 : vector<16x16xf32>
    %36 = math.exp %35 : vector<16x16xf32>
    %cst_24 = arith.constant dense<0.000000e+00> : vector<16xf32>
    %37 = vector.multi_reduction <add>, %33, %cst_24 [1] : vector<16x16xf32> to vector<16xf32>
    %38 = vector.shape_cast %37 : vector<16xf32> to vector<16x1xf32>
    %cst_25 = arith.constant dense<0.000000e+00> : vector<16xf32>
    %39 = vector.multi_reduction <add>, %36, %cst_25 [1] : vector<16x16xf32> to vector<16xf32>
    %40 = vector.shape_cast %39 : vector<16xf32> to vector<16x1xf32>
    %41 = arith.addf %38, %40 : vector<16x1xf32>
    %42 = arith.truncf %33 : vector<16x16xf32> to vector<16x16xbf16>
    %cst_26 = arith.constant dense<0.000000e+00> : vector<16x192xf32>
    %43 = tpu.matmul %42, %15, %cst_26 {dimension_numbers = #tpu.dot_dimension_numbers<[1], [0], [0], [1], [0, 0, 1, 1], [], []>} : vector<16x16xbf16>, vector<16x192xbf16>, vector<16x192xf32> -> vector<16x192xf32>
    %44 = arith.truncf %36 : vector<16x16xf32> to vector<16x16xbf16>
    %cst_27 = arith.constant dense<0.000000e+00> : vector<16x192xf32>
    %45 = tpu.matmul %44, %17, %cst_27 {dimension_numbers = #tpu.dot_dimension_numbers<[1], [0], [0], [1], [0, 0, 1, 1], [], []>} : vector<16x16xbf16>, vector<16x192xbf16>, vector<16x192xf32> -> vector<16x192xf32>
    %46 = arith.addf %43, %45 : vector<16x192xf32>
    %47 = tpu.reciprocal %41 : vector<16x1xf32> -> vector<16x1xf32>
    %48 = vector.broadcast %47 : vector<16x1xf32> to vector<16x192xf32>
    %49 = arith.mulf %46, %48 : vector<16x192xf32>
    %c0_28 = arith.constant 0 : index
    %c1_29 = arith.constant 1 : index
    %50 = arith.index_cast %1 : i32 to index
    %c0_30 = arith.constant 0 : index
    %51 = vector.load %arg4[%c0_28, %c1_29, %50, %c0_30] : memref<1x2x16x192xbf16, #tpu.memory_space<vmem>>, vector<1x1x16x192xbf16>
    %52 = vector.shape_cast %51 : vector<1x1x16x192xbf16> to vector<16x192xbf16>
    %53 = arith.extf %52 : vector<16x192xbf16> to vector<16x192xf32>
    %c0_31 = arith.constant 0 : index
    %c1_32 = arith.constant 1 : index
    %c0_33 = arith.constant 0 : index
    %c0_34 = arith.constant 0 : index
    %54 = vector.load %arg6[%c0_31, %c1_32, %c0_33, %c0_34] : memref<1x2x16x192xbf16, #tpu.memory_space<vmem>>, vector<1x1x16x192xbf16>
    %55 = vector.shape_cast %54 : vector<1x1x16x192xbf16> to vector<16x192xbf16>
    %56 = arith.extf %55 : vector<16x192xbf16> to vector<16x192xf32>
    %57 = arith.subf %49, %53 : vector<16x192xf32>
    %58 = arith.mulf %57, %56 : vector<16x192xf32>
    %59 = math.absf %58 : vector<16x192xf32>
    %cst_35 = arith.constant 5.000000e-01 : f32
    %60 = vector.broadcast %cst_35 : f32 to vector<16x192xf32>
    %61 = arith.cmpf olt, %59, %60 : vector<16x192xf32>
    %cst_36 = arith.constant 1.000000e+00 : f32
    %62 = vector.broadcast %cst_36 : f32 to vector<16x192xf32>
    %63 = arith.mulf %62, %58 : vector<16x192xf32>
    %64 = arith.mulf %63, %58 : vector<16x192xf32>
    %cst_37 = arith.constant 2.500000e-01 : f32
    %65 = vector.broadcast %cst_37 : f32 to vector<16x192xf32>
    %66 = arith.subf %59, %65 : vector<16x192xf32>
    %67 = arith.select %61, %64, %66 : vector<16x192xi1>, vector<16x192xf32>
    %cst_38 = arith.constant dense<0.000000e+00> : vector<1x192xf32>
    %68 = tpu.matmul %3, %67, %cst_38 {dimension_numbers = #tpu.dot_dimension_numbers<[1], [0], [0], [1], [0, 0, 1, 1], [], []>} : vector<1x16xf32>, vector<16x192xf32>, vector<1x192xf32> -> vector<1x192xf32>
    %69 = vector.shape_cast %68 : vector<1x192xf32> to vector<1x1x192xf32>
    %cst_39 = arith.constant dense<0.000000e+00> : vector<1xf32>
    %70 = vector.multi_reduction <add>, %69, %cst_39 [1, 2] : vector<1x1x192xf32> to vector<1xf32>
    %71 = vector.shape_cast %70 : vector<1xf32> to vector<1x1x1xf32>
    %72 = vector.extract %71[0, 0, 0] : f32 from vector<1x1x1xf32>
    %c0_i32_40 = arith.constant 0 : i32
    %73 = vector.broadcast %c0_i32_40 : i32 to vector<1x128xi32>
    %74 = arith.cmpi eq, %2, %73 : vector<1x128xi32>
    %cst_41 = arith.constant 0.000000e+00 : f32
    %75 = vector.broadcast %72 : f32 to vector<1x128xf32>
    %76 = vector.broadcast %cst_41 : f32 to vector<1x128xf32>
    %77 = arith.select %74, %75, %76 : vector<1x128xi1>, vector<1x128xf32>
    %78 = arith.addf %4, %77 : vector<1x128xf32>
    %c0_42 = arith.constant 0 : index
    %c0_43 = arith.constant 0 : index
    %c0_44 = arith.constant 0 : index
    %c0_45 = arith.constant 0 : index
    %79 = vector.load %arg7[%c0_42, %c0_43, %c0_44, %c0_45] : memref<1x1x16x192xf32, #tpu.memory_space<vmem>>, vector<1x1x16x192xf32>
    %80 = vector.shape_cast %79 : vector<1x1x16x192xf32> to vector<16x192xf32>
    %81 = vector.shape_cast %49 : vector<16x192xf32> to vector<1x1x16x192xf32>
    tpu.vector_store %arg7[%c0_42, %c0_43, %c0_44, %c0_45], %81 {strides = array<i32>} : memref<1x1x16x192xf32, #tpu.memory_space<vmem>>, vector<1x1x16x192xf32>,
    %c0_46 = arith.constant 0 : index
    %c1_47 = arith.constant 1 : index
    %c0_48 = arith.constant 0 : index
    %c0_49 = arith.constant 0 : index
    %82 = vector.load %arg2[%c0_46, %c1_47, %c0_48, %c0_49] : memref<1x2x16x32xf32, #tpu.memory_space<vmem>>, vector<1x1x16x32xf32>
    %83 = vector.shape_cast %82 : vector<1x1x16x32xf32> to vector<16x32xf32>
    %84 = arith.truncf %83 : vector<16x32xf32> to vector<16x32xbf16>
    %c0_50 = arith.constant 0 : index
    %c1_51 = arith.constant 1 : index
    %c0_52 = arith.constant 0 : index
    %c0_53 = arith.constant 0 : index
    %85 = vector.load %arg3[%c0_50, %c1_51, %c0_52, %c0_53] : memref<1x2x16x32xf32, #tpu.memory_space<vmem>>, vector<1x1x16x32xf32>
    %86 = vector.shape_cast %85 : vector<1x1x16x32xf32> to vector<16x32xf32>
    %87 = arith.truncf %86 : vector<16x32xf32> to vector<16x32xbf16>
    %c0_54 = arith.constant 0 : index
    %c1_55 = arith.constant 1 : index
    %c0_56 = arith.constant 0 : index
    %c0_57 = arith.constant 0 : index
    %88 = vector.load %arg4[%c0_54, %c1_55, %c0_56, %c0_57] : memref<1x2x16x192xbf16, #tpu.memory_space<vmem>>, vector<1x1x16x192xbf16>
    %89 = vector.shape_cast %88 : vector<1x1x16x192xbf16> to vector<16x192xbf16>
    %c0_58 = arith.constant 0 : index
    %c1_59 = arith.constant 1 : index
    %c0_60 = arith.constant 0 : index
    %c0_61 = arith.constant 0 : index
    %90 = vector.load %arg5[%c0_58, %c1_59, %c0_60, %c0_61] : memref<1x2x16x192xbf16, #tpu.memory_space<vmem>>, vector<1x1x16x192xbf16>
    %91 = vector.shape_cast %90 : vector<1x1x16x192xbf16> to vector<16x192xbf16>
    %c0_62 = arith.constant 0 : index
    %c0_63 = arith.constant 0 : index
    %92 = arith.index_cast %1 : i32 to index
    %c0_64 = arith.constant 0 : index
    %93 = vector.load %arg2[%c0_62, %c0_63, %92, %c0_64] : memref<1x2x16x32xf32, #tpu.memory_space<vmem>>, vector<1x1x16x32xf32>
    %94 = vector.shape_cast %93 : vector<1x1x16x32xf32> to vector<16x32xf32>
    %cst_65 = arith.constant 2.500000e+01 : f32
    %95 = vector.broadcast %cst_65 : f32 to vector<16x32xf32>
    %96 = arith.mulf %94, %95 : vector<16x32xf32>
    %97 = arith.truncf %96 : vector<16x32xf32> to vector<16x32xbf16>
    %cst_66 = arith.constant dense<0.000000e+00> : vector<16x16xf32>
    %98 = tpu.matmul %97, %84, %cst_66 {dimension_numbers = #tpu.dot_dimension_numbers<[1], [1], [0], [0], [0, 0, 1, 0], [], []>} : vector<16x32xbf16>, vector<16x32xbf16>, vector<16x16xf32> -> vector<16x16xf32>
    %cst_67 = arith.constant dense<0.000000e+00> : vector<16x16xf32>
    %99 = tpu.matmul %97, %87, %cst_67 {dimension_numbers = #tpu.dot_dimension_numbers<[1], [1], [0], [0], [0, 0, 1, 0], [], []>} : vector<16x32xbf16>, vector<16x32xbf16>, vector<16x16xf32> -> vector<16x16xf32>
    %cst_68 = arith.constant dense<0xFF800000> : vector<16xf32>
    %100 = vector.multi_reduction <maximumf>, %98, %cst_68 [1] : vector<16x16xf32> to vector<16xf32>
    %101 = vector.shape_cast %100 : vector<16xf32> to vector<16x1xf32>
    %cst_69 = arith.constant dense<0xFF800000> : vector<16xf32>
    %102 = vector.multi_reduction <maximumf>, %99, %cst_69 [1] : vector<16x16xf32> to vector<16xf32>
    %103 = vector.shape_cast %102 : vector<16xf32> to vector<16x1xf32>
    %104 = arith.maximumf %101, %103 : vector<16x1xf32>
    %105 = vector.broadcast %104 : vector<16x1xf32> to vector<16x16xf32>
    %106 = arith.subf %98, %105 : vector<16x16xf32>
    %107 = math.exp %106 : vector<16x16xf32>
    %108 = vector.broadcast %104 : vector<16x1xf32> to vector<16x16xf32>
    %109 = arith.subf %99, %108 : vector<16x16xf32>
    %110 = math.exp %109 : vector<16x16xf32>
    %cst_70 = arith.constant dense<0.000000e+00> : vector<16xf32>
    %111 = vector.multi_reduction <add>, %107, %cst_70 [1] : vector<16x16xf32> to vector<16xf32>
    %112 = vector.shape_cast %111 : vector<16xf32> to vector<16x1xf32>
    %cst_71 = arith.constant dense<0.000000e+00> : vector<16xf32>
    %113 = vector.multi_reduction <add>, %110, %cst_71 [1] : vector<16x16xf32> to vector<16xf32>
    %114 = vector.shape_cast %113 : vector<16xf32> to vector<16x1xf32>
    %115 = arith.addf %112, %114 : vector<16x1xf32>
    %116 = arith.truncf %107 : vector<16x16xf32> to vector<16x16xbf16>
    %cst_72 = arith.constant dense<0.000000e+00> : vector<16x192xf32>
    %117 = tpu.matmul %116, %89, %cst_72 {dimension_numbers = #tpu.dot_dimension_numbers<[1], [0], [0], [1], [0, 0, 1, 1], [], []>} : vector<16x16xbf16>, vector<16x192xbf16>, vector<16x192xf32> -> vector<16x192xf32>
    %118 = arith.truncf %110 : vector<16x16xf32> to vector<16x16xbf16>
    %cst_73 = arith.constant dense<0.000000e+00> : vector<16x192xf32>
    %119 = tpu.matmul %118, %91, %cst_73 {dimension_numbers = #tpu.dot_dimension_numbers<[1], [0], [0], [1], [0, 0, 1, 1], [], []>} : vector<16x16xbf16>, vector<16x192xbf16>, vector<16x192xf32> -> vector<16x192xf32>
    %120 = arith.addf %117, %119 : vector<16x192xf32>
    %121 = tpu.reciprocal %115 : vector<16x1xf32> -> vector<16x1xf32>
    %122 = vector.broadcast %121 : vector<16x1xf32> to vector<16x192xf32>
    %123 = arith.mulf %120, %122 : vector<16x192xf32>
    %c0_74 = arith.constant 0 : index
    %c0_75 = arith.constant 0 : index
    %124 = arith.index_cast %1 : i32 to index
    %c0_76 = arith.constant 0 : index
    %125 = vector.load %arg4[%c0_74, %c0_75, %124, %c0_76] : memref<1x2x16x192xbf16, #tpu.memory_space<vmem>>, vector<1x1x16x192xbf16>
    %126 = vector.shape_cast %125 : vector<1x1x16x192xbf16> to vector<16x192xbf16>
    %127 = arith.extf %126 : vector<16x192xbf16> to vector<16x192xf32>
    %c0_77 = arith.constant 0 : index
    %c0_78 = arith.constant 0 : index
    %c0_79 = arith.constant 0 : index
    %c0_80 = arith.constant 0 : index
    %128 = vector.load %arg6[%c0_77, %c0_78, %c0_79, %c0_80] : memref<1x2x16x192xbf16, #tpu.memory_space<vmem>>, vector<1x1x16x192xbf16>
    %129 = vector.shape_cast %128 : vector<1x1x16x192xbf16> to vector<16x192xbf16>
    %130 = arith.extf %129 : vector<16x192xbf16> to vector<16x192xf32>
    %131 = arith.subf %123, %127 : vector<16x192xf32>
    %132 = arith.mulf %131, %130 : vector<16x192xf32>
    %133 = math.absf %132 : vector<16x192xf32>
    %cst_81 = arith.constant 5.000000e-01 : f32
    %134 = vector.broadcast %cst_81 : f32 to vector<16x192xf32>
    %135 = arith.cmpf olt, %133, %134 : vector<16x192xf32>
    %cst_82 = arith.constant 1.000000e+00 : f32
    %136 = vector.broadcast %cst_82 : f32 to vector<16x192xf32>
    %137 = arith.mulf %136, %132 : vector<16x192xf32>
    %138 = arith.mulf %137, %132 : vector<16x192xf32>
    %cst_83 = arith.constant 2.500000e-01 : f32
    %139 = vector.broadcast %cst_83 : f32 to vector<16x192xf32>
    %140 = arith.subf %133, %139 : vector<16x192xf32>
    %141 = arith.select %135, %138, %140 : vector<16x192xi1>, vector<16x192xf32>
    %cst_84 = arith.constant dense<0.000000e+00> : vector<1x192xf32>
    %142 = tpu.matmul %3, %141, %cst_84 {dimension_numbers = #tpu.dot_dimension_numbers<[1], [0], [0], [1], [0, 0, 1, 1], [], []>} : vector<1x16xf32>, vector<16x192xf32>, vector<1x192xf32> -> vector<1x192xf32>
    %143 = vector.shape_cast %142 : vector<1x192xf32> to vector<1x1x192xf32>
    %cst_85 = arith.constant dense<0.000000e+00> : vector<1xf32>
    %144 = vector.multi_reduction <add>, %143, %cst_85 [1, 2] : vector<1x1x192xf32> to vector<1xf32>
    %145 = vector.shape_cast %144 : vector<1xf32> to vector<1x1x1xf32>
    %146 = vector.extract %145[0, 0, 0] : f32 from vector<1x1x1xf32>
    %c1_i32 = arith.constant 1 : i32
    %147 = vector.broadcast %c1_i32 : i32 to vector<1x128xi32>
    %148 = arith.cmpi eq, %2, %147 : vector<1x128xi32>
    %cst_86 = arith.constant 0.000000e+00 : f32
    %149 = vector.broadcast %146 : f32 to vector<1x128xf32>
    %150 = vector.broadcast %cst_86 : f32 to vector<1x128xf32>
    %151 = arith.select %148, %149, %150 : vector<1x128xi1>, vector<1x128xf32>
    %152 = arith.addf %78, %151 : vector<1x128xf32>
    %c0_87 = arith.constant 0 : index
    %c0_88 = arith.constant 0 : index
    %c0_89 = arith.constant 0 : index
    %153 = vector.load %arg8[%c0_87, %c0_88, %c0_89] : memref<1x1x128xf32, #tpu.memory_space<vmem>>, vector<1x1x128xf32>
    %154 = vector.shape_cast %153 : vector<1x1x128xf32> to vector<1x128xf32>
    %155 = arith.addf %154, %152 : vector<1x128xf32>
    %c0_90 = arith.constant 0 : index
    %c0_91 = arith.constant 0 : index
    %c0_92 = arith.constant 0 : index
    %156 = vector.load %arg8[%c0_90, %c0_91, %c0_92] : memref<1x1x128xf32, #tpu.memory_space<vmem>>, vector<1x1x128xf32>
    %157 = vector.shape_cast %156 : vector<1x1x128xf32> to vector<1x128xf32>
    %158 = vector.shape_cast %155 : vector<1x128xf32> to vector<1x1x128xf32>
    tpu.vector_store %arg8[%c0_90, %c0_91, %c0_92], %158 {strides = array<i32>} : memref<1x1x128xf32, #tpu.memory_space<vmem>>, vector<1x1x128xf32>,
    return
  }
  func.func @transform_0(%arg0: i32, %arg1: i32) -> (i32, i32, i32, i32) {
    %c0_i32 = arith.constant 0 : i32
    %c0_i32_0 = arith.constant 0 : i32
    %c0_i32_1 = arith.constant 0 : i32
    %c0_i32_2 = arith.constant 0 : i32
    return %arg0, %c0_i32, %c0_i32_0, %c0_i32_1 : i32, i32, i32, i32
  }
  func.func @transform_1(%arg0: i32, %arg1: i32) -> (i32, i32, i32, i32) {
    %c1_i32 = arith.constant 1 : i32
    %0 = arith.subi %c1_i32, %arg0 : i32
    %c0_i32 = arith.constant 0 : i32
    %c0_i32_0 = arith.constant 0 : i32
    %c0_i32_1 = arith.constant 0 : i32
    %c0_i32_2 = arith.constant 0 : i32
    return %0, %c0_i32, %c0_i32_0, %c0_i32_1 : i32, i32, i32, i32
  }
  func.func @transform_2(%arg0: i32, %arg1: i32) -> (i32, i32, i32, i32) {
    %c0_i32 = arith.constant 0 : i32
    %c0_i32_0 = arith.constant 0 : i32
    %c0_i32_1 = arith.constant 0 : i32
    %c0_i32_2 = arith.constant 0 : i32
    return %arg0, %c0_i32, %c0_i32_0, %c0_i32_1 : i32, i32, i32, i32
  }
  func.func @transform_3(%arg0: i32, %arg1: i32) -> (i32, i32, i32, i32) {
    %c1_i32 = arith.constant 1 : i32
    %0 = arith.subi %c1_i32, %arg0 : i32
    %c0_i32 = arith.constant 0 : i32
    %c0_i32_0 = arith.constant 0 : i32
    %c0_i32_1 = arith.constant 0 : i32
    %c0_i32_2 = arith.constant 0 : i32
    return %0, %c0_i32, %c0_i32_0, %c0_i32_1 : i32, i32, i32, i32
  }
  func.func @transform_4(%arg0: i32, %arg1: i32) -> (i32, i32, i32, i32) {
    %c0_i32 = arith.constant 0 : i32
    %c0_i32_0 = arith.constant 0 : i32
    %c0_i32_1 = arith.constant 0 : i32
    return %arg0, %c0_i32, %arg1, %c0_i32_0 : i32, i32, i32, i32
  }
  func.func @transform_5(%arg0: i32, %arg1: i32) -> (i32, i32, i32, i32) {
    %c0_i32 = arith.constant 0 : i32
    %c0_i32_0 = arith.constant 0 : i32
    %c0_i32_1 = arith.constant 0 : i32
    return %arg0, %c0_i32, %arg1, %c0_i32_0 : i32, i32, i32, i32
  }
  func.func @transform_6(%arg0: i32, %arg1: i32) -> (i32, i32, i32) {
    %c0_i32 = arith.constant 0 : i32
    %c0_i32_0 = arith.constant 0 : i32
    %c0_i32_1 = arith.constant 0 : i32
    return %arg0, %c0_i32, %c0_i32_0 : i32, i32, i32
  }
}

module attributes {stable_mosaic.version = 11 : i64} {
  func.func @_smooth_l1_rows_kernel(%arg0: memref<4x512xf32, #tpu.memory_space<vmem>>, %arg1: memref<4x512xf32, #tpu.memory_space<vmem>>, %arg2: memref<1x4xf32, #tpu.memory_space<vmem>>) attributes {dimension_semantics = [], scalar_prefetch = 0 : i64, scratch_operands = 0 : i64, tpu.core_type = #tpu.core_type<tc>} {
    %c0 = arith.constant 0 : index
    %c0_0 = arith.constant 0 : index
    %0 = vector.load %arg0[%c0, %c0_0] : memref<4x512xf32, #tpu.memory_space<vmem>>, vector<4x512xf32>
    %c0_1 = arith.constant 0 : index
    %c0_2 = arith.constant 0 : index
    %1 = vector.load %arg1[%c0_1, %c0_2] : memref<4x512xf32, #tpu.memory_space<vmem>>, vector<4x512xf32>
    %2 = arith.subf %0, %1 : vector<4x512xf32>
    %3 = math.absf %2 : vector<4x512xf32>
    %cst = arith.constant 5.000000e-01 : f32
    %4 = vector.broadcast %cst : f32 to vector<4x512xf32>
    %5 = arith.cmpf olt, %3, %4 : vector<4x512xf32>
    %cst_3 = arith.constant 1.000000e+00 : f32
    %6 = vector.broadcast %cst_3 : f32 to vector<4x512xf32>
    %7 = arith.mulf %6, %2 : vector<4x512xf32>
    %8 = arith.mulf %7, %2 : vector<4x512xf32>
    %cst_4 = arith.constant 2.500000e-01 : f32
    %9 = vector.broadcast %cst_4 : f32 to vector<4x512xf32>
    %10 = arith.subf %3, %9 : vector<4x512xf32>
    %11 = arith.select %5, %8, %10 : vector<4x512xi1>, vector<4x512xf32>
    %cst_5 = arith.constant 1.000000e+00 : f32
    %12 = vector.broadcast %cst_5 : f32 to vector<1x512xf32>
    %cst_6 = arith.constant dense<0.000000e+00> : vector<1x4xf32>
    %13 = tpu.matmul %12, %11, %cst_6 {dimension_numbers = #tpu.dot_dimension_numbers<[1], [1], [0], [0], [0, 0, 1, 0], [], []>} : vector<1x512xf32>, vector<4x512xf32>, vector<1x4xf32> -> vector<1x4xf32>
    %cst_7 = arith.constant 0.001953125 : f32
    %14 = vector.broadcast %cst_7 : f32 to vector<1x4xf32>
    %15 = arith.mulf %13, %14 : vector<1x4xf32>
    %c0_8 = arith.constant 0 : index
    %c0_9 = arith.constant 0 : index
    %16 = vector.load %arg2[%c0_8, %c0_9] : memref<1x4xf32, #tpu.memory_space<vmem>>, vector<1x4xf32>
    tpu.vector_store %arg2[%c0_8, %c0_9], %15 {strides = array<i32>} : memref<1x4xf32, #tpu.memory_space<vmem>>, vector<1x4xf32>,
    return
  }
}

module attributes {stable_mosaic.version = 11 : i64} {
  func.func @_neg_kernel(%arg0: i32, %arg1: i32, %arg2: memref<1x16x32xf32, #tpu.memory_space<vmem>>, %arg3: memref<1x16x32xf32, #tpu.memory_space<vmem>>, %arg4: memref<1x1x1xf32, #tpu.memory_space<vmem>>) attributes {dimension_semantics = [#tpu.dimension_semantics<parallel>, #tpu.dimension_semantics<arbitrary>], iteration_bounds = array<i64: 2, 2>, scalar_prefetch = 0 : i64, scratch_operands = 0 : i64, tpu.core_type = #tpu.core_type<tc>, window_params = [{transform_indices = @transform_0, window_bounds = array<i64: 1, 16, 32>}, {transform_indices = @transform_1, window_bounds = array<i64: 1, 16, 32>}, {transform_indices = @transform_2, window_bounds = array<i64: 1, 1, 1>}]} {
    %c0_i32 = arith.constant 0 : i32
    %0 = arith.cmpi eq, %arg1, %c0_i32 : i32
    %1 = arith.extui %0 : i1 to i32
    %c0_i32_0 = arith.constant 0 : i32
    %2 = arith.cmpi ne, %1, %c0_i32_0 : i32
    scf.if %2 {
      %cst = arith.constant 0.000000e+00 : f32
      %6 = vector.broadcast %cst : f32 to vector<1x1x1xf32>
      %c0 = arith.constant 0 : index
      %c0_2 = arith.constant 0 : index
      %c0_3 = arith.constant 0 : index
      %7 = vector.load %arg4[%c0, %c0_2, %c0_3] : memref<1x1x1xf32, #tpu.memory_space<vmem>>, vector<1x1x1xf32>
      tpu.vector_store %arg4[%c0, %c0_2, %c0_3], %6 {strides = array<i32>} : memref<1x1x1xf32, #tpu.memory_space<vmem>>, vector<1x1x1xf32>,
    } else {
    }
    %3 = arith.cmpi ne, %arg0, %arg1 : i32
    %4 = arith.extui %3 : i1 to i32
    %c0_i32_1 = arith.constant 0 : i32
    %5 = arith.cmpi ne, %4, %c0_i32_1 : i32
    scf.if %5 {
      %c0 = arith.constant 0 : index
      %c0_2 = arith.constant 0 : index
      %c0_3 = arith.constant 0 : index
      %6 = vector.load %arg2[%c0, %c0_2, %c0_3] : memref<1x16x32xf32, #tpu.memory_space<vmem>>, vector<1x16x32xf32>
      %7 = vector.shape_cast %6 : vector<1x16x32xf32> to vector<16x32xf32>
      %8 = arith.truncf %7 : vector<16x32xf32> to vector<16x32xbf16>
      %c0_4 = arith.constant 0 : index
      %c0_5 = arith.constant 0 : index
      %c0_6 = arith.constant 0 : index
      %9 = vector.load %arg3[%c0_4, %c0_5, %c0_6] : memref<1x16x32xf32, #tpu.memory_space<vmem>>, vector<1x16x32xf32>
      %10 = vector.shape_cast %9 : vector<1x16x32xf32> to vector<16x32xf32>
      %11 = arith.truncf %10 : vector<16x32xf32> to vector<16x32xbf16>
      %cst = arith.constant dense<0.000000e+00> : vector<16x16xf32>
      %12 = tpu.matmul %8, %11, %cst {dimension_numbers = #tpu.dot_dimension_numbers<[1], [1], [0], [0], [0, 0, 1, 0], [], []>} : vector<16x32xbf16>, vector<16x32xbf16>, vector<16x16xf32> -> vector<16x16xf32>
      %c0_7 = arith.constant 0 : index
      %c0_8 = arith.constant 0 : index
      %c0_9 = arith.constant 0 : index
      %13 = vector.load %arg4[%c0_7, %c0_8, %c0_9] : memref<1x1x1xf32, #tpu.memory_space<vmem>>, vector<1x1x1xf32>
      %14 = math.absf %12 : vector<16x16xf32>
      %15 = vector.shape_cast %14 : vector<16x16xf32> to vector<1x16x16xf32>
      %cst_10 = arith.constant dense<0.000000e+00> : vector<1xf32>
      %16 = vector.multi_reduction <add>, %15, %cst_10 [1, 2] : vector<1x16x16xf32> to vector<1xf32>
      %17 = vector.shape_cast %16 : vector<1xf32> to vector<1x1x1xf32>
      %18 = vector.extract %17[0, 0, 0] : f32 from vector<1x1x1xf32>
      %19 = vector.broadcast %18 : f32 to vector<1x1x1xf32>
      %20 = arith.addf %13, %19 : vector<1x1x1xf32>
      %c0_11 = arith.constant 0 : index
      %c0_12 = arith.constant 0 : index
      %c0_13 = arith.constant 0 : index
      %21 = vector.load %arg4[%c0_11, %c0_12, %c0_13] : memref<1x1x1xf32, #tpu.memory_space<vmem>>, vector<1x1x1xf32>
      tpu.vector_store %arg4[%c0_11, %c0_12, %c0_13], %20 {strides = array<i32>} : memref<1x1x1xf32, #tpu.memory_space<vmem>>, vector<1x1x1xf32>,
    } else {
    }
    return
  }
  func.func @transform_0(%arg0: i32, %arg1: i32) -> (i32, i32, i32) {
    %c0_i32 = arith.constant 0 : i32
    %c0_i32_0 = arith.constant 0 : i32
    %c0_i32_1 = arith.constant 0 : i32
    return %arg0, %c0_i32, %c0_i32_0 : i32, i32, i32
  }
  func.func @transform_1(%arg0: i32, %arg1: i32) -> (i32, i32, i32) {
    %c0_i32 = arith.constant 0 : i32
    %c0_i32_0 = arith.constant 0 : i32
    %c0_i32_1 = arith.constant 0 : i32
    return %arg1, %c0_i32, %c0_i32_0 : i32, i32, i32
  }
  func.func @transform_2(%arg0: i32, %arg1: i32) -> (i32, i32, i32) {
    %c0_i32 = arith.constant 0 : i32
    %c0_i32_0 = arith.constant 0 : i32
    %c0_i32_1 = arith.constant 0 : i32
    return %arg0, %c0_i32, %c0_i32_0 : i32, i32, i32
  }
}

</mosaic_0001>

<llo_original>
// kernel: vit_forward.4
$region0: #{vit_forward.4}
  #allocation0 [shape = 'u32[]', space=smem, size = 0x4, offset = 0x4, fixed_abs, tag = 'smem constant byte address 0x4 - core index']
  #allocation1 [shape = 'u32[144,128]{1,0:T(1,128)}', space=vmem, size = 0x12000, scoped, tag = 'internal scratch']
  %s0 = inlined_call_operand.vmem [shape: bf16[128,192], index: 0, kind: input, shape index: {}]
  %s1 = inlined_call_operand.vmem [shape: bf16[192,32], index: 1, kind: input, shape index: {}]
  %s2 = inlined_call_operand.vmem [shape: f32[1,32], index: 2, kind: input, shape index: {}]
  %s3 = inlined_call_operand.vmem [shape: f32[128,32], index: 3, kind: output, shape index: {}]
  %s4 = sld [smem:[#allocation0]]
  $region22: #{vit_forward.4} parent=0
    _
  %s6 = ssub.s32 1, %s4
  %s7 = scalar_select 0, %s6, %s4
  // Predicated region
  $region2: #{vit_forward.4} parent=0 // pred_check
    _
  $region3: #{vit_forward.4} parent=0 // pred_check_branch
    %9 = sbr.rel (0) target = $region5
  $region4: #{vit_forward.4} parent=0 // pred_region
    _
  $region5: #{vit_forward.4} parent=0 // pred_fallthru
    _
  // Predicated region
  $region6: #{vit_forward.4} parent=0 // pred_check
    _
  $region7: #{vit_forward.4} parent=0 // pred_check_branch
    %11 = sbr.rel (0) target = $region9
  $region8: #{vit_forward.4} parent=0 // pred_region
    _
  $region9: #{vit_forward.4} parent=0 // pred_fallthru
    _
  // Predicated region
  $region10: #{vit_forward.4} parent=0 // pred_check
    _
  $region11: #{vit_forward.4} parent=0 // pred_check_branch
    %13 = sbr.rel (0) target = $region13
  $region12: #{vit_forward.4} parent=0 // pred_region
    _
  $region13: #{vit_forward.4} parent=0 // pred_fallthru
    _
  %v15 = vld [vmem:[%s0] sm:$0xff]
  %v16 = vld [vmem:[%s0 + $0x8] sm:$0xff]
  %v17 = vld [vmem:[%s0 + $0x10] sm:$0xff]
  %v18 = vld [vmem:[%s0 + $0x18] sm:$0xff]
  %v19 = vld [vmem:[%s0 + $0x20] sm:$0xff]
  %v20 = vld [vmem:[%s0 + $0x28] sm:$0xff]
  %v21 = vld [vmem:[%s0 + $0x30] sm:$0xff]
  %v22 = vld [vmem:[%s0 + $0x38] sm:$0xff]
  %v23 = vld [vmem:[%s0 + $0x40] sm:$0xff]
  %v24 = vld [vmem:[%s0 + $0x48] sm:$0xff]
  %v25 = vld [vmem:[%s0 + $0x50] sm:$0xff]
  %v26 = vld [vmem:[%s0 + $0x58] sm:$0xff]
  %v27 = vld [vmem:[%s0 + $0x60] sm:$0xff]
  %v28 = vld [vmem:[%s0 + $0x68] sm:$0xff]
  %v29 = vld [vmem:[%s0 + $0x70] sm:$0xff]
  %v30 = vld [vmem:[%s0 + $0x78] sm:$0xff]
  %v31 = vld [vmem:[%s1] sm:$0xf]
  %v32 = vld [vmem:[%s1 + $0x4] sm:$0xf]
  %v33 = vld [vmem:[%s1 + $0x8] sm:$0xf]
  %v34 = vld [vmem:[%s1 + $0xc] sm:$0xf]
  %v35 = vld [vmem:[%s1 + $0x10] sm:$0xf]
  %v36 = vld [vmem:[%s1 + $0x14] sm:$0xf]
  %v37 = vld [vmem:[%s1 + $0x18] sm:$0xf]
  %v38 = vld [vmem:[%s1 + $0x1c] sm:$0xf]
  %v39 = vld [vmem:[%s1 + $0x20] sm:$0xf]
  %v40 = vld [vmem:[%s1 + $0x24] sm:$0xf]
  %v41 = vld [vmem:[%s1 + $0x28] sm:$0xf]
  %v42 = vld [vmem:[%s1 + $0x2c] sm:$0xf]
  %v43 = vld [vmem:[%s1 + $0x30] sm:$0xf]
  %v44 = vld [vmem:[%s1 + $0x34] sm:$0xf]
  %v45 = vld [vmem:[%s1 + $0x38] sm:$0xf]
  %v46 = vld [vmem:[%s1 + $0x3c] sm:$0xf]
  %v47 = vld [vmem:[%s1 + $0x40] sm:$0xf]
  %v48 = vld [vmem:[%s1 + $0x44] sm:$0xf]
  %v49 = vld [vmem:[%s1 + $0x48] sm:$0xf]
  %v50 = vld [vmem:[%s1 + $0x4c] sm:$0xf]
  %v51 = vld [vmem:[%s1 + $0x50] sm:$0xf]
  %v52 = vld [vmem:[%s1 + $0x54] sm:$0xf]
  %v53 = vld [vmem:[%s1 + $0x58] sm:$0xf]
  %v54 = vld [vmem:[%s1 + $0x5c] sm:$0xf]
  %v55 = vld [vmem:[%s2] sm:$0x1]
  %v57 = vlaneseq
  %v58 = vshrl.u32 %v57, 7
  %v59 = vsub.s32 0, %v58
  %v60 = vrot.slane %v55, %v59
  %v78 = vunpack.c.l.b16 %v15
  %v79 = vunpack.c.h.b16 %v15
  %v80 = vunpack.c.l.b16 %v16
  %v81 = vunpack.c.h.b16 %v16
  %v82 = vunpack.c.l.b16 %v17
  %v83 = vunpack.c.h.b16 %v17
  %v84 = vunpack.c.l.b16 %v18
  %v85 = vunpack.c.h.b16 %v18
  %v86 = vunpack.c.l.b16 %v19
  %v87 = vunpack.c.h.b16 %v19
  %v88 = vunpack.c.l.b16 %v20
  %v89 = vunpack.c.h.b16 %v20
  %v90 = vunpack.c.l.b16 %v21
  %v91 = vunpack.c.h.b16 %v21
  %v92 = vunpack.c.l.b16 %v22
  %v93 = vunpack.c.h.b16 %v22
  %v94 = vunpack.c.l.b16 %v23
  %v95 = vunpack.c.h.b16 %v23
  %v96 = vunpack.c.l.b16 %v24
  %v97 = vunpack.c.h.b16 %v24
  %v98 = vunpack.c.l.b16 %v25
  %v99 = vunpack.c.h.b16 %v25
  %v100 = vunpack.c.l.b16 %v26
  %v101 = vunpack.c.h.b16 %v26
  %v102 = vunpack.c.l.b16 %v27
  %v103 = vunpack.c.h.b16 %v27
  %v104 = vunpack.c.l.b16 %v28
  %v105 = vunpack.c.h.b16 %v28
  %v106 = vunpack.c.l.b16 %v29
  %v107 = vunpack.c.h.b16 %v29
  %v108 = vunpack.c.l.b16 %v30
  %v109 = vunpack.c.h.b16 %v30
  %v110 = vpack.c.b16 %v80, %v78
  %v111 = vpack.c.b16 %v81, %v79
  %v112 = vpack.c.b16 %v84, %v82
  %v113 = vpack.c.b16 %v85, %v83
  %v114 = vpack.c.b16 %v88, %v86
  %v115 = vpack.c.b16 %v89, %v87
  %v116 = vpack.c.b16 %v92, %v90
  %v117 = vpack.c.b16 %v93, %v91
  %v118 = vpack.c.b16 %v96, %v94
  %v119 = vpack.c.b16 %v97, %v95
  %v120 = vpack.c.b16 %v100, %v98
  %v121 = vpack.c.b16 %v101, %v99
  %v122 = vpack.c.b16 %v104, %v102
  %v123 = vpack.c.b16 %v105, %v103
  %v124 = vpack.c.b16 %v108, %v106
  %v125 = vpack.c.b16 %v109, %v107
  %v158 = vunpack.c.l.b16 %v31
  %v159 = vunpack.c.l.b16 %v32
  %v160 = vunpack.c.l.b16 %v33
  %v161 = vunpack.c.l.b16 %v34
  %v162 = vunpack.c.l.b16 %v35
  %v163 = vunpack.c.l.b16 %v36
  %v164 = vunpack.c.l.b16 %v37
  %v165 = vunpack.c.l.b16 %v38
  %v166 = vunpack.c.l.b16 %v39
  %v167 = vunpack.c.l.b16 %v40
  %v168 = vunpack.c.l.b16 %v41
  %v169 = vunpack.c.l.b16 %v42
  %v170 = vunpack.c.l.b16 %v43
  %v171 = vunpack.c.l.b16 %v44
  %v172 = vunpack.c.l.b16 %v45
  %v173 = vunpack.c.l.b16 %v46
  %v174 = vunpack.c.l.b16 %v47
  %v175 = vunpack.c.l.b16 %v48
  %v176 = vunpack.c.l.b16 %v49
  %v177 = vunpack.c.l.b16 %v50
  %v178 = vunpack.c.l.b16 %v51
  %v179 = vunpack.c.l.b16 %v52
  %v180 = vunpack.c.l.b16 %v53
  %v181 = vunpack.c.l.b16 %v54
  %v182 = vpack.c.b16 %v159, %v158
  %v183 = vpack.c.b16 %v161, %v160
  %v184 = vpack.c.b16 %v163, %v162
  %v185 = vpack.c.b16 %v165, %v164
  %v186 = vpack.c.b16 %v167, %v166
  %v187 = vpack.c.b16 %v169, %v168
  %v188 = vpack.c.b16 %v171, %v170
  %v189 = vpack.c.b16 %v173, %v172
  %v190 = vpack.c.b16 %v175, %v174
  %v191 = vpack.c.b16 %v177, %v176
  %v192 = vpack.c.b16 %v179, %v178
  %v193 = vpack.c.b16 %v181, %v180
  %vm206 = vcmask 523264
  %v208 = vsel %vm206, %v111, 0
  %v211 = vsel %vm206, %v113, 0
  %v214 = vsel %vm206, %v115, 0
  %v217 = vsel %vm206, %v117, 0
  %v220 = vsel %vm206, %v119, 0
  %v223 = vsel %vm206, %v121, 0
  %v226 = vsel %vm206, %v123, 0
  %v229 = vsel %vm206, %v125, 0
  %231 = vmatprep.subr.bf16.mxu0 0
  %232 = vmatpush1.bf16.msra.mxu0 %v182
  %233 = vmatprep.subr.bf16.mxu0 0
  %234 = vmatpush1.bf16.msra.mxu0 %v183
  %235 = vmatprep.subr.bf16.mxu0 0
  %236 = vmatpush1.bf16.msra.mxu0 %v184
  %237 = vmatprep.subr.bf16.mxu0 0
  %238 = vmatpush1.bf16.msra.mxu0 %v185
  %239 = vmatprep.subr.bf16.mxu0 0
  %240 = vmatpush1.bf16.msra.mxu0 %v186
  %241 = vmatprep.subr.bf16.mxu0 0
  %242 = vmatpush1.bf16.msra.mxu0 %v187
  %243 = vmatprep.subr.bf16.mxu0 0
  %244 = vmatpush1.bf16.msra.mxu0 %v188
  %245 = vmatprep.subr.bf16.mxu0 0
  %246 = vmatpush1.bf16.msra.mxu0 %v189
  %247 = vmatprep.subr.bf16.mxu0 0
  %248 = vmatpush1.bf16.msra.mxu0 %v190
  %249 = vmatprep.subr.bf16.mxu0 0
  %250 = vmatpush1.bf16.msra.mxu0 %v191
  %251 = vmatprep.subr.bf16.mxu0 0
  %252 = vmatpush1.bf16.msra.mxu0 %v192
  %253 = vmatprep.subr.bf16.mxu0 0
  %254 = vmatpush1.bf16.msra.mxu0 %v193
  %255 = vmatprep.subr.bf16.mxu0 0
  %256 = vmatpush1.bf16.msra.mxu0 0
  %257 = vmatprep.subr.bf16.mxu0 0
  %258 = vmatpush1.bf16.msra.mxu0 0
  %259 = vmatprep.subr.bf16.mxu0 0
  %260 = vmatpush1.bf16.msra.mxu0 0
  %261 = vmatprep.subr.bf16.mxu0 0
  %262 = vmatpush1.bf16.msra.mxu0 0
  %263 = vmatprep.mubr.bf16.mxu0 %v208
  %264 = vmatmul.mubr.bf16.gmra.mrb[0].mxu0 %v110
  %v265 = vpop.f32.mrb[0].mxu0
  %v266 = vadd.f32 %v60, %v265
  %v267 = vpop.f32.mrb[0].mxu0
  %v268 = vpop.f32.mrb[0].mxu0
  %v269 = vadd.f32 %v60, %v268
  %v270 = vpop.f32.mrb[0].mxu0
  %271 = vmatprep.mubr.bf16.mxu0 %v211
  %272 = vmatmul.mubr.bf16.gmra.mrb[0].mxu0 %v112
  %v273 = vpop.f32.mrb[0].mxu0
  %v274 = vadd.f32 %v60, %v273
  %v275 = vpop.f32.mrb[0].mxu0
  %v276 = vpop.f32.mrb[0].mxu0
  %v277 = vadd.f32 %v60, %v276
  %v278 = vpop.f32.mrb[0].mxu0
  %279 = vmatprep.mubr.bf16.mxu0 %v214
  %280 = vmatmul.mubr.bf16.gmra.mrb[0].mxu0 %v114
  %v281 = vpop.f32.mrb[0].mxu0
  %v282 = vadd.f32 %v60, %v281
  %v283 = vpop.f32.mrb[0].mxu0
  %v284 = vpop.f32.mrb[0].mxu0
  %v285 = vadd.f32 %v60, %v284
  %v286 = vpop.f32.mrb[0].mxu0
  %287 = vmatprep.mubr.bf16.mxu0 %v217
  %288 = vmatmul.mubr.bf16.gmra.mrb[0].mxu0 %v116
  %v289 = vpop.f32.mrb[0].mxu0
  %v290 = vadd.f32 %v60, %v289
  %v291 = vpop.f32.mrb[0].mxu0
  %v292 = vpop.f32.mrb[0].mxu0
  %v293 = vadd.f32 %v60, %v292
  %v294 = vpop.f32.mrb[0].mxu0
  %295 = vmatprep.mubr.bf16.mxu0 %v220
  %296 = vmatmul.mubr.bf16.gmra.mrb[0].mxu0 %v118
  %v297 = vpop.f32.mrb[0].mxu0
  %v298 = vadd.f32 %v60, %v297
  %v299 = vpop.f32.mrb[0].mxu0
  %v300 = vpop.f32.mrb[0].mxu0
  %v301 = vadd.f32 %v60, %v300
  %v302 = vpop.f32.mrb[0].mxu0
  %303 = vmatprep.mubr.bf16.mxu0 %v223
  %304 = vmatmul.mubr.bf16.gmra.mrb[0].mxu0 %v120
  %v305 = vpop.f32.mrb[0].mxu0
  %v306 = vadd.f32 %v60, %v305
  %v307 = vpop.f32.mrb[0].mxu0
  %v308 = vpop.f32.mrb[0].mxu0
  %v309 = vadd.f32 %v60, %v308
  %v310 = vpop.f32.mrb[0].mxu0
  %311 = vmatprep.mubr.bf16.mxu0 %v226
  %312 = vmatmul.mubr.bf16.gmra.mrb[0].mxu0 %v122
  %v313 = vpop.f32.mrb[0].mxu0
  %v314 = vadd.f32 %v60, %v313
  %v315 = vpop.f32.mrb[0].mxu0
  %v316 = vpop.f32.mrb[0].mxu0
  %v317 = vadd.f32 %v60, %v316
  %v318 = vpop.f32.mrb[0].mxu0
  %319 = vmatprep.mubr.bf16.mxu0 %v229
  %320 = vmatmul.mubr.bf16.gmra.mrb[0].mxu0 %v124
  %v321 = vpop.f32.mrb[0].mxu0
  %v322 = vadd.f32 %v60, %v321
  %v323 = vpop.f32.mrb[0].mxu0
  %v324 = vpop.f32.mrb[0].mxu0
  %v325 = vadd.f32 %v60, %v324
  %v326 = vpop.f32.mrb[0].mxu0
  %327 = vdwg.mxu0
  %v328 = vmul.f32 %v266, %v266
  %v329 = vmul.f32 %v269, %v269
  %v330 = vmul.f32 %v274, %v274
  %v331 = vmul.f32 %v277, %v277
  %v332 = vmul.f32 %v282, %v282
  %v333 = vmul.f32 %v285, %v285
  %v334 = vmul.f32 %v290, %v290
  %v335 = vmul.f32 %v293, %v293
  %v336 = vmul.f32 %v298, %v298
  %v337 = vmul.f32 %v301, %v301
  %v338 = vmul.f32 %v306, %v306
  %v339 = vmul.f32 %v309, %v309
  %v340 = vmul.f32 %v314, %v314
  %v341 = vmul.f32 %v317, %v317
  %v342 = vmul.f32 %v322, %v322
  %v343 = vmul.f32 %v325, %v325
  %vm344 = vcmask 261120
  %v345 = vsel %vm344, %v328, 0.0
  %346 = vadd.xlane.f32.xlu0 %v345
  %v347 = vpop.xlane.xlu0 %346
  %v348 = vsel %vm344, %v329, 0.0
  %349 = vadd.xlane.f32.xlu0 %v348
  %v350 = vpop.xlane.xlu0 %349
  %v351 = vsel %vm344, %v330, 0.0
  %352 = vadd.xlane.f32.xlu0 %v351
  %v353 = vpop.xlane.xlu0 %352
  %v354 = vsel %vm344, %v331, 0.0
  %355 = vadd.xlane.f32.xlu0 %v354
  %v356 = vpop.xlane.xlu0 %355
  %v357 = vsel %vm344, %v332, 0.0
  %358 = vadd.xlane.f32.xlu0 %v357
  %v359 = vpop.xlane.xlu0 %358
  %v360 = vsel %vm344, %v333, 0.0
  %361 = vadd.xlane.f32.xlu0 %v360
  %v362 = vpop.xlane.xlu0 %361
  %v363 = vsel %vm344, %v334, 0.0
  %364 = vadd.xlane.f32.xlu0 %v363
  %v365 = vpop.xlane.xlu0 %364
  %v366 = vsel %vm344, %v335, 0.0
  %367 = vadd.xlane.f32.xlu0 %v366
  %v368 = vpop.xlane.xlu0 %367
  %v369 = vsel %vm344, %v336, 0.0
  %370 = vadd.xlane.f32.xlu0 %v369
  %v371 = vpop.xlane.xlu0 %370
  %v372 = vsel %vm344, %v337, 0.0
  %373 = vadd.xlane.f32.xlu0 %v372
  %v374 = vpop.xlane.xlu0 %373
  %v375 = vsel %vm344, %v338, 0.0
  %376 = vadd.xlane.f32.xlu0 %v375
  %v377 = vpop.xlane.xlu0 %376
  %v378 = vsel %vm344, %v339, 0.0
  %379 = vadd.xlane.f32.xlu0 %v378
  %v380 = vpop.xlane.xlu0 %379
  %v381 = vsel %vm344, %v340, 0.0
  %382 = vadd.xlane.f32.xlu0 %v381
  %v383 = vpop.xlane.xlu0 %382
  %v384 = vsel %vm344, %v341, 0.0
  %385 = vadd.xlane.f32.xlu0 %v384
  %v386 = vpop.xlane.xlu0 %385
  %v387 = vsel %vm344, %v342, 0.0
  %388 = vadd.xlane.f32.xlu0 %v387
  %v389 = vpop.xlane.xlu0 %388
  %v390 = vsel %vm344, %v343, 0.0
  %391 = vadd.xlane.f32.xlu0 %v390
  %v392 = vpop.xlane.xlu0 %391
  %v393 = vadd.f32 %v347, 1e-12
  %v394 = vadd.f32 %v350, 1e-12
  %v395 = vadd.f32 %v353, 1e-12
  %v396 = vadd.f32 %v356, 1e-12
  %v397 = vadd.f32 %v359, 1e-12
  %v398 = vadd.f32 %v362, 1e-12
  %v399 = vadd.f32 %v365, 1e-12
  %v400 = vadd.f32 %v368, 1e-12
  %v401 = vadd.f32 %v371, 1e-12
  %v402 = vadd.f32 %v374, 1e-12
  %v403 = vadd.f32 %v377, 1e-12
  %v404 = vadd.f32 %v380, 1e-12
  %v405 = vadd.f32 %v383, 1e-12
  %v406 = vadd.f32 %v386, 1e-12
  %v407 = vadd.f32 %v389, 1e-12
  %v408 = vadd.f32 %v392, 1e-12
  %v409 = vrsqrt.pop %v393
  %v410 = vrsqrt.pop %v394
  %v411 = vrsqrt.pop %v395
  %v412 = vrsqrt.pop %v396
  %v413 = vrsqrt.pop %v397
  %v414 = vrsqrt.pop %v398
  %v415 = vrsqrt.pop %v399
  %v416 = vrsqrt.pop %v400
  %v417 = vrsqrt.pop %v401
  %v418 = vrsqrt.pop %v402
  %v419 = vrsqrt.pop %v403
  %v420 = vrsqrt.pop %v404
  %v421 = vrsqrt.pop %v405
  %v422 = vrsqrt.pop %v406
  %v423 = vrsqrt.pop %v407
  %v424 = vrsqrt.pop %v408
  %v425 = vmul.f32 %v266, %v409
  %v426 = vmul.f32 %v269, %v410
  %v427 = vmul.f32 %v274, %v411
  %v428 = vmul.f32 %v277, %v412
  %v429 = vmul.f32 %v282, %v413
  %v430 = vmul.f32 %v285, %v414
  %v431 = vmul.f32 %v290, %v415
  %v432 = vmul.f32 %v293, %v416
  %v433 = vmul.f32 %v298, %v417
  %v434 = vmul.f32 %v301, %v418
  %v435 = vmul.f32 %v306, %v419
  %v436 = vmul.f32 %v309, %v420
  %v437 = vmul.f32 %v314, %v421
  %v438 = vmul.f32 %v317, %v422
  %v439 = vmul.f32 %v322, %v423
  %v440 = vmul.f32 %v325, %v424
  %441 = vst.msk [vmem:[%s3] sm:$0xff] %vm344, %v425
  %442 = vst.msk [vmem:[%s3 + $0x8] sm:$0xff] %vm344, %v426
  %443 = vst.msk [vmem:[%s3 + $0x10] sm:$0xff] %vm344, %v427
  %444 = vst.msk [vmem:[%s3 + $0x18] sm:$0xff] %vm344, %v428
  %445 = vst.msk [vmem:[%s3 + $0x20] sm:$0xff] %vm344, %v429
  %446 = vst.msk [vmem:[%s3 + $0x28] sm:$0xff] %vm344, %v430
  %447 = vst.msk [vmem:[%s3 + $0x30] sm:$0xff] %vm344, %v431
  %448 = vst.msk [vmem:[%s3 + $0x38] sm:$0xff] %vm344, %v432
  %449 = vst.msk [vmem:[%s3 + $0x40] sm:$0xff] %vm344, %v433
  %450 = vst.msk [vmem:[%s3 + $0x48] sm:$0xff] %vm344, %v434
  %451 = vst.msk [vmem:[%s3 + $0x50] sm:$0xff] %vm344, %v435
  %452 = vst.msk [vmem:[%s3 + $0x58] sm:$0xff] %vm344, %v436
  %453 = vst.msk [vmem:[%s3 + $0x60] sm:$0xff] %vm344, %v437
  %454 = vst.msk [vmem:[%s3 + $0x68] sm:$0xff] %vm344, %v438
  %455 = vst.msk [vmem:[%s3 + $0x70] sm:$0xff] %vm344, %v439
  %456 = vst.msk [vmem:[%s3 + $0x78] sm:$0xff] %vm344, %v440
  // Predicated region
  $region14: #{vit_forward.4} parent=0 // pred_check
    _
  $region15: #{vit_forward.4} parent=0 // pred_check_branch
    %458 = sbr.rel (0) target = $region17
  $region16: #{vit_forward.4} parent=0 // pred_region
    _
  $region17: #{vit_forward.4} parent=0 // pred_fallthru
    _
  // Predicated region
  $region18: #{vit_forward.4} parent=0 // pred_check
    _
  $region19: #{vit_forward.4} parent=0 // pred_check_branch
    %460 = sbr.rel (0) target = $region21
  $region20: #{vit_forward.4} parent=0 // pred_region
    _
  $region21: #{vit_forward.4} parent=0 // pred_fallthru
    _

// kernel: vit_forward.6
$region0: #{vit_forward.6}
  #allocation0 [shape = 'u32[]', space=smem, size = 0x4, offset = 0x4, fixed_abs, tag = 'smem constant byte address 0x4 - core index']
  #allocation1 [shape = 'u32[144,128]{1,0:T(1,128)}', space=vmem, size = 0x12000, scoped, tag = 'internal scratch']
  %s0 = inlined_call_operand.vmem [shape: f32[2,2,16,32], index: 0, kind: input, shape index: {}, may-alias: {0,1}]
  %s1 = inlined_call_operand.vmem [shape: f32[2,2,16,32], index: 1, kind: input, shape index: {}, may-alias: {0,1}]
  %s2 = inlined_call_operand.vmem [shape: bf16[2,2,16,192], index: 2, kind: input, shape index: {}, may-alias: {2,3}]
  %s3 = inlined_call_operand.vmem [shape: bf16[2,2,16,192], index: 3, kind: input, shape index: {}, may-alias: {2,3}]
  %s4 = inlined_call_operand.vmem [shape: bf16[2,2,16,192], index: 4, kind: input, shape index: {}]
  %s5 = inlined_call_operand.vmem [shape: f32[2,1,16,192], index: 5, kind: output, shape index: {0}]
  %s6 = inlined_call_operand.vmem [shape: f32[2,1,128], index: 6, kind: output, shape index: {1}]
  %7 = xla_tuple %s5, %s6
  %s8 = sld [smem:[#allocation0]]
  $region65: #{vit_forward.6} parent=0
    _
  %s10 = ssub.s32 1, %s8
  %s11 = scalar_select 0, %s10, %s8
  loop: start=0, step=1, limit=4
  $region2: #{vit_forward.6} parent=0 // loop_pre_header
    _
  $region3: #{vit_forward.6} parent=0 // loop_header
    %s13 = sphi 0, %s17
    %p14 = scmp.ge.s32.totalorder %s13, 4
    %s20 = sphi 0, %s32
    %s21 = sphi 0, %s28
    %s22 = sphi 0, %s20
    %s23 = sphi 0, %s21
    %s24 = sphi 0, %s22
    %s25 = sphi 0, %s23
    %s35 = sphi 0, %s37
    %s38 = sphi 0, %s35
    %s39 = sphi 0, %s38
    %s55 = sphi 0, %s39
    %s63 = sphi 0, %s65
    %s66 = sphi 0, %s63
    %s67 = sphi 0, %s66
    %s83 = sphi 0, %s67
    %s89 = sphi 0, %s91
    %s92 = sphi 0, %s89
    %s93 = sphi 0, %s92
    %s109 = sphi 0, %s93
    %s117 = sphi 0, %s119
    %s120 = sphi 0, %s117
    %s121 = sphi 0, %s120
    %s137 = sphi 0, %s121
    %s145 = sphi 0, %s147
    %s148 = sphi 0, %s145
    %s149 = sphi 0, %s148
    %s165 = sphi 0, %s149
    %s173 = sphi 0, %s175
    %s176 = sphi 0, %s173
    %s177 = sphi 0, %s176
    %s193 = sphi 0, %s177
    %s199 = sphi 0, %s201
    %s202 = sphi 0, %s199
    %s203 = sphi 0, %s202
    %s219 = sphi 0, %s203
  $region4: #{vit_forward.6} parent=0 // loop_header_branch
    %16 = sbr.rel (%p14) target = $region8
  $region5: #{vit_forward.6} parent=0 // loop_body
    %s18 = ssub.s32 %s13, 1
    %s19 = ssub.s32 %s13, 2
    %s26 = sadd.s32 1, %s21
    %p27 = scmp.ge.s32.totalorder %s26, 1
    %s28 = scalar_select %p27, 0, %s26
    %s29 = sadd.s32 1, %s20
    %s30 = scalar_select %p27, %s29, %s20
    %p31 = scmp.ge.s32.totalorder %s30, 2
    %s32 = scalar_select %p31, 0, %s30
    %s33 = ssub.s32 %s20, %s32
    %p34 = scmp.eq.s32.totalorder %s33, 0
    %s36 = sadd.s32 %s35, 1
    %s37 = scalar_select %p34, %s35, %s36
    %p40 = pneg %p34
    %p41 = scmp.eq.s32.totalorder %s13, 1
    %p42 = por %p40, %p41
    %p43 = scmp.ne.s32.totalorder %s35, %s38
    %p44 = scmp.eq.s32.totalorder %s13, 0
    %p45 = por %p43, %p44
    %p46 = scmp.ne.s32.totalorder %s35, %s38
    %p47 = scmp.eq.s32.totalorder %s18, 1
    %p48 = por %p46, %p47
    %p49 = scmp.ne.s32.totalorder %s38, %s39
    %p50 = scmp.eq.s32.totalorder %s18, 0
    %p51 = por %p49, %p50
    %p52 = scmp.ne.s32.totalorder %s38, %s39
    %p53 = scmp.eq.s32.totalorder %s19, 1
    %p54 = por %p52, %p53
    %p56 = scmp.ne.s32.totalorder %s39, %s55
    %p57 = scmp.eq.s32.totalorder %s19, 0
    %p58 = por %p56, %p57
    %s59 = ssub.s32 1, %s20
    %s60 = ssub.s32 1, %s32
    %s61 = ssub.s32 %s59, %s60
    %p62 = scmp.eq.s32.totalorder %s61, 0
    %s64 = sadd.s32 %s63, 1
    %s65 = scalar_select %p62, %s63, %s64
    %p68 = pneg %p62
    %p69 = scmp.eq.s32.totalorder %s13, 1
    %p70 = por %p68, %p69
    %p71 = scmp.ne.s32.totalorder %s63, %s66
    %p72 = scmp.eq.s32.totalorder %s13, 0
    %p73 = por %p71, %p72
    %p74 = scmp.ne.s32.totalorder %s63, %s66
    %p75 = scmp.eq.s32.totalorder %s18, 1
    %p76 = por %p74, %p75
    %p77 = scmp.ne.s32.totalorder %s66, %s67
    %p78 = scmp.eq.s32.totalorder %s18, 0
    %p79 = por %p77, %p78
    %p80 = scmp.ne.s32.totalorder %s66, %s67
    %p81 = scmp.eq.s32.totalorder %s19, 1
    %p82 = por %p80, %p81
    %p84 = scmp.ne.s32.totalorder %s67, %s83
    %p85 = scmp.eq.s32.totalorder %s19, 0
    %p86 = por %p84, %p85
    %s87 = ssub.s32 %s20, %s32
    %p88 = scmp.eq.s32.totalorder %s87, 0
    %s90 = sadd.s32 %s89, 1
    %s91 = scalar_select %p88, %s89, %s90
    %p94 = pneg %p88
    %p95 = scmp.eq.s32.totalorder %s13, 1
    %p96 = por %p94, %p95
    %p97 = scmp.ne.s32.totalorder %s89, %s92
    %p98 = scmp.eq.s32.totalorder %s13, 0
    %p99 = por %p97, %p98
    %p100 = scmp.ne.s32.totalorder %s89, %s92
    %p101 = scmp.eq.s32.totalorder %s18, 1
    %p102 = por %p100, %p101
    %p103 = scmp.ne.s32.totalorder %s92, %s93
    %p104 = scmp.eq.s32.totalorder %s18, 0
    %p105 = por %p103, %p104
    %p106 = scmp.ne.s32.totalorder %s92, %s93
    %p107 = scmp.eq.s32.totalorder %s19, 1
    %p108 = por %p106, %p107
    %p110 = scmp.ne.s32.totalorder %s93, %s109
    %p111 = scmp.eq.s32.totalorder %s19, 0
    %p112 = por %p110, %p111
    %s113 = ssub.s32 1, %s20
    %s114 = ssub.s32 1, %s32
    %s115 = ssub.s32 %s113, %s114
    %p116 = scmp.eq.s32.totalorder %s115, 0
    %s118 = sadd.s32 %s117, 1
    %s119 = scalar_select %p116, %s117, %s118
    %p122 = pneg %p116
    %p123 = scmp.eq.s32.totalorder %s13, 1
    %p124 = por %p122, %p123
    %p125 = scmp.ne.s32.totalorder %s117, %s120
    %p126 = scmp.eq.s32.totalorder %s13, 0
    %p127 = por %p125, %p126
    %p128 = scmp.ne.s32.totalorder %s117, %s120
    %p129 = scmp.eq.s32.totalorder %s18, 1
    %p130 = por %p128, %p129
    %p131 = scmp.ne.s32.totalorder %s120, %s121
    %p132 = scmp.eq.s32.totalorder %s18, 0
    %p133 = por %p131, %p132
    %p134 = scmp.ne.s32.totalorder %s120, %s121
    %p135 = scmp.eq.s32.totalorder %s19, 1
    %p136 = por %p134, %p135
    %p138 = scmp.ne.s32.totalorder %s121, %s137
    %p139 = scmp.eq.s32.totalorder %s19, 0
    %p140 = por %p138, %p139
    %s141 = ssub.s32 %s20, %s32
    %s142 = ssub.s32 %s21, %s28
    %s143 = sor.u32 %s141, %s142
    %p144 = scmp.eq.s32.totalorder %s143, 0
    %s146 = sadd.s32 %s145, 1
    %s147 = scalar_select %p144, %s145, %s146
    %p150 = pneg %p144
    %p151 = scmp.eq.s32.totalorder %s13, 1
    %p152 = por %p150, %p151
    %p153 = scmp.ne.s32.totalorder %s145, %s148
    %p154 = scmp.eq.s32.totalorder %s13, 0
    %p155 = por %p153, %p154
    %p156 = scmp.ne.s32.totalorder %s145, %s148
    %p157 = scmp.eq.s32.totalorder %s18, 1
    %p158 = por %p156, %p157
    %p159 = scmp.ne.s32.totalorder %s148, %s149
    %p160 = scmp.eq.s32.totalorder %s18, 0
    %p161 = por %p159, %p160
    %p162 = scmp.ne.s32.totalorder %s148, %s149
    %p163 = scmp.eq.s32.totalorder %s19, 1
    %p164 = por %p162, %p163
    %p166 = scmp.ne.s32.totalorder %s149, %s165
    %p167 = scmp.eq.s32.totalorder %s19, 0
    %p168 = por %p166, %p167
    %s169 = ssub.s32 %s20, %s32
    %s170 = ssub.s32 %s21, %s28
    %s171 = sor.u32 %s169, %s170
    %p172 = scmp.eq.s32.totalorder %s171, 0
    %s174 = sadd.s32 %s173, 1
    %s175 = scalar_select %p172, %s173, %s174
    %p178 = pneg %p172
    %p179 = scmp.eq.s32.totalorder %s13, 1
    %p180 = por %p178, %p179
    %p181 = scmp.ne.s32.totalorder %s173, %s176
    %p182 = scmp.eq.s32.totalorder %s13, 0
    %p183 = por %p181, %p182
    %p184 = scmp.ne.s32.totalorder %s173, %s176
    %p185 = scmp.eq.s32.totalorder %s18, 1
    %p186 = por %p184, %p185
    %p187 = scmp.ne.s32.totalorder %s176, %s177
    %p188 = scmp.eq.s32.totalorder %s18, 0
    %p189 = por %p187, %p188
    %p190 = scmp.ne.s32.totalorder %s176, %s177
    %p191 = scmp.eq.s32.totalorder %s19, 1
    %p192 = por %p190, %p191
    %p194 = scmp.ne.s32.totalorder %s177, %s193
    %p195 = scmp.eq.s32.totalorder %s19, 0
    %p196 = por %p194, %p195
    %s197 = ssub.s32 %s20, %s32
    %p198 = scmp.eq.s32.totalorder %s197, 0
    %s200 = sadd.s32 %s199, 1
    %s201 = scalar_select %p198, %s199, %s200
    %p204 = pneg %p198
    %p205 = scmp.eq.s32.totalorder %s13, 1
    %p206 = por %p204, %p205
    %p207 = scmp.ne.s32.totalorder %s199, %s202
    %p208 = scmp.eq.s32.totalorder %s13, 0
    %p209 = por %p207, %p208
    %p210 = scmp.ne.s32.totalorder %s199, %s202
    %p211 = scmp.eq.s32.totalorder %s18, 1
    %p212 = por %p210, %p211
    %p213 = scmp.ne.s32.totalorder %s202, %s203
    %p214 = scmp.eq.s32.totalorder %s18, 0
    %p215 = por %p213, %p214
    %p216 = scmp.ne.s32.totalorder %s202, %s203
    %p217 = scmp.eq.s32.totalorder %s19, 1
    %p218 = por %p216, %p217
    %p220 = scmp.ne.s32.totalorder %s203, %s219
    %p221 = scmp.eq.s32.totalorder %s19, 0
    %p222 = por %p220, %p221
    %p223 = scmp.le.s32.totalorder 1, %s13
    %p224 = scmp.lt.s32.totalorder %s13, 3
    %p225 = pnand %p223, %p224
    %p226 = pneg %p225
    // Predicated region
    $region9: #{vit_forward.6} parent=5 // pred_check
      _
    $region10: #{vit_forward.6} parent=5 // pred_check_branch
      %228 = sbr.rel (%p225) target = $region12
    $region11: #{vit_forward.6} parent=5 // pred_region
      %s229 = ssub.s32 %s13, 1
    $region12: #{vit_forward.6} parent=5 // pred_fallthru
      _
    %p230 = scmp.lt.s32.totalorder %s13, 2
    // Predicated region
    $region13: #{vit_forward.6} parent=5 // pred_check
      %p231 = pneg %p230
    $region14: #{vit_forward.6} parent=5 // pred_check_branch
      %233 = sbr.rel (%p231) target = $region16
    $region15: #{vit_forward.6} parent=5 // pred_region
      // Predicated region
      $region17: #{vit_forward.6} parent=15 // pred_check
        %p234 = pneg %p45
      $region18: #{vit_forward.6} parent=15 // pred_check_branch
        %236 = sbr.rel (%p234) target = $region20
      $region19: #{vit_forward.6} parent=15 // pred_region
        %p237 = scmp.lt.s32.totalorder %s20, 1
        %s238 = scalar_select %p237, %s20, 1
        %s239 = smul.addr %s238, 4
        %s240 = smul.addr %s239, 8
        %s241 = scalar_lea.vmem %s0, %s240
      $region20: #{vit_forward.6} parent=15 // pred_fallthru
        _
      // Predicated region
      $region21: #{vit_forward.6} parent=15 // pred_check
        %p242 = pneg %p73
      $region22: #{vit_forward.6} parent=15 // pred_check_branch
        %244 = sbr.rel (%p242) target = $region24
      $region23: #{vit_forward.6} parent=15 // pred_region
        %s245 = ssub.s32 1, %s20
        %p246 = scmp.lt.s32.totalorder %s245, 1
        %s247 = scalar_select %p246, %s245, 1
        %s248 = smul.addr %s247, 4
        %s249 = smul.addr %s248, 8
        %s250 = scalar_lea.vmem %s1, %s249
        %s251 = ssub.s32 1, %s20
      $region24: #{vit_forward.6} parent=15 // pred_fallthru
        _
      // Predicated region
      $region25: #{vit_forward.6} parent=15 // pred_check
        %p252 = pneg %p99
      $region26: #{vit_forward.6} parent=15 // pred_check_branch
        %254 = sbr.rel (%p252) target = $region28
      $region27: #{vit_forward.6} parent=15 // pred_region
        %p255 = scmp.lt.s32.totalorder %s20, 1
        %s256 = scalar_select %p255, %s20, 1
        %s257 = smul.addr %s256, 8
        %s258 = smul.addr %s257, 4
        %s259 = scalar_lea.vmem %s2, %s258
      $region28: #{vit_forward.6} parent=15 // pred_fallthru
        _
      // Predicated region
      $region29: #{vit_forward.6} parent=15 // pred_check
        %p260 = pneg %p127
      $region30: #{vit_forward.6} parent=15 // pred_check_branch
        %262 = sbr.rel (%p260) target = $region32
      $region31: #{vit_forward.6} parent=15 // pred_region
        %s263 = ssub.s32 1, %s20
        %p264 = scmp.lt.s32.totalorder %s263, 1
        %s265 = scalar_select %p264, %s263, 1
        %s266 = smul.addr %s265, 8
        %s267 = smul.addr %s266, 4
        %s268 = scalar_lea.vmem %s3, %s267
        %s269 = ssub.s32 1, %s20
      $region32: #{vit_forward.6} parent=15 // pred_fallthru
        _
      // Predicated region
      $region33: #{vit_forward.6} parent=15 // pred_check
        %p270 = pneg %p155
      $region34: #{vit_forward.6} parent=15 // pred_check_branch
        %272 = sbr.rel (%p270) target = $region36
      $region35: #{vit_forward.6} parent=15 // pred_region
        %s273 = smul.u32 2, %s21
        %p274 = scmp.lt.s32.totalorder %s20, 1
        %s275 = scalar_select %p274, %s20, 1
        %p276 = scmp.lt.s32.totalorder %s273, 1
        %s277 = scalar_select %p276, %s273, 1
        %s278 = smul.addr %s277, 2
        %s279 = smul.addr %s275, 8
        %s280 = sadd.s32 %s278, %s279
        %s281 = smul.addr %s280, 4
        %s282 = scalar_lea.vmem %s4, %s281
        %s283 = smul.u32 2, %s21
      $region36: #{vit_forward.6} parent=15 // pred_fallthru
        _
    $region16: #{vit_forward.6} parent=5 // pred_fallthru
      _
    %p284 = scmp.le.s32.totalorder 1, %s13
    %p285 = scmp.lt.s32.totalorder %s13, 3
    %p286 = pnand %p284, %p285
    %p287 = pneg %p286
    // Predicated region
    $region37: #{vit_forward.6} parent=5 // pred_check
      _
    $region38: #{vit_forward.6} parent=5 // pred_check_branch
      %289 = sbr.rel (%p286) target = $region40
    $region39: #{vit_forward.6} parent=5 // pred_region
      %s290 = ssub.s32 %s13, 1
      %p291 = scmp.lt.s32.totalorder %s22, 1
      %s292 = scalar_select %p291, %s22, 1
      %s293 = smul.addr %s292, 4
      %s294 = smul.addr %s293, 8
      %s295 = scalar_lea.vmem %s0, %s294
      %p296 = pneg %p51
      %p297 = pneg %p48
      %s298 = ssub.s32 1, %s22
      %p299 = scmp.lt.s32.totalorder %s298, 1
      %s300 = scalar_select %p299, %s298, 1
      %s301 = smul.addr %s300, 4
      %s302 = smul.addr %s301, 8
      %s303 = scalar_lea.vmem %s1, %s302
      %p304 = pneg %p79
      %p305 = pneg %p76
      %p306 = scmp.lt.s32.totalorder %s22, 1
      %s307 = scalar_select %p306, %s22, 1
      %s308 = smul.addr %s307, 8
      %s309 = smul.addr %s308, 4
      %s310 = scalar_lea.vmem %s2, %s309
      %p311 = pneg %p105
      %p312 = pneg %p102
      %s313 = ssub.s32 1, %s22
      %p314 = scmp.lt.s32.totalorder %s313, 1
      %s315 = scalar_select %p314, %s313, 1
      %s316 = smul.addr %s315, 8
      %s317 = smul.addr %s316, 4
      %s318 = scalar_lea.vmem %s3, %s317
      %p319 = pneg %p133
      %p320 = pneg %p130
      %s321 = smul.u32 2, %s23
      %p322 = scmp.lt.s32.totalorder %s22, 1
      %s323 = scalar_select %p322, %s22, 1
      %p324 = scmp.lt.s32.totalorder %s321, 1
      %s325 = scalar_select %p324, %s321, 1
      %s326 = smul.addr %s325, 2
      %s327 = smul.addr %s323, 8
      %s328 = sadd.s32 %s326, %s327
      %s329 = smul.addr %s328, 4
      %s330 = scalar_lea.vmem %s4, %s329
      %p331 = pneg %p161
      %p332 = pneg %p158
      %p333 = pneg %p189
      %p334 = pneg %p186
      %s335 = smul.u32 2, %s23
      %p336 = scmp.lt.s32.totalorder %s22, 1
      %s337 = scalar_select %p336, %s22, 1
      %p338 = scmp.lt.s32.totalorder %s335, 1
      %s339 = scalar_select %p338, %s335, 1
      %s340 = smul.addr %s339, 2
      %s341 = smul.addr %s337, 4
      %s342 = sadd.s32 %s340, %s341
      %s343 = smul.addr %s342, 8
      %s344 = scalar_lea.vmem %s5, %s343
      %p345 = pneg %p215
      %p346 = pneg %p212
      %p347 = scmp.lt.s32.totalorder %s22, 1
      %s348 = scalar_select %p347, %s22, 1
      %s349 = scalar_lea.vmem %s6, %s348
      %p350 = scmp.lt.s32.totalorder %s22, 1
      %s351 = scalar_select %p350, %s22, 1
      %s352 = smul.addr %s351, 4
      %s353 = smul.addr %s352, 8
      %s354 = scalar_lea.vmem %s0, %s353
      %s355 = ssub.s32 1, %s22
      %p356 = scmp.lt.s32.totalorder %s355, 1
      %s357 = scalar_select %p356, %s355, 1
      %s358 = smul.addr %s357, 4
      %s359 = smul.addr %s358, 8
      %s360 = scalar_lea.vmem %s1, %s359
      %s361 = ssub.s32 1, %s22
      %p362 = scmp.lt.s32.totalorder %s22, 1
      %s363 = scalar_select %p362, %s22, 1
      %s364 = smul.addr %s363, 8
      %s365 = smul.addr %s364, 4
      %s366 = scalar_lea.vmem %s2, %s365
      %s367 = ssub.s32 1, %s22
      %p368 = scmp.lt.s32.totalorder %s367, 1
      %s369 = scalar_select %p368, %s367, 1
      %s370 = smul.addr %s369, 8
      %s371 = smul.addr %s370, 4
      %s372 = scalar_lea.vmem %s3, %s371
      %s373 = ssub.s32 1, %s22
      %s374 = smul.u32 2, %s23
      %p375 = scmp.lt.s32.totalorder %s22, 1
      %s376 = scalar_select %p375, %s22, 1
      %p377 = scmp.lt.s32.totalorder %s374, 1
      %s378 = scalar_select %p377, %s374, 1
      %s379 = smul.addr %s378, 2
      %s380 = smul.addr %s376, 8
      %s381 = sadd.s32 %s379, %s380
      %s382 = smul.addr %s381, 4
      %s383 = scalar_lea.vmem %s4, %s382
      %s384 = smul.u32 2, %s23
      %s385 = smul.u32 2, %s23
      %p386 = scmp.lt.s32.totalorder %s22, 1
      %s387 = scalar_select %p386, %s22, 1
      %p388 = scmp.lt.s32.totalorder %s385, 1
      %s389 = scalar_select %p388, %s385, 1
      %s390 = smul.addr %s389, 2
      %s391 = smul.addr %s387, 4
      %s392 = sadd.s32 %s390, %s391
      %s393 = smul.addr %s392, 8
      %s394 = scalar_lea.vmem %s5, %s393
      %s395 = smul.u32 2, %s23
      %p396 = scmp.lt.s32.totalorder %s22, 1
      %s397 = scalar_select %p396, %s22, 1
      %s398 = scalar_lea.vmem %s6, %s397
      %s400 = smul.u32 %s23, 16
      %v401 = vlaneseq
      %v402 = vand.u32 %v401, 127
      %p403 = scmp.eq.s32.totalorder %s23, 0
      // Predicated region
      $region41: #{vit_forward.6} parent=39 // pred_check
        %p404 = pneg %p403
      $region42: #{vit_forward.6} parent=39 // pred_check_branch
        %406 = sbr.rel (%p404) target = $region44
      $region43: #{vit_forward.6} parent=39 // pred_region
        %407 = vst [vmem:[%s398] sm:$0x1] 0.0
      $region44: #{vit_forward.6} parent=39 // pred_fallthru
        _
      %v408 = vld [vmem:[%s354] sm:$0xff]
      %v409 = vld [vmem:[%s354 + $0x8] sm:$0xff]
      %v410 = vpack.c.bf16 %v409, %v408
      %v411 = vld [vmem:[%s360] sm:$0xff]
      %v412 = vld [vmem:[%s360 + $0x8] sm:$0xff]
      %v413 = vpack.c.bf16 %v412, %v411
      %v414 = vld [vmem:[%s366] sm:$0xff]
      %v415 = vld [vmem:[%s366 + $0x8] sm:$0xff]
      %v416 = vld [vmem:[%s372] sm:$0xff]
      %v417 = vld [vmem:[%s372 + $0x8] sm:$0xff]
      %s418 = sadd.s32 %s400, 16
      %s419 = scalar_lea.vmem %s354, %s418
      %v420 = vld [vmem:[%s419] sm:$0xff]
      %v421 = vld [vmem:[%s419 + $0x8] sm:$0xff]
      %v422 = vmul.f32 %v420, 25.0
      %v423 = vmul.f32 %v421, 25.0
      %v424 = vpack.c.bf16 %v423, %v422
      %vm425 = vcmask 261120
      %v427 = vsel %vm425, %v424, 0
      %v430 = vsel %vm425, %v410, 0
      %432 = vmatprep.subr.bf16.mxu0 0
      %433 = vmatpush1.bf16.xpose.msra.mxu0 %v430
      %434 = vmatprep.subr.bf16.mxu0 0
      %435 = vmatpush1.bf16.xpose.msra.mxu0 0
      %436 = vmatprep.subr.bf16.mxu0 0
      %437 = vmatpush1.bf16.xpose.msra.mxu0 0
      %438 = vmatprep.subr.bf16.mxu0 0
      %439 = vmatpush1.bf16.xpose.msra.mxu0 0
      %440 = vmatprep.subr.bf16.mxu0 0
      %441 = vmatpush1.bf16.xpose.msra.mxu0 0
      %442 = vmatprep.subr.bf16.mxu0 0
      %443 = vmatpush1.bf16.xpose.msra.mxu0 0
      %444 = vmatprep.subr.bf16.mxu0 0
      %445 = vmatpush1.bf16.xpose.msra.mxu0 0
      %446 = vmatprep.subr.bf16.mxu0 0
      %447 = vmatpush1.bf16.xpose.msra.mxu0 0
      %448 = vmatprep.subr.bf16.mxu0 0
      %449 = vmatpush1.bf16.xpose.msra.mxu0 0
      %450 = vmatprep.subr.bf16.mxu0 0
      %451 = vmatpush1.bf16.xpose.msra.mxu0 0
      %452 = vmatprep.subr.bf16.mxu0 0
      %453 = vmatpush1.bf16.xpose.msra.mxu0 0
      %454 = vmatprep.subr.bf16.mxu0 0
      %455 = vmatpush1.bf16.xpose.msra.mxu0 0
      %456 = vmatprep.subr.bf16.mxu0 0
      %457 = vmatpush1.bf16.xpose.msra.mxu0 0
      %458 = vmatprep.subr.bf16.mxu0 0
      %459 = vmatpush1.bf16.xpose.msra.mxu0 0
      %460 = vmatprep.subr.bf16.mxu0 0
      %461 = vmatpush1.bf16.xpose.msra.mxu0 0
      %462 = vmatprep.subr.bf16.mxu0 0
      %463 = vmatpush1.bf16.xpose.msra.mxu0 0
      %464 = vmatprep.mubr.bf16.mxu0 0
      %465 = vmatmul.mubr.bf16.gmra.mrb[0].mxu0 %v427
      %v466 = vpop.f32.mrb[0].mxu0
      %v467 = vadd.f32 0.0, %v466
      %v468 = vpop.f32.mrb[0].mxu0
      %v469 = vpop.f32.mrb[0].mxu0
      %v470 = vadd.f32 0.0, %v469
      %v471 = vpop.f32.mrb[0].mxu0
      %472 = vdwg.mxu0
      %v474 = vsel %vm425, %v413, 0
      %476 = vmatprep.subr.bf16.mxu0 0
      %477 = vmatpush1.bf16.xpose.msra.mxu0 %v474
      %478 = vmatprep.subr.bf16.mxu0 0
      %479 = vmatpush1.bf16.xpose.msra.mxu0 0
      %480 = vmatprep.subr.bf16.mxu0 0
      %481 = vmatpush1.bf16.xpose.msra.mxu0 0
      %482 = vmatprep.subr.bf16.mxu0 0
      %483 = vmatpush1.bf16.xpose.msra.mxu0 0
      %484 = vmatprep.subr.bf16.mxu0 0
      %485 = vmatpush1.bf16.xpose.msra.mxu0 0
      %486 = vmatprep.subr.bf16.mxu0 0
      %487 = vmatpush1.bf16.xpose.msra.mxu0 0
      %488 = vmatprep.subr.bf16.mxu0 0
      %489 = vmatpush1.bf16.xpose.msra.mxu0 0
      %490 = vmatprep.subr.bf16.mxu0 0
      %491 = vmatpush1.bf16.xpose.msra.mxu0 0
      %492 = vmatprep.subr.bf16.mxu0 0
      %493 = vmatpush1.bf16.xpose.msra.mxu0 0
      %494 = vmatprep.subr.bf16.mxu0 0
      %495 = vmatpush1.bf16.xpose.msra.mxu0 0
      %496 = vmatprep.subr.bf16.mxu0 0
      %497 = vmatpush1.bf16.xpose.msra.mxu0 0
      %498 = vmatprep.subr.bf16.mxu0 0
      %499 = vmatpush1.bf16.xpose.msra.mxu0 0
      %500 = vmatprep.subr.bf16.mxu0 0
      %501 = vmatpush1.bf16.xpose.msra.mxu0 0
      %502 = vmatprep.subr.bf16.mxu0 0
      %503 = vmatpush1.bf16.xpose.msra.mxu0 0
      %504 = vmatprep.subr.bf16.mxu0 0
      %505 = vmatpush1.bf16.xpose.msra.mxu0 0
      %506 = vmatprep.subr.bf16.mxu0 0
      %507 = vmatpush1.bf16.xpose.msra.mxu0 0
      %508 = vmatprep.mubr.bf16.mxu0 0
      %509 = vmatmul.mubr.bf16.gmra.mrb[0].mxu0 %v427
      %v510 = vpop.f32.mrb[0].mxu0
      %v511 = vadd.f32 0.0, %v510
      %v512 = vpop.f32.mrb[0].mxu0
      %v513 = vpop.f32.mrb[0].mxu0
      %v514 = vadd.f32 0.0, %v513
      %v515 = vpop.f32.mrb[0].mxu0
      %516 = vdwg.mxu0
      %vm517 = vcmask 130048
      %v518 = vsel %vm517, %v467, -inf
      %519 = vmax.xlane.f32.xlu0 %v518
      %v520 = vpop.xlane.xlu0 %519
      %v521 = vsel %vm517, %v470, -inf
      %522 = vmax.xlane.f32.xlu0 %v521
      %v523 = vpop.xlane.xlu0 %522
      %v524 = vsel %vm517, %v511, -inf
      %525 = vmax.xlane.f32.xlu0 %v524
      %v526 = vpop.xlane.xlu0 %525
      %v527 = vsel %vm517, %v514, -inf
      %528 = vmax.xlane.f32.xlu0 %v527
      %v529 = vpop.xlane.xlu0 %528
      %v530 = vmax.f32 %v520, %v526
      %v531 = vmax.f32 %v523, %v529
      %v532 = vsub.f32 %v467, %v530
      %v533 = vsub.f32 %v470, %v531
      %v534 = vmul.f32 %v532, 1.442695
      %v535 = vpow.pop %v534
      %v536 = vmul.f32 %v533, 1.442695
      %v537 = vpow.pop %v536
      %v538 = vsub.f32 %v511, %v530
      %v539 = vsub.f32 %v514, %v531
      %v540 = vmul.f32 %v538, 1.442695
      %v541 = vpow.pop %v540
      %v542 = vmul.f32 %v539, 1.442695
      %v543 = vpow.pop %v542
      %v544 = vsel %vm517, %v535, 0.0
      %545 = vadd.xlane.f32.xlu0 %v544
      %v546 = vpop.xlane.xlu0 %545
      %v547 = vsel %vm517, %v537, 0.0
      %548 = vadd.xlane.f32.xlu0 %v547
      %v549 = vpop.xlane.xlu0 %548
      %v550 = vsel %vm517, %v541, 0.0
      %551 = vadd.xlane.f32.xlu0 %v550
      %v552 = vpop.xlane.xlu0 %551
      %v553 = vsel %vm517, %v543, 0.0
      %554 = vadd.xlane.f32.xlu0 %v553
      %v555 = vpop.xlane.xlu0 %554
      %v556 = vadd.f32 %v546, %v552
      %v557 = vadd.f32 %v549, %v555
      %v558 = vpack.c.bf16 %v537, %v535
      %v559 = vpack.c.bf16 %v543, %v541
      %v562 = vunpack.c.l.b16 %v416
      %v563 = vunpack.c.h.b16 %v416
      %v564 = vunpack.c.l.b16 %v417
      %v565 = vunpack.c.h.b16 %v417
      %v566 = vpack.c.b16 %v564, %v562
      %v567 = vpack.c.b16 %v565, %v563
      %v571 = vsel %vm517, %v559, 0
      %573 = vmatprep.subr.bf16.mxu0 %v567
      %574 = vmatpush1.bf16.msra.mxu0 %v566
      %575 = vmatprep.subr.bf16.mxu0 0
      %576 = vmatpush1.bf16.msra.mxu0 0
      %577 = vmatprep.subr.bf16.mxu0 0
      %578 = vmatpush1.bf16.msra.mxu0 0
      %579 = vmatprep.subr.bf16.mxu0 0
      %580 = vmatpush1.bf16.msra.mxu0 0
      %581 = vmatprep.subr.bf16.mxu0 0
      %582 = vmatpush1.bf16.msra.mxu0 0
      %583 = vmatprep.subr.bf16.mxu0 0
      %584 = vmatpush1.bf16.msra.mxu0 0
      %585 = vmatprep.subr.bf16.mxu0 0
      %586 = vmatpush1.bf16.msra.mxu0 0
      %587 = vmatprep.subr.bf16.mxu0 0
      %588 = vmatpush1.bf16.msra.mxu0 0
      %589 = vmatprep.subr.bf16.mxu0 0
      %590 = vmatpush1.bf16.msra.mxu0 0
      %591 = vmatprep.subr.bf16.mxu0 0
      %592 = vmatpush1.bf16.msra.mxu0 0
      %593 = vmatprep.subr.bf16.mxu0 0
      %594 = vmatpush1.bf16.msra.mxu0 0
      %595 = vmatprep.subr.bf16.mxu0 0
      %596 = vmatpush1.bf16.msra.mxu0 0
      %597 = vmatprep.subr.bf16.mxu0 0
      %598 = vmatpush1.bf16.msra.mxu0 0
      %599 = vmatprep.subr.bf16.mxu0 0
      %600 = vmatpush1.bf16.msra.mxu0 0
      %601 = vmatprep.subr.bf16.mxu0 0
      %602 = vmatpush1.bf16.msra.mxu0 0
      %603 = vmatprep.subr.bf16.mxu0 0
      %604 = vmatpush1.bf16.msra.mxu0 0
      %605 = vmatprep.mubr.bf16.mxu0 0
      %606 = vmatmul.mubr.bf16.gmra.mrb[0].mxu0 %v571
      %v607 = vpop.f32.mrb[0].mxu0
      %v608 = vadd.f32 0.0, %v607
      %v609 = vpop.f32.mrb[0].mxu0
      %v610 = vadd.f32 0.0, %v609
      %v611 = vpop.f32.mrb[0].mxu0
      %v612 = vadd.f32 0.0, %v611
      %v613 = vpop.f32.mrb[0].mxu0
      %v614 = vadd.f32 0.0, %v613
      %615 = vdwg.mxu0
      %v618 = vunpack.c.l.b16 %v414
      %v619 = vunpack.c.h.b16 %v414
      %v620 = vunpack.c.l.b16 %v415
      %v621 = vunpack.c.h.b16 %v415
      %v622 = vpack.c.b16 %v620, %v618
      %v623 = vpack.c.b16 %v621, %v619
      %v627 = vsel %vm517, %v558, 0
      %629 = vmatprep.subr.bf16.mxu0 %v623
      %630 = vmatpush1.bf16.msra.mxu0 %v622
      %631 = vmatprep.subr.bf16.mxu0 0
      %632 = vmatpush1.bf16.msra.mxu0 0
      %633 = vmatprep.subr.bf16.mxu0 0
      %634 = vmatpush1.bf16.msra.mxu0 0
      %635 = vmatprep.subr.bf16.mxu0 0
      %636 = vmatpush1.bf16.msra.mxu0 0
      %637 = vmatprep.subr.bf16.mxu0 0
      %638 = vmatpush1.bf16.msra.mxu0 0
      %639 = vmatprep.subr.bf16.mxu0 0
      %640 = vmatpush1.bf16.msra.mxu0 0
      %641 = vmatprep.subr.bf16.mxu0 0
      %642 = vmatpush1.bf16.msra.mxu0 0
      %643 = vmatprep.subr.bf16.mxu0 0
      %644 = vmatpush1.bf16.msra.mxu0 0
      %645 = vmatprep.subr.bf16.mxu0 0
      %646 = vmatpush1.bf16.msra.mxu0 0
      %647 = vmatprep.subr.bf16.mxu0 0
      %648 = vmatpush1.bf16.msra.mxu0 0
      %649 = vmatprep.subr.bf16.mxu0 0
      %650 = vmatpush1.bf16.msra.mxu0 0
      %651 = vmatprep.subr.bf16.mxu0 0
      %652 = vmatpush1.bf16.msra.mxu0 0
      %653 = vmatprep.subr.bf16.mxu0 0
      %654 = vmatpush1.bf16.msra.mxu0 0
      %655 = vmatprep.subr.bf16.mxu0 0
      %656 = vmatpush1.bf16.msra.mxu0 0
      %657 = vmatprep.subr.bf16.mxu0 0
      %658 = vmatpush1.bf16.msra.mxu0 0
      %659 = vmatprep.subr.bf16.mxu0 0
      %660 = vmatpush1.bf16.msra.mxu0 0
      %661 = vmatprep.mubr.bf16.mxu0 0
      %662 = vmatmul.mubr.bf16.gmra.mrb[0].mxu0 %v627
      %v663 = vpop.f32.mrb[0].mxu0
      %v664 = vadd.f32 %v608, %v663
      %v665 = vpop.f32.mrb[0].mxu0
      %v666 = vadd.f32 %v610, %v665
      %v667 = vpop.f32.mrb[0].mxu0
      %v668 = vadd.f32 %v612, %v667
      %v669 = vpop.f32.mrb[0].mxu0
      %v670 = vadd.f32 %v614, %v669
      %671 = vdwg.mxu0
      %v672 = vrcp.pop %v556
      %v673 = vrcp.pop %v557
      %v674 = vmul.f32 %v664, %v672
      %v675 = vmul.f32 %v666, %v672
      %v676 = vmul.f32 %v668, %v673
      %v677 = vmul.f32 %v670, %v673
      %s678 = sshra.s32 %s400, 3
      %s679 = sand.u32 %s400, 7
      %s680 = smul.u32 %s678, 2
      %s681 = sadd.s32 %s680, 4
      %s682 = smul.addr %s681, 4
      %s683 = scalar_lea.vmem %s366, %s682
      %v684 = vld [vmem:[%s683] sm:$0xff]
      %v685 = vld [vmem:[%s683 + $0x8] sm:$0xff]
      %v686 = vunpack.c.l.bf16 %v684
      %v687 = vunpack.c.h.bf16 %v684
      %v688 = vunpack.c.l.bf16 %v685
      %v689 = vunpack.c.h.bf16 %v685
      %s690 = scalar_lea.vmem %s383, 16
      %v691 = vld [vmem:[%s690] sm:$0xff]
      %v692 = vld [vmem:[%s690 + $0x8] sm:$0xff]
      %v693 = vunpack.c.l.bf16 %v691
      %v694 = vunpack.c.h.bf16 %v691
      %v695 = vunpack.c.l.bf16 %v692
      %v696 = vunpack.c.h.bf16 %v692
      %v697 = vsub.f32 %v674, %v686
      %v698 = vsub.f32 %v675, %v687
      %v699 = vsub.f32 %v676, %v688
      %v700 = vsub.f32 %v677, %v689
      %v701 = vmul.f32 %v697, %v693
      %v702 = vmul.f32 %v698, %v694
      %v703 = vmul.f32 %v699, %v695
      %v704 = vmul.f32 %v700, %v696
      %v705 = vand.u32 2147483647, %v701
      %v706 = vand.u32 2147483647, %v702
      %v707 = vand.u32 2147483647, %v703
      %v708 = vand.u32 2147483647, %v704
      %vm709 = vcmp.lt.f32.partialorder %v705, 0.5
      %vm710 = vcmp.lt.f32.partialorder %v706, 0.5
      %vm711 = vcmp.lt.f32.partialorder %v707, 0.5
      %vm712 = vcmp.lt.f32.partialorder %v708, 0.5
      %v713 = vmul.f32 %v701, %v701
      %v714 = vmul.f32 %v702, %v702
      %v715 = vmul.f32 %v703, %v703
      %v716 = vmul.f32 %v704, %v704
      %v717 = vsub.f32 %v705, 0.25
      %v718 = vsub.f32 %v706, 0.25
      %v719 = vsub.f32 %v707, 0.25
      %v720 = vsub.f32 %v708, 0.25
      %v721 = vsel %vm709, %v713, %v717
      %v722 = vsel %vm710, %v714, %v718
      %v723 = vsel %vm711, %v715, %v719
      %v724 = vsel %vm712, %v716, %v720
      %v726 = vsel %vm517, 1.0, 0
      %728 = vmatprep.subr.mxu0 %v722
      %729 = vmatpush1.msra.mxu0 %v721
      %730 = vmatprep.subr.mxu0 %v724
      %731 = vmatpush1.msra.mxu0 %v723
      %732 = vmatprep.subr.mxu0 0.0
      %733 = vmatpush1.msra.mxu0 0.0
      %734 = vmatprep.subr.mxu0 0.0
      %735 = vmatpush1.msra.mxu0 0.0
      %736 = vmatprep.subr.mxu0 0.0
      %737 = vmatpush1.msra.mxu0 0.0
      %738 = vmatprep.subr.mxu0 0.0
      %739 = vmatpush1.msra.mxu0 0.0
      %740 = vmatprep.subr.mxu0 0.0
      %741 = vmatpush1.msra.mxu0 0.0
      %742 = vmatprep.subr.mxu0 0.0
      %743 = vmatpush1.msra.mxu0 0.0
      %744 = vmatprep.subr.mxu0 0.0
      %745 = vmatpush1.msra.mxu0 0.0
      %746 = vmatprep.subr.mxu0 0.0
      %747 = vmatpush1.msra.mxu0 0.0
      %748 = vmatprep.subr.mxu0 0.0
      %749 = vmatpush1.msra.mxu0 0.0
      %750 = vmatprep.subr.mxu0 0.0
      %751 = vmatpush1.msra.mxu0 0.0
      %752 = vmatprep.subr.mxu0 0.0
      %753 = vmatpush1.msra.mxu0 0.0
      %754 = vmatprep.subr.mxu0 0.0
      %755 = vmatpush1.msra.mxu0 0.0
      %756 = vmatprep.subr.mxu0 0.0
      %757 = vmatpush1.msra.mxu0 0.0
      %758 = vmatprep.subr.mxu0 0.0
      %759 = vmatpush1.msra.mxu0 0.0
      %760 = vmatprep.subr.mxu0 0.0
      %761 = vmatpush1.msra.mxu0 0.0
      %762 = vmatprep.subr.mxu0 0.0
      %763 = vmatpush1.msra.mxu0 0.0
      %764 = vmatprep.subr.mxu0 0.0
      %765 = vmatpush1.msra.mxu0 0.0
      %766 = vmatprep.subr.mxu0 0.0
      %767 = vmatpush1.msra.mxu0 0.0
      %768 = vmatprep.subr.mxu0 0.0
      %769 = vmatpush1.msra.mxu0 0.0
      %770 = vmatprep.subr.mxu0 0.0
      %771 = vmatpush1.msra.mxu0 0.0
      %772 = vmatprep.subr.mxu0 0.0
      %773 = vmatpush1.msra.mxu0 0.0
      %774 = vmatprep.subr.mxu0 0.0
      %775 = vmatpush1.msra.mxu0 0.0
      %776 = vmatprep.subr.mxu0 0.0
      %777 = vmatpush1.msra.mxu0 0.0
      %778 = vmatprep.subr.mxu0 0.0
      %779 = vmatpush1.msra.mxu0 0.0
      %780 = vmatprep.subr.mxu0 0.0
      %781 = vmatpush1.msra.mxu0 0.0
      %782 = vmatprep.subr.mxu0 0.0
      %783 = vmatpush1.msra.mxu0 0.0
      %784 = vmatprep.subr.mxu0 0.0
      %785 = vmatpush1.msra.mxu0 0.0
      %786 = vmatprep.subr.mxu0 0.0
      %787 = vmatpush1.msra.mxu0 0.0
      %788 = vmatprep.subr.mxu0 0.0
      %789 = vmatpush1.msra.mxu0 0.0
      %790 = vmatprep.subr.mxu0 0.0
      %791 = vmatpush1.msra.mxu0 0.0
      %792 = vmatprep.mubr.f32.mxu0 0.0
      %793 = vmatmul.mubr.f32.gmra.mrb[0].mxu0 %v726
      %v794 = vpop.f32.mrb[0].mxu0
      %v795 = vadd.f32 0.0, %v794
      %v796 = vpop.f32.mrb[0].mxu0
      %v797 = vadd.f32 0.0, %v796
      %798 = vdwg.mxu0
      %vm799 = vcmask 1040384
      %v800 = vsel %vm799, %v795, 0.0
      %vm801 = vcmask 516096
      %v802 = vsel %vm801, %v797, 0.0
      %v803 = vadd.f32 %v800, %v802
      %804 = vadd.xlane.f32.xlu0 %v803
      %v805 = vpop.xlane.xlu0 %804
      %v806 = vrot.slane %v805, 4
      %v807 = vadd.f32 %v805, %v806
      %v808 = vrot.slane %v807, 2
      %v809 = vadd.f32 %v807, %v808
      %v810 = vrot.slane %v809, 1
      %v811 = vadd.f32 %v809, %v810
      %s812 = vtos %v811
      %vm813 = vcmp.eq.s32.totalorder %v402, 0
      %v814 = vstv %s812
      %v815 = vsel %vm813, %v814, 0.0
      %v816 = vadd.f32 %v815, 0.0
      %817 = vst [vmem:[%s394] sm:$0xff] %v674
      %vm818 = vcmask 523264
      %819 = vst.msk [vmem:[%s394 + $0x8] sm:$0xff] %vm818, %v675
      %820 = vst [vmem:[%s394 + $0x10] sm:$0xff] %v676
      %821 = vst.msk [vmem:[%s394 + $0x18] sm:$0xff] %vm818, %v677
      %s822 = scalar_lea.vmem %s354, 16
      %v823 = vld [vmem:[%s822] sm:$0xff]
      %v824 = vld [vmem:[%s822 + $0x8] sm:$0xff]
      %v825 = vpack.c.bf16 %v824, %v823
      %s826 = scalar_lea.vmem %s360, 16
      %v827 = vld [vmem:[%s826] sm:$0xff]
      %v828 = vld [vmem:[%s826 + $0x8] sm:$0xff]
      %v829 = vpack.c.bf16 %v828, %v827
      %s830 = scalar_lea.vmem %s366, 16
      %v831 = vld [vmem:[%s830] sm:$0xff]
      %v832 = vld [vmem:[%s830 + $0x8] sm:$0xff]
      %s833 = scalar_lea.vmem %s372, 16
      %v834 = vld [vmem:[%s833] sm:$0xff]
      %v835 = vld [vmem:[%s833 + $0x8] sm:$0xff]
      %s836 = scalar_lea.vmem %s354, %s400
      %v837 = vld [vmem:[%s836] sm:$0xff]
      %v838 = vld [vmem:[%s836 + $0x8] sm:$0xff]
      %v839 = vmul.f32 %v837, 25.0
      %v840 = vmul.f32 %v838, 25.0
      %v841 = vpack.c.bf16 %v840, %v839
      %v843 = vsel %vm425, %v841, 0
      %v846 = vsel %vm425, %v825, 0
      %848 = vmatprep.subr.bf16.mxu0 0
      %849 = vmatpush1.bf16.xpose.msra.mxu0 %v846
      %850 = vmatprep.subr.bf16.mxu0 0
      %851 = vmatpush1.bf16.xpose.msra.mxu0 0
      %852 = vmatprep.subr.bf16.mxu0 0
      %853 = vmatpush1.bf16.xpose.msra.mxu0 0
      %854 = vmatprep.subr.bf16.mxu0 0
      %855 = vmatpush1.bf16.xpose.msra.mxu0 0
      %856 = vmatprep.subr.bf16.mxu0 0
      %857 = vmatpush1.bf16.xpose.msra.mxu0 0
      %858 = vmatprep.subr.bf16.mxu0 0
      %859 = vmatpush1.bf16.xpose.msra.mxu0 0
      %860 = vmatprep.subr.bf16.mxu0 0
      %861 = vmatpush1.bf16.xpose.msra.mxu0 0
      %862 = vmatprep.subr.bf16.mxu0 0
      %863 = vmatpush1.bf16.xpose.msra.mxu0 0
      %864 = vmatprep.subr.bf16.mxu0 0
      %865 = vmatpush1.bf16.xpose.msra.mxu0 0
      %866 = vmatprep.subr.bf16.mxu0 0
      %867 = vmatpush1.bf16.xpose.msra.mxu0 0
      %868 = vmatprep.subr.bf16.mxu0 0
      %869 = vmatpush1.bf16.xpose.msra.mxu0 0
      %870 = vmatprep.subr.bf16.mxu0 0
      %871 = vmatpush1.bf16.xpose.msra.mxu0 0
      %872 = vmatprep.subr.bf16.mxu0 0
      %873 = vmatpush1.bf16.xpose.msra.mxu0 0
      %874 = vmatprep.subr.bf16.mxu0 0
      %875 = vmatpush1.bf16.xpose.msra.mxu0 0
      %876 = vmatprep.subr.bf16.mxu0 0
      %877 = vmatpush1.bf16.xpose.msra.mxu0 0
      %878 = vmatprep.subr.bf16.mxu0 0
      %879 = vmatpush1.bf16.xpose.msra.mxu0 0
      %880 = vmatprep.mubr.bf16.mxu0 0
      %881 = vmatmul.mubr.bf16.gmra.mrb[0].mxu0 %v843
      %v882 = vpop.f32.mrb[0].mxu0
      %v883 = vadd.f32 0.0, %v882
      %v884 = vpop.f32.mrb[0].mxu0
      %v885 = vpop.f32.mrb[0].mxu0
      %v886 = vadd.f32 0.0, %v885
      %v887 = vpop.f32.mrb[0].mxu0
      %888 = vdwg.mxu0
      %v890 = vsel %vm425, %v829, 0
      %892 = vmatprep.subr.bf16.mxu0 0
      %893 = vmatpush1.bf16.xpose.msra.mxu0 %v890
      %894 = vmatprep.subr.bf16.mxu0 0
      %895 = vmatpush1.bf16.xpose.msra.mxu0 0
      %896 = vmatprep.subr.bf16.mxu0 0
      %897 = vmatpush1.bf16.xpose.msra.mxu0 0
      %898 = vmatprep.subr.bf16.mxu0 0
      %899 = vmatpush1.bf16.xpose.msra.mxu0 0
      %900 = vmatprep.subr.bf16.mxu0 0
      %901 = vmatpush1.bf16.xpose.msra.mxu0 0
      %902 = vmatprep.subr.bf16.mxu0 0
      %903 = vmatpush1.bf16.xpose.msra.mxu0 0
      %904 = vmatprep.subr.bf16.mxu0 0
      %905 = vmatpush1.bf16.xpose.msra.mxu0 0
      %906 = vmatprep.subr.bf16.mxu0 0
      %907 = vmatpush1.bf16.xpose.msra.mxu0 0
      %908 = vmatprep.subr.bf16.mxu0 0
      %909 = vmatpush1.bf16.xpose.msra.mxu0 0
      %910 = vmatprep.subr.bf16.mxu0 0
      %911 = vmatpush1.bf16.xpose.msra.mxu0 0
      %912 = vmatprep.subr.bf16.mxu0 0
      %913 = vmatpush1.bf16.xpose.msra.mxu0 0
      %914 = vmatprep.subr.bf16.mxu0 0
      %915 = vmatpush1.bf16.xpose.msra.mxu0 0
      %916 = vmatprep.subr.bf16.mxu0 0
      %917 = vmatpush1.bf16.xpose.msra.mxu0 0
      %918 = vmatprep.subr.bf16.mxu0 0
      %919 = vmatpush1.bf16.xpose.msra.mxu0 0
      %920 = vmatprep.subr.bf16.mxu0 0
      %921 = vmatpush1.bf16.xpose.msra.mxu0 0
      %922 = vmatprep.subr.bf16.mxu0 0
      %923 = vmatpush1.bf16.xpose.msra.mxu0 0
      %924 = vmatprep.mubr.bf16.mxu0 0
      %925 = vmatmul.mubr.bf16.gmra.mrb[0].mxu0 %v843
      %v926 = vpop.f32.mrb[0].mxu0
      %v927 = vadd.f32 0.0, %v926
      %v928 = vpop.f32.mrb[0].mxu0
      %v929 = vpop.f32.mrb[0].mxu0
      %v930 = vadd.f32 0.0, %v929
      %v931 = vpop.f32.mrb[0].mxu0
      %932 = vdwg.mxu0
      %v933 = vsel %vm517, %v883, -inf
      %934 = vmax.xlane.f32.xlu0 %v933
      %v935 = vpop.xlane.xlu0 %934
      %v936 = vsel %vm517, %v886, -inf
      %937 = vmax.xlane.f32.xlu0 %v936
      %v938 = vpop.xlane.xlu0 %937
      %v939 = vsel %vm517, %v927, -inf
      %940 = vmax.xlane.f32.xlu0 %v939
      %v941 = vpop.xlane.xlu0 %940
      %v942 = vsel %vm517, %v930, -inf
      %943 = vmax.xlane.f32.xlu0 %v942
      %v944 = vpop.xlane.xlu0 %943
      %v945 = vmax.f32 %v935, %v941
      %v946 = vmax.f32 %v938, %v944
      %v947 = vsub.f32 %v883, %v945
      %v948 = vsub.f32 %v886, %v946
      %v949 = vmul.f32 %v947, 1.442695
      %v950 = vpow.pop %v949
      %v951 = vmul.f32 %v948, 1.442695
      %v952 = vpow.pop %v951
      %v953 = vsub.f32 %v927, %v945
      %v954 = vsub.f32 %v930, %v946
      %v955 = vmul.f32 %v953, 1.442695
      %v956 = vpow.pop %v955
      %v957 = vmul.f32 %v954, 1.442695
      %v958 = vpow.pop %v957
      %v959 = vsel %vm517, %v950, 0.0
      %960 = vadd.xlane.f32.xlu0 %v959
      %v961 = vpop.xlane.xlu0 %960
      %v962 = vsel %vm517, %v952, 0.0
      %963 = vadd.xlane.f32.xlu0 %v962
      %v964 = vpop.xlane.xlu0 %963
      %v965 = vsel %vm517, %v956, 0.0
      %966 = vadd.xlane.f32.xlu0 %v965
      %v967 = vpop.xlane.xlu0 %966
      %v968 = vsel %vm517, %v958, 0.0
      %969 = vadd.xlane.f32.xlu0 %v968
      %v970 = vpop.xlane.xlu0 %969
      %v971 = vadd.f32 %v961, %v967
      %v972 = vadd.f32 %v964, %v970
      %v973 = vpack.c.bf16 %v952, %v950
      %v974 = vpack.c.bf16 %v958, %v956
      %v977 = vunpack.c.l.b16 %v834
      %v978 = vunpack.c.h.b16 %v834
      %v979 = vunpack.c.l.b16 %v835
      %v980 = vunpack.c.h.b16 %v835
      %v981 = vpack.c.b16 %v979, %v977
      %v982 = vpack.c.b16 %v980, %v978
      %v986 = vsel %vm517, %v974, 0
      %988 = vmatprep.subr.bf16.mxu0 %v982
      %989 = vmatpush1.bf16.msra.mxu0 %v981
      %990 = vmatprep.subr.bf16.mxu0 0
      %991 = vmatpush1.bf16.msra.mxu0 0
      %992 = vmatprep.subr.bf16.mxu0 0
      %993 = vmatpush1.bf16.msra.mxu0 0
      %994 = vmatprep.subr.bf16.mxu0 0
      %995 = vmatpush1.bf16.msra.mxu0 0
      %996 = vmatprep.subr.bf16.mxu0 0
      %997 = vmatpush1.bf16.msra.mxu0 0
      %998 = vmatprep.subr.bf16.mxu0 0
      %999 = vmatpush1.bf16.msra.mxu0 0
      %1000 = vmatprep.subr.bf16.mxu0 0
      %1001 = vmatpush1.bf16.msra.mxu0 0
      %1002 = vmatprep.subr.bf16.mxu0 0
      %1003 = vmatpush1.bf16.msra.mxu0 0
      %1004 = vmatprep.subr.bf16.mxu0 0
      %1005 = vmatpush1.bf16.msra.mxu0 0
      %1006 = vmatprep.subr.bf16.mxu0 0
      %1007 = vmatpush1.bf16.msra.mxu0 0
      %1008 = vmatprep.subr.bf16.mxu0 0
      %1009 = vmatpush1.bf16.msra.mxu0 0
      %1010 = vmatprep.subr.bf16.mxu0 0
      %1011 = vmatpush1.bf16.msra.mxu0 0
      %1012 = vmatprep.subr.bf16.mxu0 0
      %1013 = vmatpush1.bf16.msra.mxu0 0
      %1014 = vmatprep.subr.bf16.mxu0 0
      %1015 = vmatpush1.bf16.msra.mxu0 0
      %1016 = vmatprep.subr.bf16.mxu0 0
      %1017 = vmatpush1.bf16.msra.mxu0 0
      %1018 = vmatprep.subr.bf16.mxu0 0
      %1019 = vmatpush1.bf16.msra.mxu0 0
      %1020 = vmatprep.mubr.bf16.mxu0 0
      %1021 = vmatmul.mubr.bf16.gmra.mrb[0].mxu0 %v986
      %v1022 = vpop.f32.mrb[0].mxu0
      %v1023 = vadd.f32 0.0, %v1022
      %v1024 = vpop.f32.mrb[0].mxu0
      %v1025 = vadd.f32 0.0, %v1024
      %v1026 = vpop.f32.mrb[0].mxu0
      %v1027 = vadd.f32 0.0, %v1026
      %v1028 = vpop.f32.mrb[0].mxu0
      %v1029 = vadd.f32 0.0, %v1028
      %1030 = vdwg.mxu0
      %v1033 = vunpack.c.l.b16 %v831
      %v1034 = vunpack.c.h.b16 %v831
      %v1035 = vunpack.c.l.b16 %v832
      %v1036 = vunpack.c.h.b16 %v832
      %v1037 = vpack.c.b16 %v1035, %v1033
      %v1038 = vpack.c.b16 %v1036, %v1034
      %v1042 = vsel %vm517, %v973, 0
      %1044 = vmatprep.subr.bf16.mxu0 %v1038
      %1045 = vmatpush1.bf16.msra.mxu0 %v1037
      %1046 = vmatprep.subr.bf16.mxu0 0
      %1047 = vmatpush1.bf16.msra.mxu0 0
      %1048 = vmatprep.subr.bf16.mxu0 0
      %1049 = vmatpush1.bf16.msra.mxu0 0
      %1050 = vmatprep.subr.bf16.mxu0 0
      %1051 = vmatpush1.bf16.msra.mxu0 0
      %1052 = vmatprep.subr.bf16.mxu0 0
      %1053 = vmatpush1.bf16.msra.mxu0 0
      %1054 = vmatprep.subr.bf16.mxu0 0
      %1055 = vmatpush1.bf16.msra.mxu0 0
      %1056 = vmatprep.subr.bf16.mxu0 0
      %1057 = vmatpush1.bf16.msra.mxu0 0
      %1058 = vmatprep.subr.bf16.mxu0 0
      %1059 = vmatpush1.bf16.msra.mxu0 0
      %1060 = vmatprep.subr.bf16.mxu0 0
      %1061 = vmatpush1.bf16.msra.mxu0 0
      %1062 = vmatprep.subr.bf16.mxu0 0
      %1063 = vmatpush1.bf16.msra.mxu0 0
      %1064 = vmatprep.subr.bf16.mxu0 0
      %1065 = vmatpush1.bf16.msra.mxu0 0
      %1066 = vmatprep.subr.bf16.mxu0 0
      %1067 = vmatpush1.bf16.msra.mxu0 0
      %1068 = vmatprep.subr.bf16.mxu0 0
      %1069 = vmatpush1.bf16.msra.mxu0 0
      %1070 = vmatprep.subr.bf16.mxu0 0
      %1071 = vmatpush1.bf16.msra.mxu0 0
      %1072 = vmatprep.subr.bf16.mxu0 0
      %1073 = vmatpush1.bf16.msra.mxu0 0
      %1074 = vmatprep.subr.bf16.mxu0 0
      %1075 = vmatpush1.bf16.msra.mxu0 0
      %1076 = vmatprep.mubr.bf16.mxu0 0
      %1077 = vmatmul.mubr.bf16.gmra.mrb[0].mxu0 %v1042
      %v1078 = vpop.f32.mrb[0].mxu0
      %v1079 = vadd.f32 %v1023, %v1078
      %v1080 = vpop.f32.mrb[0].mxu0
      %v1081 = vadd.f32 %v1025, %v1080
      %v1082 = vpop.f32.mrb[0].mxu0
      %v1083 = vadd.f32 %v1027, %v1082
      %v1084 = vpop.f32.mrb[0].mxu0
      %v1085 = vadd.f32 %v1029, %v1084
      %1086 = vdwg.mxu0
      %v1087 = vrcp.pop %v971
      %v1088 = vrcp.pop %v972
      %v1089 = vmul.f32 %v1079, %v1087
      %v1090 = vmul.f32 %v1081, %v1087
      %v1091 = vmul.f32 %v1083, %v1088
      %v1092 = vmul.f32 %v1085, %v1088
      %s1093 = smul.addr %s680, 4
      %s1094 = scalar_lea.vmem %s366, %s1093
      %v1095 = vld [vmem:[%s1094] sm:$0xff]
      %v1096 = vld [vmem:[%s1094 + $0x8] sm:$0xff]
      %v1097 = vunpack.c.l.bf16 %v1095
      %v1098 = vunpack.c.h.bf16 %v1095
      %v1099 = vunpack.c.l.bf16 %v1096
      %v1100 = vunpack.c.h.bf16 %v1096
      %v1101 = vld [vmem:[%s383] sm:$0xff]
      %v1102 = vld [vmem:[%s383 + $0x8] sm:$0xff]
      %v1103 = vunpack.c.l.bf16 %v1101
      %v1104 = vunpack.c.h.bf16 %v1101
      %v1105 = vunpack.c.l.bf16 %v1102
      %v1106 = vunpack.c.h.bf16 %v1102
      %v1107 = vsub.f32 %v1089, %v1097
      %v1108 = vsub.f32 %v1090, %v1098
      %v1109 = vsub.f32 %v1091, %v1099
      %v1110 = vsub.f32 %v1092, %v1100
      %v1111 = vmul.f32 %v1107, %v1103
      %v1112 = vmul.f32 %v1108, %v1104
      %v1113 = vmul.f32 %v1109, %v1105
      %v1114 = vmul.f32 %v1110, %v1106
      %v1115 = vand.u32 2147483647, %v1111
      %v1116 = vand.u32 2147483647, %v1112
      %v1117 = vand.u32 2147483647, %v1113
      %v1118 = vand.u32 2147483647, %v1114
      %vm1119 = vcmp.lt.f32.partialorder %v1115, 0.5
      %vm1120 = vcmp.lt.f32.partialorder %v1116, 0.5
      %vm1121 = vcmp.lt.f32.partialorder %v1117, 0.5
      %vm1122 = vcmp.lt.f32.partialorder %v1118, 0.5
      %v1123 = vmul.f32 %v1111, %v1111
      %v1124 = vmul.f32 %v1112, %v1112
      %v1125 = vmul.f32 %v1113, %v1113
      %v1126 = vmul.f32 %v1114, %v1114
      %v1127 = vsub.f32 %v1115, 0.25
      %v1128 = vsub.f32 %v1116, 0.25
      %v1129 = vsub.f32 %v1117, 0.25
      %v1130 = vsub.f32 %v1118, 0.25
      %v1131 = vsel %vm1119, %v1123, %v1127
      %v1132 = vsel %vm1120, %v1124, %v1128
      %v1133 = vsel %vm1121, %v1125, %v1129
      %v1134 = vsel %vm1122, %v1126, %v1130
      %1135 = vmatprep.subr.mxu0 %v1132
      %1136 = vmatpush1.msra.mxu0 %v1131
      %1137 = vmatprep.subr.mxu0 %v1134
      %1138 = vmatpush1.msra.mxu0 %v1133
      %1139 = vmatprep.subr.mxu0 0.0
      %1140 = vmatpush1.msra.mxu0 0.0
      %1141 = vmatprep.subr.mxu0 0.0
      %1142 = vmatpush1.msra.mxu0 0.0
      %1143 = vmatprep.subr.mxu0 0.0
      %1144 = vmatpush1.msra.mxu0 0.0
      %1145 = vmatprep.subr.mxu0 0.0
      %1146 = vmatpush1.msra.mxu0 0.0
      %1147 = vmatprep.subr.mxu0 0.0
      %1148 = vmatpush1.msra.mxu0 0.0
      %1149 = vmatprep.subr.mxu0 0.0
      %1150 = vmatpush1.msra.mxu0 0.0
      %1151 = vmatprep.subr.mxu0 0.0
      %1152 = vmatpush1.msra.mxu0 0.0
      %1153 = vmatprep.subr.mxu0 0.0
      %1154 = vmatpush1.msra.mxu0 0.0
      %1155 = vmatprep.subr.mxu0 0.0
      %1156 = vmatpush1.msra.mxu0 0.0
      %1157 = vmatprep.subr.mxu0 0.0
      %1158 = vmatpush1.msra.mxu0 0.0
      %1159 = vmatprep.subr.mxu0 0.0
      %1160 = vmatpush1.msra.mxu0 0.0
      %1161 = vmatprep.subr.mxu0 0.0
      %1162 = vmatpush1.msra.mxu0 0.0
      %1163 = vmatprep.subr.mxu0 0.0
      %1164 = vmatpush1.msra.mxu0 0.0
      %1165 = vmatprep.subr.mxu0 0.0
      %1166 = vmatpush1.msra.mxu0 0.0
      %1167 = vmatprep.subr.mxu0 0.0
      %1168 = vmatpush1.msra.mxu0 0.0
      %1169 = vmatprep.subr.mxu0 0.0
      %1170 = vmatpush1.msra.mxu0 0.0
      %1171 = vmatprep.subr.mxu0 0.0
      %1172 = vmatpush1.msra.mxu0 0.0
      %1173 = vmatprep.subr.mxu0 0.0
      %1174 = vmatpush1.msra.mxu0 0.0
      %1175 = vmatprep.subr.mxu0 0.0
      %1176 = vmatpush1.msra.mxu0 0.0
      %1177 = vmatprep.subr.mxu0 0.0
      %1178 = vmatpush1.msra.mxu0 0.0
      %1179 = vmatprep.subr.mxu0 0.0
      %1180 = vmatpush1.msra.mxu0 0.0
      %1181 = vmatprep.subr.mxu0 0.0
      %1182 = vmatpush1.msra.mxu0 0.0
      %1183 = vmatprep.subr.mxu0 0.0
      %1184 = vmatpush1.msra.mxu0 0.0
      %1185 = vmatprep.subr.mxu0 0.0
      %1186 = vmatpush1.msra.mxu0 0.0
      %1187 = vmatprep.subr.mxu0 0.0
      %1188 = vmatpush1.msra.mxu0 0.0
      %1189 = vmatprep.subr.mxu0 0.0
      %1190 = vmatpush1.msra.mxu0 0.0
      %1191 = vmatprep.subr.mxu0 0.0
      %1192 = vmatpush1.msra.mxu0 0.0
      %1193 = vmatprep.subr.mxu0 0.0
      %1194 = vmatpush1.msra.mxu0 0.0
      %1195 = vmatprep.subr.mxu0 0.0
      %1196 = vmatpush1.msra.mxu0 0.0
      %1197 = vmatprep.subr.mxu0 0.0
      %1198 = vmatpush1.msra.mxu0 0.0
      %1199 = vmatprep.mubr.f32.mxu0 0.0
      %1200 = vmatmul.mubr.f32.gmra.mrb[0].mxu0 %v726
      %v1201 = vpop.f32.mrb[0].mxu0
      %v1202 = vadd.f32 0.0, %v1201
      %v1203 = vpop.f32.mrb[0].mxu0
      %v1204 = vadd.f32 0.0, %v1203
      %1205 = vdwg.mxu0
      %v1206 = vsel %vm799, %v1202, 0.0
      %v1207 = vsel %vm801, %v1204, 0.0
      %v1208 = vadd.f32 %v1206, %v1207
      %1209 = vadd.xlane.f32.xlu0 %v1208
      %v1210 = vpop.xlane.xlu0 %1209
      %v1211 = vrot.slane %v1210, 4
      %v1212 = vadd.f32 %v1210, %v1211
      %v1213 = vrot.slane %v1212, 2
      %v1214 = vadd.f32 %v1212, %v1213
      %v1215 = vrot.slane %v1214, 1
      %v1216 = vadd.f32 %v1214, %v1215
      %s1217 = vtos %v1216
      %vm1218 = vcmp.eq.s32.totalorder %v402, 1
      %v1219 = vstv %s1217
      %v1220 = vsel %vm1218, %v1219, 0.0
      %v1221 = vadd.f32 %v816, %v1220
      %v1222 = vld [vmem:[%s398] sm:$0x1]
      %v1223 = vadd.f32 %v1222, %v1221
      %1224 = vst [vmem:[%s398] sm:$0x1] %v1223
      %s1225 = smul.u32 2, %s23
      %p1226 = scmp.lt.s32.totalorder %s22, 1
      %s1227 = scalar_select %p1226, %s22, 1
      %p1228 = scmp.lt.s32.totalorder %s1225, 1
      %s1229 = scalar_select %p1228, %s1225, 1
      %s1230 = smul.addr %s1229, 2
      %s1231 = smul.addr %s1227, 4
      %s1232 = sadd.s32 %s1230, %s1231
      %s1233 = smul.addr %s1232, 8
      %s1234 = scalar_lea.vmem %s5, %s1233
      %p1235 = scmp.lt.s32.totalorder %s22, 1
      %s1236 = scalar_select %p1235, %s22, 1
      %s1237 = scalar_lea.vmem %s6, %s1236
      // Predicated region
      $region45: #{vit_forward.6} parent=39 // pred_check
        %p1238 = pneg %p186
      $region46: #{vit_forward.6} parent=39 // pred_check_branch
        %1240 = sbr.rel (%p1238) target = $region48
      $region47: #{vit_forward.6} parent=39 // pred_region
        %s1241 = smul.u32 2, %s23
      $region48: #{vit_forward.6} parent=39 // pred_fallthru
        _
      // Predicated region
      $region49: #{vit_forward.6} parent=39 // pred_check
        %p1242 = pneg %p212
      $region50: #{vit_forward.6} parent=39 // pred_check_branch
        %1244 = sbr.rel (%p1242) target = $region52
      $region51: #{vit_forward.6} parent=39 // pred_region
        _
      $region52: #{vit_forward.6} parent=39 // pred_fallthru
        _
    $region40: #{vit_forward.6} parent=5 // pred_fallthru
      _
    %p1245 = scmp.le.s32.totalorder 2, %s13
    // Predicated region
    $region53: #{vit_forward.6} parent=5 // pred_check
      %p1246 = pneg %p1245
    $region54: #{vit_forward.6} parent=5 // pred_check_branch
      %1248 = sbr.rel (%p1246) target = $region56
    $region55: #{vit_forward.6} parent=5 // pred_region
      %s1249 = ssub.s32 %s13, 2
      // Predicated region
      $region57: #{vit_forward.6} parent=55 // pred_check
        %p1250 = pneg %p192
      $region58: #{vit_forward.6} parent=55 // pred_check_branch
        %1252 = sbr.rel (%p1250) target = $region60
      $region59: #{vit_forward.6} parent=55 // pred_region
        %s1253 = smul.u32 2, %s25
        %p1254 = scmp.lt.s32.totalorder %s24, 1
        %s1255 = scalar_select %p1254, %s24, 1
        %p1256 = scmp.lt.s32.totalorder %s1253, 1
        %s1257 = scalar_select %p1256, %s1253, 1
        %s1258 = smul.addr %s1257, 2
        %s1259 = smul.addr %s1255, 4
        %s1260 = sadd.s32 %s1258, %s1259
        %s1261 = smul.addr %s1260, 8
        %s1262 = scalar_lea.vmem %s5, %s1261
      $region60: #{vit_forward.6} parent=55 // pred_fallthru
        _
      // Predicated region
      $region61: #{vit_forward.6} parent=55 // pred_check
        %p1263 = pneg %p218
      $region62: #{vit_forward.6} parent=55 // pred_check_branch
        %1265 = sbr.rel (%p1263) target = $region64
      $region63: #{vit_forward.6} parent=55 // pred_region
        %p1266 = scmp.lt.s32.totalorder %s24, 1
        %s1267 = scalar_select %p1266, %s24, 1
        %s1268 = scalar_lea.vmem %s6, %s1267
      $region64: #{vit_forward.6} parent=55 // pred_fallthru
        _
    $region56: #{vit_forward.6} parent=5 // pred_fallthru
      _
  $region6: #{vit_forward.6} parent=0 // loop_footer
    %s17 = sadd.s32 1, %s13
  $region7: #{vit_forward.6} parent=0 // loop_footer_branch
    %12 = sbr.rel target = $region3
  $region8: #{vit_forward.6} parent=0 // loop_exit
    _

// kernel: squeeze.10
$region0: #{squeeze.10}
  %s0 = inlined_call_operand.vmem [shape: f32[2,1,16,192], index: 0, kind: input, shape index: {}]
  %s1 = inlined_call_operand.vmem [shape: f32[2,4,4,8,8,3], index: 1, kind: output, shape index: {}]
  $region1: #{squeeze.10} parent=0
    #allocation0 [shape = 'u8[1572864]{0}', space=vmem, size = 0x180000, scoped, tag = 'scoped mem for output reshape']
    %v2 = vld [vmem:[%s0] sm:$0xff]
    %vm3 = vcmask 31744
    %4 = vst.msk [vmem:[#allocation0] ss:$8 sm:$0xf] %vm3, %v2
    %5 = vst.msk [vmem:[#allocation0] ss:$8 sm:$0xf0] %vm3, %v2
    %s6 = scalar_lea.vmem %s0, 8
    %v7 = vld [vmem:[%s6] sm:$0xff]
    %vm8 = vcmask 31744
    %s9 = scalar_lea.vmem [#allocation0], 64
    %10 = vst.msk [vmem:[%s9] ss:$8 sm:$0xf] %vm8, %v7
    %s11 = scalar_lea.vmem [#allocation0], 64
    %12 = vst.msk [vmem:[%s11] ss:$8 sm:$0xf0] %vm8, %v7
    %s13 = scalar_lea.vmem %s0, 16
    %v14 = vld [vmem:[%s13] sm:$0xff]
    %vm15 = vcmask 31744
    %s16 = scalar_lea.vmem [#allocation0], 128
    %17 = vst.msk [vmem:[%s16] ss:$8 sm:$0xf] %vm15, %v14
    %s18 = scalar_lea.vmem [#allocation0], 128
    %19 = vst.msk [vmem:[%s18] ss:$8 sm:$0xf0] %vm15, %v14
    %s20 = scalar_lea.vmem %s0, 24
    %v21 = vld [vmem:[%s20] sm:$0xff]
    %vm22 = vcmask 31744
    %s23 = scalar_lea.vmem [#allocation0], 192
    %24 = vst.msk [vmem:[%s23] ss:$8 sm:$0xf] %vm22, %v21
    %s25 = scalar_lea.vmem [#allocation0], 192
    %26 = vst.msk [vmem:[%s25] ss:$8 sm:$0xf0] %vm22, %v21
    %s27 = scalar_lea.vmem %s0, 32
    %v28 = vld [vmem:[%s27] sm:$0xff]
    %vm29 = vcmask 31744
    %s30 = scalar_lea.vmem [#allocation0], 256
    %31 = vst.msk [vmem:[%s30] ss:$8 sm:$0xf] %vm29, %v28
    %s32 = scalar_lea.vmem [#allocation0], 256
    %33 = vst.msk [vmem:[%s32] ss:$8 sm:$0xf0] %vm29, %v28
    %s34 = scalar_lea.vmem %s0, 40
    %v35 = vld [vmem:[%s34] sm:$0xff]
    %vm36 = vcmask 31744
    %s37 = scalar_lea.vmem [#allocation0], 320
    %38 = vst.msk [vmem:[%s37] ss:$8 sm:$0xf] %vm36, %v35
    %s39 = scalar_lea.vmem [#allocation0], 320
    %40 = vst.msk [vmem:[%s39] ss:$8 sm:$0xf0] %vm36, %v35
    %s41 = scalar_lea.vmem %s0, 48
    %v42 = vld [vmem:[%s41] sm:$0xff]
    %vm43 = vcmask 31744
    %s44 = scalar_lea.vmem [#allocation0], 384
    %45 = vst.msk [vmem:[%s44] ss:$8 sm:$0xf] %vm43, %v42
    %s46 = scalar_lea.vmem [#allocation0], 384
    %47 = vst.msk [vmem:[%s46] ss:$8 sm:$0xf0] %vm43, %v42
    %s48 = scalar_lea.vmem %s0, 56
    %v49 = vld [vmem:[%s48] sm:$0xff]
    %vm50 = vcmask 31744
    %s51 = scalar_lea.vmem [#allocation0], 448
    %52 = vst.msk [vmem:[%s51] ss:$8 sm:$0xf] %vm50, %v49
    %s53 = scalar_lea.vmem [#allocation0], 448
    %54 = vst.msk [vmem:[%s53] ss:$8 sm:$0xf0] %vm50, %v49
    %s55 = scalar_lea.vmem %s0, 64
    %v56 = vld [vmem:[%s55] sm:$0xff]
    %vm57 = vcmask 31744
    %s58 = scalar_lea.vmem [#allocation0], 512
    %59 = vst.msk [vmem:[%s58] ss:$8 sm:$0xf] %vm57, %v56
    %s60 = scalar_lea.vmem [#allocation0], 512
    %61 = vst.msk [vmem:[%s60] ss:$8 sm:$0xf0] %vm57, %v56
    %s62 = scalar_lea.vmem %s0, 72
    %v63 = vld [vmem:[%s62] sm:$0xff]
    %vm64 = vcmask 31744
    %s65 = scalar_lea.vmem [#allocation0], 576
    %66 = vst.msk [vmem:[%s65] ss:$8 sm:$0xf] %vm64, %v63
    %s67 = scalar_lea.vmem [#allocation0], 576
    %68 = vst.msk [vmem:[%s67] ss:$8 sm:$0xf0] %vm64, %v63
    %s69 = scalar_lea.vmem %s0, 80
    %v70 = vld [vmem:[%s69] sm:$0xff]
    %vm71 = vcmask 31744
    %s72 = scalar_lea.vmem [#allocation0], 640
    %73 = vst.msk [vmem:[%s72] ss:$8 sm:$0xf] %vm71, %v70
    %s74 = scalar_lea.vmem [#allocation0], 640
    %75 = vst.msk [vmem:[%s74] ss:$8 sm:$0xf0] %vm71, %v70
    %s76 = scalar_lea.vmem %s0, 88
    %v77 = vld [vmem:[%s76] sm:$0xff]
    %vm78 = vcmask 31744
    %s79 = scalar_lea.vmem [#allocation0], 704
    %80 = vst.msk [vmem:[%s79] ss:$8 sm:$0xf] %vm78, %v77
    %s81 = scalar_lea.vmem [#allocation0], 704
    %82 = vst.msk [vmem:[%s81] ss:$8 sm:$0xf0] %vm78, %v77
    %s83 = scalar_lea.vmem %s0, 96
    %v84 = vld [vmem:[%s83] sm:$0xff]
    %vm85 = vcmask 31744
    %s86 = scalar_lea.vmem [#allocation0], 768
    %87 = vst.msk [vmem:[%s86] ss:$8 sm:$0xf] %vm85, %v84
    %s88 = scalar_lea.vmem [#allocation0], 768
    %89 = vst.msk [vmem:[%s88] ss:$8 sm:$0xf0] %vm85, %v84
    %s90 = scalar_lea.vmem %s0, 104
    %v91 = vld [vmem:[%s90] sm:$0xff]
    %vm92 = vcmask 31744
    %s93 = scalar_lea.vmem [#allocation0], 832
    %94 = vst.msk [vmem:[%s93] ss:$8 sm:$0xf] %vm92, %v91
    %s95 = scalar_lea.vmem [#allocation0], 832
    %96 = vst.msk [vmem:[%s95] ss:$8 sm:$0xf0] %vm92, %v91
    %s97 = scalar_lea.vmem %s0, 112
    %v98 = vld [vmem:[%s97] sm:$0xff]
    %vm99 = vcmask 31744
    %s100 = scalar_lea.vmem [#allocation0], 896
    %101 = vst.msk [vmem:[%s100] ss:$8 sm:$0xf] %vm99, %v98
    %s102 = scalar_lea.vmem [#allocation0], 896
    %103 = vst.msk [vmem:[%s102] ss:$8 sm:$0xf0] %vm99, %v98
    %s104 = scalar_lea.vmem %s0, 120
    %v105 = vld [vmem:[%s104] sm:$0xff]
    %vm106 = vcmask 31744
    %s107 = scalar_lea.vmem [#allocation0], 960
    %108 = vst.msk [vmem:[%s107] ss:$8 sm:$0xf] %vm106, %v105
    %s109 = scalar_lea.vmem [#allocation0], 960
    %110 = vst.msk [vmem:[%s109] ss:$8 sm:$0xf0] %vm106, %v105
    %s111 = scalar_lea.vmem %s0, 128
    %v112 = vld [vmem:[%s111] sm:$0xff]
    %vm113 = vcmask 31744
    %s114 = scalar_lea.vmem [#allocation0], 1024
    %115 = vst.msk [vmem:[%s114] ss:$8 sm:$0xf] %vm113, %v112
    %s116 = scalar_lea.vmem [#allocation0], 1024
    %117 = vst.msk [vmem:[%s116] ss:$8 sm:$0xf0] %vm113, %v112
    %s118 = scalar_lea.vmem %s0, 136
    %v119 = vld [vmem:[%s118] sm:$0xff]
    %vm120 = vcmask 31744
    %s121 = scalar_lea.vmem [#allocation0], 1088
    %122 = vst.msk [vmem:[%s121] ss:$8 sm:$0xf] %vm120, %v119
    %s123 = scalar_lea.vmem [#allocation0], 1088
    %124 = vst.msk [vmem:[%s123] ss:$8 sm:$0xf0] %vm120, %v119
    %s125 = scalar_lea.vmem %s0, 144
    %v126 = vld [vmem:[%s125] sm:$0xff]
    %vm127 = vcmask 31744
    %s128 = scalar_lea.vmem [#allocation0], 1152
    %129 = vst.msk [vmem:[%s128] ss:$8 sm:$0xf] %vm127, %v126
    %s130 = scalar_lea.vmem [#allocation0], 1152
    %131 = vst.msk [vmem:[%s130] ss:$8 sm:$0xf0] %vm127, %v126
    %s132 = scalar_lea.vmem %s0, 152
    %v133 = vld [vmem:[%s132] sm:$0xff]
    %vm134 = vcmask 31744
    %s135 = scalar_lea.vmem [#allocation0], 1216
    %136 = vst.msk [vmem:[%s135] ss:$8 sm:$0xf] %vm134, %v133
    %s137 = scalar_lea.vmem [#allocation0], 1216
    %138 = vst.msk [vmem:[%s137] ss:$8 sm:$0xf0] %vm134, %v133
    %s139 = scalar_lea.vmem %s0, 160
    %v140 = vld [vmem:[%s139] sm:$0xff]
    %vm141 = vcmask 31744
    %s142 = scalar_lea.vmem [#allocation0], 1280
    %143 = vst.msk [vmem:[%s142] ss:$8 sm:$0xf] %vm141, %v140
    %s144 = scalar_lea.vmem [#allocation0], 1280
    %145 = vst.msk [vmem:[%s144] ss:$8 sm:$0xf0] %vm141, %v140
    %s146 = scalar_lea.vmem %s0, 168
    %v147 = vld [vmem:[%s146] sm:$0xff]
    %vm148 = vcmask 31744
    %s149 = scalar_lea.vmem [#allocation0], 1344
    %150 = vst.msk [vmem:[%s149] ss:$8 sm:$0xf] %vm148, %v147
    %s151 = scalar_lea.vmem [#allocation0], 1344
    %152 = vst.msk [vmem:[%s151] ss:$8 sm:$0xf0] %vm148, %v147
    %s153 = scalar_lea.vmem %s0, 176
    %v154 = vld [vmem:[%s153] sm:$0xff]
    %vm155 = vcmask 31744
    %s156 = scalar_lea.vmem [#allocation0], 1408
    %157 = vst.msk [vmem:[%s156] ss:$8 sm:$0xf] %vm155, %v154
    %s158 = scalar_lea.vmem [#allocation0], 1408
    %159 = vst.msk [vmem:[%s158] ss:$8 sm:$0xf0] %vm155, %v154
    %s160 = scalar_lea.vmem %s0, 184
    %v161 = vld [vmem:[%s160] sm:$0xff]
    %vm162 = vcmask 31744
    %s163 = scalar_lea.vmem [#allocation0], 1472
    %164 = vst.msk [vmem:[%s163] ss:$8 sm:$0xf] %vm162, %v161
    %s165 = scalar_lea.vmem [#allocation0], 1472
    %166 = vst.msk [vmem:[%s165] ss:$8 sm:$0xf0] %vm162, %v161
    %s167 = scalar_lea.vmem %s0, 192
    %v168 = vld [vmem:[%s167] sm:$0xff]
    %vm169 = vcmask 31744
    %s170 = scalar_lea.vmem [#allocation0], 1536
    %171 = vst.msk [vmem:[%s170] ss:$8 sm:$0xf] %vm169, %v168
    %s172 = scalar_lea.vmem [#allocation0], 1536
    %173 = vst.msk [vmem:[%s172] ss:$8 sm:$0xf0] %vm169, %v168
    %s174 = scalar_lea.vmem %s0, 200
    %v175 = vld [vmem:[%s174] sm:$0xff]
    %vm176 = vcmask 31744
    %s177 = scalar_lea.vmem [#allocation0], 1600
    %178 = vst.msk [vmem:[%s177] ss:$8 sm:$0xf] %vm176, %v175
    %s179 = scalar_lea.vmem [#allocation0], 1600
    %180 = vst.msk [vmem:[%s179] ss:$8 sm:$0xf0] %vm176, %v175
    %s181 = scalar_lea.vmem %s0, 208
    %v182 = vld [vmem:[%s181] sm:$0xff]
    %vm183 = vcmask 31744
    %s184 = scalar_lea.vmem [#allocation0], 1664
    %185 = vst.msk [vmem:[%s184] ss:$8 sm:$0xf] %vm183, %v182
    %s186 = scalar_lea.vmem [#allocation0], 1664
    %187 = vst.msk [vmem:[%s186] ss:$8 sm:$0xf0] %vm183, %v182
    %s188 = scalar_lea.vmem %s0, 216
    %v189 = vld [vmem:[%s188] sm:$0xff]
    %vm190 = vcmask 31744
    %s191 = scalar_lea.vmem [#allocation0], 1728
    %192 = vst.msk [vmem:[%s191] ss:$8 sm:$0xf] %vm190, %v189
    %s193 = scalar_lea.vmem [#allocation0], 1728
    %194 = vst.msk [vmem:[%s193] ss:$8 sm:$0xf0] %vm190, %v189
    %s195 = scalar_lea.vmem %s0, 224
    %v196 = vld [vmem:[%s195] sm:$0xff]
    %vm197 = vcmask 31744
    %s198 = scalar_lea.vmem [#allocation0], 1792
    %199 = vst.msk [vmem:[%s198] ss:$8 sm:$0xf] %vm197, %v196
    %s200 = scalar_lea.vmem [#allocation0], 1792
    %201 = vst.msk [vmem:[%s200] ss:$8 sm:$0xf0] %vm197, %v196
    %s202 = scalar_lea.vmem %s0, 232
    %v203 = vld [vmem:[%s202] sm:$0xff]
    %vm204 = vcmask 31744
    %s205 = scalar_lea.vmem [#allocation0], 1856
    %206 = vst.msk [vmem:[%s205] ss:$8 sm:$0xf] %vm204, %v203
    %s207 = scalar_lea.vmem [#allocation0], 1856
    %208 = vst.msk [vmem:[%s207] ss:$8 sm:$0xf0] %vm204, %v203
    %s209 = scalar_lea.vmem %s0, 240
    %v210 = vld [vmem:[%s209] sm:$0xff]
    %vm211 = vcmask 31744
    %s212 = scalar_lea.vmem [#allocation0], 1920
    %213 = vst.msk [vmem:[%s212] ss:$8 sm:$0xf] %vm211, %v210
    %s214 = scalar_lea.vmem [#allocation0], 1920
    %215 = vst.msk [vmem:[%s214] ss:$8 sm:$0xf0] %vm211, %v210
    %s216 = scalar_lea.vmem %s0, 248
    %v217 = vld [vmem:[%s216] sm:$0xff]
    %vm218 = vcmask 31744
    %s219 = scalar_lea.vmem [#allocation0], 1984
    %220 = vst.msk [vmem:[%s219] ss:$8 sm:$0xf] %vm218, %v217
    %s221 = scalar_lea.vmem [#allocation0], 1984
    %222 = vst.msk [vmem:[%s221] ss:$8 sm:$0xf0] %vm218, %v217
    %s223 = scalar_lea.vmem %s0, 256
    %v224 = vld [vmem:[%s223] sm:$0xff]
    %vm225 = vcmask 31744
    %s226 = scalar_lea.vmem [#allocation0], 2048
    %227 = vst.msk [vmem:[%s226] ss:$8 sm:$0xf] %vm225, %v224
    %s228 = scalar_lea.vmem [#allocation0], 2048
    %229 = vst.msk [vmem:[%s228] ss:$8 sm:$0xf0] %vm225, %v224
    %s230 = scalar_lea.vmem %s0, 264
    %v231 = vld [vmem:[%s230] sm:$0xff]
    %vm232 = vcmask 31744
    %s233 = scalar_lea.vmem [#allocation0], 2112
    %234 = vst.msk [vmem:[%s233] ss:$8 sm:$0xf] %vm232, %v231
    %s235 = scalar_lea.vmem [#allocation0], 2112
    %236 = vst.msk [vmem:[%s235] ss:$8 sm:$0xf0] %vm232, %v231
    %s237 = scalar_lea.vmem %s0, 272
    %v238 = vld [vmem:[%s237] sm:$0xff]
    %vm239 = vcmask 31744
    %s240 = scalar_lea.vmem [#allocation0], 2176
    %241 = vst.msk [vmem:[%s240] ss:$8 sm:$0xf] %vm239, %v238
    %s242 = scalar_lea.vmem [#allocation0], 2176
    %243 = vst.msk [vmem:[%s242] ss:$8 sm:$0xf0] %vm239, %v238
    %s244 = scalar_lea.vmem %s0, 280
    %v245 = vld [vmem:[%s244] sm:$0xff]
    %vm246 = vcmask 31744
    %s247 = scalar_lea.vmem [#allocation0], 2240
    %248 = vst.msk [vmem:[%s247] ss:$8 sm:$0xf] %vm246, %v245
    %s249 = scalar_lea.vmem [#allocation0], 2240
    %250 = vst.msk [vmem:[%s249] ss:$8 sm:$0xf0] %vm246, %v245
    %s251 = scalar_lea.vmem %s0, 288
    %v252 = vld [vmem:[%s251] sm:$0xff]
    %vm253 = vcmask 31744
    %s254 = scalar_lea.vmem [#allocation0], 2304
    %255 = vst.msk [vmem:[%s254] ss:$8 sm:$0xf] %vm253, %v252
    %s256 = scalar_lea.vmem [#allocation0], 2304
    %257 = vst.msk [vmem:[%s256] ss:$8 sm:$0xf0] %vm253, %v252
    %s258 = scalar_lea.vmem %s0, 296
    %v259 = vld [vmem:[%s258] sm:$0xff]
    %vm260 = vcmask 31744
    %s261 = scalar_lea.vmem [#allocation0], 2368
    %262 = vst.msk [vmem:[%s261] ss:$8 sm:$0xf] %vm260, %v259
    %s263 = scalar_lea.vmem [#allocation0], 2368
    %264 = vst.msk [vmem:[%s263] ss:$8 sm:$0xf0] %vm260, %v259
    %s265 = scalar_lea.vmem %s0, 304
    %v266 = vld [vmem:[%s265] sm:$0xff]
    %vm267 = vcmask 31744
    %s268 = scalar_lea.vmem [#allocation0], 2432
    %269 = vst.msk [vmem:[%s268] ss:$8 sm:$0xf] %vm267, %v266
    %s270 = scalar_lea.vmem [#allocation0], 2432
    %271 = vst.msk [vmem:[%s270] ss:$8 sm:$0xf0] %vm267, %v266
    %s272 = scalar_lea.vmem %s0, 312
    %v273 = vld [vmem:[%s272] sm:$0xff]
    %vm274 = vcmask 31744
    %s275 = scalar_lea.vmem [#allocation0], 2496
    %276 = vst.msk [vmem:[%s275] ss:$8 sm:$0xf] %vm274, %v273
    %s277 = scalar_lea.vmem [#allocation0], 2496
    %278 = vst.msk [vmem:[%s277] ss:$8 sm:$0xf0] %vm274, %v273
    %s279 = scalar_lea.vmem %s0, 320
    %v280 = vld [vmem:[%s279] sm:$0xff]
    %vm281 = vcmask 31744
    %s282 = scalar_lea.vmem [#allocation0], 2560
    %283 = vst.msk [vmem:[%s282] ss:$8 sm:$0xf] %vm281, %v280
    %s284 = scalar_lea.vmem [#allocation0], 2560
    %285 = vst.msk [vmem:[%s284] ss:$8 sm:$0xf0] %vm281, %v280
    %s286 = scalar_lea.vmem %s0, 328
    %v287 = vld [vmem:[%s286] sm:$0xff]
    %vm288 = vcmask 31744
    %s289 = scalar_lea.vmem [#allocation0], 2624
    %290 = vst.msk [vmem:[%s289] ss:$8 sm:$0xf] %vm288, %v287
    %s291 = scalar_lea.vmem [#allocation0], 2624
    %292 = vst.msk [vmem:[%s291] ss:$8 sm:$0xf0] %vm288, %v287
    %s293 = scalar_lea.vmem %s0, 336
    %v294 = vld [vmem:[%s293] sm:$0xff]
    %vm295 = vcmask 31744
    %s296 = scalar_lea.vmem [#allocation0], 2688
    %297 = vst.msk [vmem:[%s296] ss:$8 sm:$0xf] %vm295, %v294
    %s298 = scalar_lea.vmem [#allocation0], 2688
    %299 = vst.msk [vmem:[%s298] ss:$8 sm:$0xf0] %vm295, %v294
    %s300 = scalar_lea.vmem %s0, 344
    %v301 = vld [vmem:[%s300] sm:$0xff]
    %vm302 = vcmask 31744
    %s303 = scalar_lea.vmem [#allocation0], 2752
    %304 = vst.msk [vmem:[%s303] ss:$8 sm:$0xf] %vm302, %v301
    %s305 = scalar_lea.vmem [#allocation0], 2752
    %306 = vst.msk [vmem:[%s305] ss:$8 sm:$0xf0] %vm302, %v301
    %s307 = scalar_lea.vmem %s0, 352
    %v308 = vld [vmem:[%s307] sm:$0xff]
    %vm309 = vcmask 31744
    %s310 = scalar_lea.vmem [#allocation0], 2816
    %311 = vst.msk [vmem:[%s310] ss:$8 sm:$0xf] %vm309, %v308
    %s312 = scalar_lea.vmem [#allocation0], 2816
    %313 = vst.msk [vmem:[%s312] ss:$8 sm:$0xf0] %vm309, %v308
    %s314 = scalar_lea.vmem %s0, 360
    %v315 = vld [vmem:[%s314] sm:$0xff]
    %vm316 = vcmask 31744
    %s317 = scalar_lea.vmem [#allocation0], 2880
    %318 = vst.msk [vmem:[%s317] ss:$8 sm:$0xf] %vm316, %v315
    %s319 = scalar_lea.vmem [#allocation0], 2880
    %320 = vst.msk [vmem:[%s319] ss:$8 sm:$0xf0] %vm316, %v315
    %s321 = scalar_lea.vmem %s0, 368
    %v322 = vld [vmem:[%s321] sm:$0xff]
    %vm323 = vcmask 31744
    %s324 = scalar_lea.vmem [#allocation0], 2944
    %325 = vst.msk [vmem:[%s324] ss:$8 sm:$0xf] %vm323, %v322
    %s326 = scalar_lea.vmem [#allocation0], 2944
    %327 = vst.msk [vmem:[%s326] ss:$8 sm:$0xf0] %vm323, %v322
    %s328 = scalar_lea.vmem %s0, 376
    %v329 = vld [vmem:[%s328] sm:$0xff]
    %vm330 = vcmask 31744
    %s331 = scalar_lea.vmem [#allocation0], 3008
    %332 = vst.msk [vmem:[%s331] ss:$8 sm:$0xf] %vm330, %v329
    %s333 = scalar_lea.vmem [#allocation0], 3008
    %334 = vst.msk [vmem:[%s333] ss:$8 sm:$0xf0] %vm330, %v329
    %v335 = vld [vmem:[%s0] sm:$0xff]
    %336 = vrot.lane.b32.xlu0 %v335, 124
    %v337 = vpop.permute.xlu0 %336
    %vm338 = vcmask 31744
    %s339 = scalar_lea.vmem [#allocation0], 1
    %340 = vst.msk [vmem:[%s339] ss:$8 sm:$0xf] %vm338, %v337
    %s341 = scalar_lea.vmem [#allocation0], 1
    %342 = vst.msk [vmem:[%s341] ss:$8 sm:$0xf0] %vm338, %v337
    %s343 = scalar_lea.vmem %s0, 8
    %v344 = vld [vmem:[%s343] sm:$0xff]
    %345 = vrot.lane.b32.xlu0 %v344, 124
    %v346 = vpop.permute.xlu0 %345
    %vm347 = vcmask 31744
    %s348 = scalar_lea.vmem [#allocation0], 65
    %349 = vst.msk [vmem:[%s348] ss:$8 sm:$0xf] %vm347, %v346
    %s350 = scalar_lea.vmem [#allocation0], 65
    %351 = vst.msk [vmem:[%s350] ss:$8 sm:$0xf0] %vm347, %v346
    %s352 = scalar_lea.vmem %s0, 16
    %v353 = vld [vmem:[%s352] sm:$0xff]
    %354 = vrot.lane.b32.xlu0 %v353, 124
    %v355 = vpop.permute.xlu0 %354
    %vm356 = vcmask 31744
    %s357 = scalar_lea.vmem [#allocation0], 129
    %358 = vst.msk [vmem:[%s357] ss:$8 sm:$0xf] %vm356, %v355
    %s359 = scalar_lea.vmem [#allocation0], 129
    %360 = vst.msk [vmem:[%s359] ss:$8 sm:$0xf0] %vm356, %v355
    %s361 = scalar_lea.vmem %s0, 24
    %v362 = vld [vmem:[%s361] sm:$0xff]
    %363 = vrot.lane.b32.xlu0 %v362, 124
    %v364 = vpop.permute.xlu0 %363
    %vm365 = vcmask 31744
    %s366 = scalar_lea.vmem [#allocation0], 193
    %367 = vst.msk [vmem:[%s366] ss:$8 sm:$0xf] %vm365, %v364
    %s368 = scalar_lea.vmem [#allocation0], 193
    %369 = vst.msk [vmem:[%s368] ss:$8 sm:$0xf0] %vm365, %v364
    %s370 = scalar_lea.vmem %s0, 32
    %v371 = vld [vmem:[%s370] sm:$0xff]
    %372 = vrot.lane.b32.xlu0 %v371, 124
    %v373 = vpop.permute.xlu0 %372
    %vm374 = vcmask 31744
    %s375 = scalar_lea.vmem [#allocation0], 257
    %376 = vst.msk [vmem:[%s375] ss:$8 sm:$0xf] %vm374, %v373
    %s377 = scalar_lea.vmem [#allocation0], 257
    %378 = vst.msk [vmem:[%s377] ss:$8 sm:$0xf0] %vm374, %v373
    %s379 = scalar_lea.vmem %s0, 40
    %v380 = vld [vmem:[%s379] sm:$0xff]
    %381 = vrot.lane.b32.xlu0 %v380, 124
    %v382 = vpop.permute.xlu0 %381
    %vm383 = vcmask 31744
    %s384 = scalar_lea.vmem [#allocation0], 321
    %385 = vst.msk [vmem:[%s384] ss:$8 sm:$0xf] %vm383, %v382
    %s386 = scalar_lea.vmem [#allocation0], 321
    %387 = vst.msk [vmem:[%s386] ss:$8 sm:$0xf0] %vm383, %v382
    %s388 = scalar_lea.vmem %s0, 48
    %v389 = vld [vmem:[%s388] sm:$0xff]
    %390 = vrot.lane.b32.xlu0 %v389, 124
    %v391 = vpop.permute.xlu0 %390
    %vm392 = vcmask 31744
    %s393 = scalar_lea.vmem [#allocation0], 385
    %394 = vst.msk [vmem:[%s393] ss:$8 sm:$0xf] %vm392, %v391
    %s395 = scalar_lea.vmem [#allocation0], 385
    %396 = vst.msk [vmem:[%s395] ss:$8 sm:$0xf0] %vm392, %v391
    %s397 = scalar_lea.vmem %s0, 56
    %v398 = vld [vmem:[%s397] sm:$0xff]
    %399 = vrot.lane.b32.xlu0 %v398, 124
    %v400 = vpop.permute.xlu0 %399
    %vm401 = vcmask 31744
    %s402 = scalar_lea.vmem [#allocation0], 449
    %403 = vst.msk [vmem:[%s402] ss:$8 sm:$0xf] %vm401, %v400
    %s404 = scalar_lea.vmem [#allocation0], 449
    %405 = vst.msk [vmem:[%s404] ss:$8 sm:$0xf0] %vm401, %v400
    %s406 = scalar_lea.vmem %s0, 64
    %v407 = vld [vmem:[%s406] sm:$0xff]
    %408 = vrot.lane.b32.xlu0 %v407, 124
    %v409 = vpop.permute.xlu0 %408
    %vm410 = vcmask 31744
    %s411 = scalar_lea.vmem [#allocation0], 513
    %412 = vst.msk [vmem:[%s411] ss:$8 sm:$0xf] %vm410, %v409
    %s413 = scalar_lea.vmem [#allocation0], 513
    %414 = vst.msk [vmem:[%s413] ss:$8 sm:$0xf0] %vm410, %v409
    %s415 = scalar_lea.vmem %s0, 72
    %v416 = vld [vmem:[%s415] sm:$0xff]
    %417 = vrot.lane.b32.xlu0 %v416, 124
    %v418 = vpop.permute.xlu0 %417
    %vm419 = vcmask 31744
    %s420 = scalar_lea.vmem [#allocation0], 577
    %421 = vst.msk [vmem:[%s420] ss:$8 sm:$0xf] %vm419, %v418
    %s422 = scalar_lea.vmem [#allocation0], 577
    %423 = vst.msk [vmem:[%s422] ss:$8 sm:$0xf0] %vm419, %v418
    %s424 = scalar_lea.vmem %s0, 80
    %v425 = vld [vmem:[%s424] sm:$0xff]
    %426 = vrot.lane.b32.xlu0 %v425, 124
    %v427 = vpop.permute.xlu0 %426
    %vm428 = vcmask 31744
    %s429 = scalar_lea.vmem [#allocation0], 641
    %430 = vst.msk [vmem:[%s429] ss:$8 sm:$0xf] %vm428, %v427
    %s431 = scalar_lea.vmem [#allocation0], 641
    %432 = vst.msk [vmem:[%s431] ss:$8 sm:$0xf0] %vm428, %v427
    %s433 = scalar_lea.vmem %s0, 88
    %v434 = vld [vmem:[%s433] sm:$0xff]
    %435 = vrot.lane.b32.xlu0 %v434, 124
    %v436 = vpop.permute.xlu0 %435
    %vm437 = vcmask 31744
    %s438 = scalar_lea.vmem [#allocation0], 705
    %439 = vst.msk [vmem:[%s438] ss:$8 sm:$0xf] %vm437, %v436
    %s440 = scalar_lea.vmem [#allocation0], 705
    %441 = vst.msk [vmem:[%s440] ss:$8 sm:$0xf0] %vm437, %v436
    %s442 = scalar_lea.vmem %s0, 96
    %v443 = vld [vmem:[%s442] sm:$0xff]
    %444 = vrot.lane.b32.xlu0 %v443, 124
    %v445 = vpop.permute.xlu0 %444
    %vm446 = vcmask 31744
    %s447 = scalar_lea.vmem [#allocation0], 769
    %448 = vst.msk [vmem:[%s447] ss:$8 sm:$0xf] %vm446, %v445
    %s449 = scalar_lea.vmem [#allocation0], 769
    %450 = vst.msk [vmem:[%s449] ss:$8 sm:$0xf0] %vm446, %v445
    %s451 = scalar_lea.vmem %s0, 104
    %v452 = vld [vmem:[%s451] sm:$0xff]
    %453 = vrot.lane.b32.xlu0 %v452, 124
    %v454 = vpop.permute.xlu0 %453
    %vm455 = vcmask 31744
    %s456 = scalar_lea.vmem [#allocation0], 833
    %457 = vst.msk [vmem:[%s456] ss:$8 sm:$0xf] %vm455, %v454
    %s458 = scalar_lea.vmem [#allocation0], 833
    %459 = vst.msk [vmem:[%s458] ss:$8 sm:$0xf0] %vm455, %v454
    %s460 = scalar_lea.vmem %s0, 112
    %v461 = vld [vmem:[%s460] sm:$0xff]
    %462 = vrot.lane.b32.xlu0 %v461, 124
    %v463 = vpop.permute.xlu0 %462
    %vm464 = vcmask 31744
    %s465 = scalar_lea.vmem [#allocation0], 897
    %466 = vst.msk [vmem:[%s465] ss:$8 sm:$0xf] %vm464, %v463
    %s467 = scalar_lea.vmem [#allocation0], 897
    %468 = vst.msk [vmem:[%s467] ss:$8 sm:$0xf0] %vm464, %v463
    %s469 = scalar_lea.vmem %s0, 120
    %v470 = vld [vmem:[%s469] sm:$0xff]
    %471 = vrot.lane.b32.xlu0 %v470, 124
    %v472 = vpop.permute.xlu0 %471
    %vm473 = vcmask 31744
    %s474 = scalar_lea.vmem [#allocation0], 961
    %475 = vst.msk [vmem:[%s474] ss:$8 sm:$0xf] %vm473, %v472
    %s476 = scalar_lea.vmem [#allocation0], 961
    %477 = vst.msk [vmem:[%s476] ss:$8 sm:$0xf0] %vm473, %v472
    %s478 = scalar_lea.vmem %s0, 128
    %v479 = vld [vmem:[%s478] sm:$0xff]
    %480 = vrot.lane.b32.xlu0 %v479, 124
    %v481 = vpop.permute.xlu0 %480
    %vm482 = vcmask 31744
    %s483 = scalar_lea.vmem [#allocation0], 1025
    %484 = vst.msk [vmem:[%s483] ss:$8 sm:$0xf] %vm482, %v481
    %s485 = scalar_lea.vmem [#allocation0], 1025
    %486 = vst.msk [vmem:[%s485] ss:$8 sm:$0xf0] %vm482, %v481
    %s487 = scalar_lea.vmem %s0, 136
    %v488 = vld [vmem:[%s487] sm:$0xff]
    %489 = vrot.lane.b32.xlu0 %v488, 124
    %v490 = vpop.permute.xlu0 %489
    %vm491 = vcmask 31744
    %s492 = scalar_lea.vmem [#allocation0], 1089
    %493 = vst.msk [vmem:[%s492] ss:$8 sm:$0xf] %vm491, %v490
    %s494 = scalar_lea.vmem [#allocation0], 1089
    %495 = vst.msk [vmem:[%s494] ss:$8 sm:$0xf0] %vm491, %v490
    %s496 = scalar_lea.vmem %s0, 144
    %v497 = vld [vmem:[%s496] sm:$0xff]
    %498 = vrot.lane.b32.xlu0 %v497, 124
    %v499 = vpop.permute.xlu0 %498
    %vm500 = vcmask 31744
    %s501 = scalar_lea.vmem [#allocation0], 1153
    %502 = vst.msk [vmem:[%s501] ss:$8 sm:$0xf] %vm500, %v499
    %s503 = scalar_lea.vmem [#allocation0], 1153
    %504 = vst.msk [vmem:[%s503] ss:$8 sm:$0xf0] %vm500, %v499
    %s505 = scalar_lea.vmem %s0, 152
    %v506 = vld [vmem:[%s505] sm:$0xff]
    %507 = vrot.lane.b32.xlu0 %v506, 124
    %v508 = vpop.permute.xlu0 %507
    %vm509 = vcmask 31744
    %s510 = scalar_lea.vmem [#allocation0], 1217
    %511 = vst.msk [vmem:[%s510] ss:$8 sm:$0xf] %vm509, %v508
    %s512 = scalar_lea.vmem [#allocation0], 1217
    %513 = vst.msk [vmem:[%s512] ss:$8 sm:$0xf0] %vm509, %v508
    %s514 = scalar_lea.vmem %s0, 160
    %v515 = vld [vmem:[%s514] sm:$0xff]
    %516 = vrot.lane.b32.xlu0 %v515, 124
    %v517 = vpop.permute.xlu0 %516
    %vm518 = vcmask 31744
    %s519 = scalar_lea.vmem [#allocation0], 1281
    %520 = vst.msk [vmem:[%s519] ss:$8 sm:$0xf] %vm518, %v517
    %s521 = scalar_lea.vmem [#allocation0], 1281
    %522 = vst.msk [vmem:[%s521] ss:$8 sm:$0xf0] %vm518, %v517
    %s523 = scalar_lea.vmem %s0, 168
    %v524 = vld [vmem:[%s523] sm:$0xff]
    %525 = vrot.lane.b32.xlu0 %v524, 124
    %v526 = vpop.permute.xlu0 %525
    %vm527 = vcmask 31744
    %s528 = scalar_lea.vmem [#allocation0], 1345
    %529 = vst.msk [vmem:[%s528] ss:$8 sm:$0xf] %vm527, %v526
    %s530 = scalar_lea.vmem [#allocation0], 1345
    %531 = vst.msk [vmem:[%s530] ss:$8 sm:$0xf0] %vm527, %v526
    %s532 = scalar_lea.vmem %s0, 176
    %v533 = vld [vmem:[%s532] sm:$0xff]
    %534 = vrot.lane.b32.xlu0 %v533, 124
    %v535 = vpop.permute.xlu0 %534
    %vm536 = vcmask 31744
    %s537 = scalar_lea.vmem [#allocation0], 1409
    %538 = vst.msk [vmem:[%s537] ss:$8 sm:$0xf] %vm536, %v535
    %s539 = scalar_lea.vmem [#allocation0], 1409
    %540 = vst.msk [vmem:[%s539] ss:$8 sm:$0xf0] %vm536, %v535
    %s541 = scalar_lea.vmem %s0, 184
    %v542 = vld [vmem:[%s541] sm:$0xff]
    %543 = vrot.lane.b32.xlu0 %v542, 124
    %v544 = vpop.permute.xlu0 %543
    %vm545 = vcmask 31744
    %s546 = scalar_lea.vmem [#allocation0], 1473
    %547 = vst.msk [vmem:[%s546] ss:$8 sm:$0xf] %vm545, %v544
    %s548 = scalar_lea.vmem [#allocation0], 1473
    %549 = vst.msk [vmem:[%s548] ss:$8 sm:$0xf0] %vm545, %v544
    %s550 = scalar_lea.vmem %s0, 192
    %v551 = vld [vmem:[%s550] sm:$0xff]
    %552 = vrot.lane.b32.xlu0 %v551, 124
    %v553 = vpop.permute.xlu0 %552
    %vm554 = vcmask 31744
    %s555 = scalar_lea.vmem [#allocation0], 1537
    %556 = vst.msk [vmem:[%s555] ss:$8 sm:$0xf] %vm554, %v553
    %s557 = scalar_lea.vmem [#allocation0], 1537
    %558 = vst.msk [vmem:[%s557] ss:$8 sm:$0xf0] %vm554, %v553
    %s559 = scalar_lea.vmem %s0, 200
    %v560 = vld [vmem:[%s559] sm:$0xff]
    %561 = vrot.lane.b32.xlu0 %v560, 124
    %v562 = vpop.permute.xlu0 %561
    %vm563 = vcmask 31744
    %s564 = scalar_lea.vmem [#allocation0], 1601
    %565 = vst.msk [vmem:[%s564] ss:$8 sm:$0xf] %vm563, %v562
    %s566 = scalar_lea.vmem [#allocation0], 1601
    %567 = vst.msk [vmem:[%s566] ss:$8 sm:$0xf0] %vm563, %v562
    %s568 = scalar_lea.vmem %s0, 208
    %v569 = vld [vmem:[%s568] sm:$0xff]
    %570 = vrot.lane.b32.xlu0 %v569, 124
    %v571 = vpop.permute.xlu0 %570
    %vm572 = vcmask 31744
    %s573 = scalar_lea.vmem [#allocation0], 1665
    %574 = vst.msk [vmem:[%s573] ss:$8 sm:$0xf] %vm572, %v571
    %s575 = scalar_lea.vmem [#allocation0], 1665
    %576 = vst.msk [vmem:[%s575] ss:$8 sm:$0xf0] %vm572, %v571
    %s577 = scalar_lea.vmem %s0, 216
    %v578 = vld [vmem:[%s577] sm:$0xff]
    %579 = vrot.lane.b32.xlu0 %v578, 124
    %v580 = vpop.permute.xlu0 %579
    %vm581 = vcmask 31744
    %s582 = scalar_lea.vmem [#allocation0], 1729
    %583 = vst.msk [vmem:[%s582] ss:$8 sm:$0xf] %vm581, %v580
    %s584 = scalar_lea.vmem [#allocation0], 1729
    %585 = vst.msk [vmem:[%s584] ss:$8 sm:$0xf0] %vm581, %v580
    %s586 = scalar_lea.vmem %s0, 224
    %v587 = vld [vmem:[%s586] sm:$0xff]
    %588 = vrot.lane.b32.xlu0 %v587, 124
    %v589 = vpop.permute.xlu0 %588
    %vm590 = vcmask 31744
    %s591 = scalar_lea.vmem [#allocation0], 1793
    %592 = vst.msk [vmem:[%s591] ss:$8 sm:$0xf] %vm590, %v589
    %s593 = scalar_lea.vmem [#allocation0], 1793
    %594 = vst.msk [vmem:[%s593] ss:$8 sm:$0xf0] %vm590, %v589
    %s595 = scalar_lea.vmem %s0, 232
    %v596 = vld [vmem:[%s595] sm:$0xff]
    %597 = vrot.lane.b32.xlu0 %v596, 124
    %v598 = vpop.permute.xlu0 %597
    %vm599 = vcmask 31744
    %s600 = scalar_lea.vmem [#allocation0], 1857
    %601 = vst.msk [vmem:[%s600] ss:$8 sm:$0xf] %vm599, %v598
    %s602 = scalar_lea.vmem [#allocation0], 1857
    %603 = vst.msk [vmem:[%s602] ss:$8 sm:$0xf0] %vm599, %v598
    %s604 = scalar_lea.vmem %s0, 240
    %v605 = vld [vmem:[%s604] sm:$0xff]
    %606 = vrot.lane.b32.xlu0 %v605, 124
    %v607 = vpop.permute.xlu0 %606
    %vm608 = vcmask 31744
    %s609 = scalar_lea.vmem [#allocation0], 1921
    %610 = vst.msk [vmem:[%s609] ss:$8 sm:$0xf] %vm608, %v607
    %s611 = scalar_lea.vmem [#allocation0], 1921
    %612 = vst.msk [vmem:[%s611] ss:$8 sm:$0xf0] %vm608, %v607
    %s613 = scalar_lea.vmem %s0, 248
    %v614 = vld [vmem:[%s613] sm:$0xff]
    %615 = vrot.lane.b32.xlu0 %v614, 124
    %v616 = vpop.permute.xlu0 %615
    %vm617 = vcmask 31744
    %s618 = scalar_lea.vmem [#allocation0], 1985
    %619 = vst.msk [vmem:[%s618] ss:$8 sm:$0xf] %vm617, %v616
    %s620 = scalar_lea.vmem [#allocation0], 1985
    %621 = vst.msk [vmem:[%s620] ss:$8 sm:$0xf0] %vm617, %v616
    %s622 = scalar_lea.vmem %s0, 256
    %v623 = vld [vmem:[%s622] sm:$0xff]
    %624 = vrot.lane.b32.xlu0 %v623, 124
    %v625 = vpop.permute.xlu0 %624
    %vm626 = vcmask 31744
    %s627 = scalar_lea.vmem [#allocation0], 2049
    %628 = vst.msk [vmem:[%s627] ss:$8 sm:$0xf] %vm626, %v625
    %s629 = scalar_lea.vmem [#allocation0], 2049
    %630 = vst.msk [vmem:[%s629] ss:$8 sm:$0xf0] %vm626, %v625
    %s631 = scalar_lea.vmem %s0, 264
    %v632 = vld [vmem:[%s631] sm:$0xff]
    %633 = vrot.lane.b32.xlu0 %v632, 124
    %v634 = vpop.permute.xlu0 %633
    %vm635 = vcmask 31744
    %s636 = scalar_lea.vmem [#allocation0], 2113
    %637 = vst.msk [vmem:[%s636] ss:$8 sm:$0xf] %vm635, %v634
    %s638 = scalar_lea.vmem [#allocation0], 2113
    %639 = vst.msk [vmem:[%s638] ss:$8 sm:$0xf0] %vm635, %v634
    %s640 = scalar_lea.vmem %s0, 272
    %v641 = vld [vmem:[%s640] sm:$0xff]
    %642 = vrot.lane.b32.xlu0 %v641, 124
    %v643 = vpop.permute.xlu0 %642
    %vm644 = vcmask 31744
    %s645 = scalar_lea.vmem [#allocation0], 2177
    %646 = vst.msk [vmem:[%s645] ss:$8 sm:$0xf] %vm644, %v643
    %s647 = scalar_lea.vmem [#allocation0], 2177
    %648 = vst.msk [vmem:[%s647] ss:$8 sm:$0xf0] %vm644, %v643
    %s649 = scalar_lea.vmem %s0, 280
    %v650 = vld [vmem:[%s649] sm:$0xff]
    %651 = vrot.lane.b32.xlu0 %v650, 124
    %v652 = vpop.permute.xlu0 %651
    %vm653 = vcmask 31744
    %s654 = scalar_lea.vmem [#allocation0], 2241
    %655 = vst.msk [vmem:[%s654] ss:$8 sm:$0xf] %vm653, %v652
    %s656 = scalar_lea.vmem [#allocation0], 2241
    %657 = vst.msk [vmem:[%s656] ss:$8 sm:$0xf0] %vm653, %v652
    %s658 = scalar_lea.vmem %s0, 288
    %v659 = vld [vmem:[%s658] sm:$0xff]
    %660 = vrot.lane.b32.xlu0 %v659, 124
    %v661 = vpop.permute.xlu0 %660
    %vm662 = vcmask 31744
    %s663 = scalar_lea.vmem [#allocation0], 2305
    %664 = vst.msk [vmem:[%s663] ss:$8 sm:$0xf] %vm662, %v661
    %s665 = scalar_lea.vmem [#allocation0], 2305
    %666 = vst.msk [vmem:[%s665] ss:$8 sm:$0xf0] %vm662, %v661
    %s667 = scalar_lea.vmem %s0, 296
    %v668 = vld [vmem:[%s667] sm:$0xff]
    %669 = vrot.lane.b32.xlu0 %v668, 124
    %v670 = vpop.permute.xlu0 %669
    %vm671 = vcmask 31744
    %s672 = scalar_lea.vmem [#allocation0], 2369
    %673 = vst.msk [vmem:[%s672] ss:$8 sm:$0xf] %vm671, %v670
    %s674 = scalar_lea.vmem [#allocation0], 2369
    %675 = vst.msk [vmem:[%s674] ss:$8 sm:$0xf0] %vm671, %v670
    %s676 = scalar_lea.vmem %s0, 304
    %v677 = vld [vmem:[%s676] sm:$0xff]
    %678 = vrot.lane.b32.xlu0 %v677, 124
    %v679 = vpop.permute.xlu0 %678
    %vm680 = vcmask 31744
    %s681 = scalar_lea.vmem [#allocation0], 2433
    %682 = vst.msk [vmem:[%s681] ss:$8 sm:$0xf] %vm680, %v679
    %s683 = scalar_lea.vmem [#allocation0], 2433
    %684 = vst.msk [vmem:[%s683] ss:$8 sm:$0xf0] %vm680, %v679
    %s685 = scalar_lea.vmem %s0, 312
    %v686 = vld [vmem:[%s685] sm:$0xff]
    %687 = vrot.lane.b32.xlu0 %v686, 124
    %v688 = vpop.permute.xlu0 %687
    %vm689 = vcmask 31744
    %s690 = scalar_lea.vmem [#allocation0], 2497
    %691 = vst.msk [vmem:[%s690] ss:$8 sm:$0xf] %vm689, %v688
    %s692 = scalar_lea.vmem [#allocation0], 2497
    %693 = vst.msk [vmem:[%s692] ss:$8 sm:$0xf0] %vm689, %v688
    %s694 = scalar_lea.vmem %s0, 320
    %v695 = vld [vmem:[%s694] sm:$0xff]
    %696 = vrot.lane.b32.xlu0 %v695, 124
    %v697 = vpop.permute.xlu0 %696
    %vm698 = vcmask 31744
    %s699 = scalar_lea.vmem [#allocation0], 2561
    %700 = vst.msk [vmem:[%s699] ss:$8 sm:$0xf] %vm698, %v697
    %s701 = scalar_lea.vmem [#allocation0], 2561
    %702 = vst.msk [vmem:[%s701] ss:$8 sm:$0xf0] %vm698, %v697
    %s703 = scalar_lea.vmem %s0, 328
    %v704 = vld [vmem:[%s703] sm:$0xff]
    %705 = vrot.lane.b32.xlu0 %v704, 124
    %v706 = vpop.permute.xlu0 %705
    %vm707 = vcmask 31744
    %s708 = scalar_lea.vmem [#allocation0], 2625
    %709 = vst.msk [vmem:[%s708] ss:$8 sm:$0xf] %vm707, %v706
    %s710 = scalar_lea.vmem [#allocation0], 2625
    %711 = vst.msk [vmem:[%s710] ss:$8 sm:$0xf0] %vm707, %v706
    %s712 = scalar_lea.vmem %s0, 336
    %v713 = vld [vmem:[%s712] sm:$0xff]
    %714 = vrot.lane.b32.xlu0 %v713, 124
    %v715 = vpop.permute.xlu0 %714
    %vm716 = vcmask 31744
    %s717 = scalar_lea.vmem [#allocation0], 2689
    %718 = vst.msk [vmem:[%s717] ss:$8 sm:$0xf] %vm716, %v715
    %s719 = scalar_lea.vmem [#allocation0], 2689
    %720 = vst.msk [vmem:[%s719] ss:$8 sm:$0xf0] %vm716, %v715
    %s721 = scalar_lea.vmem %s0, 344
    %v722 = vld [vmem:[%s721] sm:$0xff]
    %723 = vrot.lane.b32.xlu0 %v722, 124
    %v724 = vpop.permute.xlu0 %723
    %vm725 = vcmask 31744
    %s726 = scalar_lea.vmem [#allocation0], 2753
    %727 = vst.msk [vmem:[%s726] ss:$8 sm:$0xf] %vm725, %v724
    %s728 = scalar_lea.vmem [#allocation0], 2753
    %729 = vst.msk [vmem:[%s728] ss:$8 sm:$0xf0] %vm725, %v724
    %s730 = scalar_lea.vmem %s0, 352
    %v731 = vld [vmem:[%s730] sm:$0xff]
    %732 = vrot.lane.b32.xlu0 %v731, 124
    %v733 = vpop.permute.xlu0 %732
    %vm734 = vcmask 31744
    %s735 = scalar_lea.vmem [#allocation0], 2817
    %736 = vst.msk [vmem:[%s735] ss:$8 sm:$0xf] %vm734, %v733
    %s737 = scalar_lea.vmem [#allocation0], 2817
    %738 = vst.msk [vmem:[%s737] ss:$8 sm:$0xf0] %vm734, %v733
    %s739 = scalar_lea.vmem %s0, 360
    %v740 = vld [vmem:[%s739] sm:$0xff]
    %741 = vrot.lane.b32.xlu0 %v740, 124
    %v742 = vpop.permute.xlu0 %741
    %vm743 = vcmask 31744
    %s744 = scalar_lea.vmem [#allocation0], 2881
    %745 = vst.msk [vmem:[%s744] ss:$8 sm:$0xf] %vm743, %v742
    %s746 = scalar_lea.vmem [#allocation0], 2881
    %747 = vst.msk [vmem:[%s746] ss:$8 sm:$0xf0] %vm743, %v742
    %s748 = scalar_lea.vmem %s0, 368
    %v749 = vld [vmem:[%s748] sm:$0xff]
    %750 = vrot.lane.b32.xlu0 %v749, 124
    %v751 = vpop.permute.xlu0 %750
    %vm752 = vcmask 31744
    %s753 = scalar_lea.vmem [#allocation0], 2945
    %754 = vst.msk [vmem:[%s753] ss:$8 sm:$0xf] %vm752, %v751
    %s755 = scalar_lea.vmem [#allocation0], 2945
    %756 = vst.msk [vmem:[%s755] ss:$8 sm:$0xf0] %vm752, %v751
    %s757 = scalar_lea.vmem %s0, 376
    %v758 = vld [vmem:[%s757] sm:$0xff]
    %759 = vrot.lane.b32.xlu0 %v758, 124
    %v760 = vpop.permute.xlu0 %759
    %vm761 = vcmask 31744
    %s762 = scalar_lea.vmem [#allocation0], 3009
    %763 = vst.msk [vmem:[%s762] ss:$8 sm:$0xf] %vm761, %v760
    %s764 = scalar_lea.vmem [#allocation0], 3009
    %765 = vst.msk [vmem:[%s764] ss:$8 sm:$0xf0] %vm761, %v760
    %v766 = vld [vmem:[%s0] sm:$0xff]
    %767 = vrot.lane.b32.xlu0 %v766, 120
    %v768 = vpop.permute.xlu0 %767
    %vm769 = vcmask 31744
    %s770 = scalar_lea.vmem [#allocation0], 2
    %771 = vst.msk [vmem:[%s770] ss:$8 sm:$0xf] %vm769, %v768
    %s772 = scalar_lea.vmem [#allocation0], 2
    %773 = vst.msk [vmem:[%s772] ss:$8 sm:$0xf0] %vm769, %v768
    %s774 = scalar_lea.vmem %s0, 8
    %v775 = vld [vmem:[%s774] sm:$0xff]
    %776 = vrot.lane.b32.xlu0 %v775, 120
    %v777 = vpop.permute.xlu0 %776
    %vm778 = vcmask 31744
    %s779 = scalar_lea.vmem [#allocation0], 66
    %780 = vst.msk [vmem:[%s779] ss:$8 sm:$0xf] %vm778, %v777
    %s781 = scalar_lea.vmem [#allocation0], 66
    %782 = vst.msk [vmem:[%s781] ss:$8 sm:$0xf0] %vm778, %v777
    %s783 = scalar_lea.vmem %s0, 16
    %v784 = vld [vmem:[%s783] sm:$0xff]
    %785 = vrot.lane.b32.xlu0 %v784, 120
    %v786 = vpop.permute.xlu0 %785
    %vm787 = vcmask 31744
    %s788 = scalar_lea.vmem [#allocation0], 130
    %789 = vst.msk [vmem:[%s788] ss:$8 sm:$0xf] %vm787, %v786
    %s790 = scalar_lea.vmem [#allocation0], 130
    %791 = vst.msk [vmem:[%s790] ss:$8 sm:$0xf0] %vm787, %v786
    %s792 = scalar_lea.vmem %s0, 24
    %v793 = vld [vmem:[%s792] sm:$0xff]
    %794 = vrot.lane.b32.xlu0 %v793, 120
    %v795 = vpop.permute.xlu0 %794
    %vm796 = vcmask 31744
    %s797 = scalar_lea.vmem [#allocation0], 194
    %798 = vst.msk [vmem:[%s797] ss:$8 sm:$0xf] %vm796, %v795
    %s799 = scalar_lea.vmem [#allocation0], 194
    %800 = vst.msk [vmem:[%s799] ss:$8 sm:$0xf0] %vm796, %v795
    %s801 = scalar_lea.vmem %s0, 32
    %v802 = vld [vmem:[%s801] sm:$0xff]
    %803 = vrot.lane.b32.xlu0 %v802, 120
    %v804 = vpop.permute.xlu0 %803
    %vm805 = vcmask 31744
    %s806 = scalar_lea.vmem [#allocation0], 258
    %807 = vst.msk [vmem:[%s806] ss:$8 sm:$0xf] %vm805, %v804
    %s808 = scalar_lea.vmem [#allocation0], 258
    %809 = vst.msk [vmem:[%s808] ss:$8 sm:$0xf0] %vm805, %v804
    %s810 = scalar_lea.vmem %s0, 40
    %v811 = vld [vmem:[%s810] sm:$0xff]
    %812 = vrot.lane.b32.xlu0 %v811, 120
    %v813 = vpop.permute.xlu0 %812
    %vm814 = vcmask 31744
    %s815 = scalar_lea.vmem [#allocation0], 322
    %816 = vst.msk [vmem:[%s815] ss:$8 sm:$0xf] %vm814, %v813
    %s817 = scalar_lea.vmem [#allocation0], 322
    %818 = vst.msk [vmem:[%s817] ss:$8 sm:$0xf0] %vm814, %v813
    %s819 = scalar_lea.vmem %s0, 48
    %v820 = vld [vmem:[%s819] sm:$0xff]
    %821 = vrot.lane.b32.xlu0 %v820, 120
    %v822 = vpop.permute.xlu0 %821
    %vm823 = vcmask 31744
    %s824 = scalar_lea.vmem [#allocation0], 386
    %825 = vst.msk [vmem:[%s824] ss:$8 sm:$0xf] %vm823, %v822
    %s826 = scalar_lea.vmem [#allocation0], 386
    %827 = vst.msk [vmem:[%s826] ss:$8 sm:$0xf0] %vm823, %v822
    %s828 = scalar_lea.vmem %s0, 56
    %v829 = vld [vmem:[%s828] sm:$0xff]
    %830 = vrot.lane.b32.xlu0 %v829, 120
    %v831 = vpop.permute.xlu0 %830
    %vm832 = vcmask 31744
    %s833 = scalar_lea.vmem [#allocation0], 450
    %834 = vst.msk [vmem:[%s833] ss:$8 sm:$0xf] %vm832, %v831
    %s835 = scalar_lea.vmem [#allocation0], 450
    %836 = vst.msk [vmem:[%s835] ss:$8 sm:$0xf0] %vm832, %v831
    %s837 = scalar_lea.vmem %s0, 64
    %v838 = vld [vmem:[%s837] sm:$0xff]
    %839 = vrot.lane.b32.xlu0 %v838, 120
    %v840 = vpop.permute.xlu0 %839
    %vm841 = vcmask 31744
    %s842 = scalar_lea.vmem [#allocation0], 514
    %843 = vst.msk [vmem:[%s842] ss:$8 sm:$0xf] %vm841, %v840
    %s844 = scalar_lea.vmem [#allocation0], 514
    %845 = vst.msk [vmem:[%s844] ss:$8 sm:$0xf0] %vm841, %v840
    %s846 = scalar_lea.vmem %s0, 72
    %v847 = vld [vmem:[%s846] sm:$0xff]
    %848 = vrot.lane.b32.xlu0 %v847, 120
    %v849 = vpop.permute.xlu0 %848
    %vm850 = vcmask 31744
    %s851 = scalar_lea.vmem [#allocation0], 578
    %852 = vst.msk [vmem:[%s851] ss:$8 sm:$0xf] %vm850, %v849
    %s853 = scalar_lea.vmem [#allocation0], 578
    %854 = vst.msk [vmem:[%s853] ss:$8 sm:$0xf0] %vm850, %v849
    %s855 = scalar_lea.vmem %s0, 80
    %v856 = vld [vmem:[%s855] sm:$0xff]
    %857 = vrot.lane.b32.xlu0 %v856, 120
    %v858 = vpop.permute.xlu0 %857
    %vm859 = vcmask 31744
    %s860 = scalar_lea.vmem [#allocation0], 642
    %861 = vst.msk [vmem:[%s860] ss:$8 sm:$0xf] %vm859, %v858
    %s862 = scalar_lea.vmem [#allocation0], 642
    %863 = vst.msk [vmem:[%s862] ss:$8 sm:$0xf0] %vm859, %v858
    %s864 = scalar_lea.vmem %s0, 88
    %v865 = vld [vmem:[%s864] sm:$0xff]
    %866 = vrot.lane.b32.xlu0 %v865, 120
    %v867 = vpop.permute.xlu0 %866
    %vm868 = vcmask 31744
    %s869 = scalar_lea.vmem [#allocation0], 706
    %870 = vst.msk [vmem:[%s869] ss:$8 sm:$0xf] %vm868, %v867
    %s871 = scalar_lea.vmem [#allocation0], 706
    %872 = vst.msk [vmem:[%s871] ss:$8 sm:$0xf0] %vm868, %v867
    %s873 = scalar_lea.vmem %s0, 96
    %v874 = vld [vmem:[%s873] sm:$0xff]
    %875 = vrot.lane.b32.xlu0 %v874, 120
    %v876 = vpop.permute.xlu0 %875
    %vm877 = vcmask 31744
    %s878 = scalar_lea.vmem [#allocation0], 770
    %879 = vst.msk [vmem:[%s878] ss:$8 sm:$0xf] %vm877, %v876
    %s880 = scalar_lea.vmem [#allocation0], 770
    %881 = vst.msk [vmem:[%s880] ss:$8 sm:$0xf0] %vm877, %v876
    %s882 = scalar_lea.vmem %s0, 104
    %v883 = vld [vmem:[%s882] sm:$0xff]
    %884 = vrot.lane.b32.xlu0 %v883, 120
    %v885 = vpop.permute.xlu0 %884
    %vm886 = vcmask 31744
    %s887 = scalar_lea.vmem [#allocation0], 834
    %888 = vst.msk [vmem:[%s887] ss:$8 sm:$0xf] %vm886, %v885
    %s889 = scalar_lea.vmem [#allocation0], 834
    %890 = vst.msk [vmem:[%s889] ss:$8 sm:$0xf0] %vm886, %v885
    %s891 = scalar_lea.vmem %s0, 112
    %v892 = vld [vmem:[%s891] sm:$0xff]
    %893 = vrot.lane.b32.xlu0 %v892, 120
    %v894 = vpop.permute.xlu0 %893
    %vm895 = vcmask 31744
    %s896 = scalar_lea.vmem [#allocation0], 898
    %897 = vst.msk [vmem:[%s896] ss:$8 sm:$0xf] %vm895, %v894
    %s898 = scalar_lea.vmem [#allocation0], 898
    %899 = vst.msk [vmem:[%s898] ss:$8 sm:$0xf0] %vm895, %v894
    %s900 = scalar_lea.vmem %s0, 120
    %v901 = vld [vmem:[%s900] sm:$0xff]
    %902 = vrot.lane.b32.xlu0 %v901, 120
    %v903 = vpop.permute.xlu0 %902
    %vm904 = vcmask 31744
    %s905 = scalar_lea.vmem [#allocation0], 962
    %906 = vst.msk [vmem:[%s905] ss:$8 sm:$0xf] %vm904, %v903
    %s907 = scalar_lea.vmem [#allocation0], 962
    %908 = vst.msk [vmem:[%s907] ss:$8 sm:$0xf0] %vm904, %v903
    %s909 = scalar_lea.vmem %s0, 128
    %v910 = vld [vmem:[%s909] sm:$0xff]
    %911 = vrot.lane.b32.xlu0 %v910, 120
    %v912 = vpop.permute.xlu0 %911
    %vm913 = vcmask 31744
    %s914 = scalar_lea.vmem [#allocation0], 1026
    %915 = vst.msk [vmem:[%s914] ss:$8 sm:$0xf] %vm913, %v912
    %s916 = scalar_lea.vmem [#allocation0], 1026
    %917 = vst.msk [vmem:[%s916] ss:$8 sm:$0xf0] %vm913, %v912
    %s918 = scalar_lea.vmem %s0, 136
    %v919 = vld [vmem:[%s918] sm:$0xff]
    %920 = vrot.lane.b32.xlu0 %v919, 120
    %v921 = vpop.permute.xlu0 %920
    %vm922 = vcmask 31744
    %s923 = scalar_lea.vmem [#allocation0], 1090
    %924 = vst.msk [vmem:[%s923] ss:$8 sm:$0xf] %vm922, %v921
    %s925 = scalar_lea.vmem [#allocation0], 1090
    %926 = vst.msk [vmem:[%s925] ss:$8 sm:$0xf0] %vm922, %v921
    %s927 = scalar_lea.vmem %s0, 144
    %v928 = vld [vmem:[%s927] sm:$0xff]
    %929 = vrot.lane.b32.xlu0 %v928, 120
    %v930 = vpop.permute.xlu0 %929
    %vm931 = vcmask 31744
    %s932 = scalar_lea.vmem [#allocation0], 1154
    %933 = vst.msk [vmem:[%s932] ss:$8 sm:$0xf] %vm931, %v930
    %s934 = scalar_lea.vmem [#allocation0], 1154
    %935 = vst.msk [vmem:[%s934] ss:$8 sm:$0xf0] %vm931, %v930
    %s936 = scalar_lea.vmem %s0, 152
    %v937 = vld [vmem:[%s936] sm:$0xff]
    %938 = vrot.lane.b32.xlu0 %v937, 120
    %v939 = vpop.permute.xlu0 %938
    %vm940 = vcmask 31744
    %s941 = scalar_lea.vmem [#allocation0], 1218
    %942 = vst.msk [vmem:[%s941] ss:$8 sm:$0xf] %vm940, %v939
    %s943 = scalar_lea.vmem [#allocation0], 1218
    %944 = vst.msk [vmem:[%s943] ss:$8 sm:$0xf0] %vm940, %v939
    %s945 = scalar_lea.vmem %s0, 160
    %v946 = vld [vmem:[%s945] sm:$0xff]
    %947 = vrot.lane.b32.xlu0 %v946, 120
    %v948 = vpop.permute.xlu0 %947
    %vm949 = vcmask 31744
    %s950 = scalar_lea.vmem [#allocation0], 1282
    %951 = vst.msk [vmem:[%s950] ss:$8 sm:$0xf] %vm949, %v948
    %s952 = scalar_lea.vmem [#allocation0], 1282
    %953 = vst.msk [vmem:[%s952] ss:$8 sm:$0xf0] %vm949, %v948
    %s954 = scalar_lea.vmem %s0, 168
    %v955 = vld [vmem:[%s954] sm:$0xff]
    %956 = vrot.lane.b32.xlu0 %v955, 120
    %v957 = vpop.permute.xlu0 %956
    %vm958 = vcmask 31744
    %s959 = scalar_lea.vmem [#allocation0], 1346
    %960 = vst.msk [vmem:[%s959] ss:$8 sm:$0xf] %vm958, %v957
    %s961 = scalar_lea.vmem [#allocation0], 1346
    %962 = vst.msk [vmem:[%s961] ss:$8 sm:$0xf0] %vm958, %v957
    %s963 = scalar_lea.vmem %s0, 176
    %v964 = vld [vmem:[%s963] sm:$0xff]
    %965 = vrot.lane.b32.xlu0 %v964, 120
    %v966 = vpop.permute.xlu0 %965
    %vm967 = vcmask 31744
    %s968 = scalar_lea.vmem [#allocation0], 1410
    %969 = vst.msk [vmem:[%s968] ss:$8 sm:$0xf] %vm967, %v966
    %s970 = scalar_lea.vmem [#allocation0], 1410
    %971 = vst.msk [vmem:[%s970] ss:$8 sm:$0xf0] %vm967, %v966
    %s972 = scalar_lea.vmem %s0, 184
    %v973 = vld [vmem:[%s972] sm:$0xff]
    %974 = vrot.lane.b32.xlu0 %v973, 120
    %v975 = vpop.permute.xlu0 %974
    %vm976 = vcmask 31744
    %s977 = scalar_lea.vmem [#allocation0], 1474
    %978 = vst.msk [vmem:[%s977] ss:$8 sm:$0xf] %vm976, %v975
    %s979 = scalar_lea.vmem [#allocation0], 1474
    %980 = vst.msk [vmem:[%s979] ss:$8 sm:$0xf0] %vm976, %v975
    %s981 = scalar_lea.vmem %s0, 192
    %v982 = vld [vmem:[%s981] sm:$0xff]
    %983 = vrot.lane.b32.xlu0 %v982, 120
    %v984 = vpop.permute.xlu0 %983
    %vm985 = vcmask 31744
    %s986 = scalar_lea.vmem [#allocation0], 1538
    %987 = vst.msk [vmem:[%s986] ss:$8 sm:$0xf] %vm985, %v984
    %s988 = scalar_lea.vmem [#allocation0], 1538
    %989 = vst.msk [vmem:[%s988] ss:$8 sm:$0xf0] %vm985, %v984
    %s990 = scalar_lea.vmem %s0, 200
    %v991 = vld [vmem:[%s990] sm:$0xff]
    %992 = vrot.lane.b32.xlu0 %v991, 120
    %v993 = vpop.permute.xlu0 %992
    %vm994 = vcmask 31744
    %s995 = scalar_lea.vmem [#allocation0], 1602
    %996 = vst.msk [vmem:[%s995] ss:$8 sm:$0xf] %vm994, %v993
    %s997 = scalar_lea.vmem [#allocation0], 1602
    %998 = vst.msk [vmem:[%s997] ss:$8 sm:$0xf0] %vm994, %v993
    %s999 = scalar_lea.vmem %s0, 208
    %v1000 = vld [vmem:[%s999] sm:$0xff]
    %1001 = vrot.lane.b32.xlu0 %v1000, 120
    %v1002 = vpop.permute.xlu0 %1001
    %vm1003 = vcmask 31744
    %s1004 = scalar_lea.vmem [#allocation0], 1666
    %1005 = vst.msk [vmem:[%s1004] ss:$8 sm:$0xf] %vm1003, %v1002
    %s1006 = scalar_lea.vmem [#allocation0], 1666
    %1007 = vst.msk [vmem:[%s1006] ss:$8 sm:$0xf0] %vm1003, %v1002
    %s1008 = scalar_lea.vmem %s0, 216
    %v1009 = vld [vmem:[%s1008] sm:$0xff]
    %1010 = vrot.lane.b32.xlu0 %v1009, 120
    %v1011 = vpop.permute.xlu0 %1010
    %vm1012 = vcmask 31744
    %s1013 = scalar_lea.vmem [#allocation0], 1730
    %1014 = vst.msk [vmem:[%s1013] ss:$8 sm:$0xf] %vm1012, %v1011
    %s1015 = scalar_lea.vmem [#allocation0], 1730
    %1016 = vst.msk [vmem:[%s1015] ss:$8 sm:$0xf0] %vm1012, %v1011
    %s1017 = scalar_lea.vmem %s0, 224
    %v1018 = vld [vmem:[%s1017] sm:$0xff]
    %1019 = vrot.lane.b32.xlu0 %v1018, 120
    %v1020 = vpop.permute.xlu0 %1019
    %vm1021 = vcmask 31744
    %s1022 = scalar_lea.vmem [#allocation0], 1794
    %1023 = vst.msk [vmem:[%s1022] ss:$8 sm:$0xf] %vm1021, %v1020
    %s1024 = scalar_lea.vmem [#allocation0], 1794
    %1025 = vst.msk [vmem:[%s1024] ss:$8 sm:$0xf0] %vm1021, %v1020
    %s1026 = scalar_lea.vmem %s0, 232
    %v1027 = vld [vmem:[%s1026] sm:$0xff]
    %1028 = vrot.lane.b32.xlu0 %v1027, 120
    %v1029 = vpop.permute.xlu0 %1028
    %vm1030 = vcmask 31744
    %s1031 = scalar_lea.vmem [#allocation0], 1858
    %1032 = vst.msk [vmem:[%s1031] ss:$8 sm:$0xf] %vm1030, %v1029
    %s1033 = scalar_lea.vmem [#allocation0], 1858
    %1034 = vst.msk [vmem:[%s1033] ss:$8 sm:$0xf0] %vm1030, %v1029
    %s1035 = scalar_lea.vmem %s0, 240
    %v1036 = vld [vmem:[%s1035] sm:$0xff]
    %1037 = vrot.lane.b32.xlu0 %v1036, 120
    %v1038 = vpop.permute.xlu0 %1037
    %vm1039 = vcmask 31744
    %s1040 = scalar_lea.vmem [#allocation0], 1922
    %1041 = vst.msk [vmem:[%s1040] ss:$8 sm:$0xf] %vm1039, %v1038
    %s1042 = scalar_lea.vmem [#allocation0], 1922
    %1043 = vst.msk [vmem:[%s1042] ss:$8 sm:$0xf0] %vm1039, %v1038
    %s1044 = scalar_lea.vmem %s0, 248
    %v1045 = vld [vmem:[%s1044] sm:$0xff]
    %1046 = vrot.lane.b32.xlu0 %v1045, 120
    %v1047 = vpop.permute.xlu0 %1046
    %vm1048 = vcmask 31744
    %s1049 = scalar_lea.vmem [#allocation0], 1986
    %1050 = vst.msk [vmem:[%s1049] ss:$8 sm:$0xf] %vm1048, %v1047
    %s1051 = scalar_lea.vmem [#allocation0], 1986
    %1052 = vst.msk [vmem:[%s1051] ss:$8 sm:$0xf0] %vm1048, %v1047
    %s1053 = scalar_lea.vmem %s0, 256
    %v1054 = vld [vmem:[%s1053] sm:$0xff]
    %1055 = vrot.lane.b32.xlu0 %v1054, 120
    %v1056 = vpop.permute.xlu0 %1055
    %vm1057 = vcmask 31744
    %s1058 = scalar_lea.vmem [#allocation0], 2050
    %1059 = vst.msk [vmem:[%s1058] ss:$8 sm:$0xf] %vm1057, %v1056
    %s1060 = scalar_lea.vmem [#allocation0], 2050
    %1061 = vst.msk [vmem:[%s1060] ss:$8 sm:$0xf0] %vm1057, %v1056
    %s1062 = scalar_lea.vmem %s0, 264
    %v1063 = vld [vmem:[%s1062] sm:$0xff]
    %1064 = vrot.lane.b32.xlu0 %v1063, 120
    %v1065 = vpop.permute.xlu0 %1064
    %vm1066 = vcmask 31744
    %s1067 = scalar_lea.vmem [#allocation0], 2114
    %1068 = vst.msk [vmem:[%s1067] ss:$8 sm:$0xf] %vm1066, %v1065
    %s1069 = scalar_lea.vmem [#allocation0], 2114
    %1070 = vst.msk [vmem:[%s1069] ss:$8 sm:$0xf0] %vm1066, %v1065
    %s1071 = scalar_lea.vmem %s0, 272
    %v1072 = vld [vmem:[%s1071] sm:$0xff]
    %1073 = vrot.lane.b32.xlu0 %v1072, 120
    %v1074 = vpop.permute.xlu0 %1073
    %vm1075 = vcmask 31744
    %s1076 = scalar_lea.vmem [#allocation0], 2178
    %1077 = vst.msk [vmem:[%s1076] ss:$8 sm:$0xf] %vm1075, %v1074
    %s1078 = scalar_lea.vmem [#allocation0], 2178
    %1079 = vst.msk [vmem:[%s1078] ss:$8 sm:$0xf0] %vm1075, %v1074
    %s1080 = scalar_lea.vmem %s0, 280
    %v1081 = vld [vmem:[%s1080] sm:$0xff]
    %1082 = vrot.lane.b32.xlu0 %v1081, 120
    %v1083 = vpop.permute.xlu0 %1082
    %vm1084 = vcmask 31744
    %s1085 = scalar_lea.vmem [#allocation0], 2242
    %1086 = vst.msk [vmem:[%s1085] ss:$8 sm:$0xf] %vm1084, %v1083
    %s1087 = scalar_lea.vmem [#allocation0], 2242
    %1088 = vst.msk [vmem:[%s1087] ss:$8 sm:$0xf0] %vm1084, %v1083
    %s1089 = scalar_lea.vmem %s0, 288
    %v1090 = vld [vmem:[%s1089] sm:$0xff]
    %1091 = vrot.lane.b32.xlu0 %v1090, 120
    %v1092 = vpop.permute.xlu0 %1091
    %vm1093 = vcmask 31744
    %s1094 = scalar_lea.vmem [#allocation0], 2306
    %1095 = vst.msk [vmem:[%s1094] ss:$8 sm:$0xf] %vm1093, %v1092
    %s1096 = scalar_lea.vmem [#allocation0], 2306
    %1097 = vst.msk [vmem:[%s1096] ss:$8 sm:$0xf0] %vm1093, %v1092
    %s1098 = scalar_lea.vmem %s0, 296
    %v1099 = vld [vmem:[%s1098] sm:$0xff]
    %1100 = vrot.lane.b32.xlu0 %v1099, 120
    %v1101 = vpop.permute.xlu0 %1100
    %vm1102 = vcmask 31744
    %s1103 = scalar_lea.vmem [#allocation0], 2370
    %1104 = vst.msk [vmem:[%s1103] ss:$8 sm:$0xf] %vm1102, %v1101
    %s1105 = scalar_lea.vmem [#allocation0], 2370
    %1106 = vst.msk [vmem:[%s1105] ss:$8 sm:$0xf0] %vm1102, %v1101
    %s1107 = scalar_lea.vmem %s0, 304
    %v1108 = vld [vmem:[%s1107] sm:$0xff]
    %1109 = vrot.lane.b32.xlu0 %v1108, 120
    %v1110 = vpop.permute.xlu0 %1109
    %vm1111 = vcmask 31744
    %s1112 = scalar_lea.vmem [#allocation0], 2434
    %1113 = vst.msk [vmem:[%s1112] ss:$8 sm:$0xf] %vm1111, %v1110
    %s1114 = scalar_lea.vmem [#allocation0], 2434
    %1115 = vst.msk [vmem:[%s1114] ss:$8 sm:$0xf0] %vm1111, %v1110
    %s1116 = scalar_lea.vmem %s0, 312
    %v1117 = vld [vmem:[%s1116] sm:$0xff]
    %1118 = vrot.lane.b32.xlu0 %v1117, 120
    %v1119 = vpop.permute.xlu0 %1118
    %vm1120 = vcmask 31744
    %s1121 = scalar_lea.vmem [#allocation0], 2498
    %1122 = vst.msk [vmem:[%s1121] ss:$8 sm:$0xf] %vm1120, %v1119
    %s1123 = scalar_lea.vmem [#allocation0], 2498
    %1124 = vst.msk [vmem:[%s1123] ss:$8 sm:$0xf0] %vm1120, %v1119
    %s1125 = scalar_lea.vmem %s0, 320
    %v1126 = vld [vmem:[%s1125] sm:$0xff]
    %1127 = vrot.lane.b32.xlu0 %v1126, 120
    %v1128 = vpop.permute.xlu0 %1127
    %vm1129 = vcmask 31744
    %s1130 = scalar_lea.vmem [#allocation0], 2562
    %1131 = vst.msk [vmem:[%s1130] ss:$8 sm:$0xf] %vm1129, %v1128
    %s1132 = scalar_lea.vmem [#allocation0], 2562
    %1133 = vst.msk [vmem:[%s1132] ss:$8 sm:$0xf0] %vm1129, %v1128
    %s1134 = scalar_lea.vmem %s0, 328
    %v1135 = vld [vmem:[%s1134] sm:$0xff]
    %1136 = vrot.lane.b32.xlu0 %v1135, 120
    %v1137 = vpop.permute.xlu0 %1136
    %vm1138 = vcmask 31744
    %s1139 = scalar_lea.vmem [#allocation0], 2626
    %1140 = vst.msk [vmem:[%s1139] ss:$8 sm:$0xf] %vm1138, %v1137
    %s1141 = scalar_lea.vmem [#allocation0], 2626
    %1142 = vst.msk [vmem:[%s1141] ss:$8 sm:$0xf0] %vm1138, %v1137
    %s1143 = scalar_lea.vmem %s0, 336
    %v1144 = vld [vmem:[%s1143] sm:$0xff]
    %1145 = vrot.lane.b32.xlu0 %v1144, 120
    %v1146 = vpop.permute.xlu0 %1145
    %vm1147 = vcmask 31744
    %s1148 = scalar_lea.vmem [#allocation0], 2690
    %1149 = vst.msk [vmem:[%s1148] ss:$8 sm:$0xf] %vm1147, %v1146
    %s1150 = scalar_lea.vmem [#allocation0], 2690
    %1151 = vst.msk [vmem:[%s1150] ss:$8 sm:$0xf0] %vm1147, %v1146
    %s1152 = scalar_lea.vmem %s0, 344
    %v1153 = vld [vmem:[%s1152] sm:$0xff]
    %1154 = vrot.lane.b32.xlu0 %v1153, 120
    %v1155 = vpop.permute.xlu0 %1154
    %vm1156 = vcmask 31744
    %s1157 = scalar_lea.vmem [#allocation0], 2754
    %1158 = vst.msk [vmem:[%s1157] ss:$8 sm:$0xf] %vm1156, %v1155
    %s1159 = scalar_lea.vmem [#allocation0], 2754
    %1160 = vst.msk [vmem:[%s1159] ss:$8 sm:$0xf0] %vm1156, %v1155
    %s1161 = scalar_lea.vmem %s0, 352
    %v1162 = vld [vmem:[%s1161] sm:$0xff]
    %1163 = vrot.lane.b32.xlu0 %v1162, 120
    %v1164 = vpop.permute.xlu0 %1163
    %vm1165 = vcmask 31744
    %s1166 = scalar_lea.vmem [#allocation0], 2818
    %1167 = vst.msk [vmem:[%s1166] ss:$8 sm:$0xf] %vm1165, %v1164
    %s1168 = scalar_lea.vmem [#allocation0], 2818
    %1169 = vst.msk [vmem:[%s1168] ss:$8 sm:$0xf0] %vm1165, %v1164
    %s1170 = scalar_lea.vmem %s0, 360
    %v1171 = vld [vmem:[%s1170] sm:$0xff]
    %1172 = vrot.lane.b32.xlu0 %v1171, 120
    %v1173 = vpop.permute.xlu0 %1172
    %vm1174 = vcmask 31744
    %s1175 = scalar_lea.vmem [#allocation0], 2882
    %1176 = vst.msk [vmem:[%s1175] ss:$8 sm:$0xf] %vm1174, %v1173
    %s1177 = scalar_lea.vmem [#allocation0], 2882
    %1178 = vst.msk [vmem:[%s1177] ss:$8 sm:$0xf0] %vm1174, %v1173
    %s1179 = scalar_lea.vmem %s0, 368
    %v1180 = vld [vmem:[%s1179] sm:$0xff]
    %1181 = vrot.lane.b32.xlu0 %v1180, 120
    %v1182 = vpop.permute.xlu0 %1181
    %vm1183 = vcmask 31744
    %s1184 = scalar_lea.vmem [#allocation0], 2946
    %1185 = vst.msk [vmem:[%s1184] ss:$8 sm:$0xf] %vm1183, %v1182
    %s1186 = scalar_lea.vmem [#allocation0], 2946
    %1187 = vst.msk [vmem:[%s1186] ss:$8 sm:$0xf0] %vm1183, %v1182
    %s1188 = scalar_lea.vmem %s0, 376
    %v1189 = vld [vmem:[%s1188] sm:$0xff]
    %1190 = vrot.lane.b32.xlu0 %v1189, 120
    %v1191 = vpop.permute.xlu0 %1190
    %vm1192 = vcmask 31744
    %s1193 = scalar_lea.vmem [#allocation0], 3010
    %1194 = vst.msk [vmem:[%s1193] ss:$8 sm:$0xf] %vm1192, %v1191
    %s1195 = scalar_lea.vmem [#allocation0], 3010
    %1196 = vst.msk [vmem:[%s1195] ss:$8 sm:$0xf0] %vm1192, %v1191
    %v1197 = vld [vmem:[%s0] sm:$0xff]
    %1198 = vrot.lane.b32.xlu0 %v1197, 116
    %v1199 = vpop.permute.xlu0 %1198
    %vm1200 = vcmask 31744
    %s1201 = scalar_lea.vmem [#allocation0], 3
    %1202 = vst.msk [vmem:[%s1201] ss:$8 sm:$0xf] %vm1200, %v1199
    %s1203 = scalar_lea.vmem [#allocation0], 3
    %1204 = vst.msk [vmem:[%s1203] ss:$8 sm:$0xf0] %vm1200, %v1199
    %s1205 = scalar_lea.vmem %s0, 8
    %v1206 = vld [vmem:[%s1205] sm:$0xff]
    %1207 = vrot.lane.b32.xlu0 %v1206, 116
    %v1208 = vpop.permute.xlu0 %1207
    %vm1209 = vcmask 31744
    %s1210 = scalar_lea.vmem [#allocation0], 67
    %1211 = vst.msk [vmem:[%s1210] ss:$8 sm:$0xf] %vm1209, %v1208
    %s1212 = scalar_lea.vmem [#allocation0], 67
    %1213 = vst.msk [vmem:[%s1212] ss:$8 sm:$0xf0] %vm1209, %v1208
    %s1214 = scalar_lea.vmem %s0, 16
    %v1215 = vld [vmem:[%s1214] sm:$0xff]
    %1216 = vrot.lane.b32.xlu0 %v1215, 116
    %v1217 = vpop.permute.xlu0 %1216
    %vm1218 = vcmask 31744
    %s1219 = scalar_lea.vmem [#allocation0], 131
    %1220 = vst.msk [vmem:[%s1219] ss:$8 sm:$0xf] %vm1218, %v1217
    %s1221 = scalar_lea.vmem [#allocation0], 131
    %1222 = vst.msk [vmem:[%s1221] ss:$8 sm:$0xf0] %vm1218, %v1217
    %s1223 = scalar_lea.vmem %s0, 24
    %v1224 = vld [vmem:[%s1223] sm:$0xff]
    %1225 = vrot.lane.b32.xlu0 %v1224, 116
    %v1226 = vpop.permute.xlu0 %1225
    %vm1227 = vcmask 31744
    %s1228 = scalar_lea.vmem [#allocation0], 195
    %1229 = vst.msk [vmem:[%s1228] ss:$8 sm:$0xf] %vm1227, %v1226
    %s1230 = scalar_lea.vmem [#allocation0], 195
    %1231 = vst.msk [vmem:[%s1230] ss:$8 sm:$0xf0] %vm1227, %v1226
    %s1232 = scalar_lea.vmem %s0, 32
    %v1233 = vld [vmem:[%s1232] sm:$0xff]
    %1234 = vrot.lane.b32.xlu0 %v1233, 116
    %v1235 = vpop.permute.xlu0 %1234
    %vm1236 = vcmask 31744
    %s1237 = scalar_lea.vmem [#allocation0], 259
    %1238 = vst.msk [vmem:[%s1237] ss:$8 sm:$0xf] %vm1236, %v1235
    %s1239 = scalar_lea.vmem [#allocation0], 259
    %1240 = vst.msk [vmem:[%s1239] ss:$8 sm:$0xf0] %vm1236, %v1235
    %s1241 = scalar_lea.vmem %s0, 40
    %v1242 = vld [vmem:[%s1241] sm:$0xff]
    %1243 = vrot.lane.b32.xlu0 %v1242, 116
    %v1244 = vpop.permute.xlu0 %1243
    %vm1245 = vcmask 31744
    %s1246 = scalar_lea.vmem [#allocation0], 323
    %1247 = vst.msk [vmem:[%s1246] ss:$8 sm:$0xf] %vm1245, %v1244
    %s1248 = scalar_lea.vmem [#allocation0], 323
    %1249 = vst.msk [vmem:[%s1248] ss:$8 sm:$0xf0] %vm1245, %v1244
    %s1250 = scalar_lea.vmem %s0, 48
    %v1251 = vld [vmem:[%s1250] sm:$0xff]
    %1252 = vrot.lane.b32.xlu0 %v1251, 116
    %v1253 = vpop.permute.xlu0 %1252
    %vm1254 = vcmask 31744
    %s1255 = scalar_lea.vmem [#allocation0], 387
    %1256 = vst.msk [vmem:[%s1255] ss:$8 sm:$0xf] %vm1254, %v1253
    %s1257 = scalar_lea.vmem [#allocation0], 387
    %1258 = vst.msk [vmem:[%s1257] ss:$8 sm:$0xf0] %vm1254, %v1253
    %s1259 = scalar_lea.vmem %s0, 56
    %v1260 = vld [vmem:[%s1259] sm:$0xff]
    %1261 = vrot.lane.b32.xlu0 %v1260, 116
    %v1262 = vpop.permute.xlu0 %1261
    %vm1263 = vcmask 31744
    %s1264 = scalar_lea.vmem [#allocation0], 451
    %1265 = vst.msk [vmem:[%s1264] ss:$8 sm:$0xf] %vm1263, %v1262
    %s1266 = scalar_lea.vmem [#allocation0], 451
    %1267 = vst.msk [vmem:[%s1266] ss:$8 sm:$0xf0] %vm1263, %v1262
    %s1268 = scalar_lea.vmem %s0, 64
    %v1269 = vld [vmem:[%s1268] sm:$0xff]
    %1270 = vrot.lane.b32.xlu0 %v1269, 116
    %v1271 = vpop.permute.xlu0 %1270
    %vm1272 = vcmask 31744
    %s1273 = scalar_lea.vmem [#allocation0], 515
    %1274 = vst.msk [vmem:[%s1273] ss:$8 sm:$0xf] %vm1272, %v1271
    %s1275 = scalar_lea.vmem [#allocation0], 515
    %1276 = vst.msk [vmem:[%s1275] ss:$8 sm:$0xf0] %vm1272, %v1271
    %s1277 = scalar_lea.vmem %s0, 72
    %v1278 = vld [vmem:[%s1277] sm:$0xff]
    %1279 = vrot.lane.b32.xlu0 %v1278, 116
    %v1280 = vpop.permute.xlu0 %1279
    %vm1281 = vcmask 31744
    %s1282 = scalar_lea.vmem [#allocation0], 579
    %1283 = vst.msk [vmem:[%s1282] ss:$8 sm:$0xf] %vm1281, %v1280
    %s1284 = scalar_lea.vmem [#allocation0], 579
    %1285 = vst.msk [vmem:[%s1284] ss:$8 sm:$0xf0] %vm1281, %v1280
    %s1286 = scalar_lea.vmem %s0, 80
    %v1287 = vld [vmem:[%s1286] sm:$0xff]
    %1288 = vrot.lane.b32.xlu0 %v1287, 116
    %v1289 = vpop.permute.xlu0 %1288
    %vm1290 = vcmask 31744
    %s1291 = scalar_lea.vmem [#allocation0], 643
    %1292 = vst.msk [vmem:[%s1291] ss:$8 sm:$0xf] %vm1290, %v1289
    %s1293 = scalar_lea.vmem [#allocation0], 643
    %1294 = vst.msk [vmem:[%s1293] ss:$8 sm:$0xf0] %vm1290, %v1289
    %s1295 = scalar_lea.vmem %s0, 88
    %v1296 = vld [vmem:[%s1295] sm:$0xff]
    %1297 = vrot.lane.b32.xlu0 %v1296, 116
    %v1298 = vpop.permute.xlu0 %1297
    %vm1299 = vcmask 31744
    %s1300 = scalar_lea.vmem [#allocation0], 707
    %1301 = vst.msk [vmem:[%s1300] ss:$8 sm:$0xf] %vm1299, %v1298
    %s1302 = scalar_lea.vmem [#allocation0], 707
    %1303 = vst.msk [vmem:[%s1302] ss:$8 sm:$0xf0] %vm1299, %v1298
    %s1304 = scalar_lea.vmem %s0, 96
    %v1305 = vld [vmem:[%s1304] sm:$0xff]
    %1306 = vrot.lane.b32.xlu0 %v1305, 116
    %v1307 = vpop.permute.xlu0 %1306
    %vm1308 = vcmask 31744
    %s1309 = scalar_lea.vmem [#allocation0], 771
    %1310 = vst.msk [vmem:[%s1309] ss:$8 sm:$0xf] %vm1308, %v1307
    %s1311 = scalar_lea.vmem [#allocation0], 771
    %1312 = vst.msk [vmem:[%s1311] ss:$8 sm:$0xf0] %vm1308, %v1307
    %s1313 = scalar_lea.vmem %s0, 104
    %v1314 = vld [vmem:[%s1313] sm:$0xff]
    %1315 = vrot.lane.b32.xlu0 %v1314, 116
    %v1316 = vpop.permute.xlu0 %1315
    %vm1317 = vcmask 31744
    %s1318 = scalar_lea.vmem [#allocation0], 835
    %1319 = vst.msk [vmem:[%s1318] ss:$8 sm:$0xf] %vm1317, %v1316
    %s1320 = scalar_lea.vmem [#allocation0], 835
    %1321 = vst.msk [vmem:[%s1320] ss:$8 sm:$0xf0] %vm1317, %v1316
    %s1322 = scalar_lea.vmem %s0, 112
    %v1323 = vld [vmem:[%s1322] sm:$0xff]
    %1324 = vrot.lane.b32.xlu0 %v1323, 116
    %v1325 = vpop.permute.xlu0 %1324
    %vm1326 = vcmask 31744
    %s1327 = scalar_lea.vmem [#allocation0], 899
    %1328 = vst.msk [vmem:[%s1327] ss:$8 sm:$0xf] %vm1326, %v1325
    %s1329 = scalar_lea.vmem [#allocation0], 899
    %1330 = vst.msk [vmem:[%s1329] ss:$8 sm:$0xf0] %vm1326, %v1325
    %s1331 = scalar_lea.vmem %s0, 120
    %v1332 = vld [vmem:[%s1331] sm:$0xff]
    %1333 = vrot.lane.b32.xlu0 %v1332, 116
    %v1334 = vpop.permute.xlu0 %1333
    %vm1335 = vcmask 31744
    %s1336 = scalar_lea.vmem [#allocation0], 963
    %1337 = vst.msk [vmem:[%s1336] ss:$8 sm:$0xf] %vm1335, %v1334
    %s1338 = scalar_lea.vmem [#allocation0], 963
    %1339 = vst.msk [vmem:[%s1338] ss:$8 sm:$0xf0] %vm1335, %v1334
    %s1340 = scalar_lea.vmem %s0, 128
    %v1341 = vld [vmem:[%s1340] sm:$0xff]
    %1342 = vrot.lane.b32.xlu0 %v1341, 116
    %v1343 = vpop.permute.xlu0 %1342
    %vm1344 = vcmask 31744
    %s1345 = scalar_lea.vmem [#allocation0], 1027
    %1346 = vst.msk [vmem:[%s1345] ss:$8 sm:$0xf] %vm1344, %v1343
    %s1347 = scalar_lea.vmem [#allocation0], 1027
    %1348 = vst.msk [vmem:[%s1347] ss:$8 sm:$0xf0] %vm1344, %v1343
    %s1349 = scalar_lea.vmem %s0, 136
    %v1350 = vld [vmem:[%s1349] sm:$0xff]
    %1351 = vrot.lane.b32.xlu0 %v1350, 116
    %v1352 = vpop.permute.xlu0 %1351
    %vm1353 = vcmask 31744
    %s1354 = scalar_lea.vmem [#allocation0], 1091
    %1355 = vst.msk [vmem:[%s1354] ss:$8 sm:$0xf] %vm1353, %v1352
    %s1356 = scalar_lea.vmem [#allocation0], 1091
    %1357 = vst.msk [vmem:[%s1356] ss:$8 sm:$0xf0] %vm1353, %v1352
    %s1358 = scalar_lea.vmem %s0, 144
    %v1359 = vld [vmem:[%s1358] sm:$0xff]
    %1360 = vrot.lane.b32.xlu0 %v1359, 116
    %v1361 = vpop.permute.xlu0 %1360
    %vm1362 = vcmask 31744
    %s1363 = scalar_lea.vmem [#allocation0], 1155
    %1364 = vst.msk [vmem:[%s1363] ss:$8 sm:$0xf] %vm1362, %v1361
    %s1365 = scalar_lea.vmem [#allocation0], 1155
    %1366 = vst.msk [vmem:[%s1365] ss:$8 sm:$0xf0] %vm1362, %v1361
    %s1367 = scalar_lea.vmem %s0, 152
    %v1368 = vld [vmem:[%s1367] sm:$0xff]
    %1369 = vrot.lane.b32.xlu0 %v1368, 116
    %v1370 = vpop.permute.xlu0 %1369
    %vm1371 = vcmask 31744
    %s1372 = scalar_lea.vmem [#allocation0], 1219
    %1373 = vst.msk [vmem:[%s1372] ss:$8 sm:$0xf] %vm1371, %v1370
    %s1374 = scalar_lea.vmem [#allocation0], 1219
    %1375 = vst.msk [vmem:[%s1374] ss:$8 sm:$0xf0] %vm1371, %v1370
    %s1376 = scalar_lea.vmem %s0, 160
    %v1377 = vld [vmem:[%s1376] sm:$0xff]
    %1378 = vrot.lane.b32.xlu0 %v1377, 116
    %v1379 = vpop.permute.xlu0 %1378
    %vm1380 = vcmask 31744
    %s1381 = scalar_lea.vmem [#allocation0], 1283
    %1382 = vst.msk [vmem:[%s1381] ss:$8 sm:$0xf] %vm1380, %v1379
    %s1383 = scalar_lea.vmem [#allocation0], 1283
    %1384 = vst.msk [vmem:[%s1383] ss:$8 sm:$0xf0] %vm1380, %v1379
    %s1385 = scalar_lea.vmem %s0, 168
    %v1386 = vld [vmem:[%s1385] sm:$0xff]
    %1387 = vrot.lane.b32.xlu0 %v1386, 116
    %v1388 = vpop.permute.xlu0 %1387
    %vm1389 = vcmask 31744
    %s1390 = scalar_lea.vmem [#allocation0], 1347
    %1391 = vst.msk [vmem:[%s1390] ss:$8 sm:$0xf] %vm1389, %v1388
    %s1392 = scalar_lea.vmem [#allocation0], 1347
    %1393 = vst.msk [vmem:[%s1392] ss:$8 sm:$0xf0] %vm1389, %v1388
    %s1394 = scalar_lea.vmem %s0, 176
    %v1395 = vld [vmem:[%s1394] sm:$0xff]
    %1396 = vrot.lane.b32.xlu0 %v1395, 116
    %v1397 = vpop.permute.xlu0 %1396
    %vm1398 = vcmask 31744
    %s1399 = scalar_lea.vmem [#allocation0], 1411
    %1400 = vst.msk [vmem:[%s1399] ss:$8 sm:$0xf] %vm1398, %v1397
    %s1401 = scalar_lea.vmem [#allocation0], 1411
    %1402 = vst.msk [vmem:[%s1401] ss:$8 sm:$0xf0] %vm1398, %v1397
    %s1403 = scalar_lea.vmem %s0, 184
    %v1404 = vld [vmem:[%s1403] sm:$0xff]
    %1405 = vrot.lane.b32.xlu0 %v1404, 116
    %v1406 = vpop.permute.xlu0 %1405
    %vm1407 = vcmask 31744
    %s1408 = scalar_lea.vmem [#allocation0], 1475
    %1409 = vst.msk [vmem:[%s1408] ss:$8 sm:$0xf] %vm1407, %v1406
    %s1410 = scalar_lea.vmem [#allocation0], 1475
    %1411 = vst.msk [vmem:[%s1410] ss:$8 sm:$0xf0] %vm1407, %v1406
    %s1412 = scalar_lea.vmem %s0, 192
    %v1413 = vld [vmem:[%s1412] sm:$0xff]
    %1414 = vrot.lane.b32.xlu0 %v1413, 116
    %v1415 = vpop.permute.xlu0 %1414
    %vm1416 = vcmask 31744
    %s1417 = scalar_lea.vmem [#allocation0], 1539
    %1418 = vst.msk [vmem:[%s1417] ss:$8 sm:$0xf] %vm1416, %v1415
    %s1419 = scalar_lea.vmem [#allocation0], 1539
    %1420 = vst.msk [vmem:[%s1419] ss:$8 sm:$0xf0] %vm1416, %v1415
    %s1421 = scalar_lea.vmem %s0, 200
    %v1422 = vld [vmem:[%s1421] sm:$0xff]
    %1423 = vrot.lane.b32.xlu0 %v1422, 116
    %v1424 = vpop.permute.xlu0 %1423
    %vm1425 = vcmask 31744
    %s1426 = scalar_lea.vmem [#allocation0], 1603
    %1427 = vst.msk [vmem:[%s1426] ss:$8 sm:$0xf] %vm1425, %v1424
    %s1428 = scalar_lea.vmem [#allocation0], 1603
    %1429 = vst.msk [vmem:[%s1428] ss:$8 sm:$0xf0] %vm1425, %v1424
    %s1430 = scalar_lea.vmem %s0, 208
    %v1431 = vld [vmem:[%s1430] sm:$0xff]
    %1432 = vrot.lane.b32.xlu0 %v1431, 116
    %v1433 = vpop.permute.xlu0 %1432
    %vm1434 = vcmask 31744
    %s1435 = scalar_lea.vmem [#allocation0], 1667
    %1436 = vst.msk [vmem:[%s1435] ss:$8 sm:$0xf] %vm1434, %v1433
    %s1437 = scalar_lea.vmem [#allocation0], 1667
    %1438 = vst.msk [vmem:[%s1437] ss:$8 sm:$0xf0] %vm1434, %v1433
    %s1439 = scalar_lea.vmem %s0, 216
    %v1440 = vld [vmem:[%s1439] sm:$0xff]
    %1441 = vrot.lane.b32.xlu0 %v1440, 116
    %v1442 = vpop.permute.xlu0 %1441
    %vm1443 = vcmask 31744
    %s1444 = scalar_lea.vmem [#allocation0], 1731
    %1445 = vst.msk [vmem:[%s1444] ss:$8 sm:$0xf] %vm1443, %v1442
    %s1446 = scalar_lea.vmem [#allocation0], 1731
    %1447 = vst.msk [vmem:[%s1446] ss:$8 sm:$0xf0] %vm1443, %v1442
    %s1448 = scalar_lea.vmem %s0, 224
    %v1449 = vld [vmem:[%s1448] sm:$0xff]
    %1450 = vrot.lane.b32.xlu0 %v1449, 116
    %v1451 = vpop.permute.xlu0 %1450
    %vm1452 = vcmask 31744
    %s1453 = scalar_lea.vmem [#allocation0], 1795
    %1454 = vst.msk [vmem:[%s1453] ss:$8 sm:$0xf] %vm1452, %v1451
    %s1455 = scalar_lea.vmem [#allocation0], 1795
    %1456 = vst.msk [vmem:[%s1455] ss:$8 sm:$0xf0] %vm1452, %v1451
    %s1457 = scalar_lea.vmem %s0, 232
    %v1458 = vld [vmem:[%s1457] sm:$0xff]
    %1459 = vrot.lane.b32.xlu0 %v1458, 116
    %v1460 = vpop.permute.xlu0 %1459
    %vm1461 = vcmask 31744
    %s1462 = scalar_lea.vmem [#allocation0], 1859
    %1463 = vst.msk [vmem:[%s1462] ss:$8 sm:$0xf] %vm1461, %v1460
    %s1464 = scalar_lea.vmem [#allocation0], 1859
    %1465 = vst.msk [vmem:[%s1464] ss:$8 sm:$0xf0] %vm1461, %v1460
    %s1466 = scalar_lea.vmem %s0, 240
    %v1467 = vld [vmem:[%s1466] sm:$0xff]
    %1468 = vrot.lane.b32.xlu0 %v1467, 116
    %v1469 = vpop.permute.xlu0 %1468
    %vm1470 = vcmask 31744
    %s1471 = scalar_lea.vmem [#allocation0], 1923
    %1472 = vst.msk [vmem:[%s1471] ss:$8 sm:$0xf] %vm1470, %v1469
    %s1473 = scalar_lea.vmem [#allocation0], 1923
    %1474 = vst.msk [vmem:[%s1473] ss:$8 sm:$0xf0] %vm1470, %v1469
    %s1475 = scalar_lea.vmem %s0, 248
    %v1476 = vld [vmem:[%s1475] sm:$0xff]
    %1477 = vrot.lane.b32.xlu0 %v1476, 116
    %v1478 = vpop.permute.xlu0 %1477
    %vm1479 = vcmask 31744
    %s1480 = scalar_lea.vmem [#allocation0], 1987
    %1481 = vst.msk [vmem:[%s1480] ss:$8 sm:$0xf] %vm1479, %v1478
    %s1482 = scalar_lea.vmem [#allocation0], 1987
    %1483 = vst.msk [vmem:[%s1482] ss:$8 sm:$0xf0] %vm1479, %v1478
    %s1484 = scalar_lea.vmem %s0, 256
    %v1485 = vld [vmem:[%s1484] sm:$0xff]
    %1486 = vrot.lane.b32.xlu0 %v1485, 116
    %v1487 = vpop.permute.xlu0 %1486
    %vm1488 = vcmask 31744
    %s1489 = scalar_lea.vmem [#allocation0], 2051
    %1490 = vst.msk [vmem:[%s1489] ss:$8 sm:$0xf] %vm1488, %v1487
    %s1491 = scalar_lea.vmem [#allocation0], 2051
    %1492 = vst.msk [vmem:[%s1491] ss:$8 sm:$0xf0] %vm1488, %v1487
    %s1493 = scalar_lea.vmem %s0, 264
    %v1494 = vld [vmem:[%s1493] sm:$0xff]
    %1495 = vrot.lane.b32.xlu0 %v1494, 116
    %v1496 = vpop.permute.xlu0 %1495
    %vm1497 = vcmask 31744
    %s1498 = scalar_lea.vmem [#allocation0], 2115
    %1499 = vst.msk [vmem:[%s1498] ss:$8 sm:$0xf] %vm1497, %v1496
    %s1500 = scalar_lea.vmem [#allocation0], 2115
    %1501 = vst.msk [vmem:[%s1500] ss:$8 sm:$0xf0] %vm1497, %v1496
    %s1502 = scalar_lea.vmem %s0, 272
    %v1503 = vld [vmem:[%s1502] sm:$0xff]
    %1504 = vrot.lane.b32.xlu0 %v1503, 116
    %v1505 = vpop.permute.xlu0 %1504
    %vm1506 = vcmask 31744
    %s1507 = scalar_lea.vmem [#allocation0], 2179
    %1508 = vst.msk [vmem:[%s1507] ss:$8 sm:$0xf] %vm1506, %v1505
    %s1509 = scalar_lea.vmem [#allocation0], 2179
    %1510 = vst.msk [vmem:[%s1509] ss:$8 sm:$0xf0] %vm1506, %v1505
    %s1511 = scalar_lea.vmem %s0, 280
    %v1512 = vld [vmem:[%s1511] sm:$0xff]
    %1513 = vrot.lane.b32.xlu0 %v1512, 116
    %v1514 = vpop.permute.xlu0 %1513
    %vm1515 = vcmask 31744
    %s1516 = scalar_lea.vmem [#allocation0], 2243
    %1517 = vst.msk [vmem:[%s1516] ss:$8 sm:$0xf] %vm1515, %v1514
    %s1518 = scalar_lea.vmem [#allocation0], 2243
    %1519 = vst.msk [vmem:[%s1518] ss:$8 sm:$0xf0] %vm1515, %v1514
    %s1520 = scalar_lea.vmem %s0, 288
    %v1521 = vld [vmem:[%s1520] sm:$0xff]
    %1522 = vrot.lane.b32.xlu0 %v1521, 116
    %v1523 = vpop.permute.xlu0 %1522
    %vm1524 = vcmask 31744
    %s1525 = scalar_lea.vmem [#allocation0], 2307
    %1526 = vst.msk [vmem:[%s1525] ss:$8 sm:$0xf] %vm1524, %v1523
    %s1527 = scalar_lea.vmem [#allocation0], 2307
    %1528 = vst.msk [vmem:[%s1527] ss:$8 sm:$0xf0] %vm1524, %v1523
    %s1529 = scalar_lea.vmem %s0, 296
    %v1530 = vld [vmem:[%s1529] sm:$0xff]
    %1531 = vrot.lane.b32.xlu0 %v1530, 116
    %v1532 = vpop.permute.xlu0 %1531
    %vm1533 = vcmask 31744
    %s1534 = scalar_lea.vmem [#allocation0], 2371
    %1535 = vst.msk [vmem:[%s1534] ss:$8 sm:$0xf] %vm1533, %v1532
    %s1536 = scalar_lea.vmem [#allocation0], 2371
    %1537 = vst.msk [vmem:[%s1536] ss:$8 sm:$0xf0] %vm1533, %v1532
    %s1538 = scalar_lea.vmem %s0, 304
    %v1539 = vld [vmem:[%s1538] sm:$0xff]
    %1540 = vrot.lane.b32.xlu0 %v1539, 116
    %v1541 = vpop.permute.xlu0 %1540
    %vm1542 = vcmask 31744
    %s1543 = scalar_lea.vmem [#allocation0], 2435
    %1544 = vst.msk [vmem:[%s1543] ss:$8 sm:$0xf] %vm1542, %v1541
    %s1545 = scalar_lea.vmem [#allocation0], 2435
    %1546 = vst.msk [vmem:[%s1545] ss:$8 sm:$0xf0] %vm1542, %v1541
    %s1547 = scalar_lea.vmem %s0, 312
    %v1548 = vld [vmem:[%s1547] sm:$0xff]
    %1549 = vrot.lane.b32.xlu0 %v1548, 116
    %v1550 = vpop.permute.xlu0 %1549
    %vm1551 = vcmask 31744
    %s1552 = scalar_lea.vmem [#allocation0], 2499
    %1553 = vst.msk [vmem:[%s1552] ss:$8 sm:$0xf] %vm1551, %v1550
    %s1554 = scalar_lea.vmem [#allocation0], 2499
    %1555 = vst.msk [vmem:[%s1554] ss:$8 sm:$0xf0] %vm1551, %v1550
    %s1556 = scalar_lea.vmem %s0, 320
    %v1557 = vld [vmem:[%s1556] sm:$0xff]
    %1558 = vrot.lane.b32.xlu0 %v1557, 116
    %v1559 = vpop.permute.xlu0 %1558
    %vm1560 = vcmask 31744
    %s1561 = scalar_lea.vmem [#allocation0], 2563
    %1562 = vst.msk [vmem:[%s1561] ss:$8 sm:$0xf] %vm1560, %v1559
    %s1563 = scalar_lea.vmem [#allocation0], 2563
    %1564 = vst.msk [vmem:[%s1563] ss:$8 sm:$0xf0] %vm1560, %v1559
    %s1565 = scalar_lea.vmem %s0, 328
    %v1566 = vld [vmem:[%s1565] sm:$0xff]
    %1567 = vrot.lane.b32.xlu0 %v1566, 116
    %v1568 = vpop.permute.xlu0 %1567
    %vm1569 = vcmask 31744
    %s1570 = scalar_lea.vmem [#allocation0], 2627
    %1571 = vst.msk [vmem:[%s1570] ss:$8 sm:$0xf] %vm1569, %v1568
    %s1572 = scalar_lea.vmem [#allocation0], 2627
    %1573 = vst.msk [vmem:[%s1572] ss:$8 sm:$0xf0] %vm1569, %v1568
    %s1574 = scalar_lea.vmem %s0, 336
    %v1575 = vld [vmem:[%s1574] sm:$0xff]
    %1576 = vrot.lane.b32.xlu0 %v1575, 116
    %v1577 = vpop.permute.xlu0 %1576
    %vm1578 = vcmask 31744
    %s1579 = scalar_lea.vmem [#allocation0], 2691
    %1580 = vst.msk [vmem:[%s1579] ss:$8 sm:$0xf] %vm1578, %v1577
    %s1581 = scalar_lea.vmem [#allocation0], 2691
    %1582 = vst.msk [vmem:[%s1581] ss:$8 sm:$0xf0] %vm1578, %v1577
    %s1583 = scalar_lea.vmem %s0, 344
    %v1584 = vld [vmem:[%s1583] sm:$0xff]
    %1585 = vrot.lane.b32.xlu0 %v1584, 116
    %v1586 = vpop.permute.xlu0 %1585
    %vm1587 = vcmask 31744
    %s1588 = scalar_lea.vmem [#allocation0], 2755
    %1589 = vst.msk [vmem:[%s1588] ss:$8 sm:$0xf] %vm1587, %v1586
    %s1590 = scalar_lea.vmem [#allocation0], 2755
    %1591 = vst.msk [vmem:[%s1590] ss:$8 sm:$0xf0] %vm1587, %v1586
    %s1592 = scalar_lea.vmem %s0, 352
    %v1593 = vld [vmem:[%s1592] sm:$0xff]
    %1594 = vrot.lane.b32.xlu0 %v1593, 116
    %v1595 = vpop.permute.xlu0 %1594
    %vm1596 = vcmask 31744
    %s1597 = scalar_lea.vmem [#allocation0], 2819
    %1598 = vst.msk [vmem:[%s1597] ss:$8 sm:$0xf] %vm1596, %v1595
    %s1599 = scalar_lea.vmem [#allocation0], 2819
    %1600 = vst.msk [vmem:[%s1599] ss:$8 sm:$0xf0] %vm1596, %v1595
    %s1601 = scalar_lea.vmem %s0, 360
    %v1602 = vld [vmem:[%s1601] sm:$0xff]
    %1603 = vrot.lane.b32.xlu0 %v1602, 116
    %v1604 = vpop.permute.xlu0 %1603
    %vm1605 = vcmask 31744
    %s1606 = scalar_lea.vmem [#allocation0], 2883
    %1607 = vst.msk [vmem:[%s1606] ss:$8 sm:$0xf] %vm1605, %v1604
    %s1608 = scalar_lea.vmem [#allocation0], 2883
    %1609 = vst.msk [vmem:[%s1608] ss:$8 sm:$0xf0] %vm1605, %v1604
    %s1610 = scalar_lea.vmem %s0, 368
    %v1611 = vld [vmem:[%s1610] sm:$0xff]
    %1612 = vrot.lane.b32.xlu0 %v1611, 116
    %v1613 = vpop.permute.xlu0 %1612
    %vm1614 = vcmask 31744
    %s1615 = scalar_lea.vmem [#allocation0], 2947
    %1616 = vst.msk [vmem:[%s1615] ss:$8 sm:$0xf] %vm1614, %v1613
    %s1617 = scalar_lea.vmem [#allocation0], 2947
    %1618 = vst.msk [vmem:[%s1617] ss:$8 sm:$0xf0] %vm1614, %v1613
    %s1619 = scalar_lea.vmem %s0, 376
    %v1620 = vld [vmem:[%s1619] sm:$0xff]
    %1621 = vrot.lane.b32.xlu0 %v1620, 116
    %v1622 = vpop.permute.xlu0 %1621
    %vm1623 = vcmask 31744
    %s1624 = scalar_lea.vmem [#allocation0], 3011
    %1625 = vst.msk [vmem:[%s1624] ss:$8 sm:$0xf] %vm1623, %v1622
    %s1626 = scalar_lea.vmem [#allocation0], 3011
    %1627 = vst.msk [vmem:[%s1626] ss:$8 sm:$0xf0] %vm1623, %v1622
    %s1629 = sshllo.u32 0, 4
    %v1631 = vld [vmem:[#allocation0] sm:%s1629]
    %s1632 = sshllo.u32 0, 4
    %1633 = vst [vmem:[%s1] sm:%s1632] %v1631
    %s1634 = scalar_lea.vmem [#allocation0], 8
    %v1635 = vld [vmem:[%s1634] sm:%s1629]
    %s1636 = sshllo.u32 0, 4
    %s1637 = scalar_lea.vmem %s1, 4
    %1638 = vst [vmem:[%s1637] sm:%s1636] %v1635
    %s1639 = scalar_lea.vmem [#allocation0], 16
    %v1640 = vld [vmem:[%s1639] sm:%s1629]
    %s1641 = sshllo.u32 0, 4
    %s1642 = smul.addr 4, 2
    %s1643 = scalar_lea.vmem %s1, %s1642
    %1644 = vst [vmem:[%s1643] sm:%s1641] %v1640
    %s1645 = scalar_lea.vmem [#allocation0], 24
    %v1646 = vld [vmem:[%s1645] sm:%s1629]
    %s1647 = sshllo.u32 0, 4
    %s1648 = smul.addr 4, 3
    %s1649 = scalar_lea.vmem %s1, %s1648
    %1650 = vst [vmem:[%s1649] sm:%s1647] %v1646
    %s1651 = scalar_lea.vmem [#allocation0], 32
    %v1652 = vld [vmem:[%s1651] sm:%s1629]
    %s1653 = sshllo.u32 0, 4
    %s1654 = smul.addr 4, 4
    %s1655 = scalar_lea.vmem %s1, %s1654
    %1656 = vst [vmem:[%s1655] sm:%s1653] %v1652
    %s1657 = scalar_lea.vmem [#allocation0], 40
    %v1658 = vld [vmem:[%s1657] sm:%s1629]
    %s1659 = sshllo.u32 0, 4
    %s1660 = smul.addr 4, 5
    %s1661 = scalar_lea.vmem %s1, %s1660
    %1662 = vst [vmem:[%s1661] sm:%s1659] %v1658
    %s1663 = scalar_lea.vmem [#allocation0], 48
    %v1664 = vld [vmem:[%s1663] sm:%s1629]
    %s1665 = sshllo.u32 0, 4
    %s1666 = smul.addr 4, 6
    %s1667 = scalar_lea.vmem %s1, %s1666
    %1668 = vst [vmem:[%s1667] sm:%s1665] %v1664
    %s1669 = scalar_lea.vmem [#allocation0], 56
    %v1670 = vld [vmem:[%s1669] sm:%s1629]
    %s1671 = sshllo.u32 0, 4
    %s1672 = smul.addr 4, 7
    %s1673 = scalar_lea.vmem %s1, %s1672
    %1674 = vst [vmem:[%s1673] sm:%s1671] %v1670
    %s1675 = scalar_lea.vmem [#allocation0], 64
    %v1676 = vld [vmem:[%s1675] sm:%s1629]
    %s1677 = sshllo.u32 0, 4
    %s1678 = smul.addr 4, 8
    %s1679 = scalar_lea.vmem %s1, %s1678
    %1680 = vst [vmem:[%s1679] sm:%s1677] %v1676
    %s1681 = scalar_lea.vmem [#allocation0], 72
    %v1682 = vld [vmem:[%s1681] sm:%s1629]
    %s1683 = sshllo.u32 0, 4
    %s1684 = smul.addr 4, 9
    %s1685 = scalar_lea.vmem %s1, %s1684
    %1686 = vst [vmem:[%s1685] sm:%s1683] %v1682
    %s1687 = scalar_lea.vmem [#allocation0], 80
    %v1688 = vld [vmem:[%s1687] sm:%s1629]
    %s1689 = sshllo.u32 0, 4
    %s1690 = smul.addr 4, 10
    %s1691 = scalar_lea.vmem %s1, %s1690
    %1692 = vst [vmem:[%s1691] sm:%s1689] %v1688
    %s1693 = scalar_lea.vmem [#allocation0], 88
    %v1694 = vld [vmem:[%s1693] sm:%s1629]
    %s1695 = sshllo.u32 0, 4
    %s1696 = smul.addr 4, 11
    %s1697 = scalar_lea.vmem %s1, %s1696
    %1698 = vst [vmem:[%s1697] sm:%s1695] %v1694
    %s1699 = scalar_lea.vmem [#allocation0], 96
    %v1700 = vld [vmem:[%s1699] sm:%s1629]
    %s1701 = sshllo.u32 0, 4
    %s1702 = smul.addr 4, 12
    %s1703 = scalar_lea.vmem %s1, %s1702
    %1704 = vst [vmem:[%s1703] sm:%s1701] %v1700
    %s1705 = scalar_lea.vmem [#allocation0], 104
    %v1706 = vld [vmem:[%s1705] sm:%s1629]
    %s1707 = sshllo.u32 0, 4
    %s1708 = smul.addr 4, 13
    %s1709 = scalar_lea.vmem %s1, %s1708
    %1710 = vst [vmem:[%s1709] sm:%s1707] %v1706
    %s1711 = scalar_lea.vmem [#allocation0], 112
    %v1712 = vld [vmem:[%s1711] sm:%s1629]
    %s1713 = sshllo.u32 0, 4
    %s1714 = smul.addr 4, 14
    %s1715 = scalar_lea.vmem %s1, %s1714
    %1716 = vst [vmem:[%s1715] sm:%s1713] %v1712
    %s1717 = scalar_lea.vmem [#allocation0], 120
    %v1718 = vld [vmem:[%s1717] sm:%s1629]
    %s1719 = sshllo.u32 0, 4
    %s1720 = smul.addr 4, 15
    %s1721 = scalar_lea.vmem %s1, %s1720
    %1722 = vst [vmem:[%s1721] sm:%s1719] %v1718
    %s1723 = scalar_lea.vmem [#allocation0], 128
    %v1724 = vld [vmem:[%s1723] sm:%s1629]
    %s1725 = sshllo.u32 0, 4
    %s1726 = smul.addr 4, 16
    %s1727 = scalar_lea.vmem %s1, %s1726
    %1728 = vst [vmem:[%s1727] sm:%s1725] %v1724
    %s1729 = scalar_lea.vmem [#allocation0], 136
    %v1730 = vld [vmem:[%s1729] sm:%s1629]
    %s1731 = sshllo.u32 0, 4
    %s1732 = smul.addr 4, 17
    %s1733 = scalar_lea.vmem %s1, %s1732
    %1734 = vst [vmem:[%s1733] sm:%s1731] %v1730
    %s1735 = scalar_lea.vmem [#allocation0], 144
    %v1736 = vld [vmem:[%s1735] sm:%s1629]
    %s1737 = sshllo.u32 0, 4
    %s1738 = smul.addr 4, 18
    %s1739 = scalar_lea.vmem %s1, %s1738
    %1740 = vst [vmem:[%s1739] sm:%s1737] %v1736
    %s1741 = scalar_lea.vmem [#allocation0], 152
    %v1742 = vld [vmem:[%s1741] sm:%s1629]
    %s1743 = sshllo.u32 0, 4
    %s1744 = smul.addr 4, 19
    %s1745 = scalar_lea.vmem %s1, %s1744
    %1746 = vst [vmem:[%s1745] sm:%s1743] %v1742
    %s1747 = scalar_lea.vmem [#allocation0], 160
    %v1748 = vld [vmem:[%s1747] sm:%s1629]
    %s1749 = sshllo.u32 0, 4
    %s1750 = smul.addr 4, 20
    %s1751 = scalar_lea.vmem %s1, %s1750
    %1752 = vst [vmem:[%s1751] sm:%s1749] %v1748
    %s1753 = scalar_lea.vmem [#allocation0], 168
    %v1754 = vld [vmem:[%s1753] sm:%s1629]
    %s1755 = sshllo.u32 0, 4
    %s1756 = smul.addr 4, 21
    %s1757 = scalar_lea.vmem %s1, %s1756
    %1758 = vst [vmem:[%s1757] sm:%s1755] %v1754
    %s1759 = scalar_lea.vmem [#allocation0], 176
    %v1760 = vld [vmem:[%s1759] sm:%s1629]
    %s1761 = sshllo.u32 0, 4
    %s1762 = smul.addr 4, 22
    %s1763 = scalar_lea.vmem %s1, %s1762
    %1764 = vst [vmem:[%s1763] sm:%s1761] %v1760
    %s1765 = scalar_lea.vmem [#allocation0], 184
    %v1766 = vld [vmem:[%s1765] sm:%s1629]
    %s1767 = sshllo.u32 0, 4
    %s1768 = smul.addr 4, 23
    %s1769 = scalar_lea.vmem %s1, %s1768
    %1770 = vst [vmem:[%s1769] sm:%s1767] %v1766
    %s1771 = scalar_lea.vmem [#allocation0], 192
    %v1772 = vld [vmem:[%s1771] sm:%s1629]
    %s1773 = sshllo.u32 0, 4
    %s1774 = smul.addr 4, 24
    %s1775 = scalar_lea.vmem %s1, %s1774
    %1776 = vst [vmem:[%s1775] sm:%s1773] %v1772
    %s1777 = scalar_lea.vmem [#allocation0], 200
    %v1778 = vld [vmem:[%s1777] sm:%s1629]
    %s1779 = sshllo.u32 0, 4
    %s1780 = smul.addr 4, 25
    %s1781 = scalar_lea.vmem %s1, %s1780
    %1782 = vst [vmem:[%s1781] sm:%s1779] %v1778
    %s1783 = scalar_lea.vmem [#allocation0], 208
    %v1784 = vld [vmem:[%s1783] sm:%s1629]
    %s1785 = sshllo.u32 0, 4
    %s1786 = smul.addr 4, 26
    %s1787 = scalar_lea.vmem %s1, %s1786
    %1788 = vst [vmem:[%s1787] sm:%s1785] %v1784
    %s1789 = scalar_lea.vmem [#allocation0], 216
    %v1790 = vld [vmem:[%s1789] sm:%s1629]
    %s1791 = sshllo.u32 0, 4
    %s1792 = smul.addr 4, 27
    %s1793 = scalar_lea.vmem %s1, %s1792
    %1794 = vst [vmem:[%s1793] sm:%s1791] %v1790
    %s1795 = scalar_lea.vmem [#allocation0], 224
    %v1796 = vld [vmem:[%s1795] sm:%s1629]
    %s1797 = sshllo.u32 0, 4
    %s1798 = smul.addr 4, 28
    %s1799 = scalar_lea.vmem %s1, %s1798
    %1800 = vst [vmem:[%s1799] sm:%s1797] %v1796
    %s1801 = scalar_lea.vmem [#allocation0], 232
    %v1802 = vld [vmem:[%s1801] sm:%s1629]
    %s1803 = sshllo.u32 0, 4
    %s1804 = smul.addr 4, 29
    %s1805 = scalar_lea.vmem %s1, %s1804
    %1806 = vst [vmem:[%s1805] sm:%s1803] %v1802
    %s1807 = scalar_lea.vmem [#allocation0], 240
    %v1808 = vld [vmem:[%s1807] sm:%s1629]
    %s1809 = sshllo.u32 0, 4
    %s1810 = smul.addr 4, 30
    %s1811 = scalar_lea.vmem %s1, %s1810
    %1812 = vst [vmem:[%s1811] sm:%s1809] %v1808
    %s1813 = scalar_lea.vmem [#allocation0], 248
    %v1814 = vld [vmem:[%s1813] sm:%s1629]
    %s1815 = sshllo.u32 0, 4
    %s1816 = smul.addr 4, 31
    %s1817 = scalar_lea.vmem %s1, %s1816
    %1818 = vst [vmem:[%s1817] sm:%s1815] %v1814
    %s1819 = scalar_lea.vmem [#allocation0], 256
    %v1820 = vld [vmem:[%s1819] sm:%s1629]
    %s1821 = sshllo.u32 0, 4
    %s1822 = smul.addr 4, 32
    %s1823 = scalar_lea.vmem %s1, %s1822
    %1824 = vst [vmem:[%s1823] sm:%s1821] %v1820
    %s1825 = scalar_lea.vmem [#allocation0], 264
    %v1826 = vld [vmem:[%s1825] sm:%s1629]
    %s1827 = sshllo.u32 0, 4
    %s1828 = smul.addr 4, 33
    %s1829 = scalar_lea.vmem %s1, %s1828
    %1830 = vst [vmem:[%s1829] sm:%s1827] %v1826
    %s1831 = scalar_lea.vmem [#allocation0], 272
    %v1832 = vld [vmem:[%s1831] sm:%s1629]
    %s1833 = sshllo.u32 0, 4
    %s1834 = smul.addr 4, 34
    %s1835 = scalar_lea.vmem %s1, %s1834
    %1836 = vst [vmem:[%s1835] sm:%s1833] %v1832
    %s1837 = scalar_lea.vmem [#allocation0], 280
    %v1838 = vld [vmem:[%s1837] sm:%s1629]
    %s1839 = sshllo.u32 0, 4
    %s1840 = smul.addr 4, 35
    %s1841 = scalar_lea.vmem %s1, %s1840
    %1842 = vst [vmem:[%s1841] sm:%s1839] %v1838
    %s1843 = scalar_lea.vmem [#allocation0], 288
    %v1844 = vld [vmem:[%s1843] sm:%s1629]
    %s1845 = sshllo.u32 0, 4
    %s1846 = smul.addr 4, 36
    %s1847 = scalar_lea.vmem %s1, %s1846
    %1848 = vst [vmem:[%s1847] sm:%s1845] %v1844
    %s1849 = scalar_lea.vmem [#allocation0], 296
    %v1850 = vld [vmem:[%s1849] sm:%s1629]
    %s1851 = sshllo.u32 0, 4
    %s1852 = smul.addr 4, 37
    %s1853 = scalar_lea.vmem %s1, %s1852
    %1854 = vst [vmem:[%s1853] sm:%s1851] %v1850
    %s1855 = scalar_lea.vmem [#allocation0], 304
    %v1856 = vld [vmem:[%s1855] sm:%s1629]
    %s1857 = sshllo.u32 0, 4
    %s1858 = smul.addr 4, 38
    %s1859 = scalar_lea.vmem %s1, %s1858
    %1860 = vst [vmem:[%s1859] sm:%s1857] %v1856
    %s1861 = scalar_lea.vmem [#allocation0], 312
    %v1862 = vld [vmem:[%s1861] sm:%s1629]
    %s1863 = sshllo.u32 0, 4
    %s1864 = smul.addr 4, 39
    %s1865 = scalar_lea.vmem %s1, %s1864
    %1866 = vst [vmem:[%s1865] sm:%s1863] %v1862
    %s1867 = scalar_lea.vmem [#allocation0], 320
    %v1868 = vld [vmem:[%s1867] sm:%s1629]
    %s1869 = sshllo.u32 0, 4
    %s1870 = smul.addr 4, 40
    %s1871 = scalar_lea.vmem %s1, %s1870
    %1872 = vst [vmem:[%s1871] sm:%s1869] %v1868
    %s1873 = scalar_lea.vmem [#allocation0], 328
    %v1874 = vld [vmem:[%s1873] sm:%s1629]
    %s1875 = sshllo.u32 0, 4
    %s1876 = smul.addr 4, 41
    %s1877 = scalar_lea.vmem %s1, %s1876
    %1878 = vst [vmem:[%s1877] sm:%s1875] %v1874
    %s1879 = scalar_lea.vmem [#allocation0], 336
    %v1880 = vld [vmem:[%s1879] sm:%s1629]
    %s1881 = sshllo.u32 0, 4
    %s1882 = smul.addr 4, 42
    %s1883 = scalar_lea.vmem %s1, %s1882
    %1884 = vst [vmem:[%s1883] sm:%s1881] %v1880
    %s1885 = scalar_lea.vmem [#allocation0], 344
    %v1886 = vld [vmem:[%s1885] sm:%s1629]
    %s1887 = sshllo.u32 0, 4
    %s1888 = smul.addr 4, 43
    %s1889 = scalar_lea.vmem %s1, %s1888
    %1890 = vst [vmem:[%s1889] sm:%s1887] %v1886
    %s1891 = scalar_lea.vmem [#allocation0], 352
    %v1892 = vld [vmem:[%s1891] sm:%s1629]
    %s1893 = sshllo.u32 0, 4
    %s1894 = smul.addr 4, 44
    %s1895 = scalar_lea.vmem %s1, %s1894
    %1896 = vst [vmem:[%s1895] sm:%s1893] %v1892
    %s1897 = scalar_lea.vmem [#allocation0], 360
    %v1898 = vld [vmem:[%s1897] sm:%s1629]
    %s1899 = sshllo.u32 0, 4
    %s1900 = smul.addr 4, 45
    %s1901 = scalar_lea.vmem %s1, %s1900
    %1902 = vst [vmem:[%s1901] sm:%s1899] %v1898
    %s1903 = scalar_lea.vmem [#allocation0], 368
    %v1904 = vld [vmem:[%s1903] sm:%s1629]
    %s1905 = sshllo.u32 0, 4
    %s1906 = smul.addr 4, 46
    %s1907 = scalar_lea.vmem %s1, %s1906
    %1908 = vst [vmem:[%s1907] sm:%s1905] %v1904
    %s1909 = scalar_lea.vmem [#allocation0], 376
    %v1910 = vld [vmem:[%s1909] sm:%s1629]
    %s1911 = sshllo.u32 0, 4
    %s1912 = smul.addr 4, 47
    %s1913 = scalar_lea.vmem %s1, %s1912
    %1914 = vst [vmem:[%s1913] sm:%s1911] %v1910
    %s1915 = scalar_lea.vmem [#allocation0], 384
    %v1916 = vld [vmem:[%s1915] sm:%s1629]
    %s1917 = sshllo.u32 0, 4
    %s1918 = smul.addr 4, 48
    %s1919 = scalar_lea.vmem %s1, %s1918
    %1920 = vst [vmem:[%s1919] sm:%s1917] %v1916
    %s1921 = scalar_lea.vmem [#allocation0], 392
    %v1922 = vld [vmem:[%s1921] sm:%s1629]
    %s1923 = sshllo.u32 0, 4
    %s1924 = smul.addr 4, 49
    %s1925 = scalar_lea.vmem %s1, %s1924
    %1926 = vst [vmem:[%s1925] sm:%s1923] %v1922
    %s1927 = scalar_lea.vmem [#allocation0], 400
    %v1928 = vld [vmem:[%s1927] sm:%s1629]
    %s1929 = sshllo.u32 0, 4
    %s1930 = smul.addr 4, 50
    %s1931 = scalar_lea.vmem %s1, %s1930
    %1932 = vst [vmem:[%s1931] sm:%s1929] %v1928
    %s1933 = scalar_lea.vmem [#allocation0], 408
    %v1934 = vld [vmem:[%s1933] sm:%s1629]
    %s1935 = sshllo.u32 0, 4
    %s1936 = smul.addr 4, 51
    %s1937 = scalar_lea.vmem %s1, %s1936
    %1938 = vst [vmem:[%s1937] sm:%s1935] %v1934
    %s1939 = scalar_lea.vmem [#allocation0], 416
    %v1940 = vld [vmem:[%s1939] sm:%s1629]
    %s1941 = sshllo.u32 0, 4
    %s1942 = smul.addr 4, 52
    %s1943 = scalar_lea.vmem %s1, %s1942
    %1944 = vst [vmem:[%s1943] sm:%s1941] %v1940
    %s1945 = scalar_lea.vmem [#allocation0], 424
    %v1946 = vld [vmem:[%s1945] sm:%s1629]
    %s1947 = sshllo.u32 0, 4
    %s1948 = smul.addr 4, 53
    %s1949 = scalar_lea.vmem %s1, %s1948
    %1950 = vst [vmem:[%s1949] sm:%s1947] %v1946
    %s1951 = scalar_lea.vmem [#allocation0], 432
    %v1952 = vld [vmem:[%s1951] sm:%s1629]
    %s1953 = sshllo.u32 0, 4
    %s1954 = smul.addr 4, 54
    %s1955 = scalar_lea.vmem %s1, %s1954
    %1956 = vst [vmem:[%s1955] sm:%s1953] %v1952
    %s1957 = scalar_lea.vmem [#allocation0], 440
    %v1958 = vld [vmem:[%s1957] sm:%s1629]
    %s1959 = sshllo.u32 0, 4
    %s1960 = smul.addr 4, 55
    %s1961 = scalar_lea.vmem %s1, %s1960
    %1962 = vst [vmem:[%s1961] sm:%s1959] %v1958
    %s1963 = scalar_lea.vmem [#allocation0], 448
    %v1964 = vld [vmem:[%s1963] sm:%s1629]
    %s1965 = sshllo.u32 0, 4
    %s1966 = smul.addr 4, 56
    %s1967 = scalar_lea.vmem %s1, %s1966
    %1968 = vst [vmem:[%s1967] sm:%s1965] %v1964
    %s1969 = scalar_lea.vmem [#allocation0], 456
    %v1970 = vld [vmem:[%s1969] sm:%s1629]
    %s1971 = sshllo.u32 0, 4
    %s1972 = smul.addr 4, 57
    %s1973 = scalar_lea.vmem %s1, %s1972
    %1974 = vst [vmem:[%s1973] sm:%s1971] %v1970
    %s1975 = scalar_lea.vmem [#allocation0], 464
    %v1976 = vld [vmem:[%s1975] sm:%s1629]
    %s1977 = sshllo.u32 0, 4
    %s1978 = smul.addr 4, 58
    %s1979 = scalar_lea.vmem %s1, %s1978
    %1980 = vst [vmem:[%s1979] sm:%s1977] %v1976
    %s1981 = scalar_lea.vmem [#allocation0], 472
    %v1982 = vld [vmem:[%s1981] sm:%s1629]
    %s1983 = sshllo.u32 0, 4
    %s1984 = smul.addr 4, 59
    %s1985 = scalar_lea.vmem %s1, %s1984
    %1986 = vst [vmem:[%s1985] sm:%s1983] %v1982
    %s1987 = scalar_lea.vmem [#allocation0], 480
    %v1988 = vld [vmem:[%s1987] sm:%s1629]
    %s1989 = sshllo.u32 0, 4
    %s1990 = smul.addr 4, 60
    %s1991 = scalar_lea.vmem %s1, %s1990
    %1992 = vst [vmem:[%s1991] sm:%s1989] %v1988
    %s1993 = scalar_lea.vmem [#allocation0], 488
    %v1994 = vld [vmem:[%s1993] sm:%s1629]
    %s1995 = sshllo.u32 0, 4
    %s1996 = smul.addr 4, 61
    %s1997 = scalar_lea.vmem %s1, %s1996
    %1998 = vst [vmem:[%s1997] sm:%s1995] %v1994
    %s1999 = scalar_lea.vmem [#allocation0], 496
    %v2000 = vld [vmem:[%s1999] sm:%s1629]
    %s2001 = sshllo.u32 0, 4
    %s2002 = smul.addr 4, 62
    %s2003 = scalar_lea.vmem %s1, %s2002
    %2004 = vst [vmem:[%s2003] sm:%s2001] %v2000
    %s2005 = scalar_lea.vmem [#allocation0], 504
    %v2006 = vld [vmem:[%s2005] sm:%s1629]
    %s2007 = sshllo.u32 0, 4
    %s2008 = smul.addr 4, 63
    %s2009 = scalar_lea.vmem %s1, %s2008
    %2010 = vst [vmem:[%s2009] sm:%s2007] %v2006
    %s2011 = scalar_lea.vmem [#allocation0], 512
    %v2012 = vld [vmem:[%s2011] sm:%s1629]
    %s2013 = sshllo.u32 0, 4
    %s2014 = smul.addr 4, 64
    %s2015 = scalar_lea.vmem %s1, %s2014
    %2016 = vst [vmem:[%s2015] sm:%s2013] %v2012
    %s2017 = scalar_lea.vmem [#allocation0], 520
    %v2018 = vld [vmem:[%s2017] sm:%s1629]
    %s2019 = sshllo.u32 0, 4
    %s2020 = smul.addr 4, 65
    %s2021 = scalar_lea.vmem %s1, %s2020
    %2022 = vst [vmem:[%s2021] sm:%s2019] %v2018
    %s2023 = scalar_lea.vmem [#allocation0], 528
    %v2024 = vld [vmem:[%s2023] sm:%s1629]
    %s2025 = sshllo.u32 0, 4
    %s2026 = smul.addr 4, 66
    %s2027 = scalar_lea.vmem %s1, %s2026
    %2028 = vst [vmem:[%s2027] sm:%s2025] %v2024
    %s2029 = scalar_lea.vmem [#allocation0], 536
    %v2030 = vld [vmem:[%s2029] sm:%s1629]
    %s2031 = sshllo.u32 0, 4
    %s2032 = smul.addr 4, 67
    %s2033 = scalar_lea.vmem %s1, %s2032
    %2034 = vst [vmem:[%s2033] sm:%s2031] %v2030
    %s2035 = scalar_lea.vmem [#allocation0], 544
    %v2036 = vld [vmem:[%s2035] sm:%s1629]
    %s2037 = sshllo.u32 0, 4
    %s2038 = smul.addr 4, 68
    %s2039 = scalar_lea.vmem %s1, %s2038
    %2040 = vst [vmem:[%s2039] sm:%s2037] %v2036
    %s2041 = scalar_lea.vmem [#allocation0], 552
    %v2042 = vld [vmem:[%s2041] sm:%s1629]
    %s2043 = sshllo.u32 0, 4
    %s2044 = smul.addr 4, 69
    %s2045 = scalar_lea.vmem %s1, %s2044
    %2046 = vst [vmem:[%s2045] sm:%s2043] %v2042
    %s2047 = scalar_lea.vmem [#allocation0], 560
    %v2048 = vld [vmem:[%s2047] sm:%s1629]
    %s2049 = sshllo.u32 0, 4
    %s2050 = smul.addr 4, 70
    %s2051 = scalar_lea.vmem %s1, %s2050
    %2052 = vst [vmem:[%s2051] sm:%s2049] %v2048
    %s2053 = scalar_lea.vmem [#allocation0], 568
    %v2054 = vld [vmem:[%s2053] sm:%s1629]
    %s2055 = sshllo.u32 0, 4
    %s2056 = smul.addr 4, 71
    %s2057 = scalar_lea.vmem %s1, %s2056
    %2058 = vst [vmem:[%s2057] sm:%s2055] %v2054
    %s2059 = scalar_lea.vmem [#allocation0], 576
    %v2060 = vld [vmem:[%s2059] sm:%s1629]
    %s2061 = sshllo.u32 0, 4
    %s2062 = smul.addr 4, 72
    %s2063 = scalar_lea.vmem %s1, %s2062
    %2064 = vst [vmem:[%s2063] sm:%s2061] %v2060
    %s2065 = scalar_lea.vmem [#allocation0], 584
    %v2066 = vld [vmem:[%s2065] sm:%s1629]
    %s2067 = sshllo.u32 0, 4
    %s2068 = smul.addr 4, 73
    %s2069 = scalar_lea.vmem %s1, %s2068
    %2070 = vst [vmem:[%s2069] sm:%s2067] %v2066
    %s2071 = scalar_lea.vmem [#allocation0], 592
    %v2072 = vld [vmem:[%s2071] sm:%s1629]
    %s2073 = sshllo.u32 0, 4
    %s2074 = smul.addr 4, 74
    %s2075 = scalar_lea.vmem %s1, %s2074
    %2076 = vst [vmem:[%s2075] sm:%s2073] %v2072
    %s2077 = scalar_lea.vmem [#allocation0], 600
    %v2078 = vld [vmem:[%s2077] sm:%s1629]
    %s2079 = sshllo.u32 0, 4
    %s2080 = smul.addr 4, 75
    %s2081 = scalar_lea.vmem %s1, %s2080
    %2082 = vst [vmem:[%s2081] sm:%s2079] %v2078
    %s2083 = scalar_lea.vmem [#allocation0], 608
    %v2084 = vld [vmem:[%s2083] sm:%s1629]
    %s2085 = sshllo.u32 0, 4
    %s2086 = smul.addr 4, 76
    %s2087 = scalar_lea.vmem %s1, %s2086
    %2088 = vst [vmem:[%s2087] sm:%s2085] %v2084
    %s2089 = scalar_lea.vmem [#allocation0], 616
    %v2090 = vld [vmem:[%s2089] sm:%s1629]
    %s2091 = sshllo.u32 0, 4
    %s2092 = smul.addr 4, 77
    %s2093 = scalar_lea.vmem %s1, %s2092
    %2094 = vst [vmem:[%s2093] sm:%s2091] %v2090
    %s2095 = scalar_lea.vmem [#allocation0], 624
    %v2096 = vld [vmem:[%s2095] sm:%s1629]
    %s2097 = sshllo.u32 0, 4
    %s2098 = smul.addr 4, 78
    %s2099 = scalar_lea.vmem %s1, %s2098
    %2100 = vst [vmem:[%s2099] sm:%s2097] %v2096
    %s2101 = scalar_lea.vmem [#allocation0], 632
    %v2102 = vld [vmem:[%s2101] sm:%s1629]
    %s2103 = sshllo.u32 0, 4
    %s2104 = smul.addr 4, 79
    %s2105 = scalar_lea.vmem %s1, %s2104
    %2106 = vst [vmem:[%s2105] sm:%s2103] %v2102
    %s2107 = scalar_lea.vmem [#allocation0], 640
    %v2108 = vld [vmem:[%s2107] sm:%s1629]
    %s2109 = sshllo.u32 0, 4
    %s2110 = smul.addr 4, 80
    %s2111 = scalar_lea.vmem %s1, %s2110
    %2112 = vst [vmem:[%s2111] sm:%s2109] %v2108
    %s2113 = scalar_lea.vmem [#allocation0], 648
    %v2114 = vld [vmem:[%s2113] sm:%s1629]
    %s2115 = sshllo.u32 0, 4
    %s2116 = smul.addr 4, 81
    %s2117 = scalar_lea.vmem %s1, %s2116
    %2118 = vst [vmem:[%s2117] sm:%s2115] %v2114
    %s2119 = scalar_lea.vmem [#allocation0], 656
    %v2120 = vld [vmem:[%s2119] sm:%s1629]
    %s2121 = sshllo.u32 0, 4
    %s2122 = smul.addr 4, 82
    %s2123 = scalar_lea.vmem %s1, %s2122
    %2124 = vst [vmem:[%s2123] sm:%s2121] %v2120
    %s2125 = scalar_lea.vmem [#allocation0], 664
    %v2126 = vld [vmem:[%s2125] sm:%s1629]
    %s2127 = sshllo.u32 0, 4
    %s2128 = smul.addr 4, 83
    %s2129 = scalar_lea.vmem %s1, %s2128
    %2130 = vst [vmem:[%s2129] sm:%s2127] %v2126
    %s2131 = scalar_lea.vmem [#allocation0], 672
    %v2132 = vld [vmem:[%s2131] sm:%s1629]
    %s2133 = sshllo.u32 0, 4
    %s2134 = smul.addr 4, 84
    %s2135 = scalar_lea.vmem %s1, %s2134
    %2136 = vst [vmem:[%s2135] sm:%s2133] %v2132
    %s2137 = scalar_lea.vmem [#allocation0], 680
    %v2138 = vld [vmem:[%s2137] sm:%s1629]
    %s2139 = sshllo.u32 0, 4
    %s2140 = smul.addr 4, 85
    %s2141 = scalar_lea.vmem %s1, %s2140
    %2142 = vst [vmem:[%s2141] sm:%s2139] %v2138
    %s2143 = scalar_lea.vmem [#allocation0], 688
    %v2144 = vld [vmem:[%s2143] sm:%s1629]
    %s2145 = sshllo.u32 0, 4
    %s2146 = smul.addr 4, 86
    %s2147 = scalar_lea.vmem %s1, %s2146
    %2148 = vst [vmem:[%s2147] sm:%s2145] %v2144
    %s2149 = scalar_lea.vmem [#allocation0], 696
    %v2150 = vld [vmem:[%s2149] sm:%s1629]
    %s2151 = sshllo.u32 0, 4
    %s2152 = smul.addr 4, 87
    %s2153 = scalar_lea.vmem %s1, %s2152
    %2154 = vst [vmem:[%s2153] sm:%s2151] %v2150
    %s2155 = scalar_lea.vmem [#allocation0], 704
    %v2156 = vld [vmem:[%s2155] sm:%s1629]
    %s2157 = sshllo.u32 0, 4
    %s2158 = smul.addr 4, 88
    %s2159 = scalar_lea.vmem %s1, %s2158
    %2160 = vst [vmem:[%s2159] sm:%s2157] %v2156
    %s2161 = scalar_lea.vmem [#allocation0], 712
    %v2162 = vld [vmem:[%s2161] sm:%s1629]
    %s2163 = sshllo.u32 0, 4
    %s2164 = smul.addr 4, 89
    %s2165 = scalar_lea.vmem %s1, %s2164
    %2166 = vst [vmem:[%s2165] sm:%s2163] %v2162
    %s2167 = scalar_lea.vmem [#allocation0], 720
    %v2168 = vld [vmem:[%s2167] sm:%s1629]
    %s2169 = sshllo.u32 0, 4
    %s2170 = smul.addr 4, 90
    %s2171 = scalar_lea.vmem %s1, %s2170
    %2172 = vst [vmem:[%s2171] sm:%s2169] %v2168
    %s2173 = scalar_lea.vmem [#allocation0], 728
    %v2174 = vld [vmem:[%s2173] sm:%s1629]
    %s2175 = sshllo.u32 0, 4
    %s2176 = smul.addr 4, 91
    %s2177 = scalar_lea.vmem %s1, %s2176
    %2178 = vst [vmem:[%s2177] sm:%s2175] %v2174
    %s2179 = scalar_lea.vmem [#allocation0], 736
    %v2180 = vld [vmem:[%s2179] sm:%s1629]
    %s2181 = sshllo.u32 0, 4
    %s2182 = smul.addr 4, 92
    %s2183 = scalar_lea.vmem %s1, %s2182
    %2184 = vst [vmem:[%s2183] sm:%s2181] %v2180
    %s2185 = scalar_lea.vmem [#allocation0], 744
    %v2186 = vld [vmem:[%s2185] sm:%s1629]
    %s2187 = sshllo.u32 0, 4
    %s2188 = smul.addr 4, 93
    %s2189 = scalar_lea.vmem %s1, %s2188
    %2190 = vst [vmem:[%s2189] sm:%s2187] %v2186
    %s2191 = scalar_lea.vmem [#allocation0], 752
    %v2192 = vld [vmem:[%s2191] sm:%s1629]
    %s2193 = sshllo.u32 0, 4
    %s2194 = smul.addr 4, 94
    %s2195 = scalar_lea.vmem %s1, %s2194
    %2196 = vst [vmem:[%s2195] sm:%s2193] %v2192
    %s2197 = scalar_lea.vmem [#allocation0], 760
    %v2198 = vld [vmem:[%s2197] sm:%s1629]
    %s2199 = sshllo.u32 0, 4
    %s2200 = smul.addr 4, 95
    %s2201 = scalar_lea.vmem %s1, %s2200
    %2202 = vst [vmem:[%s2201] sm:%s2199] %v2198
    %s2203 = scalar_lea.vmem [#allocation0], 768
    %v2204 = vld [vmem:[%s2203] sm:%s1629]
    %s2205 = sshllo.u32 0, 4
    %s2206 = smul.addr 4, 96
    %s2207 = scalar_lea.vmem %s1, %s2206
    %2208 = vst [vmem:[%s2207] sm:%s2205] %v2204
    %s2209 = scalar_lea.vmem [#allocation0], 776
    %v2210 = vld [vmem:[%s2209] sm:%s1629]
    %s2211 = sshllo.u32 0, 4
    %s2212 = smul.addr 4, 97
    %s2213 = scalar_lea.vmem %s1, %s2212
    %2214 = vst [vmem:[%s2213] sm:%s2211] %v2210
    %s2215 = scalar_lea.vmem [#allocation0], 784
    %v2216 = vld [vmem:[%s2215] sm:%s1629]
    %s2217 = sshllo.u32 0, 4
    %s2218 = smul.addr 4, 98
    %s2219 = scalar_lea.vmem %s1, %s2218
    %2220 = vst [vmem:[%s2219] sm:%s2217] %v2216
    %s2221 = scalar_lea.vmem [#allocation0], 792
    %v2222 = vld [vmem:[%s2221] sm:%s1629]
    %s2223 = sshllo.u32 0, 4
    %s2224 = smul.addr 4, 99
    %s2225 = scalar_lea.vmem %s1, %s2224
    %2226 = vst [vmem:[%s2225] sm:%s2223] %v2222
    %s2227 = scalar_lea.vmem [#allocation0], 800
    %v2228 = vld [vmem:[%s2227] sm:%s1629]
    %s2229 = sshllo.u32 0, 4
    %s2230 = smul.addr 4, 100
    %s2231 = scalar_lea.vmem %s1, %s2230
    %2232 = vst [vmem:[%s2231] sm:%s2229] %v2228
    %s2233 = scalar_lea.vmem [#allocation0], 808
    %v2234 = vld [vmem:[%s2233] sm:%s1629]
    %s2235 = sshllo.u32 0, 4
    %s2236 = smul.addr 4, 101
    %s2237 = scalar_lea.vmem %s1, %s2236
    %2238 = vst [vmem:[%s2237] sm:%s2235] %v2234
    %s2239 = scalar_lea.vmem [#allocation0], 816
    %v2240 = vld [vmem:[%s2239] sm:%s1629]
    %s2241 = sshllo.u32 0, 4
    %s2242 = smul.addr 4, 102
    %s2243 = scalar_lea.vmem %s1, %s2242
    %2244 = vst [vmem:[%s2243] sm:%s2241] %v2240
    %s2245 = scalar_lea.vmem [#allocation0], 824
    %v2246 = vld [vmem:[%s2245] sm:%s1629]
    %s2247 = sshllo.u32 0, 4
    %s2248 = smul.addr 4, 103
    %s2249 = scalar_lea.vmem %s1, %s2248
    %2250 = vst [vmem:[%s2249] sm:%s2247] %v2246
    %s2251 = scalar_lea.vmem [#allocation0], 832
    %v2252 = vld [vmem:[%s2251] sm:%s1629]
    %s2253 = sshllo.u32 0, 4
    %s2254 = smul.addr 4, 104
    %s2255 = scalar_lea.vmem %s1, %s2254
    %2256 = vst [vmem:[%s2255] sm:%s2253] %v2252
    %s2257 = scalar_lea.vmem [#allocation0], 840
    %v2258 = vld [vmem:[%s2257] sm:%s1629]
    %s2259 = sshllo.u32 0, 4
    %s2260 = smul.addr 4, 105
    %s2261 = scalar_lea.vmem %s1, %s2260
    %2262 = vst [vmem:[%s2261] sm:%s2259] %v2258
    %s2263 = scalar_lea.vmem [#allocation0], 848
    %v2264 = vld [vmem:[%s2263] sm:%s1629]
    %s2265 = sshllo.u32 0, 4
    %s2266 = smul.addr 4, 106
    %s2267 = scalar_lea.vmem %s1, %s2266
    %2268 = vst [vmem:[%s2267] sm:%s2265] %v2264
    %s2269 = scalar_lea.vmem [#allocation0], 856
    %v2270 = vld [vmem:[%s2269] sm:%s1629]
    %s2271 = sshllo.u32 0, 4
    %s2272 = smul.addr 4, 107
    %s2273 = scalar_lea.vmem %s1, %s2272
    %2274 = vst [vmem:[%s2273] sm:%s2271] %v2270
    %s2275 = scalar_lea.vmem [#allocation0], 864
    %v2276 = vld [vmem:[%s2275] sm:%s1629]
    %s2277 = sshllo.u32 0, 4
    %s2278 = smul.addr 4, 108
    %s2279 = scalar_lea.vmem %s1, %s2278
    %2280 = vst [vmem:[%s2279] sm:%s2277] %v2276
    %s2281 = scalar_lea.vmem [#allocation0], 872
    %v2282 = vld [vmem:[%s2281] sm:%s1629]
    %s2283 = sshllo.u32 0, 4
    %s2284 = smul.addr 4, 109
    %s2285 = scalar_lea.vmem %s1, %s2284
    %2286 = vst [vmem:[%s2285] sm:%s2283] %v2282
    %s2287 = scalar_lea.vmem [#allocation0], 880
    %v2288 = vld [vmem:[%s2287] sm:%s1629]
    %s2289 = sshllo.u32 0, 4
    %s2290 = smul.addr 4, 110
    %s2291 = scalar_lea.vmem %s1, %s2290
    %2292 = vst [vmem:[%s2291] sm:%s2289] %v2288
    %s2293 = scalar_lea.vmem [#allocation0], 888
    %v2294 = vld [vmem:[%s2293] sm:%s1629]
    %s2295 = sshllo.u32 0, 4
    %s2296 = smul.addr 4, 111
    %s2297 = scalar_lea.vmem %s1, %s2296
    %2298 = vst [vmem:[%s2297] sm:%s2295] %v2294
    %s2299 = scalar_lea.vmem [#allocation0], 896
    %v2300 = vld [vmem:[%s2299] sm:%s1629]
    %s2301 = sshllo.u32 0, 4
    %s2302 = smul.addr 4, 112
    %s2303 = scalar_lea.vmem %s1, %s2302
    %2304 = vst [vmem:[%s2303] sm:%s2301] %v2300
    %s2305 = scalar_lea.vmem [#allocation0], 904
    %v2306 = vld [vmem:[%s2305] sm:%s1629]
    %s2307 = sshllo.u32 0, 4
    %s2308 = smul.addr 4, 113
    %s2309 = scalar_lea.vmem %s1, %s2308
    %2310 = vst [vmem:[%s2309] sm:%s2307] %v2306
    %s2311 = scalar_lea.vmem [#allocation0], 912
    %v2312 = vld [vmem:[%s2311] sm:%s1629]
    %s2313 = sshllo.u32 0, 4
    %s2314 = smul.addr 4, 114
    %s2315 = scalar_lea.vmem %s1, %s2314
    %2316 = vst [vmem:[%s2315] sm:%s2313] %v2312
    %s2317 = scalar_lea.vmem [#allocation0], 920
    %v2318 = vld [vmem:[%s2317] sm:%s1629]
    %s2319 = sshllo.u32 0, 4
    %s2320 = smul.addr 4, 115
    %s2321 = scalar_lea.vmem %s1, %s2320
    %2322 = vst [vmem:[%s2321] sm:%s2319] %v2318
    %s2323 = scalar_lea.vmem [#allocation0], 928
    %v2324 = vld [vmem:[%s2323] sm:%s1629]
    %s2325 = sshllo.u32 0, 4
    %s2326 = smul.addr 4, 116
    %s2327 = scalar_lea.vmem %s1, %s2326
    %2328 = vst [vmem:[%s2327] sm:%s2325] %v2324
    %s2329 = scalar_lea.vmem [#allocation0], 936
    %v2330 = vld [vmem:[%s2329] sm:%s1629]
    %s2331 = sshllo.u32 0, 4
    %s2332 = smul.addr 4, 117
    %s2333 = scalar_lea.vmem %s1, %s2332
    %2334 = vst [vmem:[%s2333] sm:%s2331] %v2330
    %s2335 = scalar_lea.vmem [#allocation0], 944
    %v2336 = vld [vmem:[%s2335] sm:%s1629]
    %s2337 = sshllo.u32 0, 4
    %s2338 = smul.addr 4, 118
    %s2339 = scalar_lea.vmem %s1, %s2338
    %2340 = vst [vmem:[%s2339] sm:%s2337] %v2336
    %s2341 = scalar_lea.vmem [#allocation0], 952
    %v2342 = vld [vmem:[%s2341] sm:%s1629]
    %s2343 = sshllo.u32 0, 4
    %s2344 = smul.addr 4, 119
    %s2345 = scalar_lea.vmem %s1, %s2344
    %2346 = vst [vmem:[%s2345] sm:%s2343] %v2342
    %s2347 = scalar_lea.vmem [#allocation0], 960
    %v2348 = vld [vmem:[%s2347] sm:%s1629]
    %s2349 = sshllo.u32 0, 4
    %s2350 = smul.addr 4, 120
    %s2351 = scalar_lea.vmem %s1, %s2350
    %2352 = vst [vmem:[%s2351] sm:%s2349] %v2348
    %s2353 = scalar_lea.vmem [#allocation0], 968
    %v2354 = vld [vmem:[%s2353] sm:%s1629]
    %s2355 = sshllo.u32 0, 4
    %s2356 = smul.addr 4, 121
    %s2357 = scalar_lea.vmem %s1, %s2356
    %2358 = vst [vmem:[%s2357] sm:%s2355] %v2354
    %s2359 = scalar_lea.vmem [#allocation0], 976
    %v2360 = vld [vmem:[%s2359] sm:%s1629]
    %s2361 = sshllo.u32 0, 4
    %s2362 = smul.addr 4, 122
    %s2363 = scalar_lea.vmem %s1, %s2362
    %2364 = vst [vmem:[%s2363] sm:%s2361] %v2360
    %s2365 = scalar_lea.vmem [#allocation0], 984
    %v2366 = vld [vmem:[%s2365] sm:%s1629]
    %s2367 = sshllo.u32 0, 4
    %s2368 = smul.addr 4, 123
    %s2369 = scalar_lea.vmem %s1, %s2368
    %2370 = vst [vmem:[%s2369] sm:%s2367] %v2366
    %s2371 = scalar_lea.vmem [#allocation0], 992
    %v2372 = vld [vmem:[%s2371] sm:%s1629]
    %s2373 = sshllo.u32 0, 4
    %s2374 = smul.addr 4, 124
    %s2375 = scalar_lea.vmem %s1, %s2374
    %2376 = vst [vmem:[%s2375] sm:%s2373] %v2372
    %s2377 = scalar_lea.vmem [#allocation0], 1000
    %v2378 = vld [vmem:[%s2377] sm:%s1629]
    %s2379 = sshllo.u32 0, 4
    %s2380 = smul.addr 4, 125
    %s2381 = scalar_lea.vmem %s1, %s2380
    %2382 = vst [vmem:[%s2381] sm:%s2379] %v2378
    %s2383 = scalar_lea.vmem [#allocation0], 1008
    %v2384 = vld [vmem:[%s2383] sm:%s1629]
    %s2385 = sshllo.u32 0, 4
    %s2386 = smul.addr 4, 126
    %s2387 = scalar_lea.vmem %s1, %s2386
    %2388 = vst [vmem:[%s2387] sm:%s2385] %v2384
    %s2389 = scalar_lea.vmem [#allocation0], 1016
    %v2390 = vld [vmem:[%s2389] sm:%s1629]
    %s2391 = sshllo.u32 0, 4
    %s2392 = smul.addr 4, 127
    %s2393 = scalar_lea.vmem %s1, %s2392
    %2394 = vst [vmem:[%s2393] sm:%s2391] %v2390
    %s2395 = scalar_lea.vmem [#allocation0], 1024
    %v2396 = vld [vmem:[%s2395] sm:%s1629]
    %s2397 = sshllo.u32 0, 4
    %s2398 = smul.addr 4, 128
    %s2399 = scalar_lea.vmem %s1, %s2398
    %2400 = vst [vmem:[%s2399] sm:%s2397] %v2396
    %s2401 = scalar_lea.vmem [#allocation0], 1032
    %v2402 = vld [vmem:[%s2401] sm:%s1629]
    %s2403 = sshllo.u32 0, 4
    %s2404 = smul.addr 4, 129
    %s2405 = scalar_lea.vmem %s1, %s2404
    %2406 = vst [vmem:[%s2405] sm:%s2403] %v2402
    %s2407 = scalar_lea.vmem [#allocation0], 1040
    %v2408 = vld [vmem:[%s2407] sm:%s1629]
    %s2409 = sshllo.u32 0, 4
    %s2410 = smul.addr 4, 130
    %s2411 = scalar_lea.vmem %s1, %s2410
    %2412 = vst [vmem:[%s2411] sm:%s2409] %v2408
    %s2413 = scalar_lea.vmem [#allocation0], 1048
    %v2414 = vld [vmem:[%s2413] sm:%s1629]
    %s2415 = sshllo.u32 0, 4
    %s2416 = smul.addr 4, 131
    %s2417 = scalar_lea.vmem %s1, %s2416
    %2418 = vst [vmem:[%s2417] sm:%s2415] %v2414
    %s2419 = scalar_lea.vmem [#allocation0], 1056
    %v2420 = vld [vmem:[%s2419] sm:%s1629]
    %s2421 = sshllo.u32 0, 4
    %s2422 = smul.addr 4, 132
    %s2423 = scalar_lea.vmem %s1, %s2422
    %2424 = vst [vmem:[%s2423] sm:%s2421] %v2420
    %s2425 = scalar_lea.vmem [#allocation0], 1064
    %v2426 = vld [vmem:[%s2425] sm:%s1629]
    %s2427 = sshllo.u32 0, 4
    %s2428 = smul.addr 4, 133
    %s2429 = scalar_lea.vmem %s1, %s2428
    %2430 = vst [vmem:[%s2429] sm:%s2427] %v2426
    %s2431 = scalar_lea.vmem [#allocation0], 1072
    %v2432 = vld [vmem:[%s2431] sm:%s1629]
    %s2433 = sshllo.u32 0, 4
    %s2434 = smul.addr 4, 134
    %s2435 = scalar_lea.vmem %s1, %s2434
    %2436 = vst [vmem:[%s2435] sm:%s2433] %v2432
    %s2437 = scalar_lea.vmem [#allocation0], 1080
    %v2438 = vld [vmem:[%s2437] sm:%s1629]
    %s2439 = sshllo.u32 0, 4
    %s2440 = smul.addr 4, 135
    %s2441 = scalar_lea.vmem %s1, %s2440
    %2442 = vst [vmem:[%s2441] sm:%s2439] %v2438
    %s2443 = scalar_lea.vmem [#allocation0], 1088
    %v2444 = vld [vmem:[%s2443] sm:%s1629]
    %s2445 = sshllo.u32 0, 4
    %s2446 = smul.addr 4, 136
    %s2447 = scalar_lea.vmem %s1, %s2446
    %2448 = vst [vmem:[%s2447] sm:%s2445] %v2444
    %s2449 = scalar_lea.vmem [#allocation0], 1096
    %v2450 = vld [vmem:[%s2449] sm:%s1629]
    %s2451 = sshllo.u32 0, 4
    %s2452 = smul.addr 4, 137
    %s2453 = scalar_lea.vmem %s1, %s2452
    %2454 = vst [vmem:[%s2453] sm:%s2451] %v2450
    %s2455 = scalar_lea.vmem [#allocation0], 1104
    %v2456 = vld [vmem:[%s2455] sm:%s1629]
    %s2457 = sshllo.u32 0, 4
    %s2458 = smul.addr 4, 138
    %s2459 = scalar_lea.vmem %s1, %s2458
    %2460 = vst [vmem:[%s2459] sm:%s2457] %v2456
    %s2461 = scalar_lea.vmem [#allocation0], 1112
    %v2462 = vld [vmem:[%s2461] sm:%s1629]
    %s2463 = sshllo.u32 0, 4
    %s2464 = smul.addr 4, 139
    %s2465 = scalar_lea.vmem %s1, %s2464
    %2466 = vst [vmem:[%s2465] sm:%s2463] %v2462
    %s2467 = scalar_lea.vmem [#allocation0], 1120
    %v2468 = vld [vmem:[%s2467] sm:%s1629]
    %s2469 = sshllo.u32 0, 4
    %s2470 = smul.addr 4, 140
    %s2471 = scalar_lea.vmem %s1, %s2470
    %2472 = vst [vmem:[%s2471] sm:%s2469] %v2468
    %s2473 = scalar_lea.vmem [#allocation0], 1128
    %v2474 = vld [vmem:[%s2473] sm:%s1629]
    %s2475 = sshllo.u32 0, 4
    %s2476 = smul.addr 4, 141
    %s2477 = scalar_lea.vmem %s1, %s2476
    %2478 = vst [vmem:[%s2477] sm:%s2475] %v2474
    %s2479 = scalar_lea.vmem [#allocation0], 1136
    %v2480 = vld [vmem:[%s2479] sm:%s1629]
    %s2481 = sshllo.u32 0, 4
    %s2482 = smul.addr 4, 142
    %s2483 = scalar_lea.vmem %s1, %s2482
    %2484 = vst [vmem:[%s2483] sm:%s2481] %v2480
    %s2485 = scalar_lea.vmem [#allocation0], 1144
    %v2486 = vld [vmem:[%s2485] sm:%s1629]
    %s2487 = sshllo.u32 0, 4
    %s2488 = smul.addr 4, 143
    %s2489 = scalar_lea.vmem %s1, %s2488
    %2490 = vst [vmem:[%s2489] sm:%s2487] %v2486
    %s2491 = scalar_lea.vmem [#allocation0], 1152
    %v2492 = vld [vmem:[%s2491] sm:%s1629]
    %s2493 = sshllo.u32 0, 4
    %s2494 = smul.addr 4, 144
    %s2495 = scalar_lea.vmem %s1, %s2494
    %2496 = vst [vmem:[%s2495] sm:%s2493] %v2492
    %s2497 = scalar_lea.vmem [#allocation0], 1160
    %v2498 = vld [vmem:[%s2497] sm:%s1629]
    %s2499 = sshllo.u32 0, 4
    %s2500 = smul.addr 4, 145
    %s2501 = scalar_lea.vmem %s1, %s2500
    %2502 = vst [vmem:[%s2501] sm:%s2499] %v2498
    %s2503 = scalar_lea.vmem [#allocation0], 1168
    %v2504 = vld [vmem:[%s2503] sm:%s1629]
    %s2505 = sshllo.u32 0, 4
    %s2506 = smul.addr 4, 146
    %s2507 = scalar_lea.vmem %s1, %s2506
    %2508 = vst [vmem:[%s2507] sm:%s2505] %v2504
    %s2509 = scalar_lea.vmem [#allocation0], 1176
    %v2510 = vld [vmem:[%s2509] sm:%s1629]
    %s2511 = sshllo.u32 0, 4
    %s2512 = smul.addr 4, 147
    %s2513 = scalar_lea.vmem %s1, %s2512
    %2514 = vst [vmem:[%s2513] sm:%s2511] %v2510
    %s2515 = scalar_lea.vmem [#allocation0], 1184
    %v2516 = vld [vmem:[%s2515] sm:%s1629]
    %s2517 = sshllo.u32 0, 4
    %s2518 = smul.addr 4, 148
    %s2519 = scalar_lea.vmem %s1, %s2518
    %2520 = vst [vmem:[%s2519] sm:%s2517] %v2516
    %s2521 = scalar_lea.vmem [#allocation0], 1192
    %v2522 = vld [vmem:[%s2521] sm:%s1629]
    %s2523 = sshllo.u32 0, 4
    %s2524 = smul.addr 4, 149
    %s2525 = scalar_lea.vmem %s1, %s2524
    %2526 = vst [vmem:[%s2525] sm:%s2523] %v2522
    %s2527 = scalar_lea.vmem [#allocation0], 1200
    %v2528 = vld [vmem:[%s2527] sm:%s1629]
    %s2529 = sshllo.u32 0, 4
    %s2530 = smul.addr 4, 150
    %s2531 = scalar_lea.vmem %s1, %s2530
    %2532 = vst [vmem:[%s2531] sm:%s2529] %v2528
    %s2533 = scalar_lea.vmem [#allocation0], 1208
    %v2534 = vld [vmem:[%s2533] sm:%s1629]
    %s2535 = sshllo.u32 0, 4
    %s2536 = smul.addr 4, 151
    %s2537 = scalar_lea.vmem %s1, %s2536
    %2538 = vst [vmem:[%s2537] sm:%s2535] %v2534
    %s2539 = scalar_lea.vmem [#allocation0], 1216
    %v2540 = vld [vmem:[%s2539] sm:%s1629]
    %s2541 = sshllo.u32 0, 4
    %s2542 = smul.addr 4, 152
    %s2543 = scalar_lea.vmem %s1, %s2542
    %2544 = vst [vmem:[%s2543] sm:%s2541] %v2540
    %s2545 = scalar_lea.vmem [#allocation0], 1224
    %v2546 = vld [vmem:[%s2545] sm:%s1629]
    %s2547 = sshllo.u32 0, 4
    %s2548 = smul.addr 4, 153
    %s2549 = scalar_lea.vmem %s1, %s2548
    %2550 = vst [vmem:[%s2549] sm:%s2547] %v2546
    %s2551 = scalar_lea.vmem [#allocation0], 1232
    %v2552 = vld [vmem:[%s2551] sm:%s1629]
    %s2553 = sshllo.u32 0, 4
    %s2554 = smul.addr 4, 154
    %s2555 = scalar_lea.vmem %s1, %s2554
    %2556 = vst [vmem:[%s2555] sm:%s2553] %v2552
    %s2557 = scalar_lea.vmem [#allocation0], 1240
    %v2558 = vld [vmem:[%s2557] sm:%s1629]
    %s2559 = sshllo.u32 0, 4
    %s2560 = smul.addr 4, 155
    %s2561 = scalar_lea.vmem %s1, %s2560
    %2562 = vst [vmem:[%s2561] sm:%s2559] %v2558
    %s2563 = scalar_lea.vmem [#allocation0], 1248
    %v2564 = vld [vmem:[%s2563] sm:%s1629]
    %s2565 = sshllo.u32 0, 4
    %s2566 = smul.addr 4, 156
    %s2567 = scalar_lea.vmem %s1, %s2566
    %2568 = vst [vmem:[%s2567] sm:%s2565] %v2564
    %s2569 = scalar_lea.vmem [#allocation0], 1256
    %v2570 = vld [vmem:[%s2569] sm:%s1629]
    %s2571 = sshllo.u32 0, 4
    %s2572 = smul.addr 4, 157
    %s2573 = scalar_lea.vmem %s1, %s2572
    %2574 = vst [vmem:[%s2573] sm:%s2571] %v2570
    %s2575 = scalar_lea.vmem [#allocation0], 1264
    %v2576 = vld [vmem:[%s2575] sm:%s1629]
    %s2577 = sshllo.u32 0, 4
    %s2578 = smul.addr 4, 158
    %s2579 = scalar_lea.vmem %s1, %s2578
    %2580 = vst [vmem:[%s2579] sm:%s2577] %v2576
    %s2581 = scalar_lea.vmem [#allocation0], 1272
    %v2582 = vld [vmem:[%s2581] sm:%s1629]
    %s2583 = sshllo.u32 0, 4
    %s2584 = smul.addr 4, 159
    %s2585 = scalar_lea.vmem %s1, %s2584
    %2586 = vst [vmem:[%s2585] sm:%s2583] %v2582
    %s2587 = scalar_lea.vmem [#allocation0], 1280
    %v2588 = vld [vmem:[%s2587] sm:%s1629]
    %s2589 = sshllo.u32 0, 4
    %s2590 = smul.addr 4, 160
    %s2591 = scalar_lea.vmem %s1, %s2590
    %2592 = vst [vmem:[%s2591] sm:%s2589] %v2588
    %s2593 = scalar_lea.vmem [#allocation0], 1288
    %v2594 = vld [vmem:[%s2593] sm:%s1629]
    %s2595 = sshllo.u32 0, 4
    %s2596 = smul.addr 4, 161
    %s2597 = scalar_lea.vmem %s1, %s2596
    %2598 = vst [vmem:[%s2597] sm:%s2595] %v2594
    %s2599 = scalar_lea.vmem [#allocation0], 1296
    %v2600 = vld [vmem:[%s2599] sm:%s1629]
    %s2601 = sshllo.u32 0, 4
    %s2602 = smul.addr 4, 162
    %s2603 = scalar_lea.vmem %s1, %s2602
    %2604 = vst [vmem:[%s2603] sm:%s2601] %v2600
    %s2605 = scalar_lea.vmem [#allocation0], 1304
    %v2606 = vld [vmem:[%s2605] sm:%s1629]
    %s2607 = sshllo.u32 0, 4
    %s2608 = smul.addr 4, 163
    %s2609 = scalar_lea.vmem %s1, %s2608
    %2610 = vst [vmem:[%s2609] sm:%s2607] %v2606
    %s2611 = scalar_lea.vmem [#allocation0], 1312
    %v2612 = vld [vmem:[%s2611] sm:%s1629]
    %s2613 = sshllo.u32 0, 4
    %s2614 = smul.addr 4, 164
    %s2615 = scalar_lea.vmem %s1, %s2614
    %2616 = vst [vmem:[%s2615] sm:%s2613] %v2612
    %s2617 = scalar_lea.vmem [#allocation0], 1320
    %v2618 = vld [vmem:[%s2617] sm:%s1629]
    %s2619 = sshllo.u32 0, 4
    %s2620 = smul.addr 4, 165
    %s2621 = scalar_lea.vmem %s1, %s2620
    %2622 = vst [vmem:[%s2621] sm:%s2619] %v2618
    %s2623 = scalar_lea.vmem [#allocation0], 1328
    %v2624 = vld [vmem:[%s2623] sm:%s1629]
    %s2625 = sshllo.u32 0, 4
    %s2626 = smul.addr 4, 166
    %s2627 = scalar_lea.vmem %s1, %s2626
    %2628 = vst [vmem:[%s2627] sm:%s2625] %v2624
    %s2629 = scalar_lea.vmem [#allocation0], 1336
    %v2630 = vld [vmem:[%s2629] sm:%s1629]
    %s2631 = sshllo.u32 0, 4
    %s2632 = smul.addr 4, 167
    %s2633 = scalar_lea.vmem %s1, %s2632
    %2634 = vst [vmem:[%s2633] sm:%s2631] %v2630
    %s2635 = scalar_lea.vmem [#allocation0], 1344
    %v2636 = vld [vmem:[%s2635] sm:%s1629]
    %s2637 = sshllo.u32 0, 4
    %s2638 = smul.addr 4, 168
    %s2639 = scalar_lea.vmem %s1, %s2638
    %2640 = vst [vmem:[%s2639] sm:%s2637] %v2636
    %s2641 = scalar_lea.vmem [#allocation0], 1352
    %v2642 = vld [vmem:[%s2641] sm:%s1629]
    %s2643 = sshllo.u32 0, 4
    %s2644 = smul.addr 4, 169
    %s2645 = scalar_lea.vmem %s1, %s2644
    %2646 = vst [vmem:[%s2645] sm:%s2643] %v2642
    %s2647 = scalar_lea.vmem [#allocation0], 1360
    %v2648 = vld [vmem:[%s2647] sm:%s1629]
    %s2649 = sshllo.u32 0, 4
    %s2650 = smul.addr 4, 170
    %s2651 = scalar_lea.vmem %s1, %s2650
    %2652 = vst [vmem:[%s2651] sm:%s2649] %v2648
    %s2653 = scalar_lea.vmem [#allocation0], 1368
    %v2654 = vld [vmem:[%s2653] sm:%s1629]
    %s2655 = sshllo.u32 0, 4
    %s2656 = smul.addr 4, 171
    %s2657 = scalar_lea.vmem %s1, %s2656
    %2658 = vst [vmem:[%s2657] sm:%s2655] %v2654
    %s2659 = scalar_lea.vmem [#allocation0], 1376
    %v2660 = vld [vmem:[%s2659] sm:%s1629]
    %s2661 = sshllo.u32 0, 4
    %s2662 = smul.addr 4, 172
    %s2663 = scalar_lea.vmem %s1, %s2662
    %2664 = vst [vmem:[%s2663] sm:%s2661] %v2660
    %s2665 = scalar_lea.vmem [#allocation0], 1384
    %v2666 = vld [vmem:[%s2665] sm:%s1629]
    %s2667 = sshllo.u32 0, 4
    %s2668 = smul.addr 4, 173
    %s2669 = scalar_lea.vmem %s1, %s2668
    %2670 = vst [vmem:[%s2669] sm:%s2667] %v2666
    %s2671 = scalar_lea.vmem [#allocation0], 1392
    %v2672 = vld [vmem:[%s2671] sm:%s1629]
    %s2673 = sshllo.u32 0, 4
    %s2674 = smul.addr 4, 174
    %s2675 = scalar_lea.vmem %s1, %s2674
    %2676 = vst [vmem:[%s2675] sm:%s2673] %v2672
    %s2677 = scalar_lea.vmem [#allocation0], 1400
    %v2678 = vld [vmem:[%s2677] sm:%s1629]
    %s2679 = sshllo.u32 0, 4
    %s2680 = smul.addr 4, 175
    %s2681 = scalar_lea.vmem %s1, %s2680
    %2682 = vst [vmem:[%s2681] sm:%s2679] %v2678
    %s2683 = scalar_lea.vmem [#allocation0], 1408
    %v2684 = vld [vmem:[%s2683] sm:%s1629]
    %s2685 = sshllo.u32 0, 4
    %s2686 = smul.addr 4, 176
    %s2687 = scalar_lea.vmem %s1, %s2686
    %2688 = vst [vmem:[%s2687] sm:%s2685] %v2684
    %s2689 = scalar_lea.vmem [#allocation0], 1416
    %v2690 = vld [vmem:[%s2689] sm:%s1629]
    %s2691 = sshllo.u32 0, 4
    %s2692 = smul.addr 4, 177
    %s2693 = scalar_lea.vmem %s1, %s2692
    %2694 = vst [vmem:[%s2693] sm:%s2691] %v2690
    %s2695 = scalar_lea.vmem [#allocation0], 1424
    %v2696 = vld [vmem:[%s2695] sm:%s1629]
    %s2697 = sshllo.u32 0, 4
    %s2698 = smul.addr 4, 178
    %s2699 = scalar_lea.vmem %s1, %s2698
    %2700 = vst [vmem:[%s2699] sm:%s2697] %v2696
    %s2701 = scalar_lea.vmem [#allocation0], 1432
    %v2702 = vld [vmem:[%s2701] sm:%s1629]
    %s2703 = sshllo.u32 0, 4
    %s2704 = smul.addr 4, 179
    %s2705 = scalar_lea.vmem %s1, %s2704
    %2706 = vst [vmem:[%s2705] sm:%s2703] %v2702
    %s2707 = scalar_lea.vmem [#allocation0], 1440
    %v2708 = vld [vmem:[%s2707] sm:%s1629]
    %s2709 = sshllo.u32 0, 4
    %s2710 = smul.addr 4, 180
    %s2711 = scalar_lea.vmem %s1, %s2710
    %2712 = vst [vmem:[%s2711] sm:%s2709] %v2708
    %s2713 = scalar_lea.vmem [#allocation0], 1448
    %v2714 = vld [vmem:[%s2713] sm:%s1629]
    %s2715 = sshllo.u32 0, 4
    %s2716 = smul.addr 4, 181
    %s2717 = scalar_lea.vmem %s1, %s2716
    %2718 = vst [vmem:[%s2717] sm:%s2715] %v2714
    %s2719 = scalar_lea.vmem [#allocation0], 1456
    %v2720 = vld [vmem:[%s2719] sm:%s1629]
    %s2721 = sshllo.u32 0, 4
    %s2722 = smul.addr 4, 182
    %s2723 = scalar_lea.vmem %s1, %s2722
    %2724 = vst [vmem:[%s2723] sm:%s2721] %v2720
    %s2725 = scalar_lea.vmem [#allocation0], 1464
    %v2726 = vld [vmem:[%s2725] sm:%s1629]
    %s2727 = sshllo.u32 0, 4
    %s2728 = smul.addr 4, 183
    %s2729 = scalar_lea.vmem %s1, %s2728
    %2730 = vst [vmem:[%s2729] sm:%s2727] %v2726
    %s2731 = scalar_lea.vmem [#allocation0], 1472
    %v2732 = vld [vmem:[%s2731] sm:%s1629]
    %s2733 = sshllo.u32 0, 4
    %s2734 = smul.addr 4, 184
    %s2735 = scalar_lea.vmem %s1, %s2734
    %2736 = vst [vmem:[%s2735] sm:%s2733] %v2732
    %s2737 = scalar_lea.vmem [#allocation0], 1480
    %v2738 = vld [vmem:[%s2737] sm:%s1629]
    %s2739 = sshllo.u32 0, 4
    %s2740 = smul.addr 4, 185
    %s2741 = scalar_lea.vmem %s1, %s2740
    %2742 = vst [vmem:[%s2741] sm:%s2739] %v2738
    %s2743 = scalar_lea.vmem [#allocation0], 1488
    %v2744 = vld [vmem:[%s2743] sm:%s1629]
    %s2745 = sshllo.u32 0, 4
    %s2746 = smul.addr 4, 186
    %s2747 = scalar_lea.vmem %s1, %s2746
    %2748 = vst [vmem:[%s2747] sm:%s2745] %v2744
    %s2749 = scalar_lea.vmem [#allocation0], 1496
    %v2750 = vld [vmem:[%s2749] sm:%s1629]
    %s2751 = sshllo.u32 0, 4
    %s2752 = smul.addr 4, 187
    %s2753 = scalar_lea.vmem %s1, %s2752
    %2754 = vst [vmem:[%s2753] sm:%s2751] %v2750
    %s2755 = scalar_lea.vmem [#allocation0], 1504
    %v2756 = vld [vmem:[%s2755] sm:%s1629]
    %s2757 = sshllo.u32 0, 4
    %s2758 = smul.addr 4, 188
    %s2759 = scalar_lea.vmem %s1, %s2758
    %2760 = vst [vmem:[%s2759] sm:%s2757] %v2756
    %s2761 = scalar_lea.vmem [#allocation0], 1512
    %v2762 = vld [vmem:[%s2761] sm:%s1629]
    %s2763 = sshllo.u32 0, 4
    %s2764 = smul.addr 4, 189
    %s2765 = scalar_lea.vmem %s1, %s2764
    %2766 = vst [vmem:[%s2765] sm:%s2763] %v2762
    %s2767 = scalar_lea.vmem [#allocation0], 1520
    %v2768 = vld [vmem:[%s2767] sm:%s1629]
    %s2769 = sshllo.u32 0, 4
    %s2770 = smul.addr 4, 190
    %s2771 = scalar_lea.vmem %s1, %s2770
    %2772 = vst [vmem:[%s2771] sm:%s2769] %v2768
    %s2773 = scalar_lea.vmem [#allocation0], 1528
    %v2774 = vld [vmem:[%s2773] sm:%s1629]
    %s2775 = sshllo.u32 0, 4
    %s2776 = smul.addr 4, 191
    %s2777 = scalar_lea.vmem %s1, %s2776
    %2778 = vst [vmem:[%s2777] sm:%s2775] %v2774
    %s2779 = scalar_lea.vmem [#allocation0], 1536
    %v2780 = vld [vmem:[%s2779] sm:%s1629]
    %s2781 = sshllo.u32 0, 4
    %s2782 = smul.addr 4, 192
    %s2783 = scalar_lea.vmem %s1, %s2782
    %2784 = vst [vmem:[%s2783] sm:%s2781] %v2780
    %s2785 = scalar_lea.vmem [#allocation0], 1544
    %v2786 = vld [vmem:[%s2785] sm:%s1629]
    %s2787 = sshllo.u32 0, 4
    %s2788 = smul.addr 4, 193
    %s2789 = scalar_lea.vmem %s1, %s2788
    %2790 = vst [vmem:[%s2789] sm:%s2787] %v2786
    %s2791 = scalar_lea.vmem [#allocation0], 1552
    %v2792 = vld [vmem:[%s2791] sm:%s1629]
    %s2793 = sshllo.u32 0, 4
    %s2794 = smul.addr 4, 194
    %s2795 = scalar_lea.vmem %s1, %s2794
    %2796 = vst [vmem:[%s2795] sm:%s2793] %v2792
    %s2797 = scalar_lea.vmem [#allocation0], 1560
    %v2798 = vld [vmem:[%s2797] sm:%s1629]
    %s2799 = sshllo.u32 0, 4
    %s2800 = smul.addr 4, 195
    %s2801 = scalar_lea.vmem %s1, %s2800
    %2802 = vst [vmem:[%s2801] sm:%s2799] %v2798
    %s2803 = scalar_lea.vmem [#allocation0], 1568
    %v2804 = vld [vmem:[%s2803] sm:%s1629]
    %s2805 = sshllo.u32 0, 4
    %s2806 = smul.addr 4, 196
    %s2807 = scalar_lea.vmem %s1, %s2806
    %2808 = vst [vmem:[%s2807] sm:%s2805] %v2804
    %s2809 = scalar_lea.vmem [#allocation0], 1576
    %v2810 = vld [vmem:[%s2809] sm:%s1629]
    %s2811 = sshllo.u32 0, 4
    %s2812 = smul.addr 4, 197
    %s2813 = scalar_lea.vmem %s1, %s2812
    %2814 = vst [vmem:[%s2813] sm:%s2811] %v2810
    %s2815 = scalar_lea.vmem [#allocation0], 1584
    %v2816 = vld [vmem:[%s2815] sm:%s1629]
    %s2817 = sshllo.u32 0, 4
    %s2818 = smul.addr 4, 198
    %s2819 = scalar_lea.vmem %s1, %s2818
    %2820 = vst [vmem:[%s2819] sm:%s2817] %v2816
    %s2821 = scalar_lea.vmem [#allocation0], 1592
    %v2822 = vld [vmem:[%s2821] sm:%s1629]
    %s2823 = sshllo.u32 0, 4
    %s2824 = smul.addr 4, 199
    %s2825 = scalar_lea.vmem %s1, %s2824
    %2826 = vst [vmem:[%s2825] sm:%s2823] %v2822
    %s2827 = scalar_lea.vmem [#allocation0], 1600
    %v2828 = vld [vmem:[%s2827] sm:%s1629]
    %s2829 = sshllo.u32 0, 4
    %s2830 = smul.addr 4, 200
    %s2831 = scalar_lea.vmem %s1, %s2830
    %2832 = vst [vmem:[%s2831] sm:%s2829] %v2828
    %s2833 = scalar_lea.vmem [#allocation0], 1608
    %v2834 = vld [vmem:[%s2833] sm:%s1629]
    %s2835 = sshllo.u32 0, 4
    %s2836 = smul.addr 4, 201
    %s2837 = scalar_lea.vmem %s1, %s2836
    %2838 = vst [vmem:[%s2837] sm:%s2835] %v2834
    %s2839 = scalar_lea.vmem [#allocation0], 1616
    %v2840 = vld [vmem:[%s2839] sm:%s1629]
    %s2841 = sshllo.u32 0, 4
    %s2842 = smul.addr 4, 202
    %s2843 = scalar_lea.vmem %s1, %s2842
    %2844 = vst [vmem:[%s2843] sm:%s2841] %v2840
    %s2845 = scalar_lea.vmem [#allocation0], 1624
    %v2846 = vld [vmem:[%s2845] sm:%s1629]
    %s2847 = sshllo.u32 0, 4
    %s2848 = smul.addr 4, 203
    %s2849 = scalar_lea.vmem %s1, %s2848
    %2850 = vst [vmem:[%s2849] sm:%s2847] %v2846
    %s2851 = scalar_lea.vmem [#allocation0], 1632
    %v2852 = vld [vmem:[%s2851] sm:%s1629]
    %s2853 = sshllo.u32 0, 4
    %s2854 = smul.addr 4, 204
    %s2855 = scalar_lea.vmem %s1, %s2854
    %2856 = vst [vmem:[%s2855] sm:%s2853] %v2852
    %s2857 = scalar_lea.vmem [#allocation0], 1640
    %v2858 = vld [vmem:[%s2857] sm:%s1629]
    %s2859 = sshllo.u32 0, 4
    %s2860 = smul.addr 4, 205
    %s2861 = scalar_lea.vmem %s1, %s2860
    %2862 = vst [vmem:[%s2861] sm:%s2859] %v2858
    %s2863 = scalar_lea.vmem [#allocation0], 1648
    %v2864 = vld [vmem:[%s2863] sm:%s1629]
    %s2865 = sshllo.u32 0, 4
    %s2866 = smul.addr 4, 206
    %s2867 = scalar_lea.vmem %s1, %s2866
    %2868 = vst [vmem:[%s2867] sm:%s2865] %v2864
    %s2869 = scalar_lea.vmem [#allocation0], 1656
    %v2870 = vld [vmem:[%s2869] sm:%s1629]
    %s2871 = sshllo.u32 0, 4
    %s2872 = smul.addr 4, 207
    %s2873 = scalar_lea.vmem %s1, %s2872
    %2874 = vst [vmem:[%s2873] sm:%s2871] %v2870
    %s2875 = scalar_lea.vmem [#allocation0], 1664
    %v2876 = vld [vmem:[%s2875] sm:%s1629]
    %s2877 = sshllo.u32 0, 4
    %s2878 = smul.addr 4, 208
    %s2879 = scalar_lea.vmem %s1, %s2878
    %2880 = vst [vmem:[%s2879] sm:%s2877] %v2876
    %s2881 = scalar_lea.vmem [#allocation0], 1672
    %v2882 = vld [vmem:[%s2881] sm:%s1629]
    %s2883 = sshllo.u32 0, 4
    %s2884 = smul.addr 4, 209
    %s2885 = scalar_lea.vmem %s1, %s2884
    %2886 = vst [vmem:[%s2885] sm:%s2883] %v2882
    %s2887 = scalar_lea.vmem [#allocation0], 1680
    %v2888 = vld [vmem:[%s2887] sm:%s1629]
    %s2889 = sshllo.u32 0, 4
    %s2890 = smul.addr 4, 210
    %s2891 = scalar_lea.vmem %s1, %s2890
    %2892 = vst [vmem:[%s2891] sm:%s2889] %v2888
    %s2893 = scalar_lea.vmem [#allocation0], 1688
    %v2894 = vld [vmem:[%s2893] sm:%s1629]
    %s2895 = sshllo.u32 0, 4
    %s2896 = smul.addr 4, 211
    %s2897 = scalar_lea.vmem %s1, %s2896
    %2898 = vst [vmem:[%s2897] sm:%s2895] %v2894
    %s2899 = scalar_lea.vmem [#allocation0], 1696
    %v2900 = vld [vmem:[%s2899] sm:%s1629]
    %s2901 = sshllo.u32 0, 4
    %s2902 = smul.addr 4, 212
    %s2903 = scalar_lea.vmem %s1, %s2902
    %2904 = vst [vmem:[%s2903] sm:%s2901] %v2900
    %s2905 = scalar_lea.vmem [#allocation0], 1704
    %v2906 = vld [vmem:[%s2905] sm:%s1629]
    %s2907 = sshllo.u32 0, 4
    %s2908 = smul.addr 4, 213
    %s2909 = scalar_lea.vmem %s1, %s2908
    %2910 = vst [vmem:[%s2909] sm:%s2907] %v2906
    %s2911 = scalar_lea.vmem [#allocation0], 1712
    %v2912 = vld [vmem:[%s2911] sm:%s1629]
    %s2913 = sshllo.u32 0, 4
    %s2914 = smul.addr 4, 214
    %s2915 = scalar_lea.vmem %s1, %s2914
    %2916 = vst [vmem:[%s2915] sm:%s2913] %v2912
    %s2917 = scalar_lea.vmem [#allocation0], 1720
    %v2918 = vld [vmem:[%s2917] sm:%s1629]
    %s2919 = sshllo.u32 0, 4
    %s2920 = smul.addr 4, 215
    %s2921 = scalar_lea.vmem %s1, %s2920
    %2922 = vst [vmem:[%s2921] sm:%s2919] %v2918
    %s2923 = scalar_lea.vmem [#allocation0], 1728
    %v2924 = vld [vmem:[%s2923] sm:%s1629]
    %s2925 = sshllo.u32 0, 4
    %s2926 = smul.addr 4, 216
    %s2927 = scalar_lea.vmem %s1, %s2926
    %2928 = vst [vmem:[%s2927] sm:%s2925] %v2924
    %s2929 = scalar_lea.vmem [#allocation0], 1736
    %v2930 = vld [vmem:[%s2929] sm:%s1629]
    %s2931 = sshllo.u32 0, 4
    %s2932 = smul.addr 4, 217
    %s2933 = scalar_lea.vmem %s1, %s2932
    %2934 = vst [vmem:[%s2933] sm:%s2931] %v2930
    %s2935 = scalar_lea.vmem [#allocation0], 1744
    %v2936 = vld [vmem:[%s2935] sm:%s1629]
    %s2937 = sshllo.u32 0, 4
    %s2938 = smul.addr 4, 218
    %s2939 = scalar_lea.vmem %s1, %s2938
    %2940 = vst [vmem:[%s2939] sm:%s2937] %v2936
    %s2941 = scalar_lea.vmem [#allocation0], 1752
    %v2942 = vld [vmem:[%s2941] sm:%s1629]
    %s2943 = sshllo.u32 0, 4
    %s2944 = smul.addr 4, 219
    %s2945 = scalar_lea.vmem %s1, %s2944
    %2946 = vst [vmem:[%s2945] sm:%s2943] %v2942
    %s2947 = scalar_lea.vmem [#allocation0], 1760
    %v2948 = vld [vmem:[%s2947] sm:%s1629]
    %s2949 = sshllo.u32 0, 4
    %s2950 = smul.addr 4, 220
    %s2951 = scalar_lea.vmem %s1, %s2950
    %2952 = vst [vmem:[%s2951] sm:%s2949] %v2948
    %s2953 = scalar_lea.vmem [#allocation0], 1768
    %v2954 = vld [vmem:[%s2953] sm:%s1629]
    %s2955 = sshllo.u32 0, 4
    %s2956 = smul.addr 4, 221
    %s2957 = scalar_lea.vmem %s1, %s2956
    %2958 = vst [vmem:[%s2957] sm:%s2955] %v2954
    %s2959 = scalar_lea.vmem [#allocation0], 1776
    %v2960 = vld [vmem:[%s2959] sm:%s1629]
    %s2961 = sshllo.u32 0, 4
    %s2962 = smul.addr 4, 222
    %s2963 = scalar_lea.vmem %s1, %s2962
    %2964 = vst [vmem:[%s2963] sm:%s2961] %v2960
    %s2965 = scalar_lea.vmem [#allocation0], 1784
    %v2966 = vld [vmem:[%s2965] sm:%s1629]
    %s2967 = sshllo.u32 0, 4
    %s2968 = smul.addr 4, 223
    %s2969 = scalar_lea.vmem %s1, %s2968
    %2970 = vst [vmem:[%s2969] sm:%s2967] %v2966
    %s2971 = scalar_lea.vmem [#allocation0], 1792
    %v2972 = vld [vmem:[%s2971] sm:%s1629]
    %s2973 = sshllo.u32 0, 4
    %s2974 = smul.addr 4, 224
    %s2975 = scalar_lea.vmem %s1, %s2974
    %2976 = vst [vmem:[%s2975] sm:%s2973] %v2972
    %s2977 = scalar_lea.vmem [#allocation0], 1800
    %v2978 = vld [vmem:[%s2977] sm:%s1629]
    %s2979 = sshllo.u32 0, 4
    %s2980 = smul.addr 4, 225
    %s2981 = scalar_lea.vmem %s1, %s2980
    %2982 = vst [vmem:[%s2981] sm:%s2979] %v2978
    %s2983 = scalar_lea.vmem [#allocation0], 1808
    %v2984 = vld [vmem:[%s2983] sm:%s1629]
    %s2985 = sshllo.u32 0, 4
    %s2986 = smul.addr 4, 226
    %s2987 = scalar_lea.vmem %s1, %s2986
    %2988 = vst [vmem:[%s2987] sm:%s2985] %v2984
    %s2989 = scalar_lea.vmem [#allocation0], 1816
    %v2990 = vld [vmem:[%s2989] sm:%s1629]
    %s2991 = sshllo.u32 0, 4
    %s2992 = smul.addr 4, 227
    %s2993 = scalar_lea.vmem %s1, %s2992
    %2994 = vst [vmem:[%s2993] sm:%s2991] %v2990
    %s2995 = scalar_lea.vmem [#allocation0], 1824
    %v2996 = vld [vmem:[%s2995] sm:%s1629]
    %s2997 = sshllo.u32 0, 4
    %s2998 = smul.addr 4, 228
    %s2999 = scalar_lea.vmem %s1, %s2998
    %3000 = vst [vmem:[%s2999] sm:%s2997] %v2996
    %s3001 = scalar_lea.vmem [#allocation0], 1832
    %v3002 = vld [vmem:[%s3001] sm:%s1629]
    %s3003 = sshllo.u32 0, 4
    %s3004 = smul.addr 4, 229
    %s3005 = scalar_lea.vmem %s1, %s3004
    %3006 = vst [vmem:[%s3005] sm:%s3003] %v3002
    %s3007 = scalar_lea.vmem [#allocation0], 1840
    %v3008 = vld [vmem:[%s3007] sm:%s1629]
    %s3009 = sshllo.u32 0, 4
    %s3010 = smul.addr 4, 230
    %s3011 = scalar_lea.vmem %s1, %s3010
    %3012 = vst [vmem:[%s3011] sm:%s3009] %v3008
    %s3013 = scalar_lea.vmem [#allocation0], 1848
    %v3014 = vld [vmem:[%s3013] sm:%s1629]
    %s3015 = sshllo.u32 0, 4
    %s3016 = smul.addr 4, 231
    %s3017 = scalar_lea.vmem %s1, %s3016
    %3018 = vst [vmem:[%s3017] sm:%s3015] %v3014
    %s3019 = scalar_lea.vmem [#allocation0], 1856
    %v3020 = vld [vmem:[%s3019] sm:%s1629]
    %s3021 = sshllo.u32 0, 4
    %s3022 = smul.addr 4, 232
    %s3023 = scalar_lea.vmem %s1, %s3022
    %3024 = vst [vmem:[%s3023] sm:%s3021] %v3020
    %s3025 = scalar_lea.vmem [#allocation0], 1864
    %v3026 = vld [vmem:[%s3025] sm:%s1629]
    %s3027 = sshllo.u32 0, 4
    %s3028 = smul.addr 4, 233
    %s3029 = scalar_lea.vmem %s1, %s3028
    %3030 = vst [vmem:[%s3029] sm:%s3027] %v3026
    %s3031 = scalar_lea.vmem [#allocation0], 1872
    %v3032 = vld [vmem:[%s3031] sm:%s1629]
    %s3033 = sshllo.u32 0, 4
    %s3034 = smul.addr 4, 234
    %s3035 = scalar_lea.vmem %s1, %s3034
    %3036 = vst [vmem:[%s3035] sm:%s3033] %v3032
    %s3037 = scalar_lea.vmem [#allocation0], 1880
    %v3038 = vld [vmem:[%s3037] sm:%s1629]
    %s3039 = sshllo.u32 0, 4
    %s3040 = smul.addr 4, 235
    %s3041 = scalar_lea.vmem %s1, %s3040
    %3042 = vst [vmem:[%s3041] sm:%s3039] %v3038
    %s3043 = scalar_lea.vmem [#allocation0], 1888
    %v3044 = vld [vmem:[%s3043] sm:%s1629]
    %s3045 = sshllo.u32 0, 4
    %s3046 = smul.addr 4, 236
    %s3047 = scalar_lea.vmem %s1, %s3046
    %3048 = vst [vmem:[%s3047] sm:%s3045] %v3044
    %s3049 = scalar_lea.vmem [#allocation0], 1896
    %v3050 = vld [vmem:[%s3049] sm:%s1629]
    %s3051 = sshllo.u32 0, 4
    %s3052 = smul.addr 4, 237
    %s3053 = scalar_lea.vmem %s1, %s3052
    %3054 = vst [vmem:[%s3053] sm:%s3051] %v3050
    %s3055 = scalar_lea.vmem [#allocation0], 1904
    %v3056 = vld [vmem:[%s3055] sm:%s1629]
    %s3057 = sshllo.u32 0, 4
    %s3058 = smul.addr 4, 238
    %s3059 = scalar_lea.vmem %s1, %s3058
    %3060 = vst [vmem:[%s3059] sm:%s3057] %v3056
    %s3061 = scalar_lea.vmem [#allocation0], 1912
    %v3062 = vld [vmem:[%s3061] sm:%s1629]
    %s3063 = sshllo.u32 0, 4
    %s3064 = smul.addr 4, 239
    %s3065 = scalar_lea.vmem %s1, %s3064
    %3066 = vst [vmem:[%s3065] sm:%s3063] %v3062
    %s3067 = scalar_lea.vmem [#allocation0], 1920
    %v3068 = vld [vmem:[%s3067] sm:%s1629]
    %s3069 = sshllo.u32 0, 4
    %s3070 = smul.addr 4, 240
    %s3071 = scalar_lea.vmem %s1, %s3070
    %3072 = vst [vmem:[%s3071] sm:%s3069] %v3068
    %s3073 = scalar_lea.vmem [#allocation0], 1928
    %v3074 = vld [vmem:[%s3073] sm:%s1629]
    %s3075 = sshllo.u32 0, 4
    %s3076 = smul.addr 4, 241
    %s3077 = scalar_lea.vmem %s1, %s3076
    %3078 = vst [vmem:[%s3077] sm:%s3075] %v3074
    %s3079 = scalar_lea.vmem [#allocation0], 1936
    %v3080 = vld [vmem:[%s3079] sm:%s1629]
    %s3081 = sshllo.u32 0, 4
    %s3082 = smul.addr 4, 242
    %s3083 = scalar_lea.vmem %s1, %s3082
    %3084 = vst [vmem:[%s3083] sm:%s3081] %v3080
    %s3085 = scalar_lea.vmem [#allocation0], 1944
    %v3086 = vld [vmem:[%s3085] sm:%s1629]
    %s3087 = sshllo.u32 0, 4
    %s3088 = smul.addr 4, 243
    %s3089 = scalar_lea.vmem %s1, %s3088
    %3090 = vst [vmem:[%s3089] sm:%s3087] %v3086
    %s3091 = scalar_lea.vmem [#allocation0], 1952
    %v3092 = vld [vmem:[%s3091] sm:%s1629]
    %s3093 = sshllo.u32 0, 4
    %s3094 = smul.addr 4, 244
    %s3095 = scalar_lea.vmem %s1, %s3094
    %3096 = vst [vmem:[%s3095] sm:%s3093] %v3092
    %s3097 = scalar_lea.vmem [#allocation0], 1960
    %v3098 = vld [vmem:[%s3097] sm:%s1629]
    %s3099 = sshllo.u32 0, 4
    %s3100 = smul.addr 4, 245
    %s3101 = scalar_lea.vmem %s1, %s3100
    %3102 = vst [vmem:[%s3101] sm:%s3099] %v3098
    %s3103 = scalar_lea.vmem [#allocation0], 1968
    %v3104 = vld [vmem:[%s3103] sm:%s1629]
    %s3105 = sshllo.u32 0, 4
    %s3106 = smul.addr 4, 246
    %s3107 = scalar_lea.vmem %s1, %s3106
    %3108 = vst [vmem:[%s3107] sm:%s3105] %v3104
    %s3109 = scalar_lea.vmem [#allocation0], 1976
    %v3110 = vld [vmem:[%s3109] sm:%s1629]
    %s3111 = sshllo.u32 0, 4
    %s3112 = smul.addr 4, 247
    %s3113 = scalar_lea.vmem %s1, %s3112
    %3114 = vst [vmem:[%s3113] sm:%s3111] %v3110
    %s3115 = scalar_lea.vmem [#allocation0], 1984
    %v3116 = vld [vmem:[%s3115] sm:%s1629]
    %s3117 = sshllo.u32 0, 4
    %s3118 = smul.addr 4, 248
    %s3119 = scalar_lea.vmem %s1, %s3118
    %3120 = vst [vmem:[%s3119] sm:%s3117] %v3116
    %s3121 = scalar_lea.vmem [#allocation0], 1992
    %v3122 = vld [vmem:[%s3121] sm:%s1629]
    %s3123 = sshllo.u32 0, 4
    %s3124 = smul.addr 4, 249
    %s3125 = scalar_lea.vmem %s1, %s3124
    %3126 = vst [vmem:[%s3125] sm:%s3123] %v3122
    %s3127 = scalar_lea.vmem [#allocation0], 2000
    %v3128 = vld [vmem:[%s3127] sm:%s1629]
    %s3129 = sshllo.u32 0, 4
    %s3130 = smul.addr 4, 250
    %s3131 = scalar_lea.vmem %s1, %s3130
    %3132 = vst [vmem:[%s3131] sm:%s3129] %v3128
    %s3133 = scalar_lea.vmem [#allocation0], 2008
    %v3134 = vld [vmem:[%s3133] sm:%s1629]
    %s3135 = sshllo.u32 0, 4
    %s3136 = smul.addr 4, 251
    %s3137 = scalar_lea.vmem %s1, %s3136
    %3138 = vst [vmem:[%s3137] sm:%s3135] %v3134
    %s3139 = scalar_lea.vmem [#allocation0], 2016
    %v3140 = vld [vmem:[%s3139] sm:%s1629]
    %s3141 = sshllo.u32 0, 4
    %s3142 = smul.addr 4, 252
    %s3143 = scalar_lea.vmem %s1, %s3142
    %3144 = vst [vmem:[%s3143] sm:%s3141] %v3140
    %s3145 = scalar_lea.vmem [#allocation0], 2024
    %v3146 = vld [vmem:[%s3145] sm:%s1629]
    %s3147 = sshllo.u32 0, 4
    %s3148 = smul.addr 4, 253
    %s3149 = scalar_lea.vmem %s1, %s3148
    %3150 = vst [vmem:[%s3149] sm:%s3147] %v3146
    %s3151 = scalar_lea.vmem [#allocation0], 2032
    %v3152 = vld [vmem:[%s3151] sm:%s1629]
    %s3153 = sshllo.u32 0, 4
    %s3154 = smul.addr 4, 254
    %s3155 = scalar_lea.vmem %s1, %s3154
    %3156 = vst [vmem:[%s3155] sm:%s3153] %v3152
    %s3157 = scalar_lea.vmem [#allocation0], 2040
    %v3158 = vld [vmem:[%s3157] sm:%s1629]
    %s3159 = sshllo.u32 0, 4
    %s3160 = smul.addr 4, 255
    %s3161 = scalar_lea.vmem %s1, %s3160
    %3162 = vst [vmem:[%s3161] sm:%s3159] %v3158
    %s3163 = scalar_lea.vmem [#allocation0], 2048
    %v3164 = vld [vmem:[%s3163] sm:%s1629]
    %s3165 = sshllo.u32 0, 4
    %s3166 = smul.addr 4, 256
    %s3167 = scalar_lea.vmem %s1, %s3166
    %3168 = vst [vmem:[%s3167] sm:%s3165] %v3164
    %s3169 = scalar_lea.vmem [#allocation0], 2056
    %v3170 = vld [vmem:[%s3169] sm:%s1629]
    %s3171 = sshllo.u32 0, 4
    %s3172 = smul.addr 4, 257
    %s3173 = scalar_lea.vmem %s1, %s3172
    %3174 = vst [vmem:[%s3173] sm:%s3171] %v3170
    %s3175 = scalar_lea.vmem [#allocation0], 2064
    %v3176 = vld [vmem:[%s3175] sm:%s1629]
    %s3177 = sshllo.u32 0, 4
    %s3178 = smul.addr 4, 258
    %s3179 = scalar_lea.vmem %s1, %s3178
    %3180 = vst [vmem:[%s3179] sm:%s3177] %v3176
    %s3181 = scalar_lea.vmem [#allocation0], 2072
    %v3182 = vld [vmem:[%s3181] sm:%s1629]
    %s3183 = sshllo.u32 0, 4
    %s3184 = smul.addr 4, 259
    %s3185 = scalar_lea.vmem %s1, %s3184
    %3186 = vst [vmem:[%s3185] sm:%s3183] %v3182
    %s3187 = scalar_lea.vmem [#allocation0], 2080
    %v3188 = vld [vmem:[%s3187] sm:%s1629]
    %s3189 = sshllo.u32 0, 4
    %s3190 = smul.addr 4, 260
    %s3191 = scalar_lea.vmem %s1, %s3190
    %3192 = vst [vmem:[%s3191] sm:%s3189] %v3188
    %s3193 = scalar_lea.vmem [#allocation0], 2088
    %v3194 = vld [vmem:[%s3193] sm:%s1629]
    %s3195 = sshllo.u32 0, 4
    %s3196 = smul.addr 4, 261
    %s3197 = scalar_lea.vmem %s1, %s3196
    %3198 = vst [vmem:[%s3197] sm:%s3195] %v3194
    %s3199 = scalar_lea.vmem [#allocation0], 2096
    %v3200 = vld [vmem:[%s3199] sm:%s1629]
    %s3201 = sshllo.u32 0, 4
    %s3202 = smul.addr 4, 262
    %s3203 = scalar_lea.vmem %s1, %s3202
    %3204 = vst [vmem:[%s3203] sm:%s3201] %v3200
    %s3205 = scalar_lea.vmem [#allocation0], 2104
    %v3206 = vld [vmem:[%s3205] sm:%s1629]
    %s3207 = sshllo.u32 0, 4
    %s3208 = smul.addr 4, 263
    %s3209 = scalar_lea.vmem %s1, %s3208
    %3210 = vst [vmem:[%s3209] sm:%s3207] %v3206
    %s3211 = scalar_lea.vmem [#allocation0], 2112
    %v3212 = vld [vmem:[%s3211] sm:%s1629]
    %s3213 = sshllo.u32 0, 4
    %s3214 = smul.addr 4, 264
    %s3215 = scalar_lea.vmem %s1, %s3214
    %3216 = vst [vmem:[%s3215] sm:%s3213] %v3212
    %s3217 = scalar_lea.vmem [#allocation0], 2120
    %v3218 = vld [vmem:[%s3217] sm:%s1629]
    %s3219 = sshllo.u32 0, 4
    %s3220 = smul.addr 4, 265
    %s3221 = scalar_lea.vmem %s1, %s3220
    %3222 = vst [vmem:[%s3221] sm:%s3219] %v3218
    %s3223 = scalar_lea.vmem [#allocation0], 2128
    %v3224 = vld [vmem:[%s3223] sm:%s1629]
    %s3225 = sshllo.u32 0, 4
    %s3226 = smul.addr 4, 266
    %s3227 = scalar_lea.vmem %s1, %s3226
    %3228 = vst [vmem:[%s3227] sm:%s3225] %v3224
    %s3229 = scalar_lea.vmem [#allocation0], 2136
    %v3230 = vld [vmem:[%s3229] sm:%s1629]
    %s3231 = sshllo.u32 0, 4
    %s3232 = smul.addr 4, 267
    %s3233 = scalar_lea.vmem %s1, %s3232
    %3234 = vst [vmem:[%s3233] sm:%s3231] %v3230
    %s3235 = scalar_lea.vmem [#allocation0], 2144
    %v3236 = vld [vmem:[%s3235] sm:%s1629]
    %s3237 = sshllo.u32 0, 4
    %s3238 = smul.addr 4, 268
    %s3239 = scalar_lea.vmem %s1, %s3238
    %3240 = vst [vmem:[%s3239] sm:%s3237] %v3236
    %s3241 = scalar_lea.vmem [#allocation0], 2152
    %v3242 = vld [vmem:[%s3241] sm:%s1629]
    %s3243 = sshllo.u32 0, 4
    %s3244 = smul.addr 4, 269
    %s3245 = scalar_lea.vmem %s1, %s3244
    %3246 = vst [vmem:[%s3245] sm:%s3243] %v3242
    %s3247 = scalar_lea.vmem [#allocation0], 2160
    %v3248 = vld [vmem:[%s3247] sm:%s1629]
    %s3249 = sshllo.u32 0, 4
    %s3250 = smul.addr 4, 270
    %s3251 = scalar_lea.vmem %s1, %s3250
    %3252 = vst [vmem:[%s3251] sm:%s3249] %v3248
    %s3253 = scalar_lea.vmem [#allocation0], 2168
    %v3254 = vld [vmem:[%s3253] sm:%s1629]
    %s3255 = sshllo.u32 0, 4
    %s3256 = smul.addr 4, 271
    %s3257 = scalar_lea.vmem %s1, %s3256
    %3258 = vst [vmem:[%s3257] sm:%s3255] %v3254
    %s3259 = scalar_lea.vmem [#allocation0], 2176
    %v3260 = vld [vmem:[%s3259] sm:%s1629]
    %s3261 = sshllo.u32 0, 4
    %s3262 = smul.addr 4, 272
    %s3263 = scalar_lea.vmem %s1, %s3262
    %3264 = vst [vmem:[%s3263] sm:%s3261] %v3260
    %s3265 = scalar_lea.vmem [#allocation0], 2184
    %v3266 = vld [vmem:[%s3265] sm:%s1629]
    %s3267 = sshllo.u32 0, 4
    %s3268 = smul.addr 4, 273
    %s3269 = scalar_lea.vmem %s1, %s3268
    %3270 = vst [vmem:[%s3269] sm:%s3267] %v3266
    %s3271 = scalar_lea.vmem [#allocation0], 2192
    %v3272 = vld [vmem:[%s3271] sm:%s1629]
    %s3273 = sshllo.u32 0, 4
    %s3274 = smul.addr 4, 274
    %s3275 = scalar_lea.vmem %s1, %s3274
    %3276 = vst [vmem:[%s3275] sm:%s3273] %v3272
    %s3277 = scalar_lea.vmem [#allocation0], 2200
    %v3278 = vld [vmem:[%s3277] sm:%s1629]
    %s3279 = sshllo.u32 0, 4
    %s3280 = smul.addr 4, 275
    %s3281 = scalar_lea.vmem %s1, %s3280
    %3282 = vst [vmem:[%s3281] sm:%s3279] %v3278
    %s3283 = scalar_lea.vmem [#allocation0], 2208
    %v3284 = vld [vmem:[%s3283] sm:%s1629]
    %s3285 = sshllo.u32 0, 4
    %s3286 = smul.addr 4, 276
    %s3287 = scalar_lea.vmem %s1, %s3286
    %3288 = vst [vmem:[%s3287] sm:%s3285] %v3284
    %s3289 = scalar_lea.vmem [#allocation0], 2216
    %v3290 = vld [vmem:[%s3289] sm:%s1629]
    %s3291 = sshllo.u32 0, 4
    %s3292 = smul.addr 4, 277
    %s3293 = scalar_lea.vmem %s1, %s3292
    %3294 = vst [vmem:[%s3293] sm:%s3291] %v3290
    %s3295 = scalar_lea.vmem [#allocation0], 2224
    %v3296 = vld [vmem:[%s3295] sm:%s1629]
    %s3297 = sshllo.u32 0, 4
    %s3298 = smul.addr 4, 278
    %s3299 = scalar_lea.vmem %s1, %s3298
    %3300 = vst [vmem:[%s3299] sm:%s3297] %v3296
    %s3301 = scalar_lea.vmem [#allocation0], 2232
    %v3302 = vld [vmem:[%s3301] sm:%s1629]
    %s3303 = sshllo.u32 0, 4
    %s3304 = smul.addr 4, 279
    %s3305 = scalar_lea.vmem %s1, %s3304
    %3306 = vst [vmem:[%s3305] sm:%s3303] %v3302
    %s3307 = scalar_lea.vmem [#allocation0], 2240
    %v3308 = vld [vmem:[%s3307] sm:%s1629]
    %s3309 = sshllo.u32 0, 4
    %s3310 = smul.addr 4, 280
    %s3311 = scalar_lea.vmem %s1, %s3310
    %3312 = vst [vmem:[%s3311] sm:%s3309] %v3308
    %s3313 = scalar_lea.vmem [#allocation0], 2248
    %v3314 = vld [vmem:[%s3313] sm:%s1629]
    %s3315 = sshllo.u32 0, 4
    %s3316 = smul.addr 4, 281
    %s3317 = scalar_lea.vmem %s1, %s3316
    %3318 = vst [vmem:[%s3317] sm:%s3315] %v3314
    %s3319 = scalar_lea.vmem [#allocation0], 2256
    %v3320 = vld [vmem:[%s3319] sm:%s1629]
    %s3321 = sshllo.u32 0, 4
    %s3322 = smul.addr 4, 282
    %s3323 = scalar_lea.vmem %s1, %s3322
    %3324 = vst [vmem:[%s3323] sm:%s3321] %v3320
    %s3325 = scalar_lea.vmem [#allocation0], 2264
    %v3326 = vld [vmem:[%s3325] sm:%s1629]
    %s3327 = sshllo.u32 0, 4
    %s3328 = smul.addr 4, 283
    %s3329 = scalar_lea.vmem %s1, %s3328
    %3330 = vst [vmem:[%s3329] sm:%s3327] %v3326
    %s3331 = scalar_lea.vmem [#allocation0], 2272
    %v3332 = vld [vmem:[%s3331] sm:%s1629]
    %s3333 = sshllo.u32 0, 4
    %s3334 = smul.addr 4, 284
    %s3335 = scalar_lea.vmem %s1, %s3334
    %3336 = vst [vmem:[%s3335] sm:%s3333] %v3332
    %s3337 = scalar_lea.vmem [#allocation0], 2280
    %v3338 = vld [vmem:[%s3337] sm:%s1629]
    %s3339 = sshllo.u32 0, 4
    %s3340 = smul.addr 4, 285
    %s3341 = scalar_lea.vmem %s1, %s3340
    %3342 = vst [vmem:[%s3341] sm:%s3339] %v3338
    %s3343 = scalar_lea.vmem [#allocation0], 2288
    %v3344 = vld [vmem:[%s3343] sm:%s1629]
    %s3345 = sshllo.u32 0, 4
    %s3346 = smul.addr 4, 286
    %s3347 = scalar_lea.vmem %s1, %s3346
    %3348 = vst [vmem:[%s3347] sm:%s3345] %v3344
    %s3349 = scalar_lea.vmem [#allocation0], 2296
    %v3350 = vld [vmem:[%s3349] sm:%s1629]
    %s3351 = sshllo.u32 0, 4
    %s3352 = smul.addr 4, 287
    %s3353 = scalar_lea.vmem %s1, %s3352
    %3354 = vst [vmem:[%s3353] sm:%s3351] %v3350
    %s3355 = scalar_lea.vmem [#allocation0], 2304
    %v3356 = vld [vmem:[%s3355] sm:%s1629]
    %s3357 = sshllo.u32 0, 4
    %s3358 = smul.addr 4, 288
    %s3359 = scalar_lea.vmem %s1, %s3358
    %3360 = vst [vmem:[%s3359] sm:%s3357] %v3356
    %s3361 = scalar_lea.vmem [#allocation0], 2312
    %v3362 = vld [vmem:[%s3361] sm:%s1629]
    %s3363 = sshllo.u32 0, 4
    %s3364 = smul.addr 4, 289
    %s3365 = scalar_lea.vmem %s1, %s3364
    %3366 = vst [vmem:[%s3365] sm:%s3363] %v3362
    %s3367 = scalar_lea.vmem [#allocation0], 2320
    %v3368 = vld [vmem:[%s3367] sm:%s1629]
    %s3369 = sshllo.u32 0, 4
    %s3370 = smul.addr 4, 290
    %s3371 = scalar_lea.vmem %s1, %s3370
    %3372 = vst [vmem:[%s3371] sm:%s3369] %v3368
    %s3373 = scalar_lea.vmem [#allocation0], 2328
    %v3374 = vld [vmem:[%s3373] sm:%s1629]
    %s3375 = sshllo.u32 0, 4
    %s3376 = smul.addr 4, 291
    %s3377 = scalar_lea.vmem %s1, %s3376
    %3378 = vst [vmem:[%s3377] sm:%s3375] %v3374
    %s3379 = scalar_lea.vmem [#allocation0], 2336
    %v3380 = vld [vmem:[%s3379] sm:%s1629]
    %s3381 = sshllo.u32 0, 4
    %s3382 = smul.addr 4, 292
    %s3383 = scalar_lea.vmem %s1, %s3382
    %3384 = vst [vmem:[%s3383] sm:%s3381] %v3380
    %s3385 = scalar_lea.vmem [#allocation0], 2344
    %v3386 = vld [vmem:[%s3385] sm:%s1629]
    %s3387 = sshllo.u32 0, 4
    %s3388 = smul.addr 4, 293
    %s3389 = scalar_lea.vmem %s1, %s3388
    %3390 = vst [vmem:[%s3389] sm:%s3387] %v3386
    %s3391 = scalar_lea.vmem [#allocation0], 2352
    %v3392 = vld [vmem:[%s3391] sm:%s1629]
    %s3393 = sshllo.u32 0, 4
    %s3394 = smul.addr 4, 294
    %s3395 = scalar_lea.vmem %s1, %s3394
    %3396 = vst [vmem:[%s3395] sm:%s3393] %v3392
    %s3397 = scalar_lea.vmem [#allocation0], 2360
    %v3398 = vld [vmem:[%s3397] sm:%s1629]
    %s3399 = sshllo.u32 0, 4
    %s3400 = smul.addr 4, 295
    %s3401 = scalar_lea.vmem %s1, %s3400
    %3402 = vst [vmem:[%s3401] sm:%s3399] %v3398
    %s3403 = scalar_lea.vmem [#allocation0], 2368
    %v3404 = vld [vmem:[%s3403] sm:%s1629]
    %s3405 = sshllo.u32 0, 4
    %s3406 = smul.addr 4, 296
    %s3407 = scalar_lea.vmem %s1, %s3406
    %3408 = vst [vmem:[%s3407] sm:%s3405] %v3404
    %s3409 = scalar_lea.vmem [#allocation0], 2376
    %v3410 = vld [vmem:[%s3409] sm:%s1629]
    %s3411 = sshllo.u32 0, 4
    %s3412 = smul.addr 4, 297
    %s3413 = scalar_lea.vmem %s1, %s3412
    %3414 = vst [vmem:[%s3413] sm:%s3411] %v3410
    %s3415 = scalar_lea.vmem [#allocation0], 2384
    %v3416 = vld [vmem:[%s3415] sm:%s1629]
    %s3417 = sshllo.u32 0, 4
    %s3418 = smul.addr 4, 298
    %s3419 = scalar_lea.vmem %s1, %s3418
    %3420 = vst [vmem:[%s3419] sm:%s3417] %v3416
    %s3421 = scalar_lea.vmem [#allocation0], 2392
    %v3422 = vld [vmem:[%s3421] sm:%s1629]
    %s3423 = sshllo.u32 0, 4
    %s3424 = smul.addr 4, 299
    %s3425 = scalar_lea.vmem %s1, %s3424
    %3426 = vst [vmem:[%s3425] sm:%s3423] %v3422
    %s3427 = scalar_lea.vmem [#allocation0], 2400
    %v3428 = vld [vmem:[%s3427] sm:%s1629]
    %s3429 = sshllo.u32 0, 4
    %s3430 = smul.addr 4, 300
    %s3431 = scalar_lea.vmem %s1, %s3430
    %3432 = vst [vmem:[%s3431] sm:%s3429] %v3428
    %s3433 = scalar_lea.vmem [#allocation0], 2408
    %v3434 = vld [vmem:[%s3433] sm:%s1629]
    %s3435 = sshllo.u32 0, 4
    %s3436 = smul.addr 4, 301
    %s3437 = scalar_lea.vmem %s1, %s3436
    %3438 = vst [vmem:[%s3437] sm:%s3435] %v3434
    %s3439 = scalar_lea.vmem [#allocation0], 2416
    %v3440 = vld [vmem:[%s3439] sm:%s1629]
    %s3441 = sshllo.u32 0, 4
    %s3442 = smul.addr 4, 302
    %s3443 = scalar_lea.vmem %s1, %s3442
    %3444 = vst [vmem:[%s3443] sm:%s3441] %v3440
    %s3445 = scalar_lea.vmem [#allocation0], 2424
    %v3446 = vld [vmem:[%s3445] sm:%s1629]
    %s3447 = sshllo.u32 0, 4
    %s3448 = smul.addr 4, 303
    %s3449 = scalar_lea.vmem %s1, %s3448
    %3450 = vst [vmem:[%s3449] sm:%s3447] %v3446
    %s3451 = scalar_lea.vmem [#allocation0], 2432
    %v3452 = vld [vmem:[%s3451] sm:%s1629]
    %s3453 = sshllo.u32 0, 4
    %s3454 = smul.addr 4, 304
    %s3455 = scalar_lea.vmem %s1, %s3454
    %3456 = vst [vmem:[%s3455] sm:%s3453] %v3452
    %s3457 = scalar_lea.vmem [#allocation0], 2440
    %v3458 = vld [vmem:[%s3457] sm:%s1629]
    %s3459 = sshllo.u32 0, 4
    %s3460 = smul.addr 4, 305
    %s3461 = scalar_lea.vmem %s1, %s3460
    %3462 = vst [vmem:[%s3461] sm:%s3459] %v3458
    %s3463 = scalar_lea.vmem [#allocation0], 2448
    %v3464 = vld [vmem:[%s3463] sm:%s1629]
    %s3465 = sshllo.u32 0, 4
    %s3466 = smul.addr 4, 306
    %s3467 = scalar_lea.vmem %s1, %s3466
    %3468 = vst [vmem:[%s3467] sm:%s3465] %v3464
    %s3469 = scalar_lea.vmem [#allocation0], 2456
    %v3470 = vld [vmem:[%s3469] sm:%s1629]
    %s3471 = sshllo.u32 0, 4
    %s3472 = smul.addr 4, 307
    %s3473 = scalar_lea.vmem %s1, %s3472
    %3474 = vst [vmem:[%s3473] sm:%s3471] %v3470
    %s3475 = scalar_lea.vmem [#allocation0], 2464
    %v3476 = vld [vmem:[%s3475] sm:%s1629]
    %s3477 = sshllo.u32 0, 4
    %s3478 = smul.addr 4, 308
    %s3479 = scalar_lea.vmem %s1, %s3478
    %3480 = vst [vmem:[%s3479] sm:%s3477] %v3476
    %s3481 = scalar_lea.vmem [#allocation0], 2472
    %v3482 = vld [vmem:[%s3481] sm:%s1629]
    %s3483 = sshllo.u32 0, 4
    %s3484 = smul.addr 4, 309
    %s3485 = scalar_lea.vmem %s1, %s3484
    %3486 = vst [vmem:[%s3485] sm:%s3483] %v3482
    %s3487 = scalar_lea.vmem [#allocation0], 2480
    %v3488 = vld [vmem:[%s3487] sm:%s1629]
    %s3489 = sshllo.u32 0, 4
    %s3490 = smul.addr 4, 310
    %s3491 = scalar_lea.vmem %s1, %s3490
    %3492 = vst [vmem:[%s3491] sm:%s3489] %v3488
    %s3493 = scalar_lea.vmem [#allocation0], 2488
    %v3494 = vld [vmem:[%s3493] sm:%s1629]
    %s3495 = sshllo.u32 0, 4
    %s3496 = smul.addr 4, 311
    %s3497 = scalar_lea.vmem %s1, %s3496
    %3498 = vst [vmem:[%s3497] sm:%s3495] %v3494
    %s3499 = scalar_lea.vmem [#allocation0], 2496
    %v3500 = vld [vmem:[%s3499] sm:%s1629]
    %s3501 = sshllo.u32 0, 4
    %s3502 = smul.addr 4, 312
    %s3503 = scalar_lea.vmem %s1, %s3502
    %3504 = vst [vmem:[%s3503] sm:%s3501] %v3500
    %s3505 = scalar_lea.vmem [#allocation0], 2504
    %v3506 = vld [vmem:[%s3505] sm:%s1629]
    %s3507 = sshllo.u32 0, 4
    %s3508 = smul.addr 4, 313
    %s3509 = scalar_lea.vmem %s1, %s3508
    %3510 = vst [vmem:[%s3509] sm:%s3507] %v3506
    %s3511 = scalar_lea.vmem [#allocation0], 2512
    %v3512 = vld [vmem:[%s3511] sm:%s1629]
    %s3513 = sshllo.u32 0, 4
    %s3514 = smul.addr 4, 314
    %s3515 = scalar_lea.vmem %s1, %s3514
    %3516 = vst [vmem:[%s3515] sm:%s3513] %v3512
    %s3517 = scalar_lea.vmem [#allocation0], 2520
    %v3518 = vld [vmem:[%s3517] sm:%s1629]
    %s3519 = sshllo.u32 0, 4
    %s3520 = smul.addr 4, 315
    %s3521 = scalar_lea.vmem %s1, %s3520
    %3522 = vst [vmem:[%s3521] sm:%s3519] %v3518
    %s3523 = scalar_lea.vmem [#allocation0], 2528
    %v3524 = vld [vmem:[%s3523] sm:%s1629]
    %s3525 = sshllo.u32 0, 4
    %s3526 = smul.addr 4, 316
    %s3527 = scalar_lea.vmem %s1, %s3526
    %3528 = vst [vmem:[%s3527] sm:%s3525] %v3524
    %s3529 = scalar_lea.vmem [#allocation0], 2536
    %v3530 = vld [vmem:[%s3529] sm:%s1629]
    %s3531 = sshllo.u32 0, 4
    %s3532 = smul.addr 4, 317
    %s3533 = scalar_lea.vmem %s1, %s3532
    %3534 = vst [vmem:[%s3533] sm:%s3531] %v3530
    %s3535 = scalar_lea.vmem [#allocation0], 2544
    %v3536 = vld [vmem:[%s3535] sm:%s1629]
    %s3537 = sshllo.u32 0, 4
    %s3538 = smul.addr 4, 318
    %s3539 = scalar_lea.vmem %s1, %s3538
    %3540 = vst [vmem:[%s3539] sm:%s3537] %v3536
    %s3541 = scalar_lea.vmem [#allocation0], 2552
    %v3542 = vld [vmem:[%s3541] sm:%s1629]
    %s3543 = sshllo.u32 0, 4
    %s3544 = smul.addr 4, 319
    %s3545 = scalar_lea.vmem %s1, %s3544
    %3546 = vst [vmem:[%s3545] sm:%s3543] %v3542
    %s3547 = scalar_lea.vmem [#allocation0], 2560
    %v3548 = vld [vmem:[%s3547] sm:%s1629]
    %s3549 = sshllo.u32 0, 4
    %s3550 = smul.addr 4, 320
    %s3551 = scalar_lea.vmem %s1, %s3550
    %3552 = vst [vmem:[%s3551] sm:%s3549] %v3548
    %s3553 = scalar_lea.vmem [#allocation0], 2568
    %v3554 = vld [vmem:[%s3553] sm:%s1629]
    %s3555 = sshllo.u32 0, 4
    %s3556 = smul.addr 4, 321
    %s3557 = scalar_lea.vmem %s1, %s3556
    %3558 = vst [vmem:[%s3557] sm:%s3555] %v3554
    %s3559 = scalar_lea.vmem [#allocation0], 2576
    %v3560 = vld [vmem:[%s3559] sm:%s1629]
    %s3561 = sshllo.u32 0, 4
    %s3562 = smul.addr 4, 322
    %s3563 = scalar_lea.vmem %s1, %s3562
    %3564 = vst [vmem:[%s3563] sm:%s3561] %v3560
    %s3565 = scalar_lea.vmem [#allocation0], 2584
    %v3566 = vld [vmem:[%s3565] sm:%s1629]
    %s3567 = sshllo.u32 0, 4
    %s3568 = smul.addr 4, 323
    %s3569 = scalar_lea.vmem %s1, %s3568
    %3570 = vst [vmem:[%s3569] sm:%s3567] %v3566
    %s3571 = scalar_lea.vmem [#allocation0], 2592
    %v3572 = vld [vmem:[%s3571] sm:%s1629]
    %s3573 = sshllo.u32 0, 4
    %s3574 = smul.addr 4, 324
    %s3575 = scalar_lea.vmem %s1, %s3574
    %3576 = vst [vmem:[%s3575] sm:%s3573] %v3572
    %s3577 = scalar_lea.vmem [#allocation0], 2600
    %v3578 = vld [vmem:[%s3577] sm:%s1629]
    %s3579 = sshllo.u32 0, 4
    %s3580 = smul.addr 4, 325
    %s3581 = scalar_lea.vmem %s1, %s3580
    %3582 = vst [vmem:[%s3581] sm:%s3579] %v3578
    %s3583 = scalar_lea.vmem [#allocation0], 2608
    %v3584 = vld [vmem:[%s3583] sm:%s1629]
    %s3585 = sshllo.u32 0, 4
    %s3586 = smul.addr 4, 326
    %s3587 = scalar_lea.vmem %s1, %s3586
    %3588 = vst [vmem:[%s3587] sm:%s3585] %v3584
    %s3589 = scalar_lea.vmem [#allocation0], 2616
    %v3590 = vld [vmem:[%s3589] sm:%s1629]
    %s3591 = sshllo.u32 0, 4
    %s3592 = smul.addr 4, 327
    %s3593 = scalar_lea.vmem %s1, %s3592
    %3594 = vst [vmem:[%s3593] sm:%s3591] %v3590
    %s3595 = scalar_lea.vmem [#allocation0], 2624
    %v3596 = vld [vmem:[%s3595] sm:%s1629]
    %s3597 = sshllo.u32 0, 4
    %s3598 = smul.addr 4, 328
    %s3599 = scalar_lea.vmem %s1, %s3598
    %3600 = vst [vmem:[%s3599] sm:%s3597] %v3596
    %s3601 = scalar_lea.vmem [#allocation0], 2632
    %v3602 = vld [vmem:[%s3601] sm:%s1629]
    %s3603 = sshllo.u32 0, 4
    %s3604 = smul.addr 4, 329
    %s3605 = scalar_lea.vmem %s1, %s3604
    %3606 = vst [vmem:[%s3605] sm:%s3603] %v3602
    %s3607 = scalar_lea.vmem [#allocation0], 2640
    %v3608 = vld [vmem:[%s3607] sm:%s1629]
    %s3609 = sshllo.u32 0, 4
    %s3610 = smul.addr 4, 330
    %s3611 = scalar_lea.vmem %s1, %s3610
    %3612 = vst [vmem:[%s3611] sm:%s3609] %v3608
    %s3613 = scalar_lea.vmem [#allocation0], 2648
    %v3614 = vld [vmem:[%s3613] sm:%s1629]
    %s3615 = sshllo.u32 0, 4
    %s3616 = smul.addr 4, 331
    %s3617 = scalar_lea.vmem %s1, %s3616
    %3618 = vst [vmem:[%s3617] sm:%s3615] %v3614
    %s3619 = scalar_lea.vmem [#allocation0], 2656
    %v3620 = vld [vmem:[%s3619] sm:%s1629]
    %s3621 = sshllo.u32 0, 4
    %s3622 = smul.addr 4, 332
    %s3623 = scalar_lea.vmem %s1, %s3622
    %3624 = vst [vmem:[%s3623] sm:%s3621] %v3620
    %s3625 = scalar_lea.vmem [#allocation0], 2664
    %v3626 = vld [vmem:[%s3625] sm:%s1629]
    %s3627 = sshllo.u32 0, 4
    %s3628 = smul.addr 4, 333
    %s3629 = scalar_lea.vmem %s1, %s3628
    %3630 = vst [vmem:[%s3629] sm:%s3627] %v3626
    %s3631 = scalar_lea.vmem [#allocation0], 2672
    %v3632 = vld [vmem:[%s3631] sm:%s1629]
    %s3633 = sshllo.u32 0, 4
    %s3634 = smul.addr 4, 334
    %s3635 = scalar_lea.vmem %s1, %s3634
    %3636 = vst [vmem:[%s3635] sm:%s3633] %v3632
    %s3637 = scalar_lea.vmem [#allocation0], 2680
    %v3638 = vld [vmem:[%s3637] sm:%s1629]
    %s3639 = sshllo.u32 0, 4
    %s3640 = smul.addr 4, 335
    %s3641 = scalar_lea.vmem %s1, %s3640
    %3642 = vst [vmem:[%s3641] sm:%s3639] %v3638
    %s3643 = scalar_lea.vmem [#allocation0], 2688
    %v3644 = vld [vmem:[%s3643] sm:%s1629]
    %s3645 = sshllo.u32 0, 4
    %s3646 = smul.addr 4, 336
    %s3647 = scalar_lea.vmem %s1, %s3646
    %3648 = vst [vmem:[%s3647] sm:%s3645] %v3644
    %s3649 = scalar_lea.vmem [#allocation0], 2696
    %v3650 = vld [vmem:[%s3649] sm:%s1629]
    %s3651 = sshllo.u32 0, 4
    %s3652 = smul.addr 4, 337
    %s3653 = scalar_lea.vmem %s1, %s3652
    %3654 = vst [vmem:[%s3653] sm:%s3651] %v3650
    %s3655 = scalar_lea.vmem [#allocation0], 2704
    %v3656 = vld [vmem:[%s3655] sm:%s1629]
    %s3657 = sshllo.u32 0, 4
    %s3658 = smul.addr 4, 338
    %s3659 = scalar_lea.vmem %s1, %s3658
    %3660 = vst [vmem:[%s3659] sm:%s3657] %v3656
    %s3661 = scalar_lea.vmem [#allocation0], 2712
    %v3662 = vld [vmem:[%s3661] sm:%s1629]
    %s3663 = sshllo.u32 0, 4
    %s3664 = smul.addr 4, 339
    %s3665 = scalar_lea.vmem %s1, %s3664
    %3666 = vst [vmem:[%s3665] sm:%s3663] %v3662
    %s3667 = scalar_lea.vmem [#allocation0], 2720
    %v3668 = vld [vmem:[%s3667] sm:%s1629]
    %s3669 = sshllo.u32 0, 4
    %s3670 = smul.addr 4, 340
    %s3671 = scalar_lea.vmem %s1, %s3670
    %3672 = vst [vmem:[%s3671] sm:%s3669] %v3668
    %s3673 = scalar_lea.vmem [#allocation0], 2728
    %v3674 = vld [vmem:[%s3673] sm:%s1629]
    %s3675 = sshllo.u32 0, 4
    %s3676 = smul.addr 4, 341
    %s3677 = scalar_lea.vmem %s1, %s3676
    %3678 = vst [vmem:[%s3677] sm:%s3675] %v3674
    %s3679 = scalar_lea.vmem [#allocation0], 2736
    %v3680 = vld [vmem:[%s3679] sm:%s1629]
    %s3681 = sshllo.u32 0, 4
    %s3682 = smul.addr 4, 342
    %s3683 = scalar_lea.vmem %s1, %s3682
    %3684 = vst [vmem:[%s3683] sm:%s3681] %v3680
    %s3685 = scalar_lea.vmem [#allocation0], 2744
    %v3686 = vld [vmem:[%s3685] sm:%s1629]
    %s3687 = sshllo.u32 0, 4
    %s3688 = smul.addr 4, 343
    %s3689 = scalar_lea.vmem %s1, %s3688
    %3690 = vst [vmem:[%s3689] sm:%s3687] %v3686
    %s3691 = scalar_lea.vmem [#allocation0], 2752
    %v3692 = vld [vmem:[%s3691] sm:%s1629]
    %s3693 = sshllo.u32 0, 4
    %s3694 = smul.addr 4, 344
    %s3695 = scalar_lea.vmem %s1, %s3694
    %3696 = vst [vmem:[%s3695] sm:%s3693] %v3692
    %s3697 = scalar_lea.vmem [#allocation0], 2760
    %v3698 = vld [vmem:[%s3697] sm:%s1629]
    %s3699 = sshllo.u32 0, 4
    %s3700 = smul.addr 4, 345
    %s3701 = scalar_lea.vmem %s1, %s3700
    %3702 = vst [vmem:[%s3701] sm:%s3699] %v3698
    %s3703 = scalar_lea.vmem [#allocation0], 2768
    %v3704 = vld [vmem:[%s3703] sm:%s1629]
    %s3705 = sshllo.u32 0, 4
    %s3706 = smul.addr 4, 346
    %s3707 = scalar_lea.vmem %s1, %s3706
    %3708 = vst [vmem:[%s3707] sm:%s3705] %v3704
    %s3709 = scalar_lea.vmem [#allocation0], 2776
    %v3710 = vld [vmem:[%s3709] sm:%s1629]
    %s3711 = sshllo.u32 0, 4
    %s3712 = smul.addr 4, 347
    %s3713 = scalar_lea.vmem %s1, %s3712
    %3714 = vst [vmem:[%s3713] sm:%s3711] %v3710
    %s3715 = scalar_lea.vmem [#allocation0], 2784
    %v3716 = vld [vmem:[%s3715] sm:%s1629]
    %s3717 = sshllo.u32 0, 4
    %s3718 = smul.addr 4, 348
    %s3719 = scalar_lea.vmem %s1, %s3718
    %3720 = vst [vmem:[%s3719] sm:%s3717] %v3716
    %s3721 = scalar_lea.vmem [#allocation0], 2792
    %v3722 = vld [vmem:[%s3721] sm:%s1629]
    %s3723 = sshllo.u32 0, 4
    %s3724 = smul.addr 4, 349
    %s3725 = scalar_lea.vmem %s1, %s3724
    %3726 = vst [vmem:[%s3725] sm:%s3723] %v3722
    %s3727 = scalar_lea.vmem [#allocation0], 2800
    %v3728 = vld [vmem:[%s3727] sm:%s1629]
    %s3729 = sshllo.u32 0, 4
    %s3730 = smul.addr 4, 350
    %s3731 = scalar_lea.vmem %s1, %s3730
    %3732 = vst [vmem:[%s3731] sm:%s3729] %v3728
    %s3733 = scalar_lea.vmem [#allocation0], 2808
    %v3734 = vld [vmem:[%s3733] sm:%s1629]
    %s3735 = sshllo.u32 0, 4
    %s3736 = smul.addr 4, 351
    %s3737 = scalar_lea.vmem %s1, %s3736
    %3738 = vst [vmem:[%s3737] sm:%s3735] %v3734
    %s3739 = scalar_lea.vmem [#allocation0], 2816
    %v3740 = vld [vmem:[%s3739] sm:%s1629]
    %s3741 = sshllo.u32 0, 4
    %s3742 = smul.addr 4, 352
    %s3743 = scalar_lea.vmem %s1, %s3742
    %3744 = vst [vmem:[%s3743] sm:%s3741] %v3740
    %s3745 = scalar_lea.vmem [#allocation0], 2824
    %v3746 = vld [vmem:[%s3745] sm:%s1629]
    %s3747 = sshllo.u32 0, 4
    %s3748 = smul.addr 4, 353
    %s3749 = scalar_lea.vmem %s1, %s3748
    %3750 = vst [vmem:[%s3749] sm:%s3747] %v3746
    %s3751 = scalar_lea.vmem [#allocation0], 2832
    %v3752 = vld [vmem:[%s3751] sm:%s1629]
    %s3753 = sshllo.u32 0, 4
    %s3754 = smul.addr 4, 354
    %s3755 = scalar_lea.vmem %s1, %s3754
    %3756 = vst [vmem:[%s3755] sm:%s3753] %v3752
    %s3757 = scalar_lea.vmem [#allocation0], 2840
    %v3758 = vld [vmem:[%s3757] sm:%s1629]
    %s3759 = sshllo.u32 0, 4
    %s3760 = smul.addr 4, 355
    %s3761 = scalar_lea.vmem %s1, %s3760
    %3762 = vst [vmem:[%s3761] sm:%s3759] %v3758
    %s3763 = scalar_lea.vmem [#allocation0], 2848
    %v3764 = vld [vmem:[%s3763] sm:%s1629]
    %s3765 = sshllo.u32 0, 4
    %s3766 = smul.addr 4, 356
    %s3767 = scalar_lea.vmem %s1, %s3766
    %3768 = vst [vmem:[%s3767] sm:%s3765] %v3764
    %s3769 = scalar_lea.vmem [#allocation0], 2856
    %v3770 = vld [vmem:[%s3769] sm:%s1629]
    %s3771 = sshllo.u32 0, 4
    %s3772 = smul.addr 4, 357
    %s3773 = scalar_lea.vmem %s1, %s3772
    %3774 = vst [vmem:[%s3773] sm:%s3771] %v3770
    %s3775 = scalar_lea.vmem [#allocation0], 2864
    %v3776 = vld [vmem:[%s3775] sm:%s1629]
    %s3777 = sshllo.u32 0, 4
    %s3778 = smul.addr 4, 358
    %s3779 = scalar_lea.vmem %s1, %s3778
    %3780 = vst [vmem:[%s3779] sm:%s3777] %v3776
    %s3781 = scalar_lea.vmem [#allocation0], 2872
    %v3782 = vld [vmem:[%s3781] sm:%s1629]
    %s3783 = sshllo.u32 0, 4
    %s3784 = smul.addr 4, 359
    %s3785 = scalar_lea.vmem %s1, %s3784
    %3786 = vst [vmem:[%s3785] sm:%s3783] %v3782
    %s3787 = scalar_lea.vmem [#allocation0], 2880
    %v3788 = vld [vmem:[%s3787] sm:%s1629]
    %s3789 = sshllo.u32 0, 4
    %s3790 = smul.addr 4, 360
    %s3791 = scalar_lea.vmem %s1, %s3790
    %3792 = vst [vmem:[%s3791] sm:%s3789] %v3788
    %s3793 = scalar_lea.vmem [#allocation0], 2888
    %v3794 = vld [vmem:[%s3793] sm:%s1629]
    %s3795 = sshllo.u32 0, 4
    %s3796 = smul.addr 4, 361
    %s3797 = scalar_lea.vmem %s1, %s3796
    %3798 = vst [vmem:[%s3797] sm:%s3795] %v3794
    %s3799 = scalar_lea.vmem [#allocation0], 2896
    %v3800 = vld [vmem:[%s3799] sm:%s1629]
    %s3801 = sshllo.u32 0, 4
    %s3802 = smul.addr 4, 362
    %s3803 = scalar_lea.vmem %s1, %s3802
    %3804 = vst [vmem:[%s3803] sm:%s3801] %v3800
    %s3805 = scalar_lea.vmem [#allocation0], 2904
    %v3806 = vld [vmem:[%s3805] sm:%s1629]
    %s3807 = sshllo.u32 0, 4
    %s3808 = smul.addr 4, 363
    %s3809 = scalar_lea.vmem %s1, %s3808
    %3810 = vst [vmem:[%s3809] sm:%s3807] %v3806
    %s3811 = scalar_lea.vmem [#allocation0], 2912
    %v3812 = vld [vmem:[%s3811] sm:%s1629]
    %s3813 = sshllo.u32 0, 4
    %s3814 = smul.addr 4, 364
    %s3815 = scalar_lea.vmem %s1, %s3814
    %3816 = vst [vmem:[%s3815] sm:%s3813] %v3812
    %s3817 = scalar_lea.vmem [#allocation0], 2920
    %v3818 = vld [vmem:[%s3817] sm:%s1629]
    %s3819 = sshllo.u32 0, 4
    %s3820 = smul.addr 4, 365
    %s3821 = scalar_lea.vmem %s1, %s3820
    %3822 = vst [vmem:[%s3821] sm:%s3819] %v3818
    %s3823 = scalar_lea.vmem [#allocation0], 2928
    %v3824 = vld [vmem:[%s3823] sm:%s1629]
    %s3825 = sshllo.u32 0, 4
    %s3826 = smul.addr 4, 366
    %s3827 = scalar_lea.vmem %s1, %s3826
    %3828 = vst [vmem:[%s3827] sm:%s3825] %v3824
    %s3829 = scalar_lea.vmem [#allocation0], 2936
    %v3830 = vld [vmem:[%s3829] sm:%s1629]
    %s3831 = sshllo.u32 0, 4
    %s3832 = smul.addr 4, 367
    %s3833 = scalar_lea.vmem %s1, %s3832
    %3834 = vst [vmem:[%s3833] sm:%s3831] %v3830
    %s3835 = scalar_lea.vmem [#allocation0], 2944
    %v3836 = vld [vmem:[%s3835] sm:%s1629]
    %s3837 = sshllo.u32 0, 4
    %s3838 = smul.addr 4, 368
    %s3839 = scalar_lea.vmem %s1, %s3838
    %3840 = vst [vmem:[%s3839] sm:%s3837] %v3836
    %s3841 = scalar_lea.vmem [#allocation0], 2952
    %v3842 = vld [vmem:[%s3841] sm:%s1629]
    %s3843 = sshllo.u32 0, 4
    %s3844 = smul.addr 4, 369
    %s3845 = scalar_lea.vmem %s1, %s3844
    %3846 = vst [vmem:[%s3845] sm:%s3843] %v3842
    %s3847 = scalar_lea.vmem [#allocation0], 2960
    %v3848 = vld [vmem:[%s3847] sm:%s1629]
    %s3849 = sshllo.u32 0, 4
    %s3850 = smul.addr 4, 370
    %s3851 = scalar_lea.vmem %s1, %s3850
    %3852 = vst [vmem:[%s3851] sm:%s3849] %v3848
    %s3853 = scalar_lea.vmem [#allocation0], 2968
    %v3854 = vld [vmem:[%s3853] sm:%s1629]
    %s3855 = sshllo.u32 0, 4
    %s3856 = smul.addr 4, 371
    %s3857 = scalar_lea.vmem %s1, %s3856
    %3858 = vst [vmem:[%s3857] sm:%s3855] %v3854
    %s3859 = scalar_lea.vmem [#allocation0], 2976
    %v3860 = vld [vmem:[%s3859] sm:%s1629]
    %s3861 = sshllo.u32 0, 4
    %s3862 = smul.addr 4, 372
    %s3863 = scalar_lea.vmem %s1, %s3862
    %3864 = vst [vmem:[%s3863] sm:%s3861] %v3860
    %s3865 = scalar_lea.vmem [#allocation0], 2984
    %v3866 = vld [vmem:[%s3865] sm:%s1629]
    %s3867 = sshllo.u32 0, 4
    %s3868 = smul.addr 4, 373
    %s3869 = scalar_lea.vmem %s1, %s3868
    %3870 = vst [vmem:[%s3869] sm:%s3867] %v3866
    %s3871 = scalar_lea.vmem [#allocation0], 2992
    %v3872 = vld [vmem:[%s3871] sm:%s1629]
    %s3873 = sshllo.u32 0, 4
    %s3874 = smul.addr 4, 374
    %s3875 = scalar_lea.vmem %s1, %s3874
    %3876 = vst [vmem:[%s3875] sm:%s3873] %v3872
    %s3877 = scalar_lea.vmem [#allocation0], 3000
    %v3878 = vld [vmem:[%s3877] sm:%s1629]
    %s3879 = sshllo.u32 0, 4
    %s3880 = smul.addr 4, 375
    %s3881 = scalar_lea.vmem %s1, %s3880
    %3882 = vst [vmem:[%s3881] sm:%s3879] %v3878
    %s3883 = scalar_lea.vmem [#allocation0], 3008
    %v3884 = vld [vmem:[%s3883] sm:%s1629]
    %s3885 = sshllo.u32 0, 4
    %s3886 = smul.addr 4, 376
    %s3887 = scalar_lea.vmem %s1, %s3886
    %3888 = vst [vmem:[%s3887] sm:%s3885] %v3884
    %s3889 = scalar_lea.vmem [#allocation0], 3016
    %v3890 = vld [vmem:[%s3889] sm:%s1629]
    %s3891 = sshllo.u32 0, 4
    %s3892 = smul.addr 4, 377
    %s3893 = scalar_lea.vmem %s1, %s3892
    %3894 = vst [vmem:[%s3893] sm:%s3891] %v3890
    %s3895 = scalar_lea.vmem [#allocation0], 3024
    %v3896 = vld [vmem:[%s3895] sm:%s1629]
    %s3897 = sshllo.u32 0, 4
    %s3898 = smul.addr 4, 378
    %s3899 = scalar_lea.vmem %s1, %s3898
    %3900 = vst [vmem:[%s3899] sm:%s3897] %v3896
    %s3901 = scalar_lea.vmem [#allocation0], 3032
    %v3902 = vld [vmem:[%s3901] sm:%s1629]
    %s3903 = sshllo.u32 0, 4
    %s3904 = smul.addr 4, 379
    %s3905 = scalar_lea.vmem %s1, %s3904
    %3906 = vst [vmem:[%s3905] sm:%s3903] %v3902
    %s3907 = scalar_lea.vmem [#allocation0], 3040
    %v3908 = vld [vmem:[%s3907] sm:%s1629]
    %s3909 = sshllo.u32 0, 4
    %s3910 = smul.addr 4, 380
    %s3911 = scalar_lea.vmem %s1, %s3910
    %3912 = vst [vmem:[%s3911] sm:%s3909] %v3908
    %s3913 = scalar_lea.vmem [#allocation0], 3048
    %v3914 = vld [vmem:[%s3913] sm:%s1629]
    %s3915 = sshllo.u32 0, 4
    %s3916 = smul.addr 4, 381
    %s3917 = scalar_lea.vmem %s1, %s3916
    %3918 = vst [vmem:[%s3917] sm:%s3915] %v3914
    %s3919 = scalar_lea.vmem [#allocation0], 3056
    %v3920 = vld [vmem:[%s3919] sm:%s1629]
    %s3921 = sshllo.u32 0, 4
    %s3922 = smul.addr 4, 382
    %s3923 = scalar_lea.vmem %s1, %s3922
    %3924 = vst [vmem:[%s3923] sm:%s3921] %v3920
    %s3925 = scalar_lea.vmem [#allocation0], 3064
    %v3926 = vld [vmem:[%s3925] sm:%s1629]
    %s3927 = sshllo.u32 0, 4
    %s3928 = smul.addr 4, 383
    %s3929 = scalar_lea.vmem %s1, %s3928
    %3930 = vst [vmem:[%s3929] sm:%s3927] %v3926

// kernel: vit_forward.5
$region0: #{vit_forward.5}
  #allocation0 [shape = 'u32[]', space=smem, size = 0x4, offset = 0x4, fixed_abs, tag = 'smem constant byte address 0x4 - core index']
  #allocation1 [shape = 'u32[144,128]{1,0:T(1,128)}', space=vmem, size = 0x12000, scoped, tag = 'internal scratch']
  %s0 = inlined_call_operand.vmem [shape: f32[4,512], index: 0, kind: input, shape index: {}]
  %s1 = inlined_call_operand.vmem [shape: f32[4,512], index: 1, kind: input, shape index: {}]
  %s2 = inlined_call_operand.vmem [shape: f32[1,4], index: 2, kind: output, shape index: {}]
  %s3 = sld [smem:[#allocation0]]
  $region18: #{vit_forward.5} parent=0
    _
  %s5 = ssub.s32 1, %s3
  %s6 = scalar_select 0, %s5, %s3
  // Predicated region
  $region2: #{vit_forward.5} parent=0 // pred_check
    _
  $region3: #{vit_forward.5} parent=0 // pred_check_branch
    %8 = sbr.rel (0) target = $region5
  $region4: #{vit_forward.5} parent=0 // pred_region
    _
  $region5: #{vit_forward.5} parent=0 // pred_fallthru
    _
  // Predicated region
  $region6: #{vit_forward.5} parent=0 // pred_check
    _
  $region7: #{vit_forward.5} parent=0 // pred_check_branch
    %10 = sbr.rel (0) target = $region9
  $region8: #{vit_forward.5} parent=0 // pred_region
    _
  $region9: #{vit_forward.5} parent=0 // pred_fallthru
    _
  %v11 = vld [vmem:[%s0] sm:$0xff]
  %v12 = vld [vmem:[%s0 + $0x8] sm:$0xff]
  %v13 = vld [vmem:[%s1] sm:$0xff]
  %v14 = vld [vmem:[%s1 + $0x8] sm:$0xff]
  %v15 = vsub.f32 %v11, %v13
  %v16 = vsub.f32 %v12, %v14
  %v17 = vand.u32 2147483647, %v15
  %v18 = vand.u32 2147483647, %v16
  %vm19 = vcmp.lt.f32.partialorder %v17, 0.5
  %vm20 = vcmp.lt.f32.partialorder %v18, 0.5
  %v21 = vmul.f32 %v15, %v15
  %v22 = vmul.f32 %v16, %v16
  %v23 = vsub.f32 %v17, 0.25
  %v24 = vsub.f32 %v18, 0.25
  %v25 = vsel %vm19, %v21, %v23
  %v26 = vsel %vm20, %v22, %v24
  %v29 = vcombine.high %v25, %v25
  %v30 = vcombine.high %v26, %v26
  %33 = vmatprep.subr.mxu0 %v29
  %34 = vmatpush1.xpose.msra.mxu0 %v25
  %35 = vmatprep.subr.mxu0 0.0
  %36 = vmatpush1.xpose.msra.mxu0 0.0
  %37 = vmatprep.subr.mxu0 0.0
  %38 = vmatpush1.xpose.msra.mxu0 0.0
  %39 = vmatprep.subr.mxu0 0.0
  %40 = vmatpush1.xpose.msra.mxu0 0.0
  %41 = vmatprep.subr.mxu0 0.0
  %42 = vmatpush1.xpose.msra.mxu0 0.0
  %43 = vmatprep.subr.mxu0 0.0
  %44 = vmatpush1.xpose.msra.mxu0 0.0
  %45 = vmatprep.subr.mxu0 0.0
  %46 = vmatpush1.xpose.msra.mxu0 0.0
  %47 = vmatprep.subr.mxu0 0.0
  %48 = vmatpush1.xpose.msra.mxu0 0.0
  %49 = vmatprep.subr.mxu0 0.0
  %50 = vmatpush1.xpose.msra.mxu0 0.0
  %51 = vmatprep.subr.mxu0 0.0
  %52 = vmatpush1.xpose.msra.mxu0 0.0
  %53 = vmatprep.subr.mxu0 0.0
  %54 = vmatpush1.xpose.msra.mxu0 0.0
  %55 = vmatprep.subr.mxu0 0.0
  %56 = vmatpush1.xpose.msra.mxu0 0.0
  %57 = vmatprep.subr.mxu0 0.0
  %58 = vmatpush1.xpose.msra.mxu0 0.0
  %59 = vmatprep.subr.mxu0 0.0
  %60 = vmatpush1.xpose.msra.mxu0 0.0
  %61 = vmatprep.subr.mxu0 0.0
  %62 = vmatpush1.xpose.msra.mxu0 0.0
  %63 = vmatprep.subr.mxu0 0.0
  %64 = vmatpush1.xpose.msra.mxu0 0.0
  %65 = vmatprep.subr.mxu0 0.0
  %66 = vmatpush1.xpose.msra.mxu0 0.0
  %67 = vmatprep.subr.mxu0 0.0
  %68 = vmatpush1.xpose.msra.mxu0 0.0
  %69 = vmatprep.subr.mxu0 0.0
  %70 = vmatpush1.xpose.msra.mxu0 0.0
  %71 = vmatprep.subr.mxu0 0.0
  %72 = vmatpush1.xpose.msra.mxu0 0.0
  %73 = vmatprep.subr.mxu0 0.0
  %74 = vmatpush1.xpose.msra.mxu0 0.0
  %75 = vmatprep.subr.mxu0 0.0
  %76 = vmatpush1.xpose.msra.mxu0 0.0
  %77 = vmatprep.subr.mxu0 0.0
  %78 = vmatpush1.xpose.msra.mxu0 0.0
  %79 = vmatprep.subr.mxu0 0.0
  %80 = vmatpush1.xpose.msra.mxu0 0.0
  %81 = vmatprep.subr.mxu0 0.0
  %82 = vmatpush1.xpose.msra.mxu0 0.0
  %83 = vmatprep.subr.mxu0 0.0
  %84 = vmatpush1.xpose.msra.mxu0 0.0
  %85 = vmatprep.subr.mxu0 0.0
  %86 = vmatpush1.xpose.msra.mxu0 0.0
  %87 = vmatprep.subr.mxu0 0.0
  %88 = vmatpush1.xpose.msra.mxu0 0.0
  %89 = vmatprep.subr.mxu0 0.0
  %90 = vmatpush1.xpose.msra.mxu0 0.0
  %91 = vmatprep.subr.mxu0 0.0
  %92 = vmatpush1.xpose.msra.mxu0 0.0
  %93 = vmatprep.subr.mxu0 0.0
  %94 = vmatpush1.xpose.msra.mxu0 0.0
  %95 = vmatprep.subr.mxu0 0.0
  %96 = vmatpush1.xpose.msra.mxu0 0.0
  %97 = vmatprep.mubr.f32.mxu0 1.0
  %98 = vmatmul.mubr.f32.gmra.mrb[0].mxu0 1.0
  %v99 = vpop.f32.mrb[0].mxu0
  %v100 = vadd.f32 0.0, %v99
  %v101 = vpop.f32.mrb[0].mxu0
  %102 = vdwg.mxu0
  %103 = vmatprep.subr.mxu0 %v30
  %104 = vmatpush1.xpose.msra.mxu0 %v26
  %105 = vmatprep.subr.mxu0 0.0
  %106 = vmatpush1.xpose.msra.mxu0 0.0
  %107 = vmatprep.subr.mxu0 0.0
  %108 = vmatpush1.xpose.msra.mxu0 0.0
  %109 = vmatprep.subr.mxu0 0.0
  %110 = vmatpush1.xpose.msra.mxu0 0.0
  %111 = vmatprep.subr.mxu0 0.0
  %112 = vmatpush1.xpose.msra.mxu0 0.0
  %113 = vmatprep.subr.mxu0 0.0
  %114 = vmatpush1.xpose.msra.mxu0 0.0
  %115 = vmatprep.subr.mxu0 0.0
  %116 = vmatpush1.xpose.msra.mxu0 0.0
  %117 = vmatprep.subr.mxu0 0.0
  %118 = vmatpush1.xpose.msra.mxu0 0.0
  %119 = vmatprep.subr.mxu0 0.0
  %120 = vmatpush1.xpose.msra.mxu0 0.0
  %121 = vmatprep.subr.mxu0 0.0
  %122 = vmatpush1.xpose.msra.mxu0 0.0
  %123 = vmatprep.subr.mxu0 0.0
  %124 = vmatpush1.xpose.msra.mxu0 0.0
  %125 = vmatprep.subr.mxu0 0.0
  %126 = vmatpush1.xpose.msra.mxu0 0.0
  %127 = vmatprep.subr.mxu0 0.0
  %128 = vmatpush1.xpose.msra.mxu0 0.0
  %129 = vmatprep.subr.mxu0 0.0
  %130 = vmatpush1.xpose.msra.mxu0 0.0
  %131 = vmatprep.subr.mxu0 0.0
  %132 = vmatpush1.xpose.msra.mxu0 0.0
  %133 = vmatprep.subr.mxu0 0.0
  %134 = vmatpush1.xpose.msra.mxu0 0.0
  %135 = vmatprep.subr.mxu0 0.0
  %136 = vmatpush1.xpose.msra.mxu0 0.0
  %137 = vmatprep.subr.mxu0 0.0
  %138 = vmatpush1.xpose.msra.mxu0 0.0
  %139 = vmatprep.subr.mxu0 0.0
  %140 = vmatpush1.xpose.msra.mxu0 0.0
  %141 = vmatprep.subr.mxu0 0.0
  %142 = vmatpush1.xpose.msra.mxu0 0.0
  %143 = vmatprep.subr.mxu0 0.0
  %144 = vmatpush1.xpose.msra.mxu0 0.0
  %145 = vmatprep.subr.mxu0 0.0
  %146 = vmatpush1.xpose.msra.mxu0 0.0
  %147 = vmatprep.subr.mxu0 0.0
  %148 = vmatpush1.xpose.msra.mxu0 0.0
  %149 = vmatprep.subr.mxu0 0.0
  %150 = vmatpush1.xpose.msra.mxu0 0.0
  %151 = vmatprep.subr.mxu0 0.0
  %152 = vmatpush1.xpose.msra.mxu0 0.0
  %153 = vmatprep.subr.mxu0 0.0
  %154 = vmatpush1.xpose.msra.mxu0 0.0
  %155 = vmatprep.subr.mxu0 0.0
  %156 = vmatpush1.xpose.msra.mxu0 0.0
  %157 = vmatprep.subr.mxu0 0.0
  %158 = vmatpush1.xpose.msra.mxu0 0.0
  %159 = vmatprep.subr.mxu0 0.0
  %160 = vmatpush1.xpose.msra.mxu0 0.0
  %161 = vmatprep.subr.mxu0 0.0
  %162 = vmatpush1.xpose.msra.mxu0 0.0
  %163 = vmatprep.subr.mxu0 0.0
  %164 = vmatpush1.xpose.msra.mxu0 0.0
  %165 = vmatprep.subr.mxu0 0.0
  %166 = vmatpush1.xpose.msra.mxu0 0.0
  %167 = vmatprep.mubr.f32.mxu0 1.0
  %168 = vmatmul.mubr.f32.gmra.mrb[0].mxu0 1.0
  %v169 = vpop.f32.mrb[0].mxu0
  %v170 = vadd.f32 %v100, %v169
  %v171 = vpop.f32.mrb[0].mxu0
  %172 = vdwg.mxu0
  %v173 = vmul.f32 %v170, 0.001953125
  %vm174 = vcmask 24576
  %175 = vst.msk [vmem:[%s2] sm:$0x1] %vm174, %v173
  // Predicated region
  $region10: #{vit_forward.5} parent=0 // pred_check
    _
  $region11: #{vit_forward.5} parent=0 // pred_check_branch
    %177 = sbr.rel (0) target = $region13
  $region12: #{vit_forward.5} parent=0 // pred_region
    _
  $region13: #{vit_forward.5} parent=0 // pred_fallthru
    _
  // Predicated region
  $region14: #{vit_forward.5} parent=0 // pred_check
    _
  $region15: #{vit_forward.5} parent=0 // pred_check_branch
    %179 = sbr.rel (0) target = $region17
  $region16: #{vit_forward.5} parent=0 // pred_region
    _
  $region17: #{vit_forward.5} parent=0 // pred_fallthru
    _

// kernel: vit_forward.7
$region0: #{vit_forward.7}
  #allocation0 [shape = 'u32[]', space=smem, size = 0x4, offset = 0x4, fixed_abs, tag = 'smem constant byte address 0x4 - core index']
  #allocation1 [shape = 'u32[144,128]{1,0:T(1,128)}', space=vmem, size = 0x12000, scoped, tag = 'internal scratch']
  %s0 = inlined_call_operand.vmem [shape: f32[2,16,32], index: 0, kind: input, shape index: {}, may-alias: {0,1}]
  %s1 = inlined_call_operand.vmem [shape: f32[2,16,32], index: 1, kind: input, shape index: {}, may-alias: {0,1}]
  %s2 = inlined_call_operand.vmem [shape: f32[2,1,1], index: 2, kind: output, shape index: {}]
  %s3 = sld [smem:[#allocation0]]
  $region49: #{vit_forward.7} parent=0
    _
  %s5 = ssub.s32 1, %s3
  %s6 = scalar_select 0, %s5, %s3
  loop: start=0, step=1, limit=6
  $region2: #{vit_forward.7} parent=0 // loop_pre_header
    _
  $region3: #{vit_forward.7} parent=0 // loop_header
    %s8 = sphi 0, %s12
    %p9 = scmp.ge.s32.totalorder %s8, 6
    %s15 = sphi 0, %s27
    %s16 = sphi 0, %s23
    %s17 = sphi 0, %s15
    %s18 = sphi 0, %s16
    %s19 = sphi 0, %s17
    %s20 = sphi 0, %s18
    %s30 = sphi 0, %s32
    %s33 = sphi 0, %s30
    %s34 = sphi 0, %s33
    %s50 = sphi 0, %s34
    %s56 = sphi 0, %s58
    %s59 = sphi 0, %s56
    %s60 = sphi 0, %s59
    %s76 = sphi 0, %s60
    %s82 = sphi 0, %s84
    %s85 = sphi 0, %s82
    %s86 = sphi 0, %s85
    %s102 = sphi 0, %s86
  $region4: #{vit_forward.7} parent=0 // loop_header_branch
    %11 = sbr.rel (%p9) target = $region8
  $region5: #{vit_forward.7} parent=0 // loop_body
    %s13 = ssub.s32 %s8, 1
    %s14 = ssub.s32 %s8, 2
    %s21 = sadd.s32 1, %s16
    %p22 = scmp.ge.s32.totalorder %s21, 2
    %s23 = scalar_select %p22, 0, %s21
    %s24 = sadd.s32 1, %s15
    %s25 = scalar_select %p22, %s24, %s15
    %p26 = scmp.ge.s32.totalorder %s25, 2
    %s27 = scalar_select %p26, 0, %s25
    %s28 = ssub.s32 %s15, %s27
    %p29 = scmp.eq.s32.totalorder %s28, 0
    %s31 = sadd.s32 %s30, 1
    %s32 = scalar_select %p29, %s30, %s31
    %p35 = pneg %p29
    %p36 = scmp.eq.s32.totalorder %s8, 3
    %p37 = por %p35, %p36
    %p38 = scmp.ne.s32.totalorder %s30, %s33
    %p39 = scmp.eq.s32.totalorder %s8, 0
    %p40 = por %p38, %p39
    %p41 = scmp.ne.s32.totalorder %s30, %s33
    %p42 = scmp.eq.s32.totalorder %s13, 3
    %p43 = por %p41, %p42
    %p44 = scmp.ne.s32.totalorder %s33, %s34
    %p45 = scmp.eq.s32.totalorder %s13, 0
    %p46 = por %p44, %p45
    %p47 = scmp.ne.s32.totalorder %s33, %s34
    %p48 = scmp.eq.s32.totalorder %s14, 3
    %p49 = por %p47, %p48
    %p51 = scmp.ne.s32.totalorder %s34, %s50
    %p52 = scmp.eq.s32.totalorder %s14, 0
    %p53 = por %p51, %p52
    %s54 = ssub.s32 %s16, %s23
    %p55 = scmp.eq.s32.totalorder %s54, 0
    %s57 = sadd.s32 %s56, 1
    %s58 = scalar_select %p55, %s56, %s57
    %p61 = pneg %p55
    %p62 = scmp.eq.s32.totalorder %s8, 3
    %p63 = por %p61, %p62
    %p64 = scmp.ne.s32.totalorder %s56, %s59
    %p65 = scmp.eq.s32.totalorder %s8, 0
    %p66 = por %p64, %p65
    %p67 = scmp.ne.s32.totalorder %s56, %s59
    %p68 = scmp.eq.s32.totalorder %s13, 3
    %p69 = por %p67, %p68
    %p70 = scmp.ne.s32.totalorder %s59, %s60
    %p71 = scmp.eq.s32.totalorder %s13, 0
    %p72 = por %p70, %p71
    %p73 = scmp.ne.s32.totalorder %s59, %s60
    %p74 = scmp.eq.s32.totalorder %s14, 3
    %p75 = por %p73, %p74
    %p77 = scmp.ne.s32.totalorder %s60, %s76
    %p78 = scmp.eq.s32.totalorder %s14, 0
    %p79 = por %p77, %p78
    %s80 = ssub.s32 %s15, %s27
    %p81 = scmp.eq.s32.totalorder %s80, 0
    %s83 = sadd.s32 %s82, 1
    %s84 = scalar_select %p81, %s82, %s83
    %p87 = pneg %p81
    %p88 = scmp.eq.s32.totalorder %s8, 3
    %p89 = por %p87, %p88
    %p90 = scmp.ne.s32.totalorder %s82, %s85
    %p91 = scmp.eq.s32.totalorder %s8, 0
    %p92 = por %p90, %p91
    %p93 = scmp.ne.s32.totalorder %s82, %s85
    %p94 = scmp.eq.s32.totalorder %s13, 3
    %p95 = por %p93, %p94
    %p96 = scmp.ne.s32.totalorder %s85, %s86
    %p97 = scmp.eq.s32.totalorder %s13, 0
    %p98 = por %p96, %p97
    %p99 = scmp.ne.s32.totalorder %s85, %s86
    %p100 = scmp.eq.s32.totalorder %s14, 3
    %p101 = por %p99, %p100
    %p103 = scmp.ne.s32.totalorder %s86, %s102
    %p104 = scmp.eq.s32.totalorder %s14, 0
    %p105 = por %p103, %p104
    %p106 = scmp.le.s32.totalorder 1, %s8
    %p107 = scmp.lt.s32.totalorder %s8, 5
    %p108 = pnand %p106, %p107
    %p109 = pneg %p108
    // Predicated region
    $region9: #{vit_forward.7} parent=5 // pred_check
      _
    $region10: #{vit_forward.7} parent=5 // pred_check_branch
      %111 = sbr.rel (%p108) target = $region12
    $region11: #{vit_forward.7} parent=5 // pred_region
      %s112 = ssub.s32 %s8, 1
    $region12: #{vit_forward.7} parent=5 // pred_fallthru
      _
    %p113 = scmp.lt.s32.totalorder %s8, 4
    // Predicated region
    $region13: #{vit_forward.7} parent=5 // pred_check
      %p114 = pneg %p113
    $region14: #{vit_forward.7} parent=5 // pred_check_branch
      %116 = sbr.rel (%p114) target = $region16
    $region15: #{vit_forward.7} parent=5 // pred_region
      // Predicated region
      $region17: #{vit_forward.7} parent=15 // pred_check
        %p117 = pneg %p40
      $region18: #{vit_forward.7} parent=15 // pred_check_branch
        %119 = sbr.rel (%p117) target = $region20
      $region19: #{vit_forward.7} parent=15 // pred_region
        %p120 = scmp.lt.s32.totalorder %s15, 1
        %s121 = scalar_select %p120, %s15, 1
        %s122 = smul.addr %s121, 2
        %s123 = smul.addr %s122, 8
        %s124 = scalar_lea.vmem %s0, %s123
      $region20: #{vit_forward.7} parent=15 // pred_fallthru
        _
      // Predicated region
      $region21: #{vit_forward.7} parent=15 // pred_check
        %p125 = pneg %p66
      $region22: #{vit_forward.7} parent=15 // pred_check_branch
        %127 = sbr.rel (%p125) target = $region24
      $region23: #{vit_forward.7} parent=15 // pred_region
        %p128 = scmp.lt.s32.totalorder %s16, 1
        %s129 = scalar_select %p128, %s16, 1
        %s130 = smul.addr %s129, 2
        %s131 = smul.addr %s130, 8
        %s132 = scalar_lea.vmem %s1, %s131
      $region24: #{vit_forward.7} parent=15 // pred_fallthru
        _
    $region16: #{vit_forward.7} parent=5 // pred_fallthru
      _
    %p133 = scmp.le.s32.totalorder 1, %s8
    %p134 = scmp.lt.s32.totalorder %s8, 5
    %p135 = pnand %p133, %p134
    %p136 = pneg %p135
    // Predicated region
    $region25: #{vit_forward.7} parent=5 // pred_check
      _
    $region26: #{vit_forward.7} parent=5 // pred_check_branch
      %138 = sbr.rel (%p135) target = $region28
    $region27: #{vit_forward.7} parent=5 // pred_region
      %s139 = ssub.s32 %s8, 1
      %p140 = scmp.lt.s32.totalorder %s17, 1
      %s141 = scalar_select %p140, %s17, 1
      %s142 = smul.addr %s141, 2
      %s143 = smul.addr %s142, 8
      %s144 = scalar_lea.vmem %s0, %s143
      %p145 = pneg %p46
      %p146 = pneg %p43
      %p147 = scmp.lt.s32.totalorder %s18, 1
      %s148 = scalar_select %p147, %s18, 1
      %s149 = smul.addr %s148, 2
      %s150 = smul.addr %s149, 8
      %s151 = scalar_lea.vmem %s1, %s150
      %p152 = pneg %p72
      %p153 = pneg %p69
      %p154 = pneg %p98
      %p155 = pneg %p95
      %p156 = scmp.lt.s32.totalorder %s17, 1
      %s157 = scalar_select %p156, %s17, 1
      %s158 = scalar_lea.vmem %s2, %s157
      %p159 = scmp.lt.s32.totalorder %s17, 1
      %s160 = scalar_select %p159, %s17, 1
      %s161 = smul.addr %s160, 2
      %s162 = smul.addr %s161, 8
      %s163 = scalar_lea.vmem %s0, %s162
      %p164 = scmp.lt.s32.totalorder %s18, 1
      %s165 = scalar_select %p164, %s18, 1
      %s166 = smul.addr %s165, 2
      %s167 = smul.addr %s166, 8
      %s168 = scalar_lea.vmem %s1, %s167
      %p169 = scmp.lt.s32.totalorder %s17, 1
      %s170 = scalar_select %p169, %s17, 1
      %s171 = scalar_lea.vmem %s2, %s170
      %p173 = scmp.eq.s32.totalorder %s18, 0
      // Predicated region
      $region29: #{vit_forward.7} parent=27 // pred_check
        %p174 = pneg %p173
      $region30: #{vit_forward.7} parent=27 // pred_check_branch
        %176 = sbr.rel (%p174) target = $region32
      $region31: #{vit_forward.7} parent=27 // pred_region
        %vm177 = vcmask 0
        %178 = vst.msk [vmem:[%s171] sm:$0x1] %vm177, 0.0
      $region32: #{vit_forward.7} parent=27 // pred_fallthru
        _
      %p179 = scmp.ne.s32.totalorder %s17, %s18
      // Predicated region
      $region33: #{vit_forward.7} parent=27 // pred_check
        %p180 = pneg %p179
      $region34: #{vit_forward.7} parent=27 // pred_check_branch
        %182 = sbr.rel (%p180) target = $region36
      $region35: #{vit_forward.7} parent=27 // pred_region
        %v183 = vld [vmem:[%s163] sm:$0xff]
        %v184 = vld [vmem:[%s163 + $0x8] sm:$0xff]
        %v185 = vpack.c.bf16 %v184, %v183
        %v186 = vld [vmem:[%s168] sm:$0xff]
        %v187 = vld [vmem:[%s168 + $0x8] sm:$0xff]
        %v188 = vpack.c.bf16 %v187, %v186
        %vm189 = vcmask 261120
        %v191 = vsel %vm189, %v185, 0
        %v194 = vsel %vm189, %v188, 0
        %196 = vmatprep.subr.bf16.mxu0 0
        %197 = vmatpush1.bf16.xpose.msra.mxu0 %v194
        %198 = vmatprep.subr.bf16.mxu0 0
        %199 = vmatpush1.bf16.xpose.msra.mxu0 0
        %200 = vmatprep.subr.bf16.mxu0 0
        %201 = vmatpush1.bf16.xpose.msra.mxu0 0
        %202 = vmatprep.subr.bf16.mxu0 0
        %203 = vmatpush1.bf16.xpose.msra.mxu0 0
        %204 = vmatprep.subr.bf16.mxu0 0
        %205 = vmatpush1.bf16.xpose.msra.mxu0 0
        %206 = vmatprep.subr.bf16.mxu0 0
        %207 = vmatpush1.bf16.xpose.msra.mxu0 0
        %208 = vmatprep.subr.bf16.mxu0 0
        %209 = vmatpush1.bf16.xpose.msra.mxu0 0
        %210 = vmatprep.subr.bf16.mxu0 0
        %211 = vmatpush1.bf16.xpose.msra.mxu0 0
        %212 = vmatprep.subr.bf16.mxu0 0
        %213 = vmatpush1.bf16.xpose.msra.mxu0 0
        %214 = vmatprep.subr.bf16.mxu0 0
        %215 = vmatpush1.bf16.xpose.msra.mxu0 0
        %216 = vmatprep.subr.bf16.mxu0 0
        %217 = vmatpush1.bf16.xpose.msra.mxu0 0
        %218 = vmatprep.subr.bf16.mxu0 0
        %219 = vmatpush1.bf16.xpose.msra.mxu0 0
        %220 = vmatprep.subr.bf16.mxu0 0
        %221 = vmatpush1.bf16.xpose.msra.mxu0 0
        %222 = vmatprep.subr.bf16.mxu0 0
        %223 = vmatpush1.bf16.xpose.msra.mxu0 0
        %224 = vmatprep.subr.bf16.mxu0 0
        %225 = vmatpush1.bf16.xpose.msra.mxu0 0
        %226 = vmatprep.subr.bf16.mxu0 0
        %227 = vmatpush1.bf16.xpose.msra.mxu0 0
        %228 = vmatprep.mubr.bf16.mxu0 0
        %229 = vmatmul.mubr.bf16.gmra.mrb[0].mxu0 %v191
        %v230 = vpop.f32.mrb[0].mxu0
        %v231 = vadd.f32 0.0, %v230
        %v232 = vpop.f32.mrb[0].mxu0
        %v233 = vpop.f32.mrb[0].mxu0
        %v234 = vadd.f32 0.0, %v233
        %v235 = vpop.f32.mrb[0].mxu0
        %236 = vdwg.mxu0
        %v237 = vld [vmem:[%s171] sm:$0x1]
        %v238 = vand.u32 2147483647, %v231
        %v239 = vand.u32 2147483647, %v234
        %vm240 = vcmask 130048
        %v241 = vsel %vm240, %v238, 0.0
        %v242 = vsel %vm240, %v239, 0.0
        %v243 = vadd.f32 %v241, %v242
        %244 = vadd.xlane.f32.xlu0 %v243
        %v245 = vpop.xlane.xlu0 %244
        %v246 = vrot.slane %v245, 4
        %v247 = vadd.f32 %v245, %v246
        %v248 = vrot.slane %v247, 2
        %v249 = vadd.f32 %v247, %v248
        %v250 = vrot.slane %v249, 1
        %v251 = vadd.f32 %v249, %v250
        %s252 = vtos %v251
        %v253 = vstv %s252
        %v254 = vadd.f32 %v237, %v253
        %vm255 = vcmask 0
        %256 = vst.msk [vmem:[%s171] sm:$0x1] %vm255, %v254
      $region36: #{vit_forward.7} parent=27 // pred_fallthru
        _
      %p257 = scmp.lt.s32.totalorder %s17, 1
      %s258 = scalar_select %p257, %s17, 1
      %s259 = scalar_lea.vmem %s2, %s258
      // Predicated region
      $region37: #{vit_forward.7} parent=27 // pred_check
        %p260 = pneg %p95
      $region38: #{vit_forward.7} parent=27 // pred_check_branch
        %262 = sbr.rel (%p260) target = $region40
      $region39: #{vit_forward.7} parent=27 // pred_region
        _
      $region40: #{vit_forward.7} parent=27 // pred_fallthru
        _
    $region28: #{vit_forward.7} parent=5 // pred_fallthru
      _
    %p263 = scmp.le.s32.totalorder 2, %s8
    // Predicated region
    $region41: #{vit_forward.7} parent=5 // pred_check
      %p264 = pneg %p263
    $region42: #{vit_forward.7} parent=5 // pred_check_branch
      %266 = sbr.rel (%p264) target = $region44
    $region43: #{vit_forward.7} parent=5 // pred_region
      %s267 = ssub.s32 %s8, 2
      // Predicated region
      $region45: #{vit_forward.7} parent=43 // pred_check
        %p268 = pneg %p101
      $region46: #{vit_forward.7} parent=43 // pred_check_branch
        %270 = sbr.rel (%p268) target = $region48
      $region47: #{vit_forward.7} parent=43 // pred_region
        %p271 = scmp.lt.s32.totalorder %s19, 1
        %s272 = scalar_select %p271, %s19, 1
        %s273 = scalar_lea.vmem %s2, %s272
      $region48: #{vit_forward.7} parent=43 // pred_fallthru
        _
    $region44: #{vit_forward.7} parent=5 // pred_fallthru
      _
  $region6: #{vit_forward.7} parent=0 // loop_footer
    %s12 = sadd.s32 1, %s8
  $region7: #{vit_forward.7} parent=0 // loop_footer_branch
    %7 = sbr.rel target = $region3
  $region8: #{vit_forward.7} parent=0 // loop_exit
    _

</llo_original>
